<compile_context>
chip_gen: v5e
topology: v5e:2x2
jax: 0.10.0
libtpu: 0.0.40
codegen_flags: <defaults>
</compile_context>

<pallas_src>
import functools

import jax
import jax.numpy as jnp
from jax.experimental import pallas as pl
from jax.experimental.pallas import tpu as pltpu


# ----------------------------------------------------------------------------
# Helpers
# ----------------------------------------------------------------------------
def _round_up(x, m):
    return ((x + m - 1) // m) * m


def _is_v5():
    try:
        return "v5" in jax.devices()[0].device_kind.lower()
    except Exception:
        return False


_V5 = _is_v5()


def _largest_tk_divisor(kp):
    """Largest multiple-of-128 divisor of kp that is <= 1024."""
    best = 128
    d = 128
    while d <= min(kp, 1024):
        if kp % d == 0:
            best = d
        d += 128
    return best


def _pick_k_tiling(K):
    """Return (Kp, TK) minimizing K-steps with modest zero padding."""
    kp_div = _round_up(K, 128)
    tk_div = _largest_tk_divisor(kp_div)
    kp_pad = _round_up(K, 512)
    if kp_pad // 512 < kp_div // tk_div:
        return kp_pad, 512           # zero MACs cheaper than extra grid steps
    return kp_div, tk_div


# ----------------------------------------------------------------------------
# Pallas GEMM kernels (bias + activation fused into the epilogue)
# ----------------------------------------------------------------------------
def _gemm_single_k_kernel(x_ref, w_ref, b_ref, o_ref, *, relu):
    # Whole K fits one tile: no accumulator scratch, no pl.when epilogue.
    y = jnp.dot(x_ref[...], w_ref[...], preferred_element_type=jnp.float32)
    y = y + b_ref[...]                 # (1, TN) broadcasts over rows
    if relu:
        y = jnp.maximum(y, 0.0)
    o_ref[...] = y.astype(o_ref.dtype)


def _gemm_acc_kernel(x_ref, w_ref, b_ref, o_ref, acc_ref, *, relu):
    # Grid = (G, M, N, K); K (axis 3) is the reduction axis.
    @pl.when(pl.program_id(3) == 0)
    def _():
        acc_ref[...] = jnp.zeros_like(acc_ref)

    acc_ref[...] += jnp.dot(
        x_ref[...], w_ref[...], preferred_element_type=jnp.float32
    )

    @pl.when(pl.program_id(3) == pl.num_programs(3) - 1)
    def _():
        y = acc_ref[...] + b_ref[...]
        if relu:
            y = jnp.maximum(y, 0.0)
        o_ref[...] = y.astype(o_ref.dtype)


def batched_gemm_bias_act(patches, wmat, bias, relu, out_dtype):
    """(G,M,K) @ (G,K,N) + bias(N,), optional ReLU, one pallas_call.

    bf16 operands on the MXU, f32 accumulation, lane-dense padded output.
    G is a size-1 axis for plain convs and the 4 sub-pixel phases of a
    transpose conv (merged into a single launch, phase axis is "parallel").
    """
    G, M, K = patches.shape
    G2, K2, N = wmat.shape
    assert G == G2 and K == K2

    Kp, TK = _pick_k_tiling(K)
    TM = min(256, _round_up(M, 8))
    Mp = _round_up(M, TM)
    TN = 128 if (_V5 or N <= 128) else 256
    Np = _round_up(N, TN)
    # v7x megacore: prefer >=2 parallel blocks when narrowing TN gets it free.
    if G * (Mp // TM) * (Np // TN) < 2 and TN > 128 and Np >= 256:
        TN = 128
        Np = _round_up(N, TN)

    x = jnp.pad(patches, ((0, 0), (0, Mp - M), (0, Kp - K))).astype(jnp.bfloat16)
    w = jnp.pad(wmat, ((0, 0), (0, Kp - K), (0, Np - N))).astype(jnp.bfloat16)
    b = jnp.pad(bias, (0, Np - N)).reshape(1, Np).astype(jnp.float32)

    k_steps = Kp // TK

    if k_steps == 1:
        grid = (G, Mp // TM, Np // TN)
        kernel = functools.partial(_gemm_single_k_kernel, relu=relu)
        in_specs = [
            pl.BlockSpec((pl.Squeezed(), TM, Kp), lambda g, i, j: (g, i, 0)),
            pl.BlockSpec((pl.Squeezed(), Kp, TN), lambda g, i, j: (g, 0, j)),
            pl.BlockSpec((1, TN), lambda g, i, j: (0, j)),
        ]
        out_specs = pl.BlockSpec((pl.Squeezed(), TM, TN),
                                 lambda g, i, j: (g, i, j))
        scratch_shapes = []
        dims = ("parallel", "parallel", "parallel")
    else:
        grid = (G, Mp // TM, Np // TN, k_steps)
        kernel = functools.partial(_gemm_acc_kernel, relu=relu)
        in_specs = [
            pl.BlockSpec((pl.Squeezed(), TM, TK), lambda g, i, j, k: (g, i, k)),
            pl.BlockSpec((pl.Squeezed(), TK, TN), lambda g, i, j, k: (g, k, j)),
            pl.BlockSpec((1, TN), lambda g, i, j, k: (0, j)),
        ]
        out_specs = pl.BlockSpec((pl.Squeezed(), TM, TN),
                                 lambda g, i, j, k: (g, i, j))
        scratch_shapes = [pltpu.VMEM((TM, TN), jnp.float32)]
        dims = ("parallel", "parallel", "parallel", "arbitrary")

    out = pl.pallas_call(
        kernel,
        out_shape=jax.ShapeDtypeStruct((G, Mp, Np), out_dtype),
        grid_spec=pltpu.PrefetchScalarGridSpec(
            num_scalar_prefetch=0,
            grid=grid,
            in_specs=in_specs,
            out_specs=out_specs,
            scratch_shapes=scratch_shapes,
        ),
        compiler_params=pltpu.CompilerParams(
            dimension_semantics=dims,
            vmem_limit_bytes=32 * 1024 * 1024,
        ),
    )(x, w, b)

    # With adaptive TM, Mp == M for every Generator layer; only the padded
    # output channels are stripped here (kept padded channels would inflate
    # the next layer's K reduction, so we do not propagate them).
    return out[:, :M, :N]


# ----------------------------------------------------------------------------
# Conv layers built on the Pallas GEMM (NHWC compute layout)
# ----------------------------------------------------------------------------
def conv2d_nhwc(x, w_oihw, bias, stride, padding, relu, out_dtype):
    """NHWC Conv2d matching torch.nn.Conv2d semantics (weight OIHW)."""
    N, H, W, Cin = x.shape
    Cout, _, KH, KW = w_oihw.shape
    Ho = (H + 2 * padding - KH) // stride + 1
    Wo = (W + 2 * padding - KW) // stride + 1

    xp = jnp.pad(x, ((0, 0), (padding, padding), (padding, padding), (0, 0)))

    # TODO(synk): im2col is still materialized in HBM; fold (kh, kw) taps into
    # the GEMM K grid with windowed index_maps to kill the 49x/9x inflation.
    cols = []
    for i in range(KH):
        for j in range(KW):
            cols.append(
                xp[:, i:i + stride * (Ho - 1) + 1:stride,
                      j:j + stride * (Wo - 1) + 1:stride, :]
            )
    patches = jnp.concatenate(cols, axis=-1).reshape(
        1, N * Ho * Wo, KH * KW * Cin)

    # wmat[(kh*KW + kw)*Cin + cin, cout] = w_oihw[cout, cin, kh, kw]
    wmat = jnp.transpose(w_oihw, (2, 3, 1, 0)).reshape(1, KH * KW * Cin, Cout)

    out = batched_gemm_bias_act(patches, wmat, bias, relu, out_dtype)
    return out.reshape(N, Ho, Wo, Cout)


def conv_transpose2d_nhwc(x, w_iohw, bias, relu, out_dtype):
    """NHWC ConvTranspose2d (stride=2, k=4, pad=1) via sub-pixel decomposition.

    Four 2x2 stride-1 convs (one per output phase) run as ONE batched Pallas
    GEMM (leading size-4 phase axis) followed by a pixel interleave.  Matches
    torch.nn.ConvTranspose2d (weight IOHW, output_padding=0) without
    materializing the zero-dilated input.
    """
    N, H, W, Cin = x.shape
    Cin2, Cout, KH, KW = w_iohw.shape
    assert Cin2 == Cin and KH == 4 and KW == 4  # Generator's only config

    xp = jnp.pad(x, ((0, 0), (1, 1), (1, 1), (0, 0)))

    patch_list, wmat_list = [], []
    for p in range(2):
        for q in range(2):
            xs = xp[:, p:p + H + 1, q:q + W + 1, :]   # (N, H+1, W+1, Cin)
            cols, wms = [], []
            for dh in range(2):
                for dw in range(2):
                    cols.append(xs[:, dh:dh + H, dw:dw + W, :])
                    kh = 3 - p - 2 * dh
                    kw = 3 - q - 2 * dw
                    wms.append(w_iohw[:, :, kh, kw])  # (Cin, Cout)
            patch_list.append(
                jnp.concatenate(cols, axis=-1).reshape(N * H * W, 4 * Cin))
            wmat_list.append(jnp.concatenate(wms, axis=0))  # rows: (dh,dw,cin)

    patches = jnp.stack(patch_list, axis=0)   # (4, N*H*W, 4*Cin), g = 2*p + q
    wmats = jnp.stack(wmat_list, axis=0)      # (4, 4*Cin, Cout)

    out = batched_gemm_bias_act(patches, wmats, bias, relu, out_dtype)

    # out[2*p+q, n*H*W + oy*W + ox, c] -> img[n, 2*oy+p, 2*ox+q, c]
    ph = out.reshape(2, 2, N, H, W, Cout)
    return jnp.transpose(ph, (2, 3, 0, 4, 1, 5)).reshape(N, 2 * H, 2 * W, Cout)


# ----------------------------------------------------------------------------
# Parameter init (deterministic, PyTorch-default-style uniform bounds)
# ----------------------------------------------------------------------------
def _init_conv(key, cout, cin, k):
    kw, kb = jax.random.split(key)
    bound = 1.0 / float(cin * k * k) ** 0.5
    w = jax.random.uniform(kw, (cout, cin, k, k), jnp.float32, -bound, bound)
    b = jax.random.uniform(kb, (cout,), jnp.float32, -bound, bound)
    return w, b


def _init_conv_transpose(key, cin, cout, k):
    kw, kb = jax.random.split(key)
    bound = 1.0 / float(cout * k * k) ** 0.5
    w = jax.random.uniform(kw, (cin, cout, k, k), jnp.float32, -bound, bound)
    b = jax.random.uniform(kb, (cout,), jnp.float32, -bound, bound)
    return w, b


def init_generator_params(key):
    keys = jax.random.split(key, 6)
    params = {}
    params["w0"], params["b0"] = _init_conv(keys[0], 64, 3, 7)
    params["w1"], params["b1"] = _init_conv(keys[1], 128, 64, 3)
    params["w2"], params["b2"] = _init_conv(keys[2], 256, 128, 3)
    params["w3"], params["b3"] = _init_conv_transpose(keys[3], 256, 128, 4)
    params["w4"], params["b4"] = _init_conv_transpose(keys[4], 128, 64, 4)
    params["w5"], params["b5"] = _init_conv(keys[5], 3, 64, 7)
    return params


# ----------------------------------------------------------------------------
# Generator forward
# ----------------------------------------------------------------------------
def generator_forward(params, x_nchw, driving_kp_nchw, source_kp_nchw):
    to_nhwc = lambda t: jnp.transpose(t, (0, 2, 3, 1))
    # combined_input = x + driving_kp - source_kp  (plain JAX; XLA fuses it
    # into the first conv's padding / im2col, no extra HBM round trip).
    h = to_nhwc(x_nchw) + to_nhwc(driving_kp_nchw) - to_nhwc(source_kp_nchw)

    h = conv2d_nhwc(h, params["w0"], params["b0"], stride=1, padding=3,
                    relu=True, out_dtype=jnp.bfloat16)
    h = conv2d_nhwc(h, params["w1"], params["b1"], stride=2, padding=1,
                    relu=True, out_dtype=jnp.bfloat16)
    h = conv2d_nhwc(h, params["w2"], params["b2"], stride=2, padding=1,
                    relu=True, out_dtype=jnp.bfloat16)
    h = conv_transpose2d_nhwc(h, params["w3"], params["b3"],
                              relu=True, out_dtype=jnp.bfloat16)
    h = conv_transpose2d_nhwc(h, params["w4"], params["b4"],
                              relu=True, out_dtype=jnp.bfloat16)
    h = conv2d_nhwc(h, params["w5"], params["b5"], stride=1, padding=3,
                    relu=False, out_dtype=jnp.float32)

    # NHWC -> NCHW
    return jnp.transpose(h, (0, 3, 1, 2))


# ----------------------------------------------------------------------------
if __name__ == "__main__":
    key = jax.random.PRNGKey(0)
    k_params, k_x, k_d, k_s = jax.random.split(key, 4)

    params = init_generator_params(k_params)

    # Small deterministic inputs (NCHW, consistent with the torch module).
    B, C, H, W = 2, 3, 16, 16
    x = jax.random.normal(k_x, (B, C, H, W), jnp.float32)
    driving_kp = jax.random.normal(k_d, (B, C, H, W), jnp.float32)
    source_kp = jax.random.normal(k_s, (B, C, H, W), jnp.float32)

    out = jax.jit(generator_forward)(params, x, driving_kp, source_kp)
    out = jax.block_until_ready(out)

    assert out.shape == (B, 3, H, W), out.shape
    assert out.dtype == jnp.float32
    print("KERNEL_OK")
</pallas_src>

<mosaic_0001>
module attributes {stable_mosaic.version = 11 : i64} {
  func.func @_gemm_single_k_kernel(%arg0: i32, %arg1: i32, %arg2: i32, %arg3: memref<1x256x256xbf16, #tpu.memory_space<vmem>>, %arg4: memref<1x256x128xbf16, #tpu.memory_space<vmem>>, %arg5: memref<1x128xf32, #tpu.memory_space<vmem>>, %arg6: memref<1x256x128xbf16, #tpu.memory_space<vmem>>) attributes {dimension_semantics = [#tpu.dimension_semantics<parallel>, #tpu.dimension_semantics<parallel>, #tpu.dimension_semantics<parallel>], iteration_bounds = array<i64: 1, 2, 1>, scalar_prefetch = 0 : i64, scratch_operands = 0 : i64, tpu.core_type = #tpu.core_type<tc>, window_params = [{transform_indices = @transform_0, window_bounds = array<i64: 1, 256, 256>}, {transform_indices = @transform_1, window_bounds = array<i64: 1, 256, 128>}, {transform_indices = @transform_2, window_bounds = array<i64: 1, 128>}, {transform_indices = @transform_3, window_bounds = array<i64: 1, 256, 128>}]} {
    %c0 = arith.constant 0 : index
    %c0_0 = arith.constant 0 : index
    %c0_1 = arith.constant 0 : index
    %0 = vector.load %arg3[%c0, %c0_0, %c0_1] : memref<1x256x256xbf16, #tpu.memory_space<vmem>>, vector<1x256x256xbf16>
    %1 = vector.shape_cast %0 : vector<1x256x256xbf16> to vector<256x256xbf16>
    %c0_2 = arith.constant 0 : index
    %c0_3 = arith.constant 0 : index
    %c0_4 = arith.constant 0 : index
    %2 = vector.load %arg4[%c0_2, %c0_3, %c0_4] : memref<1x256x128xbf16, #tpu.memory_space<vmem>>, vector<1x256x128xbf16>
    %3 = vector.shape_cast %2 : vector<1x256x128xbf16> to vector<256x128xbf16>
    %cst = arith.constant dense<0.000000e+00> : vector<256x128xf32>
    %4 = tpu.matmul %1, %3, %cst {dimension_numbers = #tpu.dot_dimension_numbers<[1], [0], [0], [1], [0, 0, 1, 1], [], []>} : vector<256x256xbf16>, vector<256x128xbf16>, vector<256x128xf32> -> vector<256x128xf32>
    %c0_5 = arith.constant 0 : index
    %c0_6 = arith.constant 0 : index
    %5 = vector.load %arg5[%c0_5, %c0_6] : memref<1x128xf32, #tpu.memory_space<vmem>>, vector<1x128xf32>
    %6 = vector.broadcast %5 : vector<1x128xf32> to vector<256x128xf32>
    %7 = arith.addf %4, %6 : vector<256x128xf32>
    %cst_7 = arith.constant 0.000000e+00 : f32
    %8 = vector.broadcast %cst_7 : f32 to vector<256x128xf32>
    %9 = arith.maximumf %7, %8 : vector<256x128xf32>
    %10 = arith.truncf %9 : vector<256x128xf32> to vector<256x128xbf16>
    %c0_8 = arith.constant 0 : index
    %c0_9 = arith.constant 0 : index
    %c0_10 = arith.constant 0 : index
    %11 = vector.load %arg6[%c0_8, %c0_9, %c0_10] : memref<1x256x128xbf16, #tpu.memory_space<vmem>>, vector<1x256x128xbf16>
    %12 = vector.shape_cast %11 : vector<1x256x128xbf16> to vector<256x128xbf16>
    %13 = vector.shape_cast %10 : vector<256x128xbf16> to vector<1x256x128xbf16>
    tpu.vector_store %arg6[%c0_8, %c0_9, %c0_10], %13 {strides = array<i32>} : memref<1x256x128xbf16, #tpu.memory_space<vmem>>, vector<1x256x128xbf16>,
    return
  }
  func.func @transform_0(%arg0: i32, %arg1: i32, %arg2: i32) -> (i32, i32, i32) {
    %c0_i32 = arith.constant 0 : i32
    %c0_i32_0 = arith.constant 0 : i32
    return %arg0, %arg1, %c0_i32 : i32, i32, i32
  }
  func.func @transform_1(%arg0: i32, %arg1: i32, %arg2: i32) -> (i32, i32, i32) {
    %c0_i32 = arith.constant 0 : i32
    %c0_i32_0 = arith.constant 0 : i32
    return %arg0, %c0_i32, %arg2 : i32, i32, i32
  }
  func.func @transform_2(%arg0: i32, %arg1: i32, %arg2: i32) -> (i32, i32) {
    %c0_i32 = arith.constant 0 : i32
    %c0_i32_0 = arith.constant 0 : i32
    return %c0_i32, %arg2 : i32, i32
  }
  func.func @transform_3(%arg0: i32, %arg1: i32, %arg2: i32) -> (i32, i32, i32) {
    %c0_i32 = arith.constant 0 : i32
    return %arg0, %arg1, %arg2 : i32, i32, i32
  }
}

module attributes {stable_mosaic.version = 11 : i64} {
  func.func @_gemm_single_k_kernel(%arg0: i32, %arg1: i32, %arg2: i32, %arg3: memref<1x128x640xbf16, #tpu.memory_space<vmem>>, %arg4: memref<1x640x128xbf16, #tpu.memory_space<vmem>>, %arg5: memref<1x128xf32, #tpu.memory_space<vmem>>, %arg6: memref<1x128x128xbf16, #tpu.memory_space<vmem>>) attributes {dimension_semantics = [#tpu.dimension_semantics<parallel>, #tpu.dimension_semantics<parallel>, #tpu.dimension_semantics<parallel>], iteration_bounds = array<i64: 1, 1, 1>, scalar_prefetch = 0 : i64, scratch_operands = 0 : i64, tpu.core_type = #tpu.core_type<tc>, window_params = [{transform_indices = @transform_0, window_bounds = array<i64: 1, 128, 640>}, {transform_indices = @transform_1, window_bounds = array<i64: 1, 640, 128>}, {transform_indices = @transform_2, window_bounds = array<i64: 1, 128>}, {transform_indices = @transform_3, window_bounds = array<i64: 1, 128, 128>}]} {
    %c0 = arith.constant 0 : index
    %c0_0 = arith.constant 0 : index
    %c0_1 = arith.constant 0 : index
    %0 = vector.load %arg3[%c0, %c0_0, %c0_1] : memref<1x128x640xbf16, #tpu.memory_space<vmem>>, vector<1x128x640xbf16>
    %1 = vector.shape_cast %0 : vector<1x128x640xbf16> to vector<128x640xbf16>
    %c0_2 = arith.constant 0 : index
    %c0_3 = arith.constant 0 : index
    %c0_4 = arith.constant 0 : index
    %2 = vector.load %arg4[%c0_2, %c0_3, %c0_4] : memref<1x640x128xbf16, #tpu.memory_space<vmem>>, vector<1x640x128xbf16>
    %3 = vector.shape_cast %2 : vector<1x640x128xbf16> to vector<640x128xbf16>
    %cst = arith.constant dense<0.000000e+00> : vector<128x128xf32>
    %4 = tpu.matmul %1, %3, %cst {dimension_numbers = #tpu.dot_dimension_numbers<[1], [0], [0], [1], [0, 0, 1, 1], [], []>} : vector<128x640xbf16>, vector<640x128xbf16>, vector<128x128xf32> -> vector<128x128xf32>
    %c0_5 = arith.constant 0 : index
    %c0_6 = arith.constant 0 : index
    %5 = vector.load %arg5[%c0_5, %c0_6] : memref<1x128xf32, #tpu.memory_space<vmem>>, vector<1x128xf32>
    %6 = vector.broadcast %5 : vector<1x128xf32> to vector<128x128xf32>
    %7 = arith.addf %4, %6 : vector<128x128xf32>
    %cst_7 = arith.constant 0.000000e+00 : f32
    %8 = vector.broadcast %cst_7 : f32 to vector<128x128xf32>
    %9 = arith.maximumf %7, %8 : vector<128x128xf32>
    %10 = arith.truncf %9 : vector<128x128xf32> to vector<128x128xbf16>
    %c0_8 = arith.constant 0 : index
    %c0_9 = arith.constant 0 : index
    %c0_10 = arith.constant 0 : index
    %11 = vector.load %arg6[%c0_8, %c0_9, %c0_10] : memref<1x128x128xbf16, #tpu.memory_space<vmem>>, vector<1x128x128xbf16>
    %12 = vector.shape_cast %11 : vector<1x128x128xbf16> to vector<128x128xbf16>
    %13 = vector.shape_cast %10 : vector<128x128xbf16> to vector<1x128x128xbf16>
    tpu.vector_store %arg6[%c0_8, %c0_9, %c0_10], %13 {strides = array<i32>} : memref<1x128x128xbf16, #tpu.memory_space<vmem>>, vector<1x128x128xbf16>,
    return
  }
  func.func @transform_0(%arg0: i32, %arg1: i32, %arg2: i32) -> (i32, i32, i32) {
    %c0_i32 = arith.constant 0 : i32
    %c0_i32_0 = arith.constant 0 : i32
    return %arg0, %arg1, %c0_i32 : i32, i32, i32
  }
  func.func @transform_1(%arg0: i32, %arg1: i32, %arg2: i32) -> (i32, i32, i32) {
    %c0_i32 = arith.constant 0 : i32
    %c0_i32_0 = arith.constant 0 : i32
    return %arg0, %c0_i32, %arg2 : i32, i32, i32
  }
  func.func @transform_2(%arg0: i32, %arg1: i32, %arg2: i32) -> (i32, i32) {
    %c0_i32 = arith.constant 0 : i32
    %c0_i32_0 = arith.constant 0 : i32
    return %c0_i32, %arg2 : i32, i32
  }
  func.func @transform_3(%arg0: i32, %arg1: i32, %arg2: i32) -> (i32, i32, i32) {
    %c0_i32 = arith.constant 0 : i32
    return %arg0, %arg1, %arg2 : i32, i32, i32
  }
}

module attributes {stable_mosaic.version = 11 : i64} {
  func.func @_gemm_acc_kernel(%arg0: i32, %arg1: i32, %arg2: i32, %arg3: i32, %arg4: memref<1x32x384xbf16, #tpu.memory_space<vmem>>, %arg5: memref<1x384x128xbf16, #tpu.memory_space<vmem>>, %arg6: memref<1x128xf32, #tpu.memory_space<vmem>>, %arg7: memref<1x32x128xbf16, #tpu.memory_space<vmem>>, %arg8: memref<32x128xf32, #tpu.memory_space<vmem>>) attributes {dimension_semantics = [#tpu.dimension_semantics<parallel>, #tpu.dimension_semantics<parallel>, #tpu.dimension_semantics<parallel>, #tpu.dimension_semantics<arbitrary>], iteration_bounds = array<i64: 1, 1, 2, 3>, scalar_prefetch = 0 : i64, scratch_operands = 1 : i64, tpu.core_type = #tpu.core_type<tc>, window_params = [{transform_indices = @transform_0, window_bounds = array<i64: 1, 32, 384>}, {transform_indices = @transform_1, window_bounds = array<i64: 1, 384, 128>}, {transform_indices = @transform_2, window_bounds = array<i64: 1, 128>}, {transform_indices = @transform_3, window_bounds = array<i64: 1, 32, 128>}]} {
    %c0_i32 = arith.constant 0 : i32
    %0 = arith.cmpi eq, %arg3, %c0_i32 : i32
    %1 = arith.extui %0 : i1 to i32
    %c0_i32_0 = arith.constant 0 : i32
    %2 = arith.cmpi ne, %1, %c0_i32_0 : i32
    scf.if %2 {
      %cst_11 = arith.constant 0.000000e+00 : f32
      %14 = vector.broadcast %cst_11 : f32 to vector<32x128xf32>
      %c0_12 = arith.constant 0 : index
      %c0_13 = arith.constant 0 : index
      %15 = vector.load %arg8[%c0_12, %c0_13] : memref<32x128xf32, #tpu.memory_space<vmem>>, vector<32x128xf32>
      tpu.vector_store %arg8[%c0_12, %c0_13], %14 {strides = array<i32>} : memref<32x128xf32, #tpu.memory_space<vmem>>, vector<32x128xf32>,
    } else {
    }
    %c0 = arith.constant 0 : index
    %c0_1 = arith.constant 0 : index
    %3 = vector.load %arg8[%c0, %c0_1] : memref<32x128xf32, #tpu.memory_space<vmem>>, vector<32x128xf32>
    %c0_2 = arith.constant 0 : index
    %c0_3 = arith.constant 0 : index
    %c0_4 = arith.constant 0 : index
    %4 = vector.load %arg4[%c0_2, %c0_3, %c0_4] : memref<1x32x384xbf16, #tpu.memory_space<vmem>>, vector<1x32x384xbf16>
    %5 = vector.shape_cast %4 : vector<1x32x384xbf16> to vector<32x384xbf16>
    %c0_5 = arith.constant 0 : index
    %c0_6 = arith.constant 0 : index
    %c0_7 = arith.constant 0 : index
    %6 = vector.load %arg5[%c0_5, %c0_6, %c0_7] : memref<1x384x128xbf16, #tpu.memory_space<vmem>>, vector<1x384x128xbf16>
    %7 = vector.shape_cast %6 : vector<1x384x128xbf16> to vector<384x128xbf16>
    %cst = arith.constant dense<0.000000e+00> : vector<32x128xf32>
    %8 = tpu.matmul %5, %7, %cst {dimension_numbers = #tpu.dot_dimension_numbers<[1], [0], [0], [1], [0, 0, 1, 1], [], []>} : vector<32x384xbf16>, vector<384x128xbf16>, vector<32x128xf32> -> vector<32x128xf32>
    %9 = arith.addf %3, %8 : vector<32x128xf32>
    %c0_8 = arith.constant 0 : index
    %c0_9 = arith.constant 0 : index
    %10 = vector.load %arg8[%c0_8, %c0_9] : memref<32x128xf32, #tpu.memory_space<vmem>>, vector<32x128xf32>
    tpu.vector_store %arg8[%c0_8, %c0_9], %9 {strides = array<i32>} : memref<32x128xf32, #tpu.memory_space<vmem>>, vector<32x128xf32>,
    %c2_i32 = arith.constant 2 : i32
    %11 = arith.cmpi eq, %arg3, %c2_i32 : i32
    %12 = arith.extui %11 : i1 to i32
    %c0_i32_10 = arith.constant 0 : i32
    %13 = arith.cmpi ne, %12, %c0_i32_10 : i32
    scf.if %13 {
      %c0_11 = arith.constant 0 : index
      %c0_12 = arith.constant 0 : index
      %14 = vector.load %arg8[%c0_11, %c0_12] : memref<32x128xf32, #tpu.memory_space<vmem>>, vector<32x128xf32>
      %c0_13 = arith.constant 0 : index
      %c0_14 = arith.constant 0 : index
      %15 = vector.load %arg6[%c0_13, %c0_14] : memref<1x128xf32, #tpu.memory_space<vmem>>, vector<1x128xf32>
      %16 = vector.broadcast %15 : vector<1x128xf32> to vector<32x128xf32>
      %17 = arith.addf %14, %16 : vector<32x128xf32>
      %cst_15 = arith.constant 0.000000e+00 : f32
      %18 = vector.broadcast %cst_15 : f32 to vector<32x128xf32>
      %19 = arith.maximumf %17, %18 : vector<32x128xf32>
      %20 = arith.truncf %19 : vector<32x128xf32> to vector<32x128xbf16>
      %c0_16 = arith.constant 0 : index
      %c0_17 = arith.constant 0 : index
      %c0_18 = arith.constant 0 : index
      %21 = vector.load %arg7[%c0_16, %c0_17, %c0_18] : memref<1x32x128xbf16, #tpu.memory_space<vmem>>, vector<1x32x128xbf16>
      %22 = vector.shape_cast %21 : vector<1x32x128xbf16> to vector<32x128xbf16>
      %23 = vector.shape_cast %20 : vector<32x128xbf16> to vector<1x32x128xbf16>
      tpu.vector_store %arg7[%c0_16, %c0_17, %c0_18], %23 {strides = array<i32>} : memref<1x32x128xbf16, #tpu.memory_space<vmem>>, vector<1x32x128xbf16>,
    } else {
    }
    return
  }
  func.func @transform_0(%arg0: i32, %arg1: i32, %arg2: i32, %arg3: i32) -> (i32, i32, i32) {
    %c0_i32 = arith.constant 0 : i32
    return %arg0, %arg1, %arg3 : i32, i32, i32
  }
  func.func @transform_1(%arg0: i32, %arg1: i32, %arg2: i32, %arg3: i32) -> (i32, i32, i32) {
    %c0_i32 = arith.constant 0 : i32
    return %arg0, %arg3, %arg2 : i32, i32, i32
  }
  func.func @transform_2(%arg0: i32, %arg1: i32, %arg2: i32, %arg3: i32) -> (i32, i32) {
    %c0_i32 = arith.constant 0 : i32
    %c0_i32_0 = arith.constant 0 : i32
    return %c0_i32, %arg2 : i32, i32
  }
  func.func @transform_3(%arg0: i32, %arg1: i32, %arg2: i32, %arg3: i32) -> (i32, i32, i32) {
    %c0_i32 = arith.constant 0 : i32
    return %arg0, %arg1, %arg2 : i32, i32, i32
  }
}

module attributes {stable_mosaic.version = 11 : i64} {
  func.func @_gemm_single_k_kernel(%arg0: i32, %arg1: i32, %arg2: i32, %arg3: memref<1x32x1024xbf16, #tpu.memory_space<vmem>>, %arg4: memref<1x1024x128xbf16, #tpu.memory_space<vmem>>, %arg5: memref<1x128xf32, #tpu.memory_space<vmem>>, %arg6: memref<1x32x128xbf16, #tpu.memory_space<vmem>>) attributes {dimension_semantics = [#tpu.dimension_semantics<parallel>, #tpu.dimension_semantics<parallel>, #tpu.dimension_semantics<parallel>], iteration_bounds = array<i64: 4, 1, 1>, scalar_prefetch = 0 : i64, scratch_operands = 0 : i64, tpu.core_type = #tpu.core_type<tc>, window_params = [{transform_indices = @transform_0, window_bounds = array<i64: 1, 32, 1024>}, {transform_indices = @transform_1, window_bounds = array<i64: 1, 1024, 128>}, {transform_indices = @transform_2, window_bounds = array<i64: 1, 128>}, {transform_indices = @transform_3, window_bounds = array<i64: 1, 32, 128>}]} {
    %c0 = arith.constant 0 : index
    %c0_0 = arith.constant 0 : index
    %c0_1 = arith.constant 0 : index
    %0 = vector.load %arg3[%c0, %c0_0, %c0_1] : memref<1x32x1024xbf16, #tpu.memory_space<vmem>>, vector<1x32x1024xbf16>
    %1 = vector.shape_cast %0 : vector<1x32x1024xbf16> to vector<32x1024xbf16>
    %c0_2 = arith.constant 0 : index
    %c0_3 = arith.constant 0 : index
    %c0_4 = arith.constant 0 : index
    %2 = vector.load %arg4[%c0_2, %c0_3, %c0_4] : memref<1x1024x128xbf16, #tpu.memory_space<vmem>>, vector<1x1024x128xbf16>
    %3 = vector.shape_cast %2 : vector<1x1024x128xbf16> to vector<1024x128xbf16>
    %cst = arith.constant dense<0.000000e+00> : vector<32x128xf32>
    %4 = tpu.matmul %1, %3, %cst {dimension_numbers = #tpu.dot_dimension_numbers<[1], [0], [0], [1], [0, 0, 1, 1], [], []>} : vector<32x1024xbf16>, vector<1024x128xbf16>, vector<32x128xf32> -> vector<32x128xf32>
    %c0_5 = arith.constant 0 : index
    %c0_6 = arith.constant 0 : index
    %5 = vector.load %arg5[%c0_5, %c0_6] : memref<1x128xf32, #tpu.memory_space<vmem>>, vector<1x128xf32>
    %6 = vector.broadcast %5 : vector<1x128xf32> to vector<32x128xf32>
    %7 = arith.addf %4, %6 : vector<32x128xf32>
    %cst_7 = arith.constant 0.000000e+00 : f32
    %8 = vector.broadcast %cst_7 : f32 to vector<32x128xf32>
    %9 = arith.maximumf %7, %8 : vector<32x128xf32>
    %10 = arith.truncf %9 : vector<32x128xf32> to vector<32x128xbf16>
    %c0_8 = arith.constant 0 : index
    %c0_9 = arith.constant 0 : index
    %c0_10 = arith.constant 0 : index
    %11 = vector.load %arg6[%c0_8, %c0_9, %c0_10] : memref<1x32x128xbf16, #tpu.memory_space<vmem>>, vector<1x32x128xbf16>
    %12 = vector.shape_cast %11 : vector<1x32x128xbf16> to vector<32x128xbf16>
    %13 = vector.shape_cast %10 : vector<32x128xbf16> to vector<1x32x128xbf16>
    tpu.vector_store %arg6[%c0_8, %c0_9, %c0_10], %13 {strides = array<i32>} : memref<1x32x128xbf16, #tpu.memory_space<vmem>>, vector<1x32x128xbf16>,
    return
  }
  func.func @transform_0(%arg0: i32, %arg1: i32, %arg2: i32) -> (i32, i32, i32) {
    %c0_i32 = arith.constant 0 : i32
    %c0_i32_0 = arith.constant 0 : i32
    return %arg0, %arg1, %c0_i32 : i32, i32, i32
  }
  func.func @transform_1(%arg0: i32, %arg1: i32, %arg2: i32) -> (i32, i32, i32) {
    %c0_i32 = arith.constant 0 : i32
    %c0_i32_0 = arith.constant 0 : i32
    return %arg0, %c0_i32, %arg2 : i32, i32, i32
  }
  func.func @transform_2(%arg0: i32, %arg1: i32, %arg2: i32) -> (i32, i32) {
    %c0_i32 = arith.constant 0 : i32
    %c0_i32_0 = arith.constant 0 : i32
    return %c0_i32, %arg2 : i32, i32
  }
  func.func @transform_3(%arg0: i32, %arg1: i32, %arg2: i32) -> (i32, i32, i32) {
    %c0_i32 = arith.constant 0 : i32
    return %arg0, %arg1, %arg2 : i32, i32, i32
  }
}

module attributes {stable_mosaic.version = 11 : i64} {
  func.func @_gemm_single_k_kernel(%arg0: i32, %arg1: i32, %arg2: i32, %arg3: memref<1x128x512xbf16, #tpu.memory_space<vmem>>, %arg4: memref<1x512x128xbf16, #tpu.memory_space<vmem>>, %arg5: memref<1x128xf32, #tpu.memory_space<vmem>>, %arg6: memref<1x128x128xbf16, #tpu.memory_space<vmem>>) attributes {dimension_semantics = [#tpu.dimension_semantics<parallel>, #tpu.dimension_semantics<parallel>, #tpu.dimension_semantics<parallel>], iteration_bounds = array<i64: 4, 1, 1>, scalar_prefetch = 0 : i64, scratch_operands = 0 : i64, tpu.core_type = #tpu.core_type<tc>, window_params = [{transform_indices = @transform_0, window_bounds = array<i64: 1, 128, 512>}, {transform_indices = @transform_1, window_bounds = array<i64: 1, 512, 128>}, {transform_indices = @transform_2, window_bounds = array<i64: 1, 128>}, {transform_indices = @transform_3, window_bounds = array<i64: 1, 128, 128>}]} {
    %c0 = arith.constant 0 : index
    %c0_0 = arith.constant 0 : index
    %c0_1 = arith.constant 0 : index
    %0 = vector.load %arg3[%c0, %c0_0, %c0_1] : memref<1x128x512xbf16, #tpu.memory_space<vmem>>, vector<1x128x512xbf16>
    %1 = vector.shape_cast %0 : vector<1x128x512xbf16> to vector<128x512xbf16>
    %c0_2 = arith.constant 0 : index
    %c0_3 = arith.constant 0 : index
    %c0_4 = arith.constant 0 : index
    %2 = vector.load %arg4[%c0_2, %c0_3, %c0_4] : memref<1x512x128xbf16, #tpu.memory_space<vmem>>, vector<1x512x128xbf16>
    %3 = vector.shape_cast %2 : vector<1x512x128xbf16> to vector<512x128xbf16>
    %cst = arith.constant dense<0.000000e+00> : vector<128x128xf32>
    %4 = tpu.matmul %1, %3, %cst {dimension_numbers = #tpu.dot_dimension_numbers<[1], [0], [0], [1], [0, 0, 1, 1], [], []>} : vector<128x512xbf16>, vector<512x128xbf16>, vector<128x128xf32> -> vector<128x128xf32>
    %c0_5 = arith.constant 0 : index
    %c0_6 = arith.constant 0 : index
    %5 = vector.load %arg5[%c0_5, %c0_6] : memref<1x128xf32, #tpu.memory_space<vmem>>, vector<1x128xf32>
    %6 = vector.broadcast %5 : vector<1x128xf32> to vector<128x128xf32>
    %7 = arith.addf %4, %6 : vector<128x128xf32>
    %cst_7 = arith.constant 0.000000e+00 : f32
    %8 = vector.broadcast %cst_7 : f32 to vector<128x128xf32>
    %9 = arith.maximumf %7, %8 : vector<128x128xf32>
    %10 = arith.truncf %9 : vector<128x128xf32> to vector<128x128xbf16>
    %c0_8 = arith.constant 0 : index
    %c0_9 = arith.constant 0 : index
    %c0_10 = arith.constant 0 : index
    %11 = vector.load %arg6[%c0_8, %c0_9, %c0_10] : memref<1x128x128xbf16, #tpu.memory_space<vmem>>, vector<1x128x128xbf16>
    %12 = vector.shape_cast %11 : vector<1x128x128xbf16> to vector<128x128xbf16>
    %13 = vector.shape_cast %10 : vector<128x128xbf16> to vector<1x128x128xbf16>
    tpu.vector_store %arg6[%c0_8, %c0_9, %c0_10], %13 {strides = array<i32>} : memref<1x128x128xbf16, #tpu.memory_space<vmem>>, vector<1x128x128xbf16>,
    return
  }
  func.func @transform_0(%arg0: i32, %arg1: i32, %arg2: i32) -> (i32, i32, i32) {
    %c0_i32 = arith.constant 0 : i32
    %c0_i32_0 = arith.constant 0 : i32
    return %arg0, %arg1, %c0_i32 : i32, i32, i32
  }
  func.func @transform_1(%arg0: i32, %arg1: i32, %arg2: i32) -> (i32, i32, i32) {
    %c0_i32 = arith.constant 0 : i32
    %c0_i32_0 = arith.constant 0 : i32
    return %arg0, %c0_i32, %arg2 : i32, i32, i32
  }
  func.func @transform_2(%arg0: i32, %arg1: i32, %arg2: i32) -> (i32, i32) {
    %c0_i32 = arith.constant 0 : i32
    %c0_i32_0 = arith.constant 0 : i32
    return %c0_i32, %arg2 : i32, i32
  }
  func.func @transform_3(%arg0: i32, %arg1: i32, %arg2: i32) -> (i32, i32, i32) {
    %c0_i32 = arith.constant 0 : i32
    return %arg0, %arg1, %arg2 : i32, i32, i32
  }
}

module attributes {stable_mosaic.version = 11 : i64} {
  func.func @_gemm_acc_kernel(%arg0: i32, %arg1: i32, %arg2: i32, %arg3: i32, %arg4: memref<1x256x640xbf16, #tpu.memory_space<vmem>>, %arg5: memref<1x640x128xbf16, #tpu.memory_space<vmem>>, %arg6: memref<1x128xf32, #tpu.memory_space<vmem>>, %arg7: memref<1x256x128xf32, #tpu.memory_space<vmem>>, %arg8: memref<256x128xf32, #tpu.memory_space<vmem>>) attributes {dimension_semantics = [#tpu.dimension_semantics<parallel>, #tpu.dimension_semantics<parallel>, #tpu.dimension_semantics<parallel>, #tpu.dimension_semantics<arbitrary>], iteration_bounds = array<i64: 1, 2, 1, 5>, scalar_prefetch = 0 : i64, scratch_operands = 1 : i64, tpu.core_type = #tpu.core_type<tc>, window_params = [{transform_indices = @transform_0, window_bounds = array<i64: 1, 256, 640>}, {transform_indices = @transform_1, window_bounds = array<i64: 1, 640, 128>}, {transform_indices = @transform_2, window_bounds = array<i64: 1, 128>}, {transform_indices = @transform_3, window_bounds = array<i64: 1, 256, 128>}]} {
    %c0_i32 = arith.constant 0 : i32
    %0 = arith.cmpi eq, %arg3, %c0_i32 : i32
    %1 = arith.extui %0 : i1 to i32
    %c0_i32_0 = arith.constant 0 : i32
    %2 = arith.cmpi ne, %1, %c0_i32_0 : i32
    scf.if %2 {
      %cst_11 = arith.constant 0.000000e+00 : f32
      %14 = vector.broadcast %cst_11 : f32 to vector<256x128xf32>
      %c0_12 = arith.constant 0 : index
      %c0_13 = arith.constant 0 : index
      %15 = vector.load %arg8[%c0_12, %c0_13] : memref<256x128xf32, #tpu.memory_space<vmem>>, vector<256x128xf32>
      tpu.vector_store %arg8[%c0_12, %c0_13], %14 {strides = array<i32>} : memref<256x128xf32, #tpu.memory_space<vmem>>, vector<256x128xf32>,
    } else {
    }
    %c0 = arith.constant 0 : index
    %c0_1 = arith.constant 0 : index
    %3 = vector.load %arg8[%c0, %c0_1] : memref<256x128xf32, #tpu.memory_space<vmem>>, vector<256x128xf32>
    %c0_2 = arith.constant 0 : index
    %c0_3 = arith.constant 0 : index
    %c0_4 = arith.constant 0 : index
    %4 = vector.load %arg4[%c0_2, %c0_3, %c0_4] : memref<1x256x640xbf16, #tpu.memory_space<vmem>>, vector<1x256x640xbf16>
    %5 = vector.shape_cast %4 : vector<1x256x640xbf16> to vector<256x640xbf16>
    %c0_5 = arith.constant 0 : index
    %c0_6 = arith.constant 0 : index
    %c0_7 = arith.constant 0 : index
    %6 = vector.load %arg5[%c0_5, %c0_6, %c0_7] : memref<1x640x128xbf16, #tpu.memory_space<vmem>>, vector<1x640x128xbf16>
    %7 = vector.shape_cast %6 : vector<1x640x128xbf16> to vector<640x128xbf16>
    %cst = arith.constant dense<0.000000e+00> : vector<256x128xf32>
    %8 = tpu.matmul %5, %7, %cst {dimension_numbers = #tpu.dot_dimension_numbers<[1], [0], [0], [1], [0, 0, 1, 1], [], []>} : vector<256x640xbf16>, vector<640x128xbf16>, vector<256x128xf32> -> vector<256x128xf32>
    %9 = arith.addf %3, %8 : vector<256x128xf32>
    %c0_8 = arith.constant 0 : index
    %c0_9 = arith.constant 0 : index
    %10 = vector.load %arg8[%c0_8, %c0_9] : memref<256x128xf32, #tpu.memory_space<vmem>>, vector<256x128xf32>
    tpu.vector_store %arg8[%c0_8, %c0_9], %9 {strides = array<i32>} : memref<256x128xf32, #tpu.memory_space<vmem>>, vector<256x128xf32>,
    %c4_i32 = arith.constant 4 : i32
    %11 = arith.cmpi eq, %arg3, %c4_i32 : i32
    %12 = arith.extui %11 : i1 to i32
    %c0_i32_10 = arith.constant 0 : i32
    %13 = arith.cmpi ne, %12, %c0_i32_10 : i32
    scf.if %13 {
      %c0_11 = arith.constant 0 : index
      %c0_12 = arith.constant 0 : index
      %14 = vector.load %arg8[%c0_11, %c0_12] : memref<256x128xf32, #tpu.memory_space<vmem>>, vector<256x128xf32>
      %c0_13 = arith.constant 0 : index
      %c0_14 = arith.constant 0 : index
      %15 = vector.load %arg6[%c0_13, %c0_14] : memref<1x128xf32, #tpu.memory_space<vmem>>, vector<1x128xf32>
      %16 = vector.broadcast %15 : vector<1x128xf32> to vector<256x128xf32>
      %17 = arith.addf %14, %16 : vector<256x128xf32>
      %c0_15 = arith.constant 0 : index
      %c0_16 = arith.constant 0 : index
      %c0_17 = arith.constant 0 : index
      %18 = vector.load %arg7[%c0_15, %c0_16, %c0_17] : memref<1x256x128xf32, #tpu.memory_space<vmem>>, vector<1x256x128xf32>
      %19 = vector.shape_cast %18 : vector<1x256x128xf32> to vector<256x128xf32>
      %20 = vector.shape_cast %17 : vector<256x128xf32> to vector<1x256x128xf32>
      tpu.vector_store %arg7[%c0_15, %c0_16, %c0_17], %20 {strides = array<i32>} : memref<1x256x128xf32, #tpu.memory_space<vmem>>, vector<1x256x128xf32>,
    } else {
    }
    return
  }
  func.func @transform_0(%arg0: i32, %arg1: i32, %arg2: i32, %arg3: i32) -> (i32, i32, i32) {
    %c0_i32 = arith.constant 0 : i32
    return %arg0, %arg1, %arg3 : i32, i32, i32
  }
  func.func @transform_1(%arg0: i32, %arg1: i32, %arg2: i32, %arg3: i32) -> (i32, i32, i32) {
    %c0_i32 = arith.constant 0 : i32
    return %arg0, %arg3, %arg2 : i32, i32, i32
  }
  func.func @transform_2(%arg0: i32, %arg1: i32, %arg2: i32, %arg3: i32) -> (i32, i32) {
    %c0_i32 = arith.constant 0 : i32
    %c0_i32_0 = arith.constant 0 : i32
    return %c0_i32, %arg2 : i32, i32
  }
  func.func @transform_3(%arg0: i32, %arg1: i32, %arg2: i32, %arg3: i32) -> (i32, i32, i32) {
    %c0_i32 = arith.constant 0 : i32
    return %arg0, %arg1, %arg2 : i32, i32, i32
  }
}

</mosaic_0001>

<llo_original>
// kernel: generator_forward.6
$region0: #{generator_forward.6}
  #allocation0 [shape = 'u32[]', space=smem, size = 0x4, offset = 0x4, fixed_abs, tag = 'smem constant byte address 0x4 - core index']
  #allocation1 [shape = 'u32[72,128]{1,0:T(1,128)}', space=vmem, size = 0x9000, scoped, tag = 'internal scratch']
  %s0 = inlined_call_operand.vmem [shape: bf16[1,512,256], index: 0, kind: input, shape index: {}]
  %s1 = inlined_call_operand.vmem [shape: bf16[1,256,128], index: 1, kind: input, shape index: {}]
  %s2 = inlined_call_operand.vmem [shape: f32[1,128], index: 2, kind: input, shape index: {}]
  %s3 = inlined_call_operand.vmem [shape: bf16[1,512,128], index: 3, kind: output, shape index: {}]
  %s4 = sld [smem:[#allocation0]]
  $region45: #{generator_forward.6} parent=0
    _
  %s6 = ssub.s32 1, %s4
  %s7 = scalar_select 0, %s6, %s4
  loop: start=0, step=1, limit=4
  $region2: #{generator_forward.6} parent=0 // loop_pre_header
    _
  $region3: #{generator_forward.6} parent=0 // loop_header
    %s9 = sphi 0, %s13
    %p10 = scmp.ge.s32.totalorder %s9, 4
    %s16 = sphi 0, %s35
    %s17 = sphi 0, %s31
    %s18 = sphi 0, %s27
    %s19 = sphi 0, %s16
    %s20 = sphi 0, %s17
    %s21 = sphi 0, %s18
    %s22 = sphi 0, %s19
    %s23 = sphi 0, %s20
    %s24 = sphi 0, %s21
    %s40 = sphi 0, %s42
    %s43 = sphi 0, %s40
    %s44 = sphi 0, %s43
    %s60 = sphi 0, %s44
    %s68 = sphi 0, %s70
    %s71 = sphi 0, %s68
    %s72 = sphi 0, %s71
    %s88 = sphi 0, %s72
    %s94 = sphi 0, %s96
    %s97 = sphi 0, %s94
    %s98 = sphi 0, %s97
    %s114 = sphi 0, %s98
    %s124 = sphi 0, %s126
    %s127 = sphi 0, %s124
    %s128 = sphi 0, %s127
    %s144 = sphi 0, %s128
  $region4: #{generator_forward.6} parent=0 // loop_header_branch
    %12 = sbr.rel (%p10) target = $region8
  $region5: #{generator_forward.6} parent=0 // loop_body
    %s14 = ssub.s32 %s9, 1
    %s15 = ssub.s32 %s9, 2
    %s25 = sadd.s32 1, %s18
    %p26 = scmp.ge.s32.totalorder %s25, 1
    %s27 = scalar_select %p26, 0, %s25
    %s28 = sadd.s32 1, %s17
    %s29 = scalar_select %p26, %s28, %s17
    %p30 = scmp.ge.s32.totalorder %s29, 2
    %s31 = scalar_select %p30, 0, %s29
    %s32 = sadd.s32 1, %s16
    %s33 = scalar_select %p30, %s32, %s16
    %p34 = scmp.ge.s32.totalorder %s33, 1
    %s35 = scalar_select %p34, 0, %s33
    %s36 = ssub.s32 %s16, %s35
    %s37 = ssub.s32 %s17, %s31
    %s38 = sor.u32 %s36, %s37
    %p39 = scmp.eq.s32.totalorder %s38, 0
    %s41 = sadd.s32 %s40, 1
    %s42 = scalar_select %p39, %s40, %s41
    %p45 = pneg %p39
    %p46 = scmp.eq.s32.totalorder %s9, 1
    %p47 = por %p45, %p46
    %p48 = scmp.ne.s32.totalorder %s40, %s43
    %p49 = scmp.eq.s32.totalorder %s9, 0
    %p50 = por %p48, %p49
    %p51 = scmp.ne.s32.totalorder %s40, %s43
    %p52 = scmp.eq.s32.totalorder %s14, 1
    %p53 = por %p51, %p52
    %p54 = scmp.ne.s32.totalorder %s43, %s44
    %p55 = scmp.eq.s32.totalorder %s14, 0
    %p56 = por %p54, %p55
    %p57 = scmp.ne.s32.totalorder %s43, %s44
    %p58 = scmp.eq.s32.totalorder %s15, 1
    %p59 = por %p57, %p58
    %p61 = scmp.ne.s32.totalorder %s44, %s60
    %p62 = scmp.eq.s32.totalorder %s15, 0
    %p63 = por %p61, %p62
    %s64 = ssub.s32 %s16, %s35
    %s65 = ssub.s32 %s18, %s27
    %s66 = sor.u32 %s64, %s65
    %p67 = scmp.eq.s32.totalorder %s66, 0
    %s69 = sadd.s32 %s68, 1
    %s70 = scalar_select %p67, %s68, %s69
    %p73 = pneg %p67
    %p74 = scmp.eq.s32.totalorder %s9, 1
    %p75 = por %p73, %p74
    %p76 = scmp.ne.s32.totalorder %s68, %s71
    %p77 = scmp.eq.s32.totalorder %s9, 0
    %p78 = por %p76, %p77
    %p79 = scmp.ne.s32.totalorder %s68, %s71
    %p80 = scmp.eq.s32.totalorder %s14, 1
    %p81 = por %p79, %p80
    %p82 = scmp.ne.s32.totalorder %s71, %s72
    %p83 = scmp.eq.s32.totalorder %s14, 0
    %p84 = por %p82, %p83
    %p85 = scmp.ne.s32.totalorder %s71, %s72
    %p86 = scmp.eq.s32.totalorder %s15, 1
    %p87 = por %p85, %p86
    %p89 = scmp.ne.s32.totalorder %s72, %s88
    %p90 = scmp.eq.s32.totalorder %s15, 0
    %p91 = por %p89, %p90
    %s92 = ssub.s32 %s18, %s27
    %p93 = scmp.eq.s32.totalorder %s92, 0
    %s95 = sadd.s32 %s94, 1
    %s96 = scalar_select %p93, %s94, %s95
    %p99 = pneg %p93
    %p100 = scmp.eq.s32.totalorder %s9, 1
    %p101 = por %p99, %p100
    %p102 = scmp.ne.s32.totalorder %s94, %s97
    %p103 = scmp.eq.s32.totalorder %s9, 0
    %p104 = por %p102, %p103
    %p105 = scmp.ne.s32.totalorder %s94, %s97
    %p106 = scmp.eq.s32.totalorder %s14, 1
    %p107 = por %p105, %p106
    %p108 = scmp.ne.s32.totalorder %s97, %s98
    %p109 = scmp.eq.s32.totalorder %s14, 0
    %p110 = por %p108, %p109
    %p111 = scmp.ne.s32.totalorder %s97, %s98
    %p112 = scmp.eq.s32.totalorder %s15, 1
    %p113 = por %p111, %p112
    %p115 = scmp.ne.s32.totalorder %s98, %s114
    %p116 = scmp.eq.s32.totalorder %s15, 0
    %p117 = por %p115, %p116
    %s118 = ssub.s32 %s16, %s35
    %s119 = ssub.s32 %s17, %s31
    %s120 = sor.u32 %s118, %s119
    %s121 = ssub.s32 %s18, %s27
    %s122 = sor.u32 %s120, %s121
    %p123 = scmp.eq.s32.totalorder %s122, 0
    %s125 = sadd.s32 %s124, 1
    %s126 = scalar_select %p123, %s124, %s125
    %p129 = pneg %p123
    %p130 = scmp.eq.s32.totalorder %s9, 1
    %p131 = por %p129, %p130
    %p132 = scmp.ne.s32.totalorder %s124, %s127
    %p133 = scmp.eq.s32.totalorder %s9, 0
    %p134 = por %p132, %p133
    %p135 = scmp.ne.s32.totalorder %s124, %s127
    %p136 = scmp.eq.s32.totalorder %s14, 1
    %p137 = por %p135, %p136
    %p138 = scmp.ne.s32.totalorder %s127, %s128
    %p139 = scmp.eq.s32.totalorder %s14, 0
    %p140 = por %p138, %p139
    %p141 = scmp.ne.s32.totalorder %s127, %s128
    %p142 = scmp.eq.s32.totalorder %s15, 1
    %p143 = por %p141, %p142
    %p145 = scmp.ne.s32.totalorder %s128, %s144
    %p146 = scmp.eq.s32.totalorder %s15, 0
    %p147 = por %p145, %p146
    %p148 = scmp.le.s32.totalorder 1, %s9
    %p149 = scmp.lt.s32.totalorder %s9, 3
    %p150 = pnand %p148, %p149
    %p151 = pneg %p150
    // Predicated region
    $region9: #{generator_forward.6} parent=5 // pred_check
      _
    $region10: #{generator_forward.6} parent=5 // pred_check_branch
      %153 = sbr.rel (%p150) target = $region12
    $region11: #{generator_forward.6} parent=5 // pred_region
      %s154 = ssub.s32 %s9, 1
      // Predicated region
      $region13: #{generator_forward.6} parent=11 // pred_check
        %p155 = pneg %p84
      $region14: #{generator_forward.6} parent=11 // pred_check_branch
        %157 = sbr.rel (%p155) target = $region16
      $region15: #{generator_forward.6} parent=11 // pred_region
        %p158 = scmp.lt.s32.totalorder %s19, 0
        %s159 = scalar_select %p158, %s19, 0
        %p160 = scmp.lt.s32.totalorder %s21, 0
        %s161 = scalar_select %p160, %s21, 0
        %s162 = smul.addr %s159, 32
        %s163 = sadd.s32 %s161, %s162
        %s164 = smul.addr %s163, 4
        %s165 = scalar_lea.vmem %s1, %s164
      $region16: #{generator_forward.6} parent=11 // pred_fallthru
        _
      // Predicated region
      $region17: #{generator_forward.6} parent=11 // pred_check
        %p166 = pneg %p110
      $region18: #{generator_forward.6} parent=11 // pred_check_branch
        %168 = sbr.rel (%p166) target = $region20
      $region19: #{generator_forward.6} parent=11 // pred_region
        %p169 = scmp.lt.s32.totalorder %s21, 0
        %s170 = scalar_select %p169, %s21, 0
        %s171 = scalar_lea.vmem %s2, %s170
      $region20: #{generator_forward.6} parent=11 // pred_fallthru
        _
    $region12: #{generator_forward.6} parent=5 // pred_fallthru
      _
    %p172 = scmp.lt.s32.totalorder %s9, 2
    // Predicated region
    $region21: #{generator_forward.6} parent=5 // pred_check
      %p173 = pneg %p172
    $region22: #{generator_forward.6} parent=5 // pred_check_branch
      %175 = sbr.rel (%p173) target = $region24
    $region23: #{generator_forward.6} parent=5 // pred_region
      // Predicated region
      $region25: #{generator_forward.6} parent=23 // pred_check
        %p176 = pneg %p50
      $region26: #{generator_forward.6} parent=23 // pred_check_branch
        %178 = sbr.rel (%p176) target = $region28
      $region27: #{generator_forward.6} parent=23 // pred_region
        %s179 = smul.u32 32, %s17
        %p180 = scmp.lt.s32.totalorder %s16, 0
        %s181 = scalar_select %p180, %s16, 0
        %p182 = scmp.lt.s32.totalorder %s179, 63
        %s183 = scalar_select %p182, %s179, 63
        %s184 = smul.addr %s183, 2
        %s185 = smul.addr %s181, 128
        %s186 = sadd.s32 %s184, %s185
        %s187 = smul.addr %s186, 4
        %s188 = scalar_lea.vmem %s0, %s187
        %s189 = smul.u32 32, %s17
      $region28: #{generator_forward.6} parent=23 // pred_fallthru
        _
    $region24: #{generator_forward.6} parent=5 // pred_fallthru
      _
    %p190 = scmp.le.s32.totalorder 1, %s9
    %p191 = scmp.lt.s32.totalorder %s9, 3
    %p192 = pnand %p190, %p191
    %p193 = pneg %p192
    // Predicated region
    $region29: #{generator_forward.6} parent=5 // pred_check
      _
    $region30: #{generator_forward.6} parent=5 // pred_check_branch
      %195 = sbr.rel (%p192) target = $region32
    $region31: #{generator_forward.6} parent=5 // pred_region
      %s196 = ssub.s32 %s9, 1
      %s197 = smul.u32 32, %s20
      %p198 = scmp.lt.s32.totalorder %s19, 0
      %s199 = scalar_select %p198, %s19, 0
      %p200 = scmp.lt.s32.totalorder %s197, 63
      %s201 = scalar_select %p200, %s197, 63
      %s202 = smul.addr %s201, 2
      %s203 = smul.addr %s199, 128
      %s204 = sadd.s32 %s202, %s203
      %s205 = smul.addr %s204, 4
      %s206 = scalar_lea.vmem %s0, %s205
      %p207 = pneg %p56
      %p208 = pneg %p53
      %p209 = scmp.lt.s32.totalorder %s19, 0
      %s210 = scalar_select %p209, %s19, 0
      %p211 = scmp.lt.s32.totalorder %s21, 0
      %s212 = scalar_select %p211, %s21, 0
      %s213 = smul.addr %s210, 32
      %s214 = sadd.s32 %s212, %s213
      %s215 = smul.addr %s214, 4
      %s216 = scalar_lea.vmem %s1, %s215
      %p217 = pneg %p84
      %p218 = pneg %p81
      %p219 = scmp.lt.s32.totalorder %s21, 0
      %s220 = scalar_select %p219, %s21, 0
      %s221 = scalar_lea.vmem %s2, %s220
      %p222 = pneg %p110
      %p223 = pneg %p107
      %p224 = pneg %p140
      %p225 = pneg %p137
      %s226 = smul.u32 32, %s20
      %p227 = scmp.lt.s32.totalorder %s19, 0
      %s228 = scalar_select %p227, %s19, 0
      %p229 = scmp.lt.s32.totalorder %s226, 63
      %s230 = scalar_select %p229, %s226, 63
      %p231 = scmp.lt.s32.totalorder %s21, 0
      %s232 = scalar_select %p231, %s21, 0
      %s233 = sadd.s32 %s232, %s230
      %s234 = smul.addr %s228, 64
      %s235 = sadd.s32 %s233, %s234
      %s236 = smul.addr %s235, 4
      %s237 = scalar_lea.vmem %s3, %s236
      %s238 = smul.u32 32, %s20
      %p239 = scmp.lt.s32.totalorder %s19, 0
      %s240 = scalar_select %p239, %s19, 0
      %p241 = scmp.lt.s32.totalorder %s238, 63
      %s242 = scalar_select %p241, %s238, 63
      %s243 = smul.addr %s242, 2
      %s244 = smul.addr %s240, 128
      %s245 = sadd.s32 %s243, %s244
      %s246 = smul.addr %s245, 4
      %s247 = scalar_lea.vmem %s0, %s246
      %s248 = smul.u32 32, %s20
      %p249 = scmp.lt.s32.totalorder %s19, 0
      %s250 = scalar_select %p249, %s19, 0
      %p251 = scmp.lt.s32.totalorder %s21, 0
      %s252 = scalar_select %p251, %s21, 0
      %s253 = smul.addr %s250, 32
      %s254 = sadd.s32 %s252, %s253
      %s255 = smul.addr %s254, 4
      %s256 = scalar_lea.vmem %s1, %s255
      %p257 = scmp.lt.s32.totalorder %s21, 0
      %s258 = scalar_select %p257, %s21, 0
      %s259 = scalar_lea.vmem %s2, %s258
      %s260 = smul.u32 32, %s20
      %p261 = scmp.lt.s32.totalorder %s19, 0
      %s262 = scalar_select %p261, %s19, 0
      %p263 = scmp.lt.s32.totalorder %s260, 63
      %s264 = scalar_select %p263, %s260, 63
      %p265 = scmp.lt.s32.totalorder %s21, 0
      %s266 = scalar_select %p265, %s21, 0
      %s267 = sadd.s32 %s266, %s264
      %s268 = smul.addr %s262, 64
      %s269 = sadd.s32 %s267, %s268
      %s270 = smul.addr %s269, 4
      %s271 = scalar_lea.vmem %s3, %s270
      %s272 = smul.u32 32, %s20
      %v273 = vld [vmem:[%s247] sm:$0xff]
      %v274 = vld [vmem:[%s247 + $0x8] sm:$0xff]
      %v275 = vld [vmem:[%s247 + $0x10] sm:$0xff]
      %v276 = vld [vmem:[%s247 + $0x18] sm:$0xff]
      %v277 = vld [vmem:[%s247 + $0x20] sm:$0xff]
      %v278 = vld [vmem:[%s247 + $0x28] sm:$0xff]
      %v279 = vld [vmem:[%s247 + $0x30] sm:$0xff]
      %v280 = vld [vmem:[%s247 + $0x38] sm:$0xff]
      %v281 = vld [vmem:[%s247 + $0x40] sm:$0xff]
      %v282 = vld [vmem:[%s247 + $0x48] sm:$0xff]
      %v283 = vld [vmem:[%s247 + $0x50] sm:$0xff]
      %v284 = vld [vmem:[%s247 + $0x58] sm:$0xff]
      %v285 = vld [vmem:[%s247 + $0x60] sm:$0xff]
      %v286 = vld [vmem:[%s247 + $0x68] sm:$0xff]
      %v287 = vld [vmem:[%s247 + $0x70] sm:$0xff]
      %v288 = vld [vmem:[%s247 + $0x78] sm:$0xff]
      %v289 = vld [vmem:[%s247 + $0x80] sm:$0xff]
      %v290 = vld [vmem:[%s247 + $0x88] sm:$0xff]
      %v291 = vld [vmem:[%s247 + $0x90] sm:$0xff]
      %v292 = vld [vmem:[%s247 + $0x98] sm:$0xff]
      %v293 = vld [vmem:[%s247 + $0xa0] sm:$0xff]
      %v294 = vld [vmem:[%s247 + $0xa8] sm:$0xff]
      %v295 = vld [vmem:[%s247 + $0xb0] sm:$0xff]
      %v296 = vld [vmem:[%s247 + $0xb8] sm:$0xff]
      %v297 = vld [vmem:[%s247 + $0xc0] sm:$0xff]
      %v298 = vld [vmem:[%s247 + $0xc8] sm:$0xff]
      %v299 = vld [vmem:[%s247 + $0xd0] sm:$0xff]
      %v300 = vld [vmem:[%s247 + $0xd8] sm:$0xff]
      %v301 = vld [vmem:[%s247 + $0xe0] sm:$0xff]
      %v302 = vld [vmem:[%s247 + $0xe8] sm:$0xff]
      %v303 = vld [vmem:[%s247 + $0xf0] sm:$0xff]
      %v304 = vld [vmem:[%s247 + $0xf8] sm:$0xff]
      %v305 = vld [vmem:[%s256] sm:$0xf]
      %v306 = vld [vmem:[%s256 + $0x4] sm:$0xf]
      %v307 = vld [vmem:[%s256 + $0x8] sm:$0xf]
      %v308 = vld [vmem:[%s256 + $0xc] sm:$0xf]
      %v309 = vld [vmem:[%s256 + $0x10] sm:$0xf]
      %v310 = vld [vmem:[%s256 + $0x14] sm:$0xf]
      %v311 = vld [vmem:[%s256 + $0x18] sm:$0xf]
      %v312 = vld [vmem:[%s256 + $0x1c] sm:$0xf]
      %v313 = vld [vmem:[%s256 + $0x20] sm:$0xf]
      %v314 = vld [vmem:[%s256 + $0x24] sm:$0xf]
      %v315 = vld [vmem:[%s256 + $0x28] sm:$0xf]
      %v316 = vld [vmem:[%s256 + $0x2c] sm:$0xf]
      %v317 = vld [vmem:[%s256 + $0x30] sm:$0xf]
      %v318 = vld [vmem:[%s256 + $0x34] sm:$0xf]
      %v319 = vld [vmem:[%s256 + $0x38] sm:$0xf]
      %v320 = vld [vmem:[%s256 + $0x3c] sm:$0xf]
      %v321 = vld [vmem:[%s256 + $0x40] sm:$0xf]
      %v322 = vld [vmem:[%s256 + $0x44] sm:$0xf]
      %v323 = vld [vmem:[%s256 + $0x48] sm:$0xf]
      %v324 = vld [vmem:[%s256 + $0x4c] sm:$0xf]
      %v325 = vld [vmem:[%s256 + $0x50] sm:$0xf]
      %v326 = vld [vmem:[%s256 + $0x54] sm:$0xf]
      %v327 = vld [vmem:[%s256 + $0x58] sm:$0xf]
      %v328 = vld [vmem:[%s256 + $0x5c] sm:$0xf]
      %v329 = vld [vmem:[%s256 + $0x60] sm:$0xf]
      %v330 = vld [vmem:[%s256 + $0x64] sm:$0xf]
      %v331 = vld [vmem:[%s256 + $0x68] sm:$0xf]
      %v332 = vld [vmem:[%s256 + $0x6c] sm:$0xf]
      %v333 = vld [vmem:[%s256 + $0x70] sm:$0xf]
      %v334 = vld [vmem:[%s256 + $0x74] sm:$0xf]
      %v335 = vld [vmem:[%s256 + $0x78] sm:$0xf]
      %v336 = vld [vmem:[%s256 + $0x7c] sm:$0xf]
      %v337 = vld [vmem:[%s259] sm:$0x1]
      %v339 = vperm.slane %v337, 0
      %v373 = vunpack.c.l.b16 %v273
      %v374 = vunpack.c.h.b16 %v273
      %v375 = vunpack.c.l.b16 %v274
      %v376 = vunpack.c.h.b16 %v274
      %v377 = vunpack.c.l.b16 %v275
      %v378 = vunpack.c.h.b16 %v275
      %v379 = vunpack.c.l.b16 %v276
      %v380 = vunpack.c.h.b16 %v276
      %v381 = vunpack.c.l.b16 %v277
      %v382 = vunpack.c.h.b16 %v277
      %v383 = vunpack.c.l.b16 %v278
      %v384 = vunpack.c.h.b16 %v278
      %v385 = vunpack.c.l.b16 %v279
      %v386 = vunpack.c.h.b16 %v279
      %v387 = vunpack.c.l.b16 %v280
      %v388 = vunpack.c.h.b16 %v280
      %v389 = vunpack.c.l.b16 %v281
      %v390 = vunpack.c.h.b16 %v281
      %v391 = vunpack.c.l.b16 %v282
      %v392 = vunpack.c.h.b16 %v282
      %v393 = vunpack.c.l.b16 %v283
      %v394 = vunpack.c.h.b16 %v283
      %v395 = vunpack.c.l.b16 %v284
      %v396 = vunpack.c.h.b16 %v284
      %v397 = vunpack.c.l.b16 %v285
      %v398 = vunpack.c.h.b16 %v285
      %v399 = vunpack.c.l.b16 %v286
      %v400 = vunpack.c.h.b16 %v286
      %v401 = vunpack.c.l.b16 %v287
      %v402 = vunpack.c.h.b16 %v287
      %v403 = vunpack.c.l.b16 %v288
      %v404 = vunpack.c.h.b16 %v288
      %v405 = vunpack.c.l.b16 %v289
      %v406 = vunpack.c.h.b16 %v289
      %v407 = vunpack.c.l.b16 %v290
      %v408 = vunpack.c.h.b16 %v290
      %v409 = vunpack.c.l.b16 %v291
      %v410 = vunpack.c.h.b16 %v291
      %v411 = vunpack.c.l.b16 %v292
      %v412 = vunpack.c.h.b16 %v292
      %v413 = vunpack.c.l.b16 %v293
      %v414 = vunpack.c.h.b16 %v293
      %v415 = vunpack.c.l.b16 %v294
      %v416 = vunpack.c.h.b16 %v294
      %v417 = vunpack.c.l.b16 %v295
      %v418 = vunpack.c.h.b16 %v295
      %v419 = vunpack.c.l.b16 %v296
      %v420 = vunpack.c.h.b16 %v296
      %v421 = vunpack.c.l.b16 %v297
      %v422 = vunpack.c.h.b16 %v297
      %v423 = vunpack.c.l.b16 %v298
      %v424 = vunpack.c.h.b16 %v298
      %v425 = vunpack.c.l.b16 %v299
      %v426 = vunpack.c.h.b16 %v299
      %v427 = vunpack.c.l.b16 %v300
      %v428 = vunpack.c.h.b16 %v300
      %v429 = vunpack.c.l.b16 %v301
      %v430 = vunpack.c.h.b16 %v301
      %v431 = vunpack.c.l.b16 %v302
      %v432 = vunpack.c.h.b16 %v302
      %v433 = vunpack.c.l.b16 %v303
      %v434 = vunpack.c.h.b16 %v303
      %v435 = vunpack.c.l.b16 %v304
      %v436 = vunpack.c.h.b16 %v304
      %v437 = vpack.c.b16 %v375, %v373
      %v438 = vpack.c.b16 %v376, %v374
      %v439 = vpack.c.b16 %v379, %v377
      %v440 = vpack.c.b16 %v380, %v378
      %v441 = vpack.c.b16 %v383, %v381
      %v442 = vpack.c.b16 %v384, %v382
      %v443 = vpack.c.b16 %v387, %v385
      %v444 = vpack.c.b16 %v388, %v386
      %v445 = vpack.c.b16 %v391, %v389
      %v446 = vpack.c.b16 %v392, %v390
      %v447 = vpack.c.b16 %v395, %v393
      %v448 = vpack.c.b16 %v396, %v394
      %v449 = vpack.c.b16 %v399, %v397
      %v450 = vpack.c.b16 %v400, %v398
      %v451 = vpack.c.b16 %v403, %v401
      %v452 = vpack.c.b16 %v404, %v402
      %v453 = vpack.c.b16 %v407, %v405
      %v454 = vpack.c.b16 %v408, %v406
      %v455 = vpack.c.b16 %v411, %v409
      %v456 = vpack.c.b16 %v412, %v410
      %v457 = vpack.c.b16 %v415, %v413
      %v458 = vpack.c.b16 %v416, %v414
      %v459 = vpack.c.b16 %v419, %v417
      %v460 = vpack.c.b16 %v420, %v418
      %v461 = vpack.c.b16 %v423, %v421
      %v462 = vpack.c.b16 %v424, %v422
      %v463 = vpack.c.b16 %v427, %v425
      %v464 = vpack.c.b16 %v428, %v426
      %v465 = vpack.c.b16 %v431, %v429
      %v466 = vpack.c.b16 %v432, %v430
      %v467 = vpack.c.b16 %v435, %v433
      %v468 = vpack.c.b16 %v436, %v434
      %v533 = vunpack.c.l.b16 %v305
      %v534 = vunpack.c.l.b16 %v306
      %v535 = vunpack.c.l.b16 %v307
      %v536 = vunpack.c.l.b16 %v308
      %v537 = vunpack.c.l.b16 %v309
      %v538 = vunpack.c.l.b16 %v310
      %v539 = vunpack.c.l.b16 %v311
      %v540 = vunpack.c.l.b16 %v312
      %v541 = vunpack.c.l.b16 %v313
      %v542 = vunpack.c.l.b16 %v314
      %v543 = vunpack.c.l.b16 %v315
      %v544 = vunpack.c.l.b16 %v316
      %v545 = vunpack.c.l.b16 %v317
      %v546 = vunpack.c.l.b16 %v318
      %v547 = vunpack.c.l.b16 %v319
      %v548 = vunpack.c.l.b16 %v320
      %v549 = vunpack.c.l.b16 %v321
      %v550 = vunpack.c.l.b16 %v322
      %v551 = vunpack.c.l.b16 %v323
      %v552 = vunpack.c.l.b16 %v324
      %v553 = vunpack.c.l.b16 %v325
      %v554 = vunpack.c.l.b16 %v326
      %v555 = vunpack.c.l.b16 %v327
      %v556 = vunpack.c.l.b16 %v328
      %v557 = vunpack.c.l.b16 %v329
      %v558 = vunpack.c.l.b16 %v330
      %v559 = vunpack.c.l.b16 %v331
      %v560 = vunpack.c.l.b16 %v332
      %v561 = vunpack.c.l.b16 %v333
      %v562 = vunpack.c.l.b16 %v334
      %v563 = vunpack.c.l.b16 %v335
      %v564 = vunpack.c.l.b16 %v336
      %v565 = vpack.c.b16 %v534, %v533
      %v566 = vpack.c.b16 %v536, %v535
      %v567 = vpack.c.b16 %v538, %v537
      %v568 = vpack.c.b16 %v540, %v539
      %v569 = vpack.c.b16 %v542, %v541
      %v570 = vpack.c.b16 %v544, %v543
      %v571 = vpack.c.b16 %v546, %v545
      %v572 = vpack.c.b16 %v548, %v547
      %v573 = vpack.c.b16 %v550, %v549
      %v574 = vpack.c.b16 %v552, %v551
      %v575 = vpack.c.b16 %v554, %v553
      %v576 = vpack.c.b16 %v556, %v555
      %v577 = vpack.c.b16 %v558, %v557
      %v578 = vpack.c.b16 %v560, %v559
      %v579 = vpack.c.b16 %v562, %v561
      %v580 = vpack.c.b16 %v564, %v563
      %597 = vmatpush.bf16.msra.mxu0 %v572
      %598 = vmatpush.bf16.msra.mxu0 %v571
      %599 = vmatpush.bf16.msra.mxu0 %v570
      %600 = vmatpush.bf16.msra.mxu0 %v569
      %601 = vmatpush.bf16.msra.mxu0 %v568
      %602 = vmatpush.bf16.msra.mxu0 %v567
      %603 = vmatpush.bf16.msra.mxu0 %v566
      %604 = vmatpush.bf16.msra.mxu0 %v565
      %605 = vmatmul.bf16.gmra.mxu0 %v437
      %v606 = vpop.f32.mrf.mxu0
      %v607 = vadd.f32 %v339, %v606
      %v608 = vpop.f32.mrf.mxu0
      %v609 = vadd.f32 %v339, %v608
      %610 = vmatmul.bf16.gmra.mxu0 %v439
      %v611 = vpop.f32.mrf.mxu0
      %v612 = vadd.f32 %v339, %v611
      %v613 = vpop.f32.mrf.mxu0
      %v614 = vadd.f32 %v339, %v613
      %615 = vmatmul.bf16.gmra.mxu0 %v441
      %v616 = vpop.f32.mrf.mxu0
      %v617 = vadd.f32 %v339, %v616
      %v618 = vpop.f32.mrf.mxu0
      %v619 = vadd.f32 %v339, %v618
      %620 = vmatmul.bf16.gmra.mxu0 %v443
      %v621 = vpop.f32.mrf.mxu0
      %v622 = vadd.f32 %v339, %v621
      %v623 = vpop.f32.mrf.mxu0
      %v624 = vadd.f32 %v339, %v623
      %625 = vmatmul.bf16.gmra.mxu0 %v445
      %v626 = vpop.f32.mrf.mxu0
      %v627 = vadd.f32 %v339, %v626
      %v628 = vpop.f32.mrf.mxu0
      %v629 = vadd.f32 %v339, %v628
      %630 = vmatmul.bf16.gmra.mxu0 %v447
      %v631 = vpop.f32.mrf.mxu0
      %v632 = vadd.f32 %v339, %v631
      %v633 = vpop.f32.mrf.mxu0
      %v634 = vadd.f32 %v339, %v633
      %635 = vmatmul.bf16.gmra.mxu0 %v449
      %v636 = vpop.f32.mrf.mxu0
      %v637 = vadd.f32 %v339, %v636
      %v638 = vpop.f32.mrf.mxu0
      %v639 = vadd.f32 %v339, %v638
      %640 = vmatmul.bf16.gmra.mxu0 %v451
      %v641 = vpop.f32.mrf.mxu0
      %v642 = vadd.f32 %v339, %v641
      %v643 = vpop.f32.mrf.mxu0
      %v644 = vadd.f32 %v339, %v643
      %645 = vmatmul.bf16.gmra.mxu0 %v453
      %v646 = vpop.f32.mrf.mxu0
      %v647 = vadd.f32 %v339, %v646
      %v648 = vpop.f32.mrf.mxu0
      %v649 = vadd.f32 %v339, %v648
      %650 = vmatmul.bf16.gmra.mxu0 %v455
      %v651 = vpop.f32.mrf.mxu0
      %v652 = vadd.f32 %v339, %v651
      %v653 = vpop.f32.mrf.mxu0
      %v654 = vadd.f32 %v339, %v653
      %655 = vmatmul.bf16.gmra.mxu0 %v457
      %v656 = vpop.f32.mrf.mxu0
      %v657 = vadd.f32 %v339, %v656
      %v658 = vpop.f32.mrf.mxu0
      %v659 = vadd.f32 %v339, %v658
      %660 = vmatmul.bf16.gmra.mxu0 %v459
      %v661 = vpop.f32.mrf.mxu0
      %v662 = vadd.f32 %v339, %v661
      %v663 = vpop.f32.mrf.mxu0
      %v664 = vadd.f32 %v339, %v663
      %665 = vmatmul.bf16.gmra.mxu0 %v461
      %v666 = vpop.f32.mrf.mxu0
      %v667 = vadd.f32 %v339, %v666
      %v668 = vpop.f32.mrf.mxu0
      %v669 = vadd.f32 %v339, %v668
      %670 = vmatmul.bf16.gmra.mxu0 %v463
      %v671 = vpop.f32.mrf.mxu0
      %v672 = vadd.f32 %v339, %v671
      %v673 = vpop.f32.mrf.mxu0
      %v674 = vadd.f32 %v339, %v673
      %675 = vmatmul.bf16.gmra.mxu0 %v465
      %v676 = vpop.f32.mrf.mxu0
      %v677 = vadd.f32 %v339, %v676
      %v678 = vpop.f32.mrf.mxu0
      %v679 = vadd.f32 %v339, %v678
      %680 = vmatmul.bf16.gmra.mxu0 %v467
      %v681 = vpop.f32.mrf.mxu0
      %v682 = vadd.f32 %v339, %v681
      %v683 = vpop.f32.mrf.mxu0
      %v684 = vadd.f32 %v339, %v683
      %685 = vdwg.mxu0
      %686 = vmatpush.bf16.msra.mxu0 %v580
      %687 = vmatpush.bf16.msra.mxu0 %v579
      %688 = vmatpush.bf16.msra.mxu0 %v578
      %689 = vmatpush.bf16.msra.mxu0 %v577
      %690 = vmatpush.bf16.msra.mxu0 %v576
      %691 = vmatpush.bf16.msra.mxu0 %v575
      %692 = vmatpush.bf16.msra.mxu0 %v574
      %693 = vmatpush.bf16.msra.mxu0 %v573
      %694 = vmatmul.bf16.gmra.mxu0 %v438
      %v695 = vpop.f32.mrf.mxu0
      %v696 = vadd.f32 %v607, %v695
      %v697 = vpop.f32.mrf.mxu0
      %v698 = vadd.f32 %v609, %v697
      %699 = vmatmul.bf16.gmra.mxu0 %v440
      %v700 = vpop.f32.mrf.mxu0
      %v701 = vadd.f32 %v612, %v700
      %v702 = vpop.f32.mrf.mxu0
      %v703 = vadd.f32 %v614, %v702
      %704 = vmatmul.bf16.gmra.mxu0 %v442
      %v705 = vpop.f32.mrf.mxu0
      %v706 = vadd.f32 %v617, %v705
      %v707 = vpop.f32.mrf.mxu0
      %v708 = vadd.f32 %v619, %v707
      %709 = vmatmul.bf16.gmra.mxu0 %v444
      %v710 = vpop.f32.mrf.mxu0
      %v711 = vadd.f32 %v622, %v710
      %v712 = vpop.f32.mrf.mxu0
      %v713 = vadd.f32 %v624, %v712
      %714 = vmatmul.bf16.gmra.mxu0 %v446
      %v715 = vpop.f32.mrf.mxu0
      %v716 = vadd.f32 %v627, %v715
      %v717 = vpop.f32.mrf.mxu0
      %v718 = vadd.f32 %v629, %v717
      %719 = vmatmul.bf16.gmra.mxu0 %v448
      %v720 = vpop.f32.mrf.mxu0
      %v721 = vadd.f32 %v632, %v720
      %v722 = vpop.f32.mrf.mxu0
      %v723 = vadd.f32 %v634, %v722
      %724 = vmatmul.bf16.gmra.mxu0 %v450
      %v725 = vpop.f32.mrf.mxu0
      %v726 = vadd.f32 %v637, %v725
      %v727 = vpop.f32.mrf.mxu0
      %v728 = vadd.f32 %v639, %v727
      %729 = vmatmul.bf16.gmra.mxu0 %v452
      %v730 = vpop.f32.mrf.mxu0
      %v731 = vadd.f32 %v642, %v730
      %v732 = vpop.f32.mrf.mxu0
      %v733 = vadd.f32 %v644, %v732
      %734 = vmatmul.bf16.gmra.mxu0 %v454
      %v735 = vpop.f32.mrf.mxu0
      %v736 = vadd.f32 %v647, %v735
      %v737 = vpop.f32.mrf.mxu0
      %v738 = vadd.f32 %v649, %v737
      %739 = vmatmul.bf16.gmra.mxu0 %v456
      %v740 = vpop.f32.mrf.mxu0
      %v741 = vadd.f32 %v652, %v740
      %v742 = vpop.f32.mrf.mxu0
      %v743 = vadd.f32 %v654, %v742
      %744 = vmatmul.bf16.gmra.mxu0 %v458
      %v745 = vpop.f32.mrf.mxu0
      %v746 = vadd.f32 %v657, %v745
      %v747 = vpop.f32.mrf.mxu0
      %v748 = vadd.f32 %v659, %v747
      %749 = vmatmul.bf16.gmra.mxu0 %v460
      %v750 = vpop.f32.mrf.mxu0
      %v751 = vadd.f32 %v662, %v750
      %v752 = vpop.f32.mrf.mxu0
      %v753 = vadd.f32 %v664, %v752
      %754 = vmatmul.bf16.gmra.mxu0 %v462
      %v755 = vpop.f32.mrf.mxu0
      %v756 = vadd.f32 %v667, %v755
      %v757 = vpop.f32.mrf.mxu0
      %v758 = vadd.f32 %v669, %v757
      %759 = vmatmul.bf16.gmra.mxu0 %v464
      %v760 = vpop.f32.mrf.mxu0
      %v761 = vadd.f32 %v672, %v760
      %v762 = vpop.f32.mrf.mxu0
      %v763 = vadd.f32 %v674, %v762
      %764 = vmatmul.bf16.gmra.mxu0 %v466
      %v765 = vpop.f32.mrf.mxu0
      %v766 = vadd.f32 %v677, %v765
      %v767 = vpop.f32.mrf.mxu0
      %v768 = vadd.f32 %v679, %v767
      %769 = vmatmul.bf16.gmra.mxu0 %v468
      %v770 = vpop.f32.mrf.mxu0
      %v771 = vadd.f32 %v682, %v770
      %v772 = vpop.f32.mrf.mxu0
      %v773 = vadd.f32 %v684, %v772
      %774 = vdwg.mxu0
      %v775 = vmax.f32 %v696, 0.0
      %v776 = vmax.f32 %v698, 0.0
      %v777 = vmax.f32 %v701, 0.0
      %v778 = vmax.f32 %v703, 0.0
      %v779 = vmax.f32 %v706, 0.0
      %v780 = vmax.f32 %v708, 0.0
      %v781 = vmax.f32 %v711, 0.0
      %v782 = vmax.f32 %v713, 0.0
      %v783 = vmax.f32 %v716, 0.0
      %v784 = vmax.f32 %v718, 0.0
      %v785 = vmax.f32 %v721, 0.0
      %v786 = vmax.f32 %v723, 0.0
      %v787 = vmax.f32 %v726, 0.0
      %v788 = vmax.f32 %v728, 0.0
      %v789 = vmax.f32 %v731, 0.0
      %v790 = vmax.f32 %v733, 0.0
      %v791 = vmax.f32 %v736, 0.0
      %v792 = vmax.f32 %v738, 0.0
      %v793 = vmax.f32 %v741, 0.0
      %v794 = vmax.f32 %v743, 0.0
      %v795 = vmax.f32 %v746, 0.0
      %v796 = vmax.f32 %v748, 0.0
      %v797 = vmax.f32 %v751, 0.0
      %v798 = vmax.f32 %v753, 0.0
      %v799 = vmax.f32 %v756, 0.0
      %v800 = vmax.f32 %v758, 0.0
      %v801 = vmax.f32 %v761, 0.0
      %v802 = vmax.f32 %v763, 0.0
      %v803 = vmax.f32 %v766, 0.0
      %v804 = vmax.f32 %v768, 0.0
      %v805 = vmax.f32 %v771, 0.0
      %v806 = vmax.f32 %v773, 0.0
      %v807 = vpack.c.bf16 %v775, %v775
      %v808 = vpack.c.bf16 %v776, %v776
      %v809 = vpack.c.bf16 %v777, %v777
      %v810 = vpack.c.bf16 %v778, %v778
      %v811 = vpack.c.bf16 %v779, %v779
      %v812 = vpack.c.bf16 %v780, %v780
      %v813 = vpack.c.bf16 %v781, %v781
      %v814 = vpack.c.bf16 %v782, %v782
      %v815 = vpack.c.bf16 %v783, %v783
      %v816 = vpack.c.bf16 %v784, %v784
      %v817 = vpack.c.bf16 %v785, %v785
      %v818 = vpack.c.bf16 %v786, %v786
      %v819 = vpack.c.bf16 %v787, %v787
      %v820 = vpack.c.bf16 %v788, %v788
      %v821 = vpack.c.bf16 %v789, %v789
      %v822 = vpack.c.bf16 %v790, %v790
      %v823 = vpack.c.bf16 %v791, %v791
      %v824 = vpack.c.bf16 %v792, %v792
      %v825 = vpack.c.bf16 %v793, %v793
      %v826 = vpack.c.bf16 %v794, %v794
      %v827 = vpack.c.bf16 %v795, %v795
      %v828 = vpack.c.bf16 %v796, %v796
      %v829 = vpack.c.bf16 %v797, %v797
      %v830 = vpack.c.bf16 %v798, %v798
      %v831 = vpack.c.bf16 %v799, %v799
      %v832 = vpack.c.bf16 %v800, %v800
      %v833 = vpack.c.bf16 %v801, %v801
      %v834 = vpack.c.bf16 %v802, %v802
      %v835 = vpack.c.bf16 %v803, %v803
      %v836 = vpack.c.bf16 %v804, %v804
      %v837 = vpack.c.bf16 %v805, %v805
      %v838 = vpack.c.bf16 %v806, %v806
      %839 = vst [vmem:[%s271] sm:$0xf] %v807
      %840 = vst [vmem:[%s271 + $0x4] sm:$0xf] %v808
      %841 = vst [vmem:[%s271 + $0x8] sm:$0xf] %v809
      %842 = vst [vmem:[%s271 + $0xc] sm:$0xf] %v810
      %843 = vst [vmem:[%s271 + $0x10] sm:$0xf] %v811
      %844 = vst [vmem:[%s271 + $0x14] sm:$0xf] %v812
      %845 = vst [vmem:[%s271 + $0x18] sm:$0xf] %v813
      %846 = vst [vmem:[%s271 + $0x1c] sm:$0xf] %v814
      %847 = vst [vmem:[%s271 + $0x20] sm:$0xf] %v815
      %848 = vst [vmem:[%s271 + $0x24] sm:$0xf] %v816
      %849 = vst [vmem:[%s271 + $0x28] sm:$0xf] %v817
      %850 = vst [vmem:[%s271 + $0x2c] sm:$0xf] %v818
      %851 = vst [vmem:[%s271 + $0x30] sm:$0xf] %v819
      %852 = vst [vmem:[%s271 + $0x34] sm:$0xf] %v820
      %853 = vst [vmem:[%s271 + $0x38] sm:$0xf] %v821
      %854 = vst [vmem:[%s271 + $0x3c] sm:$0xf] %v822
      %855 = vst [vmem:[%s271 + $0x40] sm:$0xf] %v823
      %856 = vst [vmem:[%s271 + $0x44] sm:$0xf] %v824
      %857 = vst [vmem:[%s271 + $0x48] sm:$0xf] %v825
      %858 = vst [vmem:[%s271 + $0x4c] sm:$0xf] %v826
      %859 = vst [vmem:[%s271 + $0x50] sm:$0xf] %v827
      %860 = vst [vmem:[%s271 + $0x54] sm:$0xf] %v828
      %861 = vst [vmem:[%s271 + $0x58] sm:$0xf] %v829
      %862 = vst [vmem:[%s271 + $0x5c] sm:$0xf] %v830
      %863 = vst [vmem:[%s271 + $0x60] sm:$0xf] %v831
      %864 = vst [vmem:[%s271 + $0x64] sm:$0xf] %v832
      %865 = vst [vmem:[%s271 + $0x68] sm:$0xf] %v833
      %866 = vst [vmem:[%s271 + $0x6c] sm:$0xf] %v834
      %867 = vst [vmem:[%s271 + $0x70] sm:$0xf] %v835
      %868 = vst [vmem:[%s271 + $0x74] sm:$0xf] %v836
      %869 = vst [vmem:[%s271 + $0x78] sm:$0xf] %v837
      %870 = vst [vmem:[%s271 + $0x7c] sm:$0xf] %v838
      %s871 = smul.u32 32, %s20
      %p872 = scmp.lt.s32.totalorder %s19, 0
      %s873 = scalar_select %p872, %s19, 0
      %p874 = scmp.lt.s32.totalorder %s871, 63
      %s875 = scalar_select %p874, %s871, 63
      %p876 = scmp.lt.s32.totalorder %s21, 0
      %s877 = scalar_select %p876, %s21, 0
      %s878 = sadd.s32 %s877, %s875
      %s879 = smul.addr %s873, 64
      %s880 = sadd.s32 %s878, %s879
      %s881 = smul.addr %s880, 4
      %s882 = scalar_lea.vmem %s3, %s881
      // Predicated region
      $region33: #{generator_forward.6} parent=31 // pred_check
        %p883 = pneg %p137
      $region34: #{generator_forward.6} parent=31 // pred_check_branch
        %885 = sbr.rel (%p883) target = $region36
      $region35: #{generator_forward.6} parent=31 // pred_region
        %s886 = smul.u32 32, %s20
      $region36: #{generator_forward.6} parent=31 // pred_fallthru
        _
    $region32: #{generator_forward.6} parent=5 // pred_fallthru
      _
    %p887 = scmp.le.s32.totalorder 2, %s9
    // Predicated region
    $region37: #{generator_forward.6} parent=5 // pred_check
      %p888 = pneg %p887
    $region38: #{generator_forward.6} parent=5 // pred_check_branch
      %890 = sbr.rel (%p888) target = $region40
    $region39: #{generator_forward.6} parent=5 // pred_region
      %s891 = ssub.s32 %s9, 2
      // Predicated region
      $region41: #{generator_forward.6} parent=39 // pred_check
        %p892 = pneg %p143
      $region42: #{generator_forward.6} parent=39 // pred_check_branch
        %894 = sbr.rel (%p892) target = $region44
      $region43: #{generator_forward.6} parent=39 // pred_region
        %s895 = smul.u32 32, %s23
        %p896 = scmp.lt.s32.totalorder %s22, 0
        %s897 = scalar_select %p896, %s22, 0
        %p898 = scmp.lt.s32.totalorder %s895, 63
        %s899 = scalar_select %p898, %s895, 63
        %p900 = scmp.lt.s32.totalorder %s24, 0
        %s901 = scalar_select %p900, %s24, 0
        %s902 = sadd.s32 %s901, %s899
        %s903 = smul.addr %s897, 64
        %s904 = sadd.s32 %s902, %s903
        %s905 = smul.addr %s904, 4
        %s906 = scalar_lea.vmem %s3, %s905
      $region44: #{generator_forward.6} parent=39 // pred_fallthru
        _
    $region40: #{generator_forward.6} parent=5 // pred_fallthru
      _
  $region6: #{generator_forward.6} parent=0 // loop_footer
    %s13 = sadd.s32 1, %s9
  $region7: #{generator_forward.6} parent=0 // loop_footer_branch
    %8 = sbr.rel target = $region3
  $region8: #{generator_forward.6} parent=0 // loop_exit
    _

// kernel: generator_forward.7
$region0: #{generator_forward.7}
  #allocation0 [shape = 'u32[]', space=smem, size = 0x4, offset = 0x4, fixed_abs, tag = 'smem constant byte address 0x4 - core index']
  #allocation1 [shape = 'u32[72,128]{1,0:T(1,128)}', space=vmem, size = 0x9000, scoped, tag = 'internal scratch']
  %s0 = inlined_call_operand.vmem [shape: bf16[1,128,640], index: 0, kind: input, shape index: {}]
  %s1 = inlined_call_operand.vmem [shape: bf16[1,640,128], index: 1, kind: input, shape index: {}]
  %s2 = inlined_call_operand.vmem [shape: f32[1,128], index: 2, kind: input, shape index: {}]
  %s3 = inlined_call_operand.vmem [shape: bf16[1,128,128], index: 3, kind: output, shape index: {}]
  %s4 = sld [smem:[#allocation0]]
  $region22: #{generator_forward.7} parent=0
    _
  %s6 = ssub.s32 1, %s4
  %s7 = scalar_select 0, %s6, %s4
  // Predicated region
  $region2: #{generator_forward.7} parent=0 // pred_check
    _
  $region3: #{generator_forward.7} parent=0 // pred_check_branch
    %9 = sbr.rel (0) target = $region5
  $region4: #{generator_forward.7} parent=0 // pred_region
    _
  $region5: #{generator_forward.7} parent=0 // pred_fallthru
    _
  // Predicated region
  $region6: #{generator_forward.7} parent=0 // pred_check
    _
  $region7: #{generator_forward.7} parent=0 // pred_check_branch
    %11 = sbr.rel (0) target = $region9
  $region8: #{generator_forward.7} parent=0 // pred_region
    _
  $region9: #{generator_forward.7} parent=0 // pred_fallthru
    _
  // Predicated region
  $region10: #{generator_forward.7} parent=0 // pred_check
    _
  $region11: #{generator_forward.7} parent=0 // pred_check_branch
    %13 = sbr.rel (0) target = $region13
  $region12: #{generator_forward.7} parent=0 // pred_region
    _
  $region13: #{generator_forward.7} parent=0 // pred_fallthru
    _
  %v14 = vld [vmem:[%s0] sm:$0xff]
  %v15 = vld [vmem:[%s0 + $0x8] sm:$0xff]
  %v16 = vld [vmem:[%s0 + $0x10] sm:$0xf]
  %v17 = vld [vmem:[%s0 + $0x14] sm:$0xff]
  %v18 = vld [vmem:[%s0 + $0x1c] sm:$0xff]
  %v19 = vld [vmem:[%s0 + $0x24] sm:$0xf]
  %v20 = vld [vmem:[%s0 + $0x28] sm:$0xff]
  %v21 = vld [vmem:[%s0 + $0x30] sm:$0xff]
  %v22 = vld [vmem:[%s0 + $0x38] sm:$0xf]
  %v23 = vld [vmem:[%s0 + $0x3c] sm:$0xff]
  %v24 = vld [vmem:[%s0 + $0x44] sm:$0xff]
  %v25 = vld [vmem:[%s0 + $0x4c] sm:$0xf]
  %v26 = vld [vmem:[%s0 + $0x50] sm:$0xff]
  %v27 = vld [vmem:[%s0 + $0x58] sm:$0xff]
  %v28 = vld [vmem:[%s0 + $0x60] sm:$0xf]
  %v29 = vld [vmem:[%s0 + $0x64] sm:$0xff]
  %v30 = vld [vmem:[%s0 + $0x6c] sm:$0xff]
  %v31 = vld [vmem:[%s0 + $0x74] sm:$0xf]
  %v32 = vld [vmem:[%s0 + $0x78] sm:$0xff]
  %v33 = vld [vmem:[%s0 + $0x80] sm:$0xff]
  %v34 = vld [vmem:[%s0 + $0x88] sm:$0xf]
  %v35 = vld [vmem:[%s0 + $0x8c] sm:$0xff]
  %v36 = vld [vmem:[%s0 + $0x94] sm:$0xff]
  %v37 = vld [vmem:[%s0 + $0x9c] sm:$0xf]
  %v38 = vld [vmem:[%s0 + $0xa0] sm:$0xff]
  %v39 = vld [vmem:[%s0 + $0xa8] sm:$0xff]
  %v40 = vld [vmem:[%s0 + $0xb0] sm:$0xf]
  %v41 = vld [vmem:[%s0 + $0xb4] sm:$0xff]
  %v42 = vld [vmem:[%s0 + $0xbc] sm:$0xff]
  %v43 = vld [vmem:[%s0 + $0xc4] sm:$0xf]
  %v44 = vld [vmem:[%s0 + $0xc8] sm:$0xff]
  %v45 = vld [vmem:[%s0 + $0xd0] sm:$0xff]
  %v46 = vld [vmem:[%s0 + $0xd8] sm:$0xf]
  %v47 = vld [vmem:[%s0 + $0xdc] sm:$0xff]
  %v48 = vld [vmem:[%s0 + $0xe4] sm:$0xff]
  %v49 = vld [vmem:[%s0 + $0xec] sm:$0xf]
  %v50 = vld [vmem:[%s0 + $0xf0] sm:$0xff]
  %v51 = vld [vmem:[%s0 + $0xf8] sm:$0xff]
  %v52 = vld [vmem:[%s0 + $0x100] sm:$0xf]
  %v53 = vld [vmem:[%s0 + $0x104] sm:$0xff]
  %v54 = vld [vmem:[%s0 + $0x10c] sm:$0xff]
  %v55 = vld [vmem:[%s0 + $0x114] sm:$0xf]
  %v56 = vld [vmem:[%s0 + $0x118] sm:$0xff]
  %v57 = vld [vmem:[%s0 + $0x120] sm:$0xff]
  %v58 = vld [vmem:[%s0 + $0x128] sm:$0xf]
  %v59 = vld [vmem:[%s0 + $0x12c] sm:$0xff]
  %v60 = vld [vmem:[%s0 + $0x134] sm:$0xff]
  %v61 = vld [vmem:[%s0 + $0x13c] sm:$0xf]
  %v62 = vld [vmem:[%s1] sm:$0xf]
  %v63 = vld [vmem:[%s1 + $0x4] sm:$0xf]
  %v64 = vld [vmem:[%s1 + $0x8] sm:$0xf]
  %v65 = vld [vmem:[%s1 + $0xc] sm:$0xf]
  %v66 = vld [vmem:[%s1 + $0x10] sm:$0xf]
  %v67 = vld [vmem:[%s1 + $0x14] sm:$0xf]
  %v68 = vld [vmem:[%s1 + $0x18] sm:$0xf]
  %v69 = vld [vmem:[%s1 + $0x1c] sm:$0xf]
  %v70 = vld [vmem:[%s1 + $0x20] sm:$0xf]
  %v71 = vld [vmem:[%s1 + $0x24] sm:$0xf]
  %v72 = vld [vmem:[%s1 + $0x28] sm:$0xf]
  %v73 = vld [vmem:[%s1 + $0x2c] sm:$0xf]
  %v74 = vld [vmem:[%s1 + $0x30] sm:$0xf]
  %v75 = vld [vmem:[%s1 + $0x34] sm:$0xf]
  %v76 = vld [vmem:[%s1 + $0x38] sm:$0xf]
  %v77 = vld [vmem:[%s1 + $0x3c] sm:$0xf]
  %v78 = vld [vmem:[%s1 + $0x40] sm:$0xf]
  %v79 = vld [vmem:[%s1 + $0x44] sm:$0xf]
  %v80 = vld [vmem:[%s1 + $0x48] sm:$0xf]
  %v81 = vld [vmem:[%s1 + $0x4c] sm:$0xf]
  %v82 = vld [vmem:[%s1 + $0x50] sm:$0xf]
  %v83 = vld [vmem:[%s1 + $0x54] sm:$0xf]
  %v84 = vld [vmem:[%s1 + $0x58] sm:$0xf]
  %v85 = vld [vmem:[%s1 + $0x5c] sm:$0xf]
  %v86 = vld [vmem:[%s1 + $0x60] sm:$0xf]
  %v87 = vld [vmem:[%s1 + $0x64] sm:$0xf]
  %v88 = vld [vmem:[%s1 + $0x68] sm:$0xf]
  %v89 = vld [vmem:[%s1 + $0x6c] sm:$0xf]
  %v90 = vld [vmem:[%s1 + $0x70] sm:$0xf]
  %v91 = vld [vmem:[%s1 + $0x74] sm:$0xf]
  %v92 = vld [vmem:[%s1 + $0x78] sm:$0xf]
  %v93 = vld [vmem:[%s1 + $0x7c] sm:$0xf]
  %v94 = vld [vmem:[%s1 + $0x80] sm:$0xf]
  %v95 = vld [vmem:[%s1 + $0x84] sm:$0xf]
  %v96 = vld [vmem:[%s1 + $0x88] sm:$0xf]
  %v97 = vld [vmem:[%s1 + $0x8c] sm:$0xf]
  %v98 = vld [vmem:[%s1 + $0x90] sm:$0xf]
  %v99 = vld [vmem:[%s1 + $0x94] sm:$0xf]
  %v100 = vld [vmem:[%s1 + $0x98] sm:$0xf]
  %v101 = vld [vmem:[%s1 + $0x9c] sm:$0xf]
  %v102 = vld [vmem:[%s1 + $0xa0] sm:$0xf]
  %v103 = vld [vmem:[%s1 + $0xa4] sm:$0xf]
  %v104 = vld [vmem:[%s1 + $0xa8] sm:$0xf]
  %v105 = vld [vmem:[%s1 + $0xac] sm:$0xf]
  %v106 = vld [vmem:[%s1 + $0xb0] sm:$0xf]
  %v107 = vld [vmem:[%s1 + $0xb4] sm:$0xf]
  %v108 = vld [vmem:[%s1 + $0xb8] sm:$0xf]
  %v109 = vld [vmem:[%s1 + $0xbc] sm:$0xf]
  %v110 = vld [vmem:[%s1 + $0xc0] sm:$0xf]
  %v111 = vld [vmem:[%s1 + $0xc4] sm:$0xf]
  %v112 = vld [vmem:[%s1 + $0xc8] sm:$0xf]
  %v113 = vld [vmem:[%s1 + $0xcc] sm:$0xf]
  %v114 = vld [vmem:[%s1 + $0xd0] sm:$0xf]
  %v115 = vld [vmem:[%s1 + $0xd4] sm:$0xf]
  %v116 = vld [vmem:[%s1 + $0xd8] sm:$0xf]
  %v117 = vld [vmem:[%s1 + $0xdc] sm:$0xf]
  %v118 = vld [vmem:[%s1 + $0xe0] sm:$0xf]
  %v119 = vld [vmem:[%s1 + $0xe4] sm:$0xf]
  %v120 = vld [vmem:[%s1 + $0xe8] sm:$0xf]
  %v121 = vld [vmem:[%s1 + $0xec] sm:$0xf]
  %v122 = vld [vmem:[%s1 + $0xf0] sm:$0xf]
  %v123 = vld [vmem:[%s1 + $0xf4] sm:$0xf]
  %v124 = vld [vmem:[%s1 + $0xf8] sm:$0xf]
  %v125 = vld [vmem:[%s1 + $0xfc] sm:$0xf]
  %v126 = vld [vmem:[%s1 + $0x100] sm:$0xf]
  %v127 = vld [vmem:[%s1 + $0x104] sm:$0xf]
  %v128 = vld [vmem:[%s1 + $0x108] sm:$0xf]
  %v129 = vld [vmem:[%s1 + $0x10c] sm:$0xf]
  %v130 = vld [vmem:[%s1 + $0x110] sm:$0xf]
  %v131 = vld [vmem:[%s1 + $0x114] sm:$0xf]
  %v132 = vld [vmem:[%s1 + $0x118] sm:$0xf]
  %v133 = vld [vmem:[%s1 + $0x11c] sm:$0xf]
  %v134 = vld [vmem:[%s1 + $0x120] sm:$0xf]
  %v135 = vld [vmem:[%s1 + $0x124] sm:$0xf]
  %v136 = vld [vmem:[%s1 + $0x128] sm:$0xf]
  %v137 = vld [vmem:[%s1 + $0x12c] sm:$0xf]
  %v138 = vld [vmem:[%s1 + $0x130] sm:$0xf]
  %v139 = vld [vmem:[%s1 + $0x134] sm:$0xf]
  %v140 = vld [vmem:[%s1 + $0x138] sm:$0xf]
  %v141 = vld [vmem:[%s1 + $0x13c] sm:$0xf]
  %v142 = vld [vmem:[%s2] sm:$0x1]
  %v144 = vperm.slane %v142, 0
  %v194 = vunpack.c.l.b16 %v14
  %v195 = vunpack.c.h.b16 %v14
  %v196 = vunpack.c.l.b16 %v15
  %v197 = vunpack.c.h.b16 %v15
  %v198 = vunpack.c.l.b16 %v16
  %v199 = vunpack.c.l.b16 %v17
  %v200 = vunpack.c.h.b16 %v17
  %v201 = vunpack.c.l.b16 %v18
  %v202 = vunpack.c.h.b16 %v18
  %v203 = vunpack.c.l.b16 %v19
  %v204 = vunpack.c.l.b16 %v20
  %v205 = vunpack.c.h.b16 %v20
  %v206 = vunpack.c.l.b16 %v21
  %v207 = vunpack.c.h.b16 %v21
  %v208 = vunpack.c.l.b16 %v22
  %v209 = vunpack.c.l.b16 %v23
  %v210 = vunpack.c.h.b16 %v23
  %v211 = vunpack.c.l.b16 %v24
  %v212 = vunpack.c.h.b16 %v24
  %v213 = vunpack.c.l.b16 %v25
  %v214 = vunpack.c.l.b16 %v26
  %v215 = vunpack.c.h.b16 %v26
  %v216 = vunpack.c.l.b16 %v27
  %v217 = vunpack.c.h.b16 %v27
  %v218 = vunpack.c.l.b16 %v28
  %v219 = vunpack.c.l.b16 %v29
  %v220 = vunpack.c.h.b16 %v29
  %v221 = vunpack.c.l.b16 %v30
  %v222 = vunpack.c.h.b16 %v30
  %v223 = vunpack.c.l.b16 %v31
  %v224 = vunpack.c.l.b16 %v32
  %v225 = vunpack.c.h.b16 %v32
  %v226 = vunpack.c.l.b16 %v33
  %v227 = vunpack.c.h.b16 %v33
  %v228 = vunpack.c.l.b16 %v34
  %v229 = vunpack.c.l.b16 %v35
  %v230 = vunpack.c.h.b16 %v35
  %v231 = vunpack.c.l.b16 %v36
  %v232 = vunpack.c.h.b16 %v36
  %v233 = vunpack.c.l.b16 %v37
  %v234 = vunpack.c.l.b16 %v38
  %v235 = vunpack.c.h.b16 %v38
  %v236 = vunpack.c.l.b16 %v39
  %v237 = vunpack.c.h.b16 %v39
  %v238 = vunpack.c.l.b16 %v40
  %v239 = vunpack.c.l.b16 %v41
  %v240 = vunpack.c.h.b16 %v41
  %v241 = vunpack.c.l.b16 %v42
  %v242 = vunpack.c.h.b16 %v42
  %v243 = vunpack.c.l.b16 %v43
  %v244 = vunpack.c.l.b16 %v44
  %v245 = vunpack.c.h.b16 %v44
  %v246 = vunpack.c.l.b16 %v45
  %v247 = vunpack.c.h.b16 %v45
  %v248 = vunpack.c.l.b16 %v46
  %v249 = vunpack.c.l.b16 %v47
  %v250 = vunpack.c.h.b16 %v47
  %v251 = vunpack.c.l.b16 %v48
  %v252 = vunpack.c.h.b16 %v48
  %v253 = vunpack.c.l.b16 %v49
  %v254 = vunpack.c.l.b16 %v50
  %v255 = vunpack.c.h.b16 %v50
  %v256 = vunpack.c.l.b16 %v51
  %v257 = vunpack.c.h.b16 %v51
  %v258 = vunpack.c.l.b16 %v52
  %v259 = vunpack.c.l.b16 %v53
  %v260 = vunpack.c.h.b16 %v53
  %v261 = vunpack.c.l.b16 %v54
  %v262 = vunpack.c.h.b16 %v54
  %v263 = vunpack.c.l.b16 %v55
  %v264 = vunpack.c.l.b16 %v56
  %v265 = vunpack.c.h.b16 %v56
  %v266 = vunpack.c.l.b16 %v57
  %v267 = vunpack.c.h.b16 %v57
  %v268 = vunpack.c.l.b16 %v58
  %v269 = vunpack.c.l.b16 %v59
  %v270 = vunpack.c.h.b16 %v59
  %v271 = vunpack.c.l.b16 %v60
  %v272 = vunpack.c.h.b16 %v60
  %v273 = vunpack.c.l.b16 %v61
  %v274 = vpack.c.b16 %v199, %v194
  %v275 = vpack.c.b16 %v200, %v195
  %v276 = vpack.c.b16 %v201, %v196
  %v277 = vpack.c.b16 %v202, %v197
  %v278 = vpack.c.b16 %v203, %v198
  %v279 = vpack.c.b16 %v209, %v204
  %v280 = vpack.c.b16 %v210, %v205
  %v281 = vpack.c.b16 %v211, %v206
  %v282 = vpack.c.b16 %v212, %v207
  %v283 = vpack.c.b16 %v213, %v208
  %v284 = vpack.c.b16 %v219, %v214
  %v285 = vpack.c.b16 %v220, %v215
  %v286 = vpack.c.b16 %v221, %v216
  %v287 = vpack.c.b16 %v222, %v217
  %v288 = vpack.c.b16 %v223, %v218
  %v289 = vpack.c.b16 %v229, %v224
  %v290 = vpack.c.b16 %v230, %v225
  %v291 = vpack.c.b16 %v231, %v226
  %v292 = vpack.c.b16 %v232, %v227
  %v293 = vpack.c.b16 %v233, %v228
  %v294 = vpack.c.b16 %v239, %v234
  %v295 = vpack.c.b16 %v240, %v235
  %v296 = vpack.c.b16 %v241, %v236
  %v297 = vpack.c.b16 %v242, %v237
  %v298 = vpack.c.b16 %v243, %v238
  %v299 = vpack.c.b16 %v249, %v244
  %v300 = vpack.c.b16 %v250, %v245
  %v301 = vpack.c.b16 %v251, %v246
  %v302 = vpack.c.b16 %v252, %v247
  %v303 = vpack.c.b16 %v253, %v248
  %v304 = vpack.c.b16 %v259, %v254
  %v305 = vpack.c.b16 %v260, %v255
  %v306 = vpack.c.b16 %v261, %v256
  %v307 = vpack.c.b16 %v262, %v257
  %v308 = vpack.c.b16 %v263, %v258
  %v309 = vpack.c.b16 %v269, %v264
  %v310 = vpack.c.b16 %v270, %v265
  %v311 = vpack.c.b16 %v271, %v266
  %v312 = vpack.c.b16 %v272, %v267
  %v313 = vpack.c.b16 %v273, %v268
  %v434 = vunpack.c.l.b16 %v62
  %v435 = vunpack.c.l.b16 %v63
  %v436 = vunpack.c.l.b16 %v64
  %v437 = vunpack.c.l.b16 %v65
  %v438 = vunpack.c.l.b16 %v66
  %v439 = vunpack.c.l.b16 %v67
  %v440 = vunpack.c.l.b16 %v68
  %v441 = vunpack.c.l.b16 %v69
  %v442 = vunpack.c.l.b16 %v70
  %v443 = vunpack.c.l.b16 %v71
  %v444 = vunpack.c.l.b16 %v72
  %v445 = vunpack.c.l.b16 %v73
  %v446 = vunpack.c.l.b16 %v74
  %v447 = vunpack.c.l.b16 %v75
  %v448 = vunpack.c.l.b16 %v76
  %v449 = vunpack.c.l.b16 %v77
  %v450 = vunpack.c.l.b16 %v78
  %v451 = vunpack.c.l.b16 %v79
  %v452 = vunpack.c.l.b16 %v80
  %v453 = vunpack.c.l.b16 %v81
  %v454 = vunpack.c.l.b16 %v82
  %v455 = vunpack.c.l.b16 %v83
  %v456 = vunpack.c.l.b16 %v84
  %v457 = vunpack.c.l.b16 %v85
  %v458 = vunpack.c.l.b16 %v86
  %v459 = vunpack.c.l.b16 %v87
  %v460 = vunpack.c.l.b16 %v88
  %v461 = vunpack.c.l.b16 %v89
  %v462 = vunpack.c.l.b16 %v90
  %v463 = vunpack.c.l.b16 %v91
  %v464 = vunpack.c.l.b16 %v92
  %v465 = vunpack.c.l.b16 %v93
  %v466 = vunpack.c.l.b16 %v94
  %v467 = vunpack.c.l.b16 %v95
  %v468 = vunpack.c.l.b16 %v96
  %v469 = vunpack.c.l.b16 %v97
  %v470 = vunpack.c.l.b16 %v98
  %v471 = vunpack.c.l.b16 %v99
  %v472 = vunpack.c.l.b16 %v100
  %v473 = vunpack.c.l.b16 %v101
  %v474 = vunpack.c.l.b16 %v102
  %v475 = vunpack.c.l.b16 %v103
  %v476 = vunpack.c.l.b16 %v104
  %v477 = vunpack.c.l.b16 %v105
  %v478 = vunpack.c.l.b16 %v106
  %v479 = vunpack.c.l.b16 %v107
  %v480 = vunpack.c.l.b16 %v108
  %v481 = vunpack.c.l.b16 %v109
  %v482 = vunpack.c.l.b16 %v110
  %v483 = vunpack.c.l.b16 %v111
  %v484 = vunpack.c.l.b16 %v112
  %v485 = vunpack.c.l.b16 %v113
  %v486 = vunpack.c.l.b16 %v114
  %v487 = vunpack.c.l.b16 %v115
  %v488 = vunpack.c.l.b16 %v116
  %v489 = vunpack.c.l.b16 %v117
  %v490 = vunpack.c.l.b16 %v118
  %v491 = vunpack.c.l.b16 %v119
  %v492 = vunpack.c.l.b16 %v120
  %v493 = vunpack.c.l.b16 %v121
  %v494 = vunpack.c.l.b16 %v122
  %v495 = vunpack.c.l.b16 %v123
  %v496 = vunpack.c.l.b16 %v124
  %v497 = vunpack.c.l.b16 %v125
  %v498 = vunpack.c.l.b16 %v126
  %v499 = vunpack.c.l.b16 %v127
  %v500 = vunpack.c.l.b16 %v128
  %v501 = vunpack.c.l.b16 %v129
  %v502 = vunpack.c.l.b16 %v130
  %v503 = vunpack.c.l.b16 %v131
  %v504 = vunpack.c.l.b16 %v132
  %v505 = vunpack.c.l.b16 %v133
  %v506 = vunpack.c.l.b16 %v134
  %v507 = vunpack.c.l.b16 %v135
  %v508 = vunpack.c.l.b16 %v136
  %v509 = vunpack.c.l.b16 %v137
  %v510 = vunpack.c.l.b16 %v138
  %v511 = vunpack.c.l.b16 %v139
  %v512 = vunpack.c.l.b16 %v140
  %v513 = vunpack.c.l.b16 %v141
  %v514 = vpack.c.b16 %v435, %v434
  %v515 = vpack.c.b16 %v437, %v436
  %v516 = vpack.c.b16 %v439, %v438
  %v517 = vpack.c.b16 %v441, %v440
  %v518 = vpack.c.b16 %v443, %v442
  %v519 = vpack.c.b16 %v445, %v444
  %v520 = vpack.c.b16 %v447, %v446
  %v521 = vpack.c.b16 %v449, %v448
  %v522 = vpack.c.b16 %v451, %v450
  %v523 = vpack.c.b16 %v453, %v452
  %v524 = vpack.c.b16 %v455, %v454
  %v525 = vpack.c.b16 %v457, %v456
  %v526 = vpack.c.b16 %v459, %v458
  %v527 = vpack.c.b16 %v461, %v460
  %v528 = vpack.c.b16 %v463, %v462
  %v529 = vpack.c.b16 %v465, %v464
  %v530 = vpack.c.b16 %v467, %v466
  %v531 = vpack.c.b16 %v469, %v468
  %v532 = vpack.c.b16 %v471, %v470
  %v533 = vpack.c.b16 %v473, %v472
  %v534 = vpack.c.b16 %v475, %v474
  %v535 = vpack.c.b16 %v477, %v476
  %v536 = vpack.c.b16 %v479, %v478
  %v537 = vpack.c.b16 %v481, %v480
  %v538 = vpack.c.b16 %v483, %v482
  %v539 = vpack.c.b16 %v485, %v484
  %v540 = vpack.c.b16 %v487, %v486
  %v541 = vpack.c.b16 %v489, %v488
  %v542 = vpack.c.b16 %v491, %v490
  %v543 = vpack.c.b16 %v493, %v492
  %v544 = vpack.c.b16 %v495, %v494
  %v545 = vpack.c.b16 %v497, %v496
  %v546 = vpack.c.b16 %v499, %v498
  %v547 = vpack.c.b16 %v501, %v500
  %v548 = vpack.c.b16 %v503, %v502
  %v549 = vpack.c.b16 %v505, %v504
  %v550 = vpack.c.b16 %v507, %v506
  %v551 = vpack.c.b16 %v509, %v508
  %v552 = vpack.c.b16 %v511, %v510
  %v553 = vpack.c.b16 %v513, %v512
  %594 = vmatpush.bf16.msra.mxu0 %v521
  %595 = vmatpush.bf16.msra.mxu0 %v520
  %596 = vmatpush.bf16.msra.mxu0 %v519
  %597 = vmatpush.bf16.msra.mxu0 %v518
  %598 = vmatpush.bf16.msra.mxu0 %v517
  %599 = vmatpush.bf16.msra.mxu0 %v516
  %600 = vmatpush.bf16.msra.mxu0 %v515
  %601 = vmatpush.bf16.msra.mxu0 %v514
  %602 = vmatmul.bf16.gmra.mxu0 %v274
  %v603 = vpop.f32.mrf.mxu0
  %v604 = vadd.f32 %v144, %v603
  %v605 = vpop.f32.mrf.mxu0
  %v606 = vadd.f32 %v144, %v605
  %607 = vmatmul.bf16.gmra.mxu0 %v279
  %v608 = vpop.f32.mrf.mxu0
  %v609 = vadd.f32 %v144, %v608
  %v610 = vpop.f32.mrf.mxu0
  %v611 = vadd.f32 %v144, %v610
  %612 = vmatmul.bf16.gmra.mxu0 %v284
  %v613 = vpop.f32.mrf.mxu0
  %v614 = vadd.f32 %v144, %v613
  %v615 = vpop.f32.mrf.mxu0
  %v616 = vadd.f32 %v144, %v615
  %617 = vmatmul.bf16.gmra.mxu0 %v289
  %v618 = vpop.f32.mrf.mxu0
  %v619 = vadd.f32 %v144, %v618
  %v620 = vpop.f32.mrf.mxu0
  %v621 = vadd.f32 %v144, %v620
  %622 = vmatmul.bf16.gmra.mxu0 %v294
  %v623 = vpop.f32.mrf.mxu0
  %v624 = vadd.f32 %v144, %v623
  %v625 = vpop.f32.mrf.mxu0
  %v626 = vadd.f32 %v144, %v625
  %627 = vmatmul.bf16.gmra.mxu0 %v299
  %v628 = vpop.f32.mrf.mxu0
  %v629 = vadd.f32 %v144, %v628
  %v630 = vpop.f32.mrf.mxu0
  %v631 = vadd.f32 %v144, %v630
  %632 = vmatmul.bf16.gmra.mxu0 %v304
  %v633 = vpop.f32.mrf.mxu0
  %v634 = vadd.f32 %v144, %v633
  %v635 = vpop.f32.mrf.mxu0
  %v636 = vadd.f32 %v144, %v635
  %637 = vmatmul.bf16.gmra.mxu0 %v309
  %v638 = vpop.f32.mrf.mxu0
  %v639 = vadd.f32 %v144, %v638
  %v640 = vpop.f32.mrf.mxu0
  %v641 = vadd.f32 %v144, %v640
  %642 = vdwg.mxu0
  %643 = vmatpush.bf16.msra.mxu0 %v529
  %644 = vmatpush.bf16.msra.mxu0 %v528
  %645 = vmatpush.bf16.msra.mxu0 %v527
  %646 = vmatpush.bf16.msra.mxu0 %v526
  %647 = vmatpush.bf16.msra.mxu0 %v525
  %648 = vmatpush.bf16.msra.mxu0 %v524
  %649 = vmatpush.bf16.msra.mxu0 %v523
  %650 = vmatpush.bf16.msra.mxu0 %v522
  %651 = vmatmul.bf16.gmra.mxu0 %v275
  %v652 = vpop.f32.mrf.mxu0
  %v653 = vadd.f32 %v604, %v652
  %v654 = vpop.f32.mrf.mxu0
  %v655 = vadd.f32 %v606, %v654
  %656 = vmatmul.bf16.gmra.mxu0 %v280
  %v657 = vpop.f32.mrf.mxu0
  %v658 = vadd.f32 %v609, %v657
  %v659 = vpop.f32.mrf.mxu0
  %v660 = vadd.f32 %v611, %v659
  %661 = vmatmul.bf16.gmra.mxu0 %v285
  %v662 = vpop.f32.mrf.mxu0
  %v663 = vadd.f32 %v614, %v662
  %v664 = vpop.f32.mrf.mxu0
  %v665 = vadd.f32 %v616, %v664
  %666 = vmatmul.bf16.gmra.mxu0 %v290
  %v667 = vpop.f32.mrf.mxu0
  %v668 = vadd.f32 %v619, %v667
  %v669 = vpop.f32.mrf.mxu0
  %v670 = vadd.f32 %v621, %v669
  %671 = vmatmul.bf16.gmra.mxu0 %v295
  %v672 = vpop.f32.mrf.mxu0
  %v673 = vadd.f32 %v624, %v672
  %v674 = vpop.f32.mrf.mxu0
  %v675 = vadd.f32 %v626, %v674
  %676 = vmatmul.bf16.gmra.mxu0 %v300
  %v677 = vpop.f32.mrf.mxu0
  %v678 = vadd.f32 %v629, %v677
  %v679 = vpop.f32.mrf.mxu0
  %v680 = vadd.f32 %v631, %v679
  %681 = vmatmul.bf16.gmra.mxu0 %v305
  %v682 = vpop.f32.mrf.mxu0
  %v683 = vadd.f32 %v634, %v682
  %v684 = vpop.f32.mrf.mxu0
  %v685 = vadd.f32 %v636, %v684
  %686 = vmatmul.bf16.gmra.mxu0 %v310
  %v687 = vpop.f32.mrf.mxu0
  %v688 = vadd.f32 %v639, %v687
  %v689 = vpop.f32.mrf.mxu0
  %v690 = vadd.f32 %v641, %v689
  %691 = vdwg.mxu0
  %692 = vmatpush.bf16.msra.mxu0 %v537
  %693 = vmatpush.bf16.msra.mxu0 %v536
  %694 = vmatpush.bf16.msra.mxu0 %v535
  %695 = vmatpush.bf16.msra.mxu0 %v534
  %696 = vmatpush.bf16.msra.mxu0 %v533
  %697 = vmatpush.bf16.msra.mxu0 %v532
  %698 = vmatpush.bf16.msra.mxu0 %v531
  %699 = vmatpush.bf16.msra.mxu0 %v530
  %700 = vmatmul.bf16.gmra.mxu0 %v276
  %v701 = vpop.f32.mrf.mxu0
  %v702 = vadd.f32 %v653, %v701
  %v703 = vpop.f32.mrf.mxu0
  %v704 = vadd.f32 %v655, %v703
  %705 = vmatmul.bf16.gmra.mxu0 %v281
  %v706 = vpop.f32.mrf.mxu0
  %v707 = vadd.f32 %v658, %v706
  %v708 = vpop.f32.mrf.mxu0
  %v709 = vadd.f32 %v660, %v708
  %710 = vmatmul.bf16.gmra.mxu0 %v286
  %v711 = vpop.f32.mrf.mxu0
  %v712 = vadd.f32 %v663, %v711
  %v713 = vpop.f32.mrf.mxu0
  %v714 = vadd.f32 %v665, %v713
  %715 = vmatmul.bf16.gmra.mxu0 %v291
  %v716 = vpop.f32.mrf.mxu0
  %v717 = vadd.f32 %v668, %v716
  %v718 = vpop.f32.mrf.mxu0
  %v719 = vadd.f32 %v670, %v718
  %720 = vmatmul.bf16.gmra.mxu0 %v296
  %v721 = vpop.f32.mrf.mxu0
  %v722 = vadd.f32 %v673, %v721
  %v723 = vpop.f32.mrf.mxu0
  %v724 = vadd.f32 %v675, %v723
  %725 = vmatmul.bf16.gmra.mxu0 %v301
  %v726 = vpop.f32.mrf.mxu0
  %v727 = vadd.f32 %v678, %v726
  %v728 = vpop.f32.mrf.mxu0
  %v729 = vadd.f32 %v680, %v728
  %730 = vmatmul.bf16.gmra.mxu0 %v306
  %v731 = vpop.f32.mrf.mxu0
  %v732 = vadd.f32 %v683, %v731
  %v733 = vpop.f32.mrf.mxu0
  %v734 = vadd.f32 %v685, %v733
  %735 = vmatmul.bf16.gmra.mxu0 %v311
  %v736 = vpop.f32.mrf.mxu0
  %v737 = vadd.f32 %v688, %v736
  %v738 = vpop.f32.mrf.mxu0
  %v739 = vadd.f32 %v690, %v738
  %740 = vdwg.mxu0
  %741 = vmatpush.bf16.msra.mxu0 %v545
  %742 = vmatpush.bf16.msra.mxu0 %v544
  %743 = vmatpush.bf16.msra.mxu0 %v543
  %744 = vmatpush.bf16.msra.mxu0 %v542
  %745 = vmatpush.bf16.msra.mxu0 %v541
  %746 = vmatpush.bf16.msra.mxu0 %v540
  %747 = vmatpush.bf16.msra.mxu0 %v539
  %748 = vmatpush.bf16.msra.mxu0 %v538
  %749 = vmatmul.bf16.gmra.mxu0 %v277
  %v750 = vpop.f32.mrf.mxu0
  %v751 = vadd.f32 %v702, %v750
  %v752 = vpop.f32.mrf.mxu0
  %v753 = vadd.f32 %v704, %v752
  %754 = vmatmul.bf16.gmra.mxu0 %v282
  %v755 = vpop.f32.mrf.mxu0
  %v756 = vadd.f32 %v707, %v755
  %v757 = vpop.f32.mrf.mxu0
  %v758 = vadd.f32 %v709, %v757
  %759 = vmatmul.bf16.gmra.mxu0 %v287
  %v760 = vpop.f32.mrf.mxu0
  %v761 = vadd.f32 %v712, %v760
  %v762 = vpop.f32.mrf.mxu0
  %v763 = vadd.f32 %v714, %v762
  %764 = vmatmul.bf16.gmra.mxu0 %v292
  %v765 = vpop.f32.mrf.mxu0
  %v766 = vadd.f32 %v717, %v765
  %v767 = vpop.f32.mrf.mxu0
  %v768 = vadd.f32 %v719, %v767
  %769 = vmatmul.bf16.gmra.mxu0 %v297
  %v770 = vpop.f32.mrf.mxu0
  %v771 = vadd.f32 %v722, %v770
  %v772 = vpop.f32.mrf.mxu0
  %v773 = vadd.f32 %v724, %v772
  %774 = vmatmul.bf16.gmra.mxu0 %v302
  %v775 = vpop.f32.mrf.mxu0
  %v776 = vadd.f32 %v727, %v775
  %v777 = vpop.f32.mrf.mxu0
  %v778 = vadd.f32 %v729, %v777
  %779 = vmatmul.bf16.gmra.mxu0 %v307
  %v780 = vpop.f32.mrf.mxu0
  %v781 = vadd.f32 %v732, %v780
  %v782 = vpop.f32.mrf.mxu0
  %v783 = vadd.f32 %v734, %v782
  %784 = vmatmul.bf16.gmra.mxu0 %v312
  %v785 = vpop.f32.mrf.mxu0
  %v786 = vadd.f32 %v737, %v785
  %v787 = vpop.f32.mrf.mxu0
  %v788 = vadd.f32 %v739, %v787
  %789 = vdwg.mxu0
  %790 = vmatpush.bf16.msra.mxu0 %v553
  %791 = vmatpush.bf16.msra.mxu0 %v552
  %792 = vmatpush.bf16.msra.mxu0 %v551
  %793 = vmatpush.bf16.msra.mxu0 %v550
  %794 = vmatpush.bf16.msra.mxu0 %v549
  %795 = vmatpush.bf16.msra.mxu0 %v548
  %796 = vmatpush.bf16.msra.mxu0 %v547
  %797 = vmatpush.bf16.msra.mxu0 %v546
  %798 = vmatmul.bf16.gmra.mxu0 %v278
  %v799 = vpop.f32.mrf.mxu0
  %v800 = vadd.f32 %v751, %v799
  %v801 = vpop.f32.mrf.mxu0
  %v802 = vadd.f32 %v753, %v801
  %803 = vmatmul.bf16.gmra.mxu0 %v283
  %v804 = vpop.f32.mrf.mxu0
  %v805 = vadd.f32 %v756, %v804
  %v806 = vpop.f32.mrf.mxu0
  %v807 = vadd.f32 %v758, %v806
  %808 = vmatmul.bf16.gmra.mxu0 %v288
  %v809 = vpop.f32.mrf.mxu0
  %v810 = vadd.f32 %v761, %v809
  %v811 = vpop.f32.mrf.mxu0
  %v812 = vadd.f32 %v763, %v811
  %813 = vmatmul.bf16.gmra.mxu0 %v293
  %v814 = vpop.f32.mrf.mxu0
  %v815 = vadd.f32 %v766, %v814
  %v816 = vpop.f32.mrf.mxu0
  %v817 = vadd.f32 %v768, %v816
  %818 = vmatmul.bf16.gmra.mxu0 %v298
  %v819 = vpop.f32.mrf.mxu0
  %v820 = vadd.f32 %v771, %v819
  %v821 = vpop.f32.mrf.mxu0
  %v822 = vadd.f32 %v773, %v821
  %823 = vmatmul.bf16.gmra.mxu0 %v303
  %v824 = vpop.f32.mrf.mxu0
  %v825 = vadd.f32 %v776, %v824
  %v826 = vpop.f32.mrf.mxu0
  %v827 = vadd.f32 %v778, %v826
  %828 = vmatmul.bf16.gmra.mxu0 %v308
  %v829 = vpop.f32.mrf.mxu0
  %v830 = vadd.f32 %v781, %v829
  %v831 = vpop.f32.mrf.mxu0
  %v832 = vadd.f32 %v783, %v831
  %833 = vmatmul.bf16.gmra.mxu0 %v313
  %v834 = vpop.f32.mrf.mxu0
  %v835 = vadd.f32 %v786, %v834
  %v836 = vpop.f32.mrf.mxu0
  %v837 = vadd.f32 %v788, %v836
  %838 = vdwg.mxu0
  %v839 = vmax.f32 %v800, 0.0
  %v840 = vmax.f32 %v802, 0.0
  %v841 = vmax.f32 %v805, 0.0
  %v842 = vmax.f32 %v807, 0.0
  %v843 = vmax.f32 %v810, 0.0
  %v844 = vmax.f32 %v812, 0.0
  %v845 = vmax.f32 %v815, 0.0
  %v846 = vmax.f32 %v817, 0.0
  %v847 = vmax.f32 %v820, 0.0
  %v848 = vmax.f32 %v822, 0.0
  %v849 = vmax.f32 %v825, 0.0
  %v850 = vmax.f32 %v827, 0.0
  %v851 = vmax.f32 %v830, 0.0
  %v852 = vmax.f32 %v832, 0.0
  %v853 = vmax.f32 %v835, 0.0
  %v854 = vmax.f32 %v837, 0.0
  %v855 = vpack.c.bf16 %v839, %v839
  %v856 = vpack.c.bf16 %v840, %v840
  %v857 = vpack.c.bf16 %v841, %v841
  %v858 = vpack.c.bf16 %v842, %v842
  %v859 = vpack.c.bf16 %v843, %v843
  %v860 = vpack.c.bf16 %v844, %v844
  %v861 = vpack.c.bf16 %v845, %v845
  %v862 = vpack.c.bf16 %v846, %v846
  %v863 = vpack.c.bf16 %v847, %v847
  %v864 = vpack.c.bf16 %v848, %v848
  %v865 = vpack.c.bf16 %v849, %v849
  %v866 = vpack.c.bf16 %v850, %v850
  %v867 = vpack.c.bf16 %v851, %v851
  %v868 = vpack.c.bf16 %v852, %v852
  %v869 = vpack.c.bf16 %v853, %v853
  %v870 = vpack.c.bf16 %v854, %v854
  %871 = vst [vmem:[%s3] sm:$0xf] %v855
  %872 = vst [vmem:[%s3 + $0x4] sm:$0xf] %v856
  %873 = vst [vmem:[%s3 + $0x8] sm:$0xf] %v857
  %874 = vst [vmem:[%s3 + $0xc] sm:$0xf] %v858
  %875 = vst [vmem:[%s3 + $0x10] sm:$0xf] %v859
  %876 = vst [vmem:[%s3 + $0x14] sm:$0xf] %v860
  %877 = vst [vmem:[%s3 + $0x18] sm:$0xf] %v861
  %878 = vst [vmem:[%s3 + $0x1c] sm:$0xf] %v862
  %879 = vst [vmem:[%s3 + $0x20] sm:$0xf] %v863
  %880 = vst [vmem:[%s3 + $0x24] sm:$0xf] %v864
  %881 = vst [vmem:[%s3 + $0x28] sm:$0xf] %v865
  %882 = vst [vmem:[%s3 + $0x2c] sm:$0xf] %v866
  %883 = vst [vmem:[%s3 + $0x30] sm:$0xf] %v867
  %884 = vst [vmem:[%s3 + $0x34] sm:$0xf] %v868
  %885 = vst [vmem:[%s3 + $0x38] sm:$0xf] %v869
  %886 = vst [vmem:[%s3 + $0x3c] sm:$0xf] %v870
  // Predicated region
  $region14: #{generator_forward.7} parent=0 // pred_check
    _
  $region15: #{generator_forward.7} parent=0 // pred_check_branch
    %888 = sbr.rel (0) target = $region17
  $region16: #{generator_forward.7} parent=0 // pred_region
    _
  $region17: #{generator_forward.7} parent=0 // pred_fallthru
    _
  // Predicated region
  $region18: #{generator_forward.7} parent=0 // pred_check
    _
  $region19: #{generator_forward.7} parent=0 // pred_check_branch
    %890 = sbr.rel (0) target = $region21
  $region20: #{generator_forward.7} parent=0 // pred_region
    _
  $region21: #{generator_forward.7} parent=0 // pred_fallthru
    _

// kernel: generator_forward.8
$region0: #{generator_forward.8}
  #allocation0 [shape = 'u32[]', space=smem, size = 0x4, offset = 0x4, fixed_abs, tag = 'smem constant byte address 0x4 - core index']
  #allocation1 [shape = 'u32[72,128]{1,0:T(1,128)}', space=vmem, size = 0x9000, scoped, tag = 'internal scratch']
  #allocation2 [shape = 'f32[32,128]{1,0:T(8,128)}', space=vmem, size = 0x4000, scoped, tag = 'scratch operand']
  %s0 = inlined_call_operand.vmem [shape: bf16[1,32,1152], index: 0, kind: input, shape index: {}]
  %s1 = inlined_call_operand.vmem [shape: bf16[1,1152,256], index: 1, kind: input, shape index: {}]
  %s2 = inlined_call_operand.vmem [shape: f32[1,256], index: 2, kind: input, shape index: {}]
  %s3 = inlined_call_operand.vmem [shape: bf16[1,32,256], index: 3, kind: output, shape index: {}]
  %s4 = sld [smem:[#allocation0]]
  $region157: #{generator_forward.8} parent=0
    _
  %s6 = ssub.s32 1, %s4
  %s7 = scalar_select 0, %s6, %s4
  $region1: #{generator_forward.8} parent=0
    #allocation3 [shape = 'u8[49152]{0}', space=vmem, size = 0xc000, scoped, tag = 'input window, operand 0']
    #allocation4 [shape = 'u8[196608]{0}', space=vmem, size = 0x30000, scoped, tag = 'input window, operand 1']
    #allocation5 [shape = 'u8[16384]{0}', space=vmem, size = 0x4000, scoped, tag = 'output window, operand 0']
    loop: start=0, step=1, limit=8
    $region2: #{generator_forward.8} parent=1 // loop_pre_header
      _
    $region3: #{generator_forward.8} parent=1 // loop_header
      %s9 = sphi 0, %s13
      %p10 = scmp.ge.s32.totalorder %s9, 8
      %s16 = sphi 0, %s42
      %s17 = sphi 0, %s38
      %s18 = sphi 0, %s34
      %s19 = sphi 0, %s30
      %s20 = sphi 0, %s16
      %s21 = sphi 0, %s17
      %s22 = sphi 0, %s18
      %s23 = sphi 0, %s19
      %s24 = sphi 0, %s20
      %s25 = sphi 0, %s21
      %s26 = sphi 0, %s22
      %s27 = sphi 0, %s23
      %s49 = sphi 0, %s51
      %s52 = sphi 0, %s49
      %s53 = sphi 0, %s52
      %s69 = sphi 0, %s53
      %s79 = sphi 0, %s81
      %s82 = sphi 0, %s79
      %s83 = sphi 0, %s82
      %s99 = sphi 0, %s83
      %s105 = sphi 0, %s107
      %s108 = sphi 0, %s105
      %s109 = sphi 0, %s108
      %s125 = sphi 0, %s109
      %s135 = sphi 0, %s137
      %s138 = sphi 0, %s135
      %s139 = sphi 0, %s138
      %s155 = sphi 0, %s139
    $region4: #{generator_forward.8} parent=1 // loop_header_branch
      %12 = sbr.rel (%p10) target = $region8
    $region5: #{generator_forward.8} parent=1 // loop_body
      %s14 = ssub.s32 %s9, 1
      %s15 = ssub.s32 %s9, 2
      %s28 = sadd.s32 1, %s19
      %p29 = scmp.ge.s32.totalorder %s28, 3
      %s30 = scalar_select %p29, 0, %s28
      %s31 = sadd.s32 1, %s18
      %s32 = scalar_select %p29, %s31, %s18
      %p33 = scmp.ge.s32.totalorder %s32, 2
      %s34 = scalar_select %p33, 0, %s32
      %s35 = sadd.s32 1, %s17
      %s36 = scalar_select %p33, %s35, %s17
      %p37 = scmp.ge.s32.totalorder %s36, 1
      %s38 = scalar_select %p37, 0, %s36
      %s39 = sadd.s32 1, %s16
      %s40 = scalar_select %p37, %s39, %s16
      %p41 = scmp.ge.s32.totalorder %s40, 1
      %s42 = scalar_select %p41, 0, %s40
      %s43 = ssub.s32 %s16, %s42
      %s44 = ssub.s32 %s17, %s38
      %s45 = sor.u32 %s43, %s44
      %s46 = ssub.s32 %s19, %s30
      %s47 = sor.u32 %s45, %s46
      %p48 = scmp.eq.s32.totalorder %s47, 0
      %s50 = sadd.s32 %s49, 1
      %s51 = scalar_select %p48, %s49, %s50
      %p54 = pneg %p48
      %p55 = scmp.eq.s32.totalorder %s9, 5
      %p56 = por %p54, %p55
      %p57 = scmp.ne.s32.totalorder %s49, %s52
      %p58 = scmp.eq.s32.totalorder %s9, 0
      %p59 = por %p57, %p58
      %p60 = scmp.ne.s32.totalorder %s49, %s52
      %p61 = scmp.eq.s32.totalorder %s14, 5
      %p62 = por %p60, %p61
      %p63 = scmp.ne.s32.totalorder %s52, %s53
      %p64 = scmp.eq.s32.totalorder %s14, 0
      %p65 = por %p63, %p64
      %p66 = scmp.ne.s32.totalorder %s52, %s53
      %p67 = scmp.eq.s32.totalorder %s15, 5
      %p68 = por %p66, %p67
      %p70 = scmp.ne.s32.totalorder %s53, %s69
      %p71 = scmp.eq.s32.totalorder %s15, 0
      %p72 = por %p70, %p71
      %s73 = ssub.s32 %s16, %s42
      %s74 = ssub.s32 %s19, %s30
      %s75 = sor.u32 %s73, %s74
      %s76 = ssub.s32 %s18, %s34
      %s77 = sor.u32 %s75, %s76
      %p78 = scmp.eq.s32.totalorder %s77, 0
      %s80 = sadd.s32 %s79, 1
      %s81 = scalar_select %p78, %s79, %s80
      %p84 = pneg %p78
      %p85 = scmp.eq.s32.totalorder %s9, 5
      %p86 = por %p84, %p85
      %p87 = scmp.ne.s32.totalorder %s79, %s82
      %p88 = scmp.eq.s32.totalorder %s9, 0
      %p89 = por %p87, %p88
      %p90 = scmp.ne.s32.totalorder %s79, %s82
      %p91 = scmp.eq.s32.totalorder %s14, 5
      %p92 = por %p90, %p91
      %p93 = scmp.ne.s32.totalorder %s82, %s83
      %p94 = scmp.eq.s32.totalorder %s14, 0
      %p95 = por %p93, %p94
      %p96 = scmp.ne.s32.totalorder %s82, %s83
      %p97 = scmp.eq.s32.totalorder %s15, 5
      %p98 = por %p96, %p97
      %p100 = scmp.ne.s32.totalorder %s83, %s99
      %p101 = scmp.eq.s32.totalorder %s15, 0
      %p102 = por %p100, %p101
      %s103 = ssub.s32 %s18, %s34
      %p104 = scmp.eq.s32.totalorder %s103, 0
      %s106 = sadd.s32 %s105, 1
      %s107 = scalar_select %p104, %s105, %s106
      %p110 = pneg %p104
      %p111 = scmp.eq.s32.totalorder %s9, 5
      %p112 = por %p110, %p111
      %p113 = scmp.ne.s32.totalorder %s105, %s108
      %p114 = scmp.eq.s32.totalorder %s9, 0
      %p115 = por %p113, %p114
      %p116 = scmp.ne.s32.totalorder %s105, %s108
      %p117 = scmp.eq.s32.totalorder %s14, 5
      %p118 = por %p116, %p117
      %p119 = scmp.ne.s32.totalorder %s108, %s109
      %p120 = scmp.eq.s32.totalorder %s14, 0
      %p121 = por %p119, %p120
      %p122 = scmp.ne.s32.totalorder %s108, %s109
      %p123 = scmp.eq.s32.totalorder %s15, 5
      %p124 = por %p122, %p123
      %p126 = scmp.ne.s32.totalorder %s109, %s125
      %p127 = scmp.eq.s32.totalorder %s15, 0
      %p128 = por %p126, %p127
      %s129 = ssub.s32 %s16, %s42
      %s130 = ssub.s32 %s17, %s38
      %s131 = sor.u32 %s129, %s130
      %s132 = ssub.s32 %s18, %s34
      %s133 = sor.u32 %s131, %s132
      %p134 = scmp.eq.s32.totalorder %s133, 0
      %s136 = sadd.s32 %s135, 1
      %s137 = scalar_select %p134, %s135, %s136
      %p140 = pneg %p134
      %p141 = scmp.eq.s32.totalorder %s9, 5
      %p142 = por %p140, %p141
      %p143 = scmp.ne.s32.totalorder %s135, %s138
      %p144 = scmp.eq.s32.totalorder %s9, 0
      %p145 = por %p143, %p144
      %p146 = scmp.ne.s32.totalorder %s135, %s138
      %p147 = scmp.eq.s32.totalorder %s14, 5
      %p148 = por %p146, %p147
      %p149 = scmp.ne.s32.totalorder %s138, %s139
      %p150 = scmp.eq.s32.totalorder %s14, 0
      %p151 = por %p149, %p150
      %p152 = scmp.ne.s32.totalorder %s138, %s139
      %p153 = scmp.eq.s32.totalorder %s15, 5
      %p154 = por %p152, %p153
      %p156 = scmp.ne.s32.totalorder %s139, %s155
      %p157 = scmp.eq.s32.totalorder %s15, 0
      %p158 = por %p156, %p157
      %p159 = scmp.le.s32.totalorder 1, %s9
      %p160 = scmp.lt.s32.totalorder %s9, 7
      %p161 = pnand %p159, %p160
      %p162 = pneg %p161
      // Predicated region
      $region9: #{generator_forward.8} parent=5 // pred_check
        _
      $region10: #{generator_forward.8} parent=5 // pred_check_branch
        %164 = sbr.rel (%p161) target = $region12
      $region11: #{generator_forward.8} parent=5 // pred_region
        %s165 = ssub.s32 %s9, 1
      $region12: #{generator_forward.8} parent=5 // pred_fallthru
        _
      %p166 = scmp.lt.s32.totalorder %s9, 6
      // Predicated region
      $region13: #{generator_forward.8} parent=5 // pred_check
        %p167 = pneg %p166
      $region14: #{generator_forward.8} parent=5 // pred_check_branch
        %169 = sbr.rel (%p167) target = $region16
      $region15: #{generator_forward.8} parent=5 // pred_region
        // Predicated region
        $region17: #{generator_forward.8} parent=15 // pred_check
          %p170 = pneg %p59
        $region18: #{generator_forward.8} parent=15 // pred_check_branch
          %172 = sbr.rel (%p170) target = $region20
        $region19: #{generator_forward.8} parent=15 // pred_region
          %s173 = sand.u32 %s49, 1
          %s174 = sand.u32 %s49, 1
          %s175 = smul.addr %s174, 48
          %s176 = scalar_lea.vmem [#allocation3], %s175
          %s177 = smul.u32 4, %s17
          %s178 = smul.u32 3, %s19
          %s179 = smul.addr %s177, 9
          %s180 = sadd.s32 %s178, %s179
          %s181 = smul.addr %s16, 36
          %s182 = sadd.s32 %s180, %s181
          %s183 = smul.addr %s182, 4
          %s184 = scalar_lea.vmem %s0, %s183
          // Predicated region
          $region21: #{generator_forward.8} parent=19 // pred_check
            _
          $region22: #{generator_forward.8} parent=19 // pred_check_branch
            %186 = sbr.rel (0) target = $region24
          $region23: #{generator_forward.8} parent=19 // pred_region
            // Predicated region
            $region25: #{generator_forward.8} parent=23 // pred_check
              _
            $region26: #{generator_forward.8} parent=23 // pred_check_branch
              %188 = sbr.rel (0) target = $region28
            $region27: #{generator_forward.8} parent=23 // pred_region
              %s189 = scalar_lea.vmem %s184, 8
              %s190 = scalar_lea.vmem %s176, 8 [#allocation3]
              loop: start=0, step=1, limit=1
              $region29: #{generator_forward.8} parent=27 // loop_pre_header
                _
              $region30: #{generator_forward.8} parent=27 // loop_header
                %s192 = sphi 0, %s196
                %p193 = scmp.ge.s32.totalorder %s192, 1
                %s197 = sphi %s184, %s184
                %s198 = sphi %s176, %s176
              $region31: #{generator_forward.8} parent=27 // loop_header_branch
                %195 = sbr.rel (%p193) target = $region35
              $region32: #{generator_forward.8} parent=27 // loop_body
                %v199 = vld [vmem:[%s197] sm:$0xff]
                %200 = vst [vmem:[%s198] sm:$0xff] %v199
                %v201 = vld [vmem:[%s197 + $0x24] sm:$0xff]
                %202 = vst [vmem:[%s198 + $0xc] sm:$0xff] %v201
                %v203 = vld [vmem:[%s197 + $0x48] sm:$0xff]
                %204 = vst [vmem:[%s198 + $0x18] sm:$0xff] %v203
                %v205 = vld [vmem:[%s197 + $0x6c] sm:$0xff]
                %206 = vst [vmem:[%s198 + $0x24] sm:$0xff] %v205
              $region33: #{generator_forward.8} parent=27 // loop_footer
                %s196 = sadd.s32 1, %s192
              $region34: #{generator_forward.8} parent=27 // loop_footer_branch
                %191 = sbr.rel target = $region30
              $region35: #{generator_forward.8} parent=27 // loop_exit
                _
              %s208 = ssub.s32 16, 1
              loop: start=0, step=1, limit=1
              $region36: #{generator_forward.8} parent=27 // loop_pre_header
                _
              $region37: #{generator_forward.8} parent=27 // loop_header
                %s210 = sphi 0, %s214
                %p211 = scmp.ge.s32.totalorder %s210, 1
                %s215 = sphi %s189, %s189
                %s216 = sphi %s190, %s190
              $region38: #{generator_forward.8} parent=27 // loop_header_branch
                %213 = sbr.rel (%p211) target = $region42
              $region39: #{generator_forward.8} parent=27 // loop_body
                %v217 = vld [vmem:[%s215] sm:%s208]
                %218 = vst [vmem:[%s216] sm:%s208] %v217
                %v219 = vld [vmem:[%s215 + $0x24] sm:%s208]
                %220 = vst [vmem:[%s216 + $0xc] sm:%s208] %v219
                %v221 = vld [vmem:[%s215 + $0x48] sm:%s208]
                %222 = vst [vmem:[%s216 + $0x18] sm:%s208] %v221
                %v223 = vld [vmem:[%s215 + $0x6c] sm:%s208]
                %224 = vst [vmem:[%s216 + $0x24] sm:%s208] %v223
              $region40: #{generator_forward.8} parent=27 // loop_footer
                %s214 = sadd.s32 1, %s210
              $region41: #{generator_forward.8} parent=27 // loop_footer_branch
                %209 = sbr.rel target = $region37
              $region42: #{generator_forward.8} parent=27 // loop_exit
                _
            $region28: #{generator_forward.8} parent=23 // pred_fallthru
              _
          $region24: #{generator_forward.8} parent=19 // pred_fallthru
            _
          %225 = vnop
        $region20: #{generator_forward.8} parent=15 // pred_fallthru
          _
        // Predicated region
        $region43: #{generator_forward.8} parent=15 // pred_check
          %p226 = pneg %p89
        $region44: #{generator_forward.8} parent=15 // pred_check_branch
          %228 = sbr.rel (%p226) target = $region46
        $region45: #{generator_forward.8} parent=15 // pred_region
          %s229 = sand.u32 %s79, 1
          %s230 = sand.u32 %s79, 1
          %s231 = smul.addr %s230, 192
          %s232 = scalar_lea.vmem [#allocation4], %s231
          %s233 = smul.u32 48, %s19
          %s234 = smul.addr %s233, 2
          %s235 = sadd.s32 %s18, %s234
          %s236 = smul.addr %s16, 288
          %s237 = sadd.s32 %s235, %s236
          %s238 = smul.addr %s237, 4
          %s239 = scalar_lea.vmem %s1, %s238
          // Predicated region
          $region47: #{generator_forward.8} parent=45 // pred_check
            _
          $region48: #{generator_forward.8} parent=45 // pred_check_branch
            %241 = sbr.rel (0) target = $region50
          $region49: #{generator_forward.8} parent=45 // pred_region
            // Predicated region
            $region51: #{generator_forward.8} parent=49 // pred_check
              _
            $region52: #{generator_forward.8} parent=49 // pred_check_branch
              %243 = sbr.rel target = $region54
            $region53: #{generator_forward.8} parent=49 // pred_region
              // Predicated region
              $region66: #{generator_forward.8} parent=53 // pred_check
                _
              $region67: #{generator_forward.8} parent=53 // pred_check_branch
                %353 = sbr.rel (0) target = $region69
              $region68: #{generator_forward.8} parent=53 // pred_region
                loop: start=0, step=1, limit=1
                $region70: #{generator_forward.8} parent=68 // loop_pre_header
                  _
                $region71: #{generator_forward.8} parent=68 // loop_header
                  %s355 = sphi 0, %s359
                  %p356 = scmp.ge.s32.totalorder %s355, 1
                  %s360 = sphi %s239, %s239
                  %s361 = sphi %s232, %s232
                $region72: #{generator_forward.8} parent=68 // loop_header_branch
                  %358 = sbr.rel (%p356) target = $region76
                $region73: #{generator_forward.8} parent=68 // loop_body
                  _
                $region74: #{generator_forward.8} parent=68 // loop_footer
                  %s359 = sadd.s32 1, %s355
                $region75: #{generator_forward.8} parent=68 // loop_footer_branch
                  %354 = sbr.rel target = $region71
                $region76: #{generator_forward.8} parent=68 // loop_exit
                  _
                %s363 = ssub.s32 16, 1
                loop: start=0, step=1, limit=1
                $region77: #{generator_forward.8} parent=68 // loop_pre_header
                  _
                $region78: #{generator_forward.8} parent=68 // loop_header
                  %s365 = sphi 0, %s369
                  %p366 = scmp.ge.s32.totalorder %s365, 1
                  %s370 = sphi %s239, %s239
                  %s371 = sphi %s232, %s232
                $region79: #{generator_forward.8} parent=68 // loop_header_branch
                  %368 = sbr.rel (%p366) target = $region83
                $region80: #{generator_forward.8} parent=68 // loop_body
                  %v372 = vld [vmem:[%s370] sm:%s363]
                  %373 = vst [vmem:[%s371] sm:%s363] %v372
                  %v374 = vld [vmem:[%s370 + $0x8] sm:%s363]
                  %375 = vst [vmem:[%s371 + $0x4] sm:%s363] %v374
                  %v376 = vld [vmem:[%s370 + $0x10] sm:%s363]
                  %377 = vst [vmem:[%s371 + $0x8] sm:%s363] %v376
                  %v378 = vld [vmem:[%s370 + $0x18] sm:%s363]
                  %379 = vst [vmem:[%s371 + $0xc] sm:%s363] %v378
                  %v380 = vld [vmem:[%s370 + $0x20] sm:%s363]
                  %381 = vst [vmem:[%s371 + $0x10] sm:%s363] %v380
                  %v382 = vld [vmem:[%s370 + $0x28] sm:%s363]
                  %383 = vst [vmem:[%s371 + $0x14] sm:%s363] %v382
                  %v384 = vld [vmem:[%s370 + $0x30] sm:%s363]
                  %385 = vst [vmem:[%s371 + $0x18] sm:%s363] %v384
                  %v386 = vld [vmem:[%s370 + $0x38] sm:%s363]
                  %387 = vst [vmem:[%s371 + $0x1c] sm:%s363] %v386
                  %v388 = vld [vmem:[%s370 + $0x40] sm:%s363]
                  %389 = vst [vmem:[%s371 + $0x20] sm:%s363] %v388
                  %v390 = vld [vmem:[%s370 + $0x48] sm:%s363]
                  %391 = vst [vmem:[%s371 + $0x24] sm:%s363] %v390
                  %v392 = vld [vmem:[%s370 + $0x50] sm:%s363]
                  %393 = vst [vmem:[%s371 + $0x28] sm:%s363] %v392
                  %v394 = vld [vmem:[%s370 + $0x58] sm:%s363]
                  %395 = vst [vmem:[%s371 + $0x2c] sm:%s363] %v394
                  %v396 = vld [vmem:[%s370 + $0x60] sm:%s363]
                  %397 = vst [vmem:[%s371 + $0x30] sm:%s363] %v396
                  %v398 = vld [vmem:[%s370 + $0x68] sm:%s363]
                  %399 = vst [vmem:[%s371 + $0x34] sm:%s363] %v398
                  %v400 = vld [vmem:[%s370 + $0x70] sm:%s363]
                  %401 = vst [vmem:[%s371 + $0x38] sm:%s363] %v400
                  %v402 = vld [vmem:[%s370 + $0x78] sm:%s363]
                  %403 = vst [vmem:[%s371 + $0x3c] sm:%s363] %v402
                  %v404 = vld [vmem:[%s370 + $0x80] sm:%s363]
                  %405 = vst [vmem:[%s371 + $0x40] sm:%s363] %v404
                  %v406 = vld [vmem:[%s370 + $0x88] sm:%s363]
                  %407 = vst [vmem:[%s371 + $0x44] sm:%s363] %v406
                  %v408 = vld [vmem:[%s370 + $0x90] sm:%s363]
                  %409 = vst [vmem:[%s371 + $0x48] sm:%s363] %v408
                  %v410 = vld [vmem:[%s370 + $0x98] sm:%s363]
                  %411 = vst [vmem:[%s371 + $0x4c] sm:%s363] %v410
                  %v412 = vld [vmem:[%s370 + $0xa0] sm:%s363]
                  %413 = vst [vmem:[%s371 + $0x50] sm:%s363] %v412
                  %v414 = vld [vmem:[%s370 + $0xa8] sm:%s363]
                  %415 = vst [vmem:[%s371 + $0x54] sm:%s363] %v414
                  %v416 = vld [vmem:[%s370 + $0xb0] sm:%s363]
                  %417 = vst [vmem:[%s371 + $0x58] sm:%s363] %v416
                  %v418 = vld [vmem:[%s370 + $0xb8] sm:%s363]
                  %419 = vst [vmem:[%s371 + $0x5c] sm:%s363] %v418
                  %v420 = vld [vmem:[%s370 + $0xc0] sm:%s363]
                  %421 = vst [vmem:[%s371 + $0x60] sm:%s363] %v420
                  %v422 = vld [vmem:[%s370 + $0xc8] sm:%s363]
                  %423 = vst [vmem:[%s371 + $0x64] sm:%s363] %v422
                  %v424 = vld [vmem:[%s370 + $0xd0] sm:%s363]
                  %425 = vst [vmem:[%s371 + $0x68] sm:%s363] %v424
                  %v426 = vld [vmem:[%s370 + $0xd8] sm:%s363]
                  %427 = vst [vmem:[%s371 + $0x6c] sm:%s363] %v426
                  %v428 = vld [vmem:[%s370 + $0xe0] sm:%s363]
                  %429 = vst [vmem:[%s371 + $0x70] sm:%s363] %v428
                  %v430 = vld [vmem:[%s370 + $0xe8] sm:%s363]
                  %431 = vst [vmem:[%s371 + $0x74] sm:%s363] %v430
                  %v432 = vld [vmem:[%s370 + $0xf0] sm:%s363]
                  %433 = vst [vmem:[%s371 + $0x78] sm:%s363] %v432
                  %v434 = vld [vmem:[%s370 + $0xf8] sm:%s363]
                  %435 = vst [vmem:[%s371 + $0x7c] sm:%s363] %v434
                  %v436 = vld [vmem:[%s370 + $0x100] sm:%s363]
                  %437 = vst [vmem:[%s371 + $0x80] sm:%s363] %v436
                  %v438 = vld [vmem:[%s370 + $0x108] sm:%s363]
                  %439 = vst [vmem:[%s371 + $0x84] sm:%s363] %v438
                  %v440 = vld [vmem:[%s370 + $0x110] sm:%s363]
                  %441 = vst [vmem:[%s371 + $0x88] sm:%s363] %v440
                  %v442 = vld [vmem:[%s370 + $0x118] sm:%s363]
                  %443 = vst [vmem:[%s371 + $0x8c] sm:%s363] %v442
                  %v444 = vld [vmem:[%s370 + $0x120] sm:%s363]
                  %445 = vst [vmem:[%s371 + $0x90] sm:%s363] %v444
                  %v446 = vld [vmem:[%s370 + $0x128] sm:%s363]
                  %447 = vst [vmem:[%s371 + $0x94] sm:%s363] %v446
                  %v448 = vld [vmem:[%s370 + $0x130] sm:%s363]
                  %449 = vst [vmem:[%s371 + $0x98] sm:%s363] %v448
                  %v450 = vld [vmem:[%s370 + $0x138] sm:%s363]
                  %451 = vst [vmem:[%s371 + $0x9c] sm:%s363] %v450
                  %v452 = vld [vmem:[%s370 + $0x140] sm:%s363]
                  %453 = vst [vmem:[%s371 + $0xa0] sm:%s363] %v452
                  %v454 = vld [vmem:[%s370 + $0x148] sm:%s363]
                  %455 = vst [vmem:[%s371 + $0xa4] sm:%s363] %v454
                  %v456 = vld [vmem:[%s370 + $0x150] sm:%s363]
                  %457 = vst [vmem:[%s371 + $0xa8] sm:%s363] %v456
                  %v458 = vld [vmem:[%s370 + $0x158] sm:%s363]
                  %459 = vst [vmem:[%s371 + $0xac] sm:%s363] %v458
                  %v460 = vld [vmem:[%s370 + $0x160] sm:%s363]
                  %461 = vst [vmem:[%s371 + $0xb0] sm:%s363] %v460
                  %v462 = vld [vmem:[%s370 + $0x168] sm:%s363]
                  %463 = vst [vmem:[%s371 + $0xb4] sm:%s363] %v462
                  %v464 = vld [vmem:[%s370 + $0x170] sm:%s363]
                  %465 = vst [vmem:[%s371 + $0xb8] sm:%s363] %v464
                  %v466 = vld [vmem:[%s370 + $0x178] sm:%s363]
                  %467 = vst [vmem:[%s371 + $0xbc] sm:%s363] %v466
                $region81: #{generator_forward.8} parent=68 // loop_footer
                  %s369 = sadd.s32 1, %s365
                $region82: #{generator_forward.8} parent=68 // loop_footer_branch
                  %364 = sbr.rel target = $region78
                $region83: #{generator_forward.8} parent=68 // loop_exit
                  _
              $region69: #{generator_forward.8} parent=53 // pred_fallthru
                _
            $region54: #{generator_forward.8} parent=49 // pred_fallthru
              _
            // Predicated region
            $region55: #{generator_forward.8} parent=49 // pred_check
              _
            $region56: #{generator_forward.8} parent=49 // pred_check_branch
              %245 = sbr.rel (0) target = $region58
            $region57: #{generator_forward.8} parent=49 // pred_region
              %s247 = ssub.s32 16, 1
              loop: start=0, step=1, limit=1
              $region59: #{generator_forward.8} parent=57 // loop_pre_header
                _
              $region60: #{generator_forward.8} parent=57 // loop_header
                %s249 = sphi 0, %s253
                %p250 = scmp.ge.s32.totalorder %s249, 1
                %s254 = sphi %s239, %s239
                %s255 = sphi %s232, %s232
              $region61: #{generator_forward.8} parent=57 // loop_header_branch
                %252 = sbr.rel (%p250) target = $region65
              $region62: #{generator_forward.8} parent=57 // loop_body
                %v256 = vld [vmem:[%s254] sm:%s247]
                %257 = vst [vmem:[%s255] sm:%s247] %v256
                %v258 = vld [vmem:[%s254 + $0x8] sm:%s247]
                %259 = vst [vmem:[%s255 + $0x4] sm:%s247] %v258
                %v260 = vld [vmem:[%s254 + $0x10] sm:%s247]
                %261 = vst [vmem:[%s255 + $0x8] sm:%s247] %v260
                %v262 = vld [vmem:[%s254 + $0x18] sm:%s247]
                %263 = vst [vmem:[%s255 + $0xc] sm:%s247] %v262
                %v264 = vld [vmem:[%s254 + $0x20] sm:%s247]
                %265 = vst [vmem:[%s255 + $0x10] sm:%s247] %v264
                %v266 = vld [vmem:[%s254 + $0x28] sm:%s247]
                %267 = vst [vmem:[%s255 + $0x14] sm:%s247] %v266
                %v268 = vld [vmem:[%s254 + $0x30] sm:%s247]
                %269 = vst [vmem:[%s255 + $0x18] sm:%s247] %v268
                %v270 = vld [vmem:[%s254 + $0x38] sm:%s247]
                %271 = vst [vmem:[%s255 + $0x1c] sm:%s247] %v270
                %v272 = vld [vmem:[%s254 + $0x40] sm:%s247]
                %273 = vst [vmem:[%s255 + $0x20] sm:%s247] %v272
                %v274 = vld [vmem:[%s254 + $0x48] sm:%s247]
                %275 = vst [vmem:[%s255 + $0x24] sm:%s247] %v274
                %v276 = vld [vmem:[%s254 + $0x50] sm:%s247]
                %277 = vst [vmem:[%s255 + $0x28] sm:%s247] %v276
                %v278 = vld [vmem:[%s254 + $0x58] sm:%s247]
                %279 = vst [vmem:[%s255 + $0x2c] sm:%s247] %v278
                %v280 = vld [vmem:[%s254 + $0x60] sm:%s247]
                %281 = vst [vmem:[%s255 + $0x30] sm:%s247] %v280
                %v282 = vld [vmem:[%s254 + $0x68] sm:%s247]
                %283 = vst [vmem:[%s255 + $0x34] sm:%s247] %v282
                %v284 = vld [vmem:[%s254 + $0x70] sm:%s247]
                %285 = vst [vmem:[%s255 + $0x38] sm:%s247] %v284
                %v286 = vld [vmem:[%s254 + $0x78] sm:%s247]
                %287 = vst [vmem:[%s255 + $0x3c] sm:%s247] %v286
                %v288 = vld [vmem:[%s254 + $0x80] sm:%s247]
                %289 = vst [vmem:[%s255 + $0x40] sm:%s247] %v288
                %v290 = vld [vmem:[%s254 + $0x88] sm:%s247]
                %291 = vst [vmem:[%s255 + $0x44] sm:%s247] %v290
                %v292 = vld [vmem:[%s254 + $0x90] sm:%s247]
                %293 = vst [vmem:[%s255 + $0x48] sm:%s247] %v292
                %v294 = vld [vmem:[%s254 + $0x98] sm:%s247]
                %295 = vst [vmem:[%s255 + $0x4c] sm:%s247] %v294
                %v296 = vld [vmem:[%s254 + $0xa0] sm:%s247]
                %297 = vst [vmem:[%s255 + $0x50] sm:%s247] %v296
                %v298 = vld [vmem:[%s254 + $0xa8] sm:%s247]
                %299 = vst [vmem:[%s255 + $0x54] sm:%s247] %v298
                %v300 = vld [vmem:[%s254 + $0xb0] sm:%s247]
                %301 = vst [vmem:[%s255 + $0x58] sm:%s247] %v300
                %v302 = vld [vmem:[%s254 + $0xb8] sm:%s247]
                %303 = vst [vmem:[%s255 + $0x5c] sm:%s247] %v302
                %v304 = vld [vmem:[%s254 + $0xc0] sm:%s247]
                %305 = vst [vmem:[%s255 + $0x60] sm:%s247] %v304
                %v306 = vld [vmem:[%s254 + $0xc8] sm:%s247]
                %307 = vst [vmem:[%s255 + $0x64] sm:%s247] %v306
                %v308 = vld [vmem:[%s254 + $0xd0] sm:%s247]
                %309 = vst [vmem:[%s255 + $0x68] sm:%s247] %v308
                %v310 = vld [vmem:[%s254 + $0xd8] sm:%s247]
                %311 = vst [vmem:[%s255 + $0x6c] sm:%s247] %v310
                %v312 = vld [vmem:[%s254 + $0xe0] sm:%s247]
                %313 = vst [vmem:[%s255 + $0x70] sm:%s247] %v312
                %v314 = vld [vmem:[%s254 + $0xe8] sm:%s247]
                %315 = vst [vmem:[%s255 + $0x74] sm:%s247] %v314
                %v316 = vld [vmem:[%s254 + $0xf0] sm:%s247]
                %317 = vst [vmem:[%s255 + $0x78] sm:%s247] %v316
                %v318 = vld [vmem:[%s254 + $0xf8] sm:%s247]
                %319 = vst [vmem:[%s255 + $0x7c] sm:%s247] %v318
                %v320 = vld [vmem:[%s254 + $0x100] sm:%s247]
                %321 = vst [vmem:[%s255 + $0x80] sm:%s247] %v320
                %v322 = vld [vmem:[%s254 + $0x108] sm:%s247]
                %323 = vst [vmem:[%s255 + $0x84] sm:%s247] %v322
                %v324 = vld [vmem:[%s254 + $0x110] sm:%s247]
                %325 = vst [vmem:[%s255 + $0x88] sm:%s247] %v324
                %v326 = vld [vmem:[%s254 + $0x118] sm:%s247]
                %327 = vst [vmem:[%s255 + $0x8c] sm:%s247] %v326
                %v328 = vld [vmem:[%s254 + $0x120] sm:%s247]
                %329 = vst [vmem:[%s255 + $0x90] sm:%s247] %v328
                %v330 = vld [vmem:[%s254 + $0x128] sm:%s247]
                %331 = vst [vmem:[%s255 + $0x94] sm:%s247] %v330
                %v332 = vld [vmem:[%s254 + $0x130] sm:%s247]
                %333 = vst [vmem:[%s255 + $0x98] sm:%s247] %v332
                %v334 = vld [vmem:[%s254 + $0x138] sm:%s247]
                %335 = vst [vmem:[%s255 + $0x9c] sm:%s247] %v334
                %v336 = vld [vmem:[%s254 + $0x140] sm:%s247]
                %337 = vst [vmem:[%s255 + $0xa0] sm:%s247] %v336
                %v338 = vld [vmem:[%s254 + $0x148] sm:%s247]
                %339 = vst [vmem:[%s255 + $0xa4] sm:%s247] %v338
                %v340 = vld [vmem:[%s254 + $0x150] sm:%s247]
                %341 = vst [vmem:[%s255 + $0xa8] sm:%s247] %v340
                %v342 = vld [vmem:[%s254 + $0x158] sm:%s247]
                %343 = vst [vmem:[%s255 + $0xac] sm:%s247] %v342
                %v344 = vld [vmem:[%s254 + $0x160] sm:%s247]
                %345 = vst [vmem:[%s255 + $0xb0] sm:%s247] %v344
                %v346 = vld [vmem:[%s254 + $0x168] sm:%s247]
                %347 = vst [vmem:[%s255 + $0xb4] sm:%s247] %v346
                %v348 = vld [vmem:[%s254 + $0x170] sm:%s247]
                %349 = vst [vmem:[%s255 + $0xb8] sm:%s247] %v348
                %v350 = vld [vmem:[%s254 + $0x178] sm:%s247]
                %351 = vst [vmem:[%s255 + $0xbc] sm:%s247] %v350
              $region63: #{generator_forward.8} parent=57 // loop_footer
                %s253 = sadd.s32 1, %s249
              $region64: #{generator_forward.8} parent=57 // loop_footer_branch
                %248 = sbr.rel target = $region60
              $region65: #{generator_forward.8} parent=57 // loop_exit
                _
            $region58: #{generator_forward.8} parent=49 // pred_fallthru
              _
          $region50: #{generator_forward.8} parent=45 // pred_fallthru
            _
          %468 = vnop
        $region46: #{generator_forward.8} parent=15 // pred_fallthru
          _
        // Predicated region
        $region84: #{generator_forward.8} parent=15 // pred_check
          %p469 = pneg %p115
        $region85: #{generator_forward.8} parent=15 // pred_check_branch
          %471 = sbr.rel (%p469) target = $region87
        $region86: #{generator_forward.8} parent=15 // pred_region
          %p472 = scmp.lt.s32.totalorder %s18, 1
          %s473 = scalar_select %p472, %s18, 1
          %s474 = scalar_lea.vmem %s2, %s473
        $region87: #{generator_forward.8} parent=15 // pred_fallthru
          _
      $region16: #{generator_forward.8} parent=5 // pred_fallthru
        _
      %p475 = scmp.le.s32.totalorder 1, %s9
      %p476 = scmp.lt.s32.totalorder %s9, 7
      %p477 = pnand %p475, %p476
      %p478 = pneg %p477
      // Predicated region
      $region88: #{generator_forward.8} parent=5 // pred_check
        _
      $region89: #{generator_forward.8} parent=5 // pred_check_branch
        %480 = sbr.rel (%p477) target = $region91
      $region90: #{generator_forward.8} parent=5 // pred_region
        %s481 = ssub.s32 %s9, 1
        %s482 = sand.u32 %s52, 1
        %s483 = sand.u32 %s52, 1
        %s484 = smul.addr %s483, 48
        %s485 = scalar_lea.vmem [#allocation3], %s484
        // Predicated region
        $region92: #{generator_forward.8} parent=90 // pred_check
          %p486 = pneg %p65
        $region93: #{generator_forward.8} parent=90 // pred_check_branch
          %488 = sbr.rel (%p486) target = $region95
        $region94: #{generator_forward.8} parent=90 // pred_region
          _
        $region95: #{generator_forward.8} parent=90 // pred_fallthru
          _
        %s489 = sand.u32 %s82, 1
        %s490 = sand.u32 %s82, 1
        %s491 = smul.addr %s490, 192
        %s492 = scalar_lea.vmem [#allocation4], %s491
        // Predicated region
        $region96: #{generator_forward.8} parent=90 // pred_check
          %p493 = pneg %p95
        $region97: #{generator_forward.8} parent=90 // pred_check_branch
          %495 = sbr.rel (%p493) target = $region99
        $region98: #{generator_forward.8} parent=90 // pred_region
          _
        $region99: #{generator_forward.8} parent=90 // pred_fallthru
          _
        %s496 = sand.u32 %s52, 1
        %s497 = sand.u32 %s52, 1
        %s498 = smul.addr %s497, 48
        %s499 = scalar_lea.vmem [#allocation3], %s498
        %p500 = pneg %p65
        %p501 = pneg %p62
        %s502 = sand.u32 %s82, 1
        %s503 = sand.u32 %s82, 1
        %s504 = smul.addr %s503, 192
        %s505 = scalar_lea.vmem [#allocation4], %s504
        %p506 = pneg %p95
        %p507 = pneg %p92
        %p508 = scmp.lt.s32.totalorder %s22, 1
        %s509 = scalar_select %p508, %s22, 1
        %s510 = scalar_lea.vmem %s2, %s509
        %p511 = pneg %p121
        %p512 = pneg %p118
        %p513 = pneg %p151
        %p514 = pneg %p148
        %s515 = sand.u32 %s138, 1
        %s516 = sand.u32 %s138, 1
        %s517 = smul.addr %s516, 16
        %s518 = scalar_lea.vmem [#allocation5], %s517
        %s519 = smul.u32 4, %s21
        %s520 = smul.u32 3, %s23
        %s521 = smul.u32 48, %s23
        %p522 = scmp.lt.s32.totalorder %s22, 1
        %s523 = scalar_select %p522, %s22, 1
        %s524 = scalar_lea.vmem %s2, %s523
        %s525 = smul.u32 4, %s21
        %p526 = scmp.eq.s32.totalorder %s23, 0
        // Predicated region
        $region100: #{generator_forward.8} parent=90 // pred_check
          %p527 = pneg %p526
        $region101: #{generator_forward.8} parent=90 // pred_check_branch
          %529 = sbr.rel (%p527) target = $region103
        $region102: #{generator_forward.8} parent=90 // pred_region
          %530 = vst [vmem:[#allocation2] sm:$0xff] 0.0
          %531 = vst [vmem:[#allocation2 + $0x8] sm:$0xff] 0.0
          %532 = vst [vmem:[#allocation2 + $0x10] sm:$0xff] 0.0
          %533 = vst [vmem:[#allocation2 + $0x18] sm:$0xff] 0.0
        $region103: #{generator_forward.8} parent=90 // pred_fallthru
          _
        %v534 = vld [vmem:[#allocation2] sm:$0xff]
        %v535 = vld [vmem:[#allocation2 + $0x8] sm:$0xff]
        %v536 = vld [vmem:[#allocation2 + $0x10] sm:$0xff]
        %v537 = vld [vmem:[#allocation2 + $0x18] sm:$0xff]
        %v538 = vld [vmem:[%s485] sm:$0xff]
        %v539 = vld [vmem:[%s485 + $0x8] sm:$0xf]
        %v540 = vld [vmem:[%s485 + $0xc] sm:$0xff]
        %v541 = vld [vmem:[%s485 + $0x14] sm:$0xf]
        %v542 = vld [vmem:[%s485 + $0x18] sm:$0xff]
        %v543 = vld [vmem:[%s485 + $0x20] sm:$0xf]
        %v544 = vld [vmem:[%s485 + $0x24] sm:$0xff]
        %v545 = vld [vmem:[%s485 + $0x2c] sm:$0xf]
        %v546 = vld [vmem:[%s492] sm:$0xf]
        %v547 = vld [vmem:[%s492 + $0x4] sm:$0xf]
        %v548 = vld [vmem:[%s492 + $0x8] sm:$0xf]
        %v549 = vld [vmem:[%s492 + $0xc] sm:$0xf]
        %v550 = vld [vmem:[%s492 + $0x10] sm:$0xf]
        %v551 = vld [vmem:[%s492 + $0x14] sm:$0xf]
        %v552 = vld [vmem:[%s492 + $0x18] sm:$0xf]
        %v553 = vld [vmem:[%s492 + $0x1c] sm:$0xf]
        %v554 = vld [vmem:[%s492 + $0x20] sm:$0xf]
        %v555 = vld [vmem:[%s492 + $0x24] sm:$0xf]
        %v556 = vld [vmem:[%s492 + $0x28] sm:$0xf]
        %v557 = vld [vmem:[%s492 + $0x2c] sm:$0xf]
        %v558 = vld [vmem:[%s492 + $0x30] sm:$0xf]
        %v559 = vld [vmem:[%s492 + $0x34] sm:$0xf]
        %v560 = vld [vmem:[%s492 + $0x38] sm:$0xf]
        %v561 = vld [vmem:[%s492 + $0x3c] sm:$0xf]
        %v562 = vld [vmem:[%s492 + $0x40] sm:$0xf]
        %v563 = vld [vmem:[%s492 + $0x44] sm:$0xf]
        %v564 = vld [vmem:[%s492 + $0x48] sm:$0xf]
        %v565 = vld [vmem:[%s492 + $0x4c] sm:$0xf]
        %v566 = vld [vmem:[%s492 + $0x50] sm:$0xf]
        %v567 = vld [vmem:[%s492 + $0x54] sm:$0xf]
        %v568 = vld [vmem:[%s492 + $0x58] sm:$0xf]
        %v569 = vld [vmem:[%s492 + $0x5c] sm:$0xf]
        %v570 = vld [vmem:[%s492 + $0x60] sm:$0xf]
        %v571 = vld [vmem:[%s492 + $0x64] sm:$0xf]
        %v572 = vld [vmem:[%s492 + $0x68] sm:$0xf]
        %v573 = vld [vmem:[%s492 + $0x6c] sm:$0xf]
        %v574 = vld [vmem:[%s492 + $0x70] sm:$0xf]
        %v575 = vld [vmem:[%s492 + $0x74] sm:$0xf]
        %v576 = vld [vmem:[%s492 + $0x78] sm:$0xf]
        %v577 = vld [vmem:[%s492 + $0x7c] sm:$0xf]
        %v578 = vld [vmem:[%s492 + $0x80] sm:$0xf]
        %v579 = vld [vmem:[%s492 + $0x84] sm:$0xf]
        %v580 = vld [vmem:[%s492 + $0x88] sm:$0xf]
        %v581 = vld [vmem:[%s492 + $0x8c] sm:$0xf]
        %v582 = vld [vmem:[%s492 + $0x90] sm:$0xf]
        %v583 = vld [vmem:[%s492 + $0x94] sm:$0xf]
        %v584 = vld [vmem:[%s492 + $0x98] sm:$0xf]
        %v585 = vld [vmem:[%s492 + $0x9c] sm:$0xf]
        %v586 = vld [vmem:[%s492 + $0xa0] sm:$0xf]
        %v587 = vld [vmem:[%s492 + $0xa4] sm:$0xf]
        %v588 = vld [vmem:[%s492 + $0xa8] sm:$0xf]
        %v589 = vld [vmem:[%s492 + $0xac] sm:$0xf]
        %v590 = vld [vmem:[%s492 + $0xb0] sm:$0xf]
        %v591 = vld [vmem:[%s492 + $0xb4] sm:$0xf]
        %v592 = vld [vmem:[%s492 + $0xb8] sm:$0xf]
        %v593 = vld [vmem:[%s492 + $0xbc] sm:$0xf]
        %v602 = vunpack.c.l.b16 %v538
        %v603 = vunpack.c.h.b16 %v538
        %v604 = vunpack.c.l.b16 %v539
        %v605 = vunpack.c.l.b16 %v540
        %v606 = vunpack.c.h.b16 %v540
        %v607 = vunpack.c.l.b16 %v541
        %v608 = vunpack.c.l.b16 %v542
        %v609 = vunpack.c.h.b16 %v542
        %v610 = vunpack.c.l.b16 %v543
        %v611 = vunpack.c.l.b16 %v544
        %v612 = vunpack.c.h.b16 %v544
        %v613 = vunpack.c.l.b16 %v545
        %v614 = vpack.c.b16 %v605, %v602
        %v615 = vpack.c.b16 %v606, %v603
        %v616 = vpack.c.b16 %v607, %v604
        %v617 = vpack.c.b16 %v611, %v608
        %v618 = vpack.c.b16 %v612, %v609
        %v619 = vpack.c.b16 %v613, %v610
        %v674 = vunpack.c.l.b16 %v546
        %v675 = vunpack.c.l.b16 %v547
        %v676 = vunpack.c.l.b16 %v548
        %v677 = vunpack.c.l.b16 %v549
        %v678 = vunpack.c.l.b16 %v550
        %v679 = vunpack.c.l.b16 %v551
        %v680 = vunpack.c.l.b16 %v552
        %v681 = vunpack.c.l.b16 %v553
        %v682 = vunpack.c.l.b16 %v554
        %v683 = vunpack.c.l.b16 %v555
        %v684 = vunpack.c.l.b16 %v556
        %v685 = vunpack.c.l.b16 %v557
        %v686 = vunpack.c.l.b16 %v558
        %v687 = vunpack.c.l.b16 %v559
        %v688 = vunpack.c.l.b16 %v560
        %v689 = vunpack.c.l.b16 %v561
        %v690 = vunpack.c.l.b16 %v562
        %v691 = vunpack.c.l.b16 %v563
        %v692 = vunpack.c.l.b16 %v564
        %v693 = vunpack.c.l.b16 %v565
        %v694 = vunpack.c.l.b16 %v566
        %v695 = vunpack.c.l.b16 %v567
        %v696 = vunpack.c.l.b16 %v568
        %v697 = vunpack.c.l.b16 %v569
        %v698 = vunpack.c.l.b16 %v570
        %v699 = vunpack.c.l.b16 %v571
        %v700 = vunpack.c.l.b16 %v572
        %v701 = vunpack.c.l.b16 %v573
        %v702 = vunpack.c.l.b16 %v574
        %v703 = vunpack.c.l.b16 %v575
        %v704 = vunpack.c.l.b16 %v576
        %v705 = vunpack.c.l.b16 %v577
        %v706 = vunpack.c.l.b16 %v578
        %v707 = vunpack.c.l.b16 %v579
        %v708 = vunpack.c.l.b16 %v580
        %v709 = vunpack.c.l.b16 %v581
        %v710 = vunpack.c.l.b16 %v582
        %v711 = vunpack.c.l.b16 %v583
        %v712 = vunpack.c.l.b16 %v584
        %v713 = vunpack.c.l.b16 %v585
        %v714 = vunpack.c.l.b16 %v586
        %v715 = vunpack.c.l.b16 %v587
        %v716 = vunpack.c.l.b16 %v588
        %v717 = vunpack.c.l.b16 %v589
        %v718 = vunpack.c.l.b16 %v590
        %v719 = vunpack.c.l.b16 %v591
        %v720 = vunpack.c.l.b16 %v592
        %v721 = vunpack.c.l.b16 %v593
        %v722 = vpack.c.b16 %v675, %v674
        %v723 = vpack.c.b16 %v677, %v676
        %v724 = vpack.c.b16 %v679, %v678
        %v725 = vpack.c.b16 %v681, %v680
        %v726 = vpack.c.b16 %v683, %v682
        %v727 = vpack.c.b16 %v685, %v684
        %v728 = vpack.c.b16 %v687, %v686
        %v729 = vpack.c.b16 %v689, %v688
        %v730 = vpack.c.b16 %v691, %v690
        %v731 = vpack.c.b16 %v693, %v692
        %v732 = vpack.c.b16 %v695, %v694
        %v733 = vpack.c.b16 %v697, %v696
        %v734 = vpack.c.b16 %v699, %v698
        %v735 = vpack.c.b16 %v701, %v700
        %v736 = vpack.c.b16 %v703, %v702
        %v737 = vpack.c.b16 %v705, %v704
        %v738 = vpack.c.b16 %v707, %v706
        %v739 = vpack.c.b16 %v709, %v708
        %v740 = vpack.c.b16 %v711, %v710
        %v741 = vpack.c.b16 %v713, %v712
        %v742 = vpack.c.b16 %v715, %v714
        %v743 = vpack.c.b16 %v717, %v716
        %v744 = vpack.c.b16 %v719, %v718
        %v745 = vpack.c.b16 %v721, %v720
        %770 = vmatpush.bf16.msra.mxu0 %v729
        %771 = vmatpush.bf16.msra.mxu0 %v728
        %772 = vmatpush.bf16.msra.mxu0 %v727
        %773 = vmatpush.bf16.msra.mxu0 %v726
        %774 = vmatpush.bf16.msra.mxu0 %v725
        %775 = vmatpush.bf16.msra.mxu0 %v724
        %776 = vmatpush.bf16.msra.mxu0 %v723
        %777 = vmatpush.bf16.msra.mxu0 %v722
        %778 = vmatmul.bf16.gmra.mxu0 %v614
        %v779 = vpop.f32.mrf.mxu0
        %v780 = vadd.f32 0.0, %v779
        %v781 = vpop.f32.mrf.mxu0
        %v782 = vadd.f32 0.0, %v781
        %783 = vmatmul.bf16.gmra.mxu0 %v617
        %v784 = vpop.f32.mrf.mxu0
        %v785 = vadd.f32 0.0, %v784
        %v786 = vpop.f32.mrf.mxu0
        %v787 = vadd.f32 0.0, %v786
        %788 = vdwg.mxu0
        %789 = vmatpush.bf16.msra.mxu0 %v737
        %790 = vmatpush.bf16.msra.mxu0 %v736
        %791 = vmatpush.bf16.msra.mxu0 %v735
        %792 = vmatpush.bf16.msra.mxu0 %v734
        %793 = vmatpush.bf16.msra.mxu0 %v733
        %794 = vmatpush.bf16.msra.mxu0 %v732
        %795 = vmatpush.bf16.msra.mxu0 %v731
        %796 = vmatpush.bf16.msra.mxu0 %v730
        %797 = vmatmul.bf16.gmra.mxu0 %v615
        %v798 = vpop.f32.mrf.mxu0
        %v799 = vadd.f32 %v780, %v798
        %v800 = vpop.f32.mrf.mxu0
        %v801 = vadd.f32 %v782, %v800
        %802 = vmatmul.bf16.gmra.mxu0 %v618
        %v803 = vpop.f32.mrf.mxu0
        %v804 = vadd.f32 %v785, %v803
        %v805 = vpop.f32.mrf.mxu0
        %v806 = vadd.f32 %v787, %v805
        %807 = vdwg.mxu0
        %808 = vmatpush.bf16.msra.mxu0 %v745
        %809 = vmatpush.bf16.msra.mxu0 %v744
        %810 = vmatpush.bf16.msra.mxu0 %v743
        %811 = vmatpush.bf16.msra.mxu0 %v742
        %812 = vmatpush.bf16.msra.mxu0 %v741
        %813 = vmatpush.bf16.msra.mxu0 %v740
        %814 = vmatpush.bf16.msra.mxu0 %v739
        %815 = vmatpush.bf16.msra.mxu0 %v738
        %816 = vmatmul.bf16.gmra.mxu0 %v616
        %v817 = vpop.f32.mrf.mxu0
        %v818 = vadd.f32 %v799, %v817
        %v819 = vpop.f32.mrf.mxu0
        %v820 = vadd.f32 %v801, %v819
        %821 = vmatmul.bf16.gmra.mxu0 %v619
        %v822 = vpop.f32.mrf.mxu0
        %v823 = vadd.f32 %v804, %v822
        %v824 = vpop.f32.mrf.mxu0
        %v825 = vadd.f32 %v806, %v824
        %826 = vdwg.mxu0
        %v827 = vadd.f32 %v534, %v818
        %v828 = vadd.f32 %v535, %v820
        %v829 = vadd.f32 %v536, %v823
        %v830 = vadd.f32 %v537, %v825
        %831 = vst [vmem:[#allocation2] sm:$0xff] %v827
        %832 = vst [vmem:[#allocation2 + $0x8] sm:$0xff] %v828
        %833 = vst [vmem:[#allocation2 + $0x10] sm:$0xff] %v829
        %834 = vst [vmem:[#allocation2 + $0x18] sm:$0xff] %v830
        %p835 = scmp.eq.s32.totalorder %s23, 2
        // Predicated region
        $region104: #{generator_forward.8} parent=90 // pred_check
          %p836 = pneg %p835
        $region105: #{generator_forward.8} parent=90 // pred_check_branch
          %838 = sbr.rel (%p836) target = $region107
        $region106: #{generator_forward.8} parent=90 // pred_region
          %v839 = vld [vmem:[#allocation2] sm:$0xff]
          %v840 = vld [vmem:[#allocation2 + $0x8] sm:$0xff]
          %v841 = vld [vmem:[#allocation2 + $0x10] sm:$0xff]
          %v842 = vld [vmem:[#allocation2 + $0x18] sm:$0xff]
          %v843 = vld [vmem:[%s524] sm:$0x1]
          %v845 = vperm.slane %v843, 0
          %v847 = vadd.f32 %v839, %v845
          %v848 = vadd.f32 %v840, %v845
          %v849 = vadd.f32 %v841, %v845
          %v850 = vadd.f32 %v842, %v845
          %v851 = vmax.f32 %v847, 0.0
          %v852 = vmax.f32 %v848, 0.0
          %v853 = vmax.f32 %v849, 0.0
          %v854 = vmax.f32 %v850, 0.0
          %v855 = vpack.c.bf16 %v851, %v851
          %v856 = vpack.c.bf16 %v852, %v852
          %v857 = vpack.c.bf16 %v853, %v853
          %v858 = vpack.c.bf16 %v854, %v854
          %859 = vst [vmem:[%s518] sm:$0xf] %v855
          %860 = vst [vmem:[%s518 + $0x4] sm:$0xf] %v856
          %861 = vst [vmem:[%s518 + $0x8] sm:$0xf] %v857
          %862 = vst [vmem:[%s518 + $0xc] sm:$0xf] %v858
        $region107: #{generator_forward.8} parent=90 // pred_fallthru
          _
        %s863 = sand.u32 %s138, 1
        %s864 = sand.u32 %s138, 1
        %s865 = smul.addr %s864, 16
        %s866 = scalar_lea.vmem [#allocation5], %s865
        // Predicated region
        $region108: #{generator_forward.8} parent=90 // pred_check
          %p867 = pneg %p148
        $region109: #{generator_forward.8} parent=90 // pred_check_branch
          %869 = sbr.rel (%p867) target = $region111
        $region110: #{generator_forward.8} parent=90 // pred_region
          %s870 = smul.u32 4, %s21
          %s871 = smul.addr %s870, 2
          %s872 = sadd.s32 %s22, %s871
          %s873 = smul.addr %s20, 8
          %s874 = sadd.s32 %s872, %s873
          %s875 = smul.addr %s874, 4
          %s876 = scalar_lea.vmem %s3, %s875
          // Predicated region
          $region112: #{generator_forward.8} parent=110 // pred_check
            _
          $region113: #{generator_forward.8} parent=110 // pred_check_branch
            %878 = sbr.rel (0) target = $region115
          $region114: #{generator_forward.8} parent=110 // pred_region
            // Predicated region
            $region116: #{generator_forward.8} parent=114 // pred_check
              _
            $region117: #{generator_forward.8} parent=114 // pred_check_branch
              %880 = sbr.rel target = $region119
            $region118: #{generator_forward.8} parent=114 // pred_region
              // Predicated region
              $region131: #{generator_forward.8} parent=118 // pred_check
                _
              $region132: #{generator_forward.8} parent=118 // pred_check_branch
                %902 = sbr.rel (0) target = $region134
              $region133: #{generator_forward.8} parent=118 // pred_region
                loop: start=0, step=1, limit=1
                $region135: #{generator_forward.8} parent=133 // loop_pre_header
                  _
                $region136: #{generator_forward.8} parent=133 // loop_header
                  %s904 = sphi 0, %s908
                  %p905 = scmp.ge.s32.totalorder %s904, 1
                  %s909 = sphi %s866, %s866
                  %s910 = sphi %s876, %s876
                $region137: #{generator_forward.8} parent=133 // loop_header_branch
                  %907 = sbr.rel (%p905) target = $region141
                $region138: #{generator_forward.8} parent=133 // loop_body
                  _
                $region139: #{generator_forward.8} parent=133 // loop_footer
                  %s908 = sadd.s32 1, %s904
                $region140: #{generator_forward.8} parent=133 // loop_footer_branch
                  %903 = sbr.rel target = $region136
                $region141: #{generator_forward.8} parent=133 // loop_exit
                  _
                %s912 = ssub.s32 16, 1
                loop: start=0, step=1, limit=1
                $region142: #{generator_forward.8} parent=133 // loop_pre_header
                  _
                $region143: #{generator_forward.8} parent=133 // loop_header
                  %s914 = sphi 0, %s918
                  %p915 = scmp.ge.s32.totalorder %s914, 1
                  %s919 = sphi %s866, %s866
                  %s920 = sphi %s876, %s876
                $region144: #{generator_forward.8} parent=133 // loop_header_branch
                  %917 = sbr.rel (%p915) target = $region148
                $region145: #{generator_forward.8} parent=133 // loop_body
                  %v921 = vld [vmem:[%s919] sm:%s912]
                  %922 = vst [vmem:[%s920] sm:%s912] %v921
                  %v923 = vld [vmem:[%s919 + $0x4] sm:%s912]
                  %924 = vst [vmem:[%s920 + $0x8] sm:%s912] %v923
                  %v925 = vld [vmem:[%s919 + $0x8] sm:%s912]
                  %926 = vst [vmem:[%s920 + $0x10] sm:%s912] %v925
                  %v927 = vld [vmem:[%s919 + $0xc] sm:%s912]
                  %928 = vst [vmem:[%s920 + $0x18] sm:%s912] %v927
                $region146: #{generator_forward.8} parent=133 // loop_footer
                  %s918 = sadd.s32 1, %s914
                $region147: #{generator_forward.8} parent=133 // loop_footer_branch
                  %913 = sbr.rel target = $region143
                $region148: #{generator_forward.8} parent=133 // loop_exit
                  _
              $region134: #{generator_forward.8} parent=118 // pred_fallthru
                _
            $region119: #{generator_forward.8} parent=114 // pred_fallthru
              _
            // Predicated region
            $region120: #{generator_forward.8} parent=114 // pred_check
              _
            $region121: #{generator_forward.8} parent=114 // pred_check_branch
              %882 = sbr.rel (0) target = $region123
            $region122: #{generator_forward.8} parent=114 // pred_region
              %s884 = ssub.s32 16, 1
              loop: start=0, step=1, limit=1
              $region124: #{generator_forward.8} parent=122 // loop_pre_header
                _
              $region125: #{generator_forward.8} parent=122 // loop_header
                %s886 = sphi 0, %s890
                %p887 = scmp.ge.s32.totalorder %s886, 1
                %s891 = sphi %s866, %s866
                %s892 = sphi %s876, %s876
              $region126: #{generator_forward.8} parent=122 // loop_header_branch
                %889 = sbr.rel (%p887) target = $region130
              $region127: #{generator_forward.8} parent=122 // loop_body
                %v893 = vld [vmem:[%s891] sm:%s884]
                %894 = vst [vmem:[%s892] sm:%s884] %v893
                %v895 = vld [vmem:[%s891 + $0x4] sm:%s884]
                %896 = vst [vmem:[%s892 + $0x8] sm:%s884] %v895
                %v897 = vld [vmem:[%s891 + $0x8] sm:%s884]
                %898 = vst [vmem:[%s892 + $0x10] sm:%s884] %v897
                %v899 = vld [vmem:[%s891 + $0xc] sm:%s884]
                %900 = vst [vmem:[%s892 + $0x18] sm:%s884] %v899
              $region128: #{generator_forward.8} parent=122 // loop_footer
                %s890 = sadd.s32 1, %s886
              $region129: #{generator_forward.8} parent=122 // loop_footer_branch
                %885 = sbr.rel target = $region125
              $region130: #{generator_forward.8} parent=122 // loop_exit
                _
            $region123: #{generator_forward.8} parent=114 // pred_fallthru
              _
          $region115: #{generator_forward.8} parent=110 // pred_fallthru
            _
          %929 = vnop
        $region111: #{generator_forward.8} parent=90 // pred_fallthru
          _
      $region91: #{generator_forward.8} parent=5 // pred_fallthru
        _
      %p930 = scmp.le.s32.totalorder 2, %s9
      // Predicated region
      $region149: #{generator_forward.8} parent=5 // pred_check
        %p931 = pneg %p930
      $region150: #{generator_forward.8} parent=5 // pred_check_branch
        %933 = sbr.rel (%p931) target = $region152
      $region151: #{generator_forward.8} parent=5 // pred_region
        %s934 = ssub.s32 %s9, 2
        // Predicated region
        $region153: #{generator_forward.8} parent=151 // pred_check
          %p935 = pneg %p154
        $region154: #{generator_forward.8} parent=151 // pred_check_branch
          %937 = sbr.rel (%p935) target = $region156
        $region155: #{generator_forward.8} parent=151 // pred_region
          %s938 = sand.u32 %s139, 1
          %s939 = sand.u32 %s139, 1
          %s940 = smul.addr %s939, 16
          %s941 = scalar_lea.vmem [#allocation5], %s940
        $region156: #{generator_forward.8} parent=151 // pred_fallthru
          _
      $region152: #{generator_forward.8} parent=5 // pred_fallthru
        _
    $region6: #{generator_forward.8} parent=1 // loop_footer
      %s13 = sadd.s32 1, %s9
    $region7: #{generator_forward.8} parent=1 // loop_footer_branch
      %8 = sbr.rel target = $region3
    $region8: #{generator_forward.8} parent=1 // loop_exit
      _

// kernel: generator_forward.9
$region0: #{generator_forward.9}
  #allocation0 [shape = 'u32[]', space=smem, size = 0x4, offset = 0x4, fixed_abs, tag = 'smem constant byte address 0x4 - core index']
  #allocation1 [shape = 'u32[72,128]{1,0:T(1,128)}', space=vmem, size = 0x9000, scoped, tag = 'internal scratch']
  %s0 = inlined_call_operand.vmem [shape: bf16[4,32,1024], index: 0, kind: input, shape index: {}]
  %s1 = inlined_call_operand.vmem [shape: bf16[4,1024,128], index: 1, kind: input, shape index: {}]
  %s2 = inlined_call_operand.vmem [shape: f32[1,128], index: 2, kind: input, shape index: {}]
  %s3 = inlined_call_operand.vmem [shape: bf16[4,32,128], index: 3, kind: output, shape index: {}]
  %s4 = sld [smem:[#allocation0]]
  $region45: #{generator_forward.9} parent=0
    _
  %s6 = ssub.s32 1, %s4
  %s7 = scalar_select 0, %s6, %s4
  loop: start=0, step=1, limit=6
  $region2: #{generator_forward.9} parent=0 // loop_pre_header
    _
  $region3: #{generator_forward.9} parent=0 // loop_header
    %s9 = sphi 0, %s13
    %p10 = scmp.ge.s32.totalorder %s9, 6
    %s16 = sphi 0, %s35
    %s17 = sphi 0, %s31
    %s18 = sphi 0, %s27
    %s19 = sphi 0, %s16
    %s20 = sphi 0, %s17
    %s21 = sphi 0, %s18
    %s22 = sphi 0, %s19
    %s23 = sphi 0, %s20
    %s24 = sphi 0, %s21
    %s40 = sphi 0, %s42
    %s43 = sphi 0, %s40
    %s44 = sphi 0, %s43
    %s60 = sphi 0, %s44
    %s68 = sphi 0, %s70
    %s71 = sphi 0, %s68
    %s72 = sphi 0, %s71
    %s88 = sphi 0, %s72
    %s94 = sphi 0, %s96
    %s97 = sphi 0, %s94
    %s98 = sphi 0, %s97
    %s114 = sphi 0, %s98
    %s124 = sphi 0, %s126
    %s127 = sphi 0, %s124
    %s128 = sphi 0, %s127
    %s144 = sphi 0, %s128
  $region4: #{generator_forward.9} parent=0 // loop_header_branch
    %12 = sbr.rel (%p10) target = $region8
  $region5: #{generator_forward.9} parent=0 // loop_body
    %s14 = ssub.s32 %s9, 1
    %s15 = ssub.s32 %s9, 2
    %s25 = sadd.s32 1, %s18
    %p26 = scmp.ge.s32.totalorder %s25, 1
    %s27 = scalar_select %p26, 0, %s25
    %s28 = sadd.s32 1, %s17
    %s29 = scalar_select %p26, %s28, %s17
    %p30 = scmp.ge.s32.totalorder %s29, 1
    %s31 = scalar_select %p30, 0, %s29
    %s32 = sadd.s32 1, %s16
    %s33 = scalar_select %p30, %s32, %s16
    %p34 = scmp.ge.s32.totalorder %s33, 4
    %s35 = scalar_select %p34, 0, %s33
    %s36 = ssub.s32 %s16, %s35
    %s37 = ssub.s32 %s17, %s31
    %s38 = sor.u32 %s36, %s37
    %p39 = scmp.eq.s32.totalorder %s38, 0
    %s41 = sadd.s32 %s40, 1
    %s42 = scalar_select %p39, %s40, %s41
    %p45 = pneg %p39
    %p46 = scmp.eq.s32.totalorder %s9, 3
    %p47 = por %p45, %p46
    %p48 = scmp.ne.s32.totalorder %s40, %s43
    %p49 = scmp.eq.s32.totalorder %s9, 0
    %p50 = por %p48, %p49
    %p51 = scmp.ne.s32.totalorder %s40, %s43
    %p52 = scmp.eq.s32.totalorder %s14, 3
    %p53 = por %p51, %p52
    %p54 = scmp.ne.s32.totalorder %s43, %s44
    %p55 = scmp.eq.s32.totalorder %s14, 0
    %p56 = por %p54, %p55
    %p57 = scmp.ne.s32.totalorder %s43, %s44
    %p58 = scmp.eq.s32.totalorder %s15, 3
    %p59 = por %p57, %p58
    %p61 = scmp.ne.s32.totalorder %s44, %s60
    %p62 = scmp.eq.s32.totalorder %s15, 0
    %p63 = por %p61, %p62
    %s64 = ssub.s32 %s16, %s35
    %s65 = ssub.s32 %s18, %s27
    %s66 = sor.u32 %s64, %s65
    %p67 = scmp.eq.s32.totalorder %s66, 0
    %s69 = sadd.s32 %s68, 1
    %s70 = scalar_select %p67, %s68, %s69
    %p73 = pneg %p67
    %p74 = scmp.eq.s32.totalorder %s9, 3
    %p75 = por %p73, %p74
    %p76 = scmp.ne.s32.totalorder %s68, %s71
    %p77 = scmp.eq.s32.totalorder %s9, 0
    %p78 = por %p76, %p77
    %p79 = scmp.ne.s32.totalorder %s68, %s71
    %p80 = scmp.eq.s32.totalorder %s14, 3
    %p81 = por %p79, %p80
    %p82 = scmp.ne.s32.totalorder %s71, %s72
    %p83 = scmp.eq.s32.totalorder %s14, 0
    %p84 = por %p82, %p83
    %p85 = scmp.ne.s32.totalorder %s71, %s72
    %p86 = scmp.eq.s32.totalorder %s15, 3
    %p87 = por %p85, %p86
    %p89 = scmp.ne.s32.totalorder %s72, %s88
    %p90 = scmp.eq.s32.totalorder %s15, 0
    %p91 = por %p89, %p90
    %s92 = ssub.s32 %s18, %s27
    %p93 = scmp.eq.s32.totalorder %s92, 0
    %s95 = sadd.s32 %s94, 1
    %s96 = scalar_select %p93, %s94, %s95
    %p99 = pneg %p93
    %p100 = scmp.eq.s32.totalorder %s9, 3
    %p101 = por %p99, %p100
    %p102 = scmp.ne.s32.totalorder %s94, %s97
    %p103 = scmp.eq.s32.totalorder %s9, 0
    %p104 = por %p102, %p103
    %p105 = scmp.ne.s32.totalorder %s94, %s97
    %p106 = scmp.eq.s32.totalorder %s14, 3
    %p107 = por %p105, %p106
    %p108 = scmp.ne.s32.totalorder %s97, %s98
    %p109 = scmp.eq.s32.totalorder %s14, 0
    %p110 = por %p108, %p109
    %p111 = scmp.ne.s32.totalorder %s97, %s98
    %p112 = scmp.eq.s32.totalorder %s15, 3
    %p113 = por %p111, %p112
    %p115 = scmp.ne.s32.totalorder %s98, %s114
    %p116 = scmp.eq.s32.totalorder %s15, 0
    %p117 = por %p115, %p116
    %s118 = ssub.s32 %s16, %s35
    %s119 = ssub.s32 %s17, %s31
    %s120 = sor.u32 %s118, %s119
    %s121 = ssub.s32 %s18, %s27
    %s122 = sor.u32 %s120, %s121
    %p123 = scmp.eq.s32.totalorder %s122, 0
    %s125 = sadd.s32 %s124, 1
    %s126 = scalar_select %p123, %s124, %s125
    %p129 = pneg %p123
    %p130 = scmp.eq.s32.totalorder %s9, 3
    %p131 = por %p129, %p130
    %p132 = scmp.ne.s32.totalorder %s124, %s127
    %p133 = scmp.eq.s32.totalorder %s9, 0
    %p134 = por %p132, %p133
    %p135 = scmp.ne.s32.totalorder %s124, %s127
    %p136 = scmp.eq.s32.totalorder %s14, 3
    %p137 = por %p135, %p136
    %p138 = scmp.ne.s32.totalorder %s127, %s128
    %p139 = scmp.eq.s32.totalorder %s14, 0
    %p140 = por %p138, %p139
    %p141 = scmp.ne.s32.totalorder %s127, %s128
    %p142 = scmp.eq.s32.totalorder %s15, 3
    %p143 = por %p141, %p142
    %p145 = scmp.ne.s32.totalorder %s128, %s144
    %p146 = scmp.eq.s32.totalorder %s15, 0
    %p147 = por %p145, %p146
    %p148 = scmp.le.s32.totalorder 1, %s9
    %p149 = scmp.lt.s32.totalorder %s9, 5
    %p150 = pnand %p148, %p149
    %p151 = pneg %p150
    // Predicated region
    $region9: #{generator_forward.9} parent=5 // pred_check
      _
    $region10: #{generator_forward.9} parent=5 // pred_check_branch
      %153 = sbr.rel (%p150) target = $region12
    $region11: #{generator_forward.9} parent=5 // pred_region
      %s154 = ssub.s32 %s9, 1
      // Predicated region
      $region13: #{generator_forward.9} parent=11 // pred_check
        %p155 = pneg %p110
      $region14: #{generator_forward.9} parent=11 // pred_check_branch
        %157 = sbr.rel (%p155) target = $region16
      $region15: #{generator_forward.9} parent=11 // pred_region
        %p158 = scmp.lt.s32.totalorder %s21, 0
        %s159 = scalar_select %p158, %s21, 0
        %s160 = scalar_lea.vmem %s2, %s159
      $region16: #{generator_forward.9} parent=11 // pred_fallthru
        _
    $region12: #{generator_forward.9} parent=5 // pred_fallthru
      _
    %p161 = scmp.lt.s32.totalorder %s9, 4
    // Predicated region
    $region17: #{generator_forward.9} parent=5 // pred_check
      %p162 = pneg %p161
    $region18: #{generator_forward.9} parent=5 // pred_check_branch
      %164 = sbr.rel (%p162) target = $region20
    $region19: #{generator_forward.9} parent=5 // pred_region
      // Predicated region
      $region21: #{generator_forward.9} parent=19 // pred_check
        %p165 = pneg %p50
      $region22: #{generator_forward.9} parent=19 // pred_check_branch
        %167 = sbr.rel (%p165) target = $region24
      $region23: #{generator_forward.9} parent=19 // pred_region
        %s168 = smul.u32 4, %s17
        %p169 = scmp.lt.s32.totalorder %s16, 3
        %s170 = scalar_select %p169, %s16, 3
        %p171 = scmp.lt.s32.totalorder %s168, 3
        %s172 = scalar_select %p171, %s168, 3
        %s173 = smul.addr %s172, 8
        %s174 = smul.addr %s170, 32
        %s175 = sadd.s32 %s173, %s174
        %s176 = smul.addr %s175, 4
        %s177 = scalar_lea.vmem %s0, %s176
        %s178 = smul.u32 4, %s17
      $region24: #{generator_forward.9} parent=19 // pred_fallthru
        _
      // Predicated region
      $region25: #{generator_forward.9} parent=19 // pred_check
        %p179 = pneg %p78
      $region26: #{generator_forward.9} parent=19 // pred_check_branch
        %181 = sbr.rel (%p179) target = $region28
      $region27: #{generator_forward.9} parent=19 // pred_region
        %p182 = scmp.lt.s32.totalorder %s16, 3
        %s183 = scalar_select %p182, %s16, 3
        %p184 = scmp.lt.s32.totalorder %s18, 0
        %s185 = scalar_select %p184, %s18, 0
        %s186 = smul.addr %s183, 128
        %s187 = sadd.s32 %s185, %s186
        %s188 = smul.addr %s187, 4
        %s189 = scalar_lea.vmem %s1, %s188
      $region28: #{generator_forward.9} parent=19 // pred_fallthru
        _
    $region20: #{generator_forward.9} parent=5 // pred_fallthru
      _
    %p190 = scmp.le.s32.totalorder 1, %s9
    %p191 = scmp.lt.s32.totalorder %s9, 5
    %p192 = pnand %p190, %p191
    %p193 = pneg %p192
    // Predicated region
    $region29: #{generator_forward.9} parent=5 // pred_check
      _
    $region30: #{generator_forward.9} parent=5 // pred_check_branch
      %195 = sbr.rel (%p192) target = $region32
    $region31: #{generator_forward.9} parent=5 // pred_region
      %s196 = ssub.s32 %s9, 1
      %s197 = smul.u32 4, %s20
      %p198 = scmp.lt.s32.totalorder %s19, 3
      %s199 = scalar_select %p198, %s19, 3
      %p200 = scmp.lt.s32.totalorder %s197, 3
      %s201 = scalar_select %p200, %s197, 3
      %s202 = smul.addr %s201, 8
      %s203 = smul.addr %s199, 32
      %s204 = sadd.s32 %s202, %s203
      %s205 = smul.addr %s204, 4
      %s206 = scalar_lea.vmem %s0, %s205
      %p207 = pneg %p56
      %p208 = pneg %p53
      %p209 = scmp.lt.s32.totalorder %s19, 3
      %s210 = scalar_select %p209, %s19, 3
      %p211 = scmp.lt.s32.totalorder %s21, 0
      %s212 = scalar_select %p211, %s21, 0
      %s213 = smul.addr %s210, 128
      %s214 = sadd.s32 %s212, %s213
      %s215 = smul.addr %s214, 4
      %s216 = scalar_lea.vmem %s1, %s215
      %p217 = pneg %p84
      %p218 = pneg %p81
      %p219 = scmp.lt.s32.totalorder %s21, 0
      %s220 = scalar_select %p219, %s21, 0
      %s221 = scalar_lea.vmem %s2, %s220
      %p222 = pneg %p110
      %p223 = pneg %p107
      %p224 = pneg %p140
      %p225 = pneg %p137
      %s226 = smul.u32 4, %s20
      %p227 = scmp.lt.s32.totalorder %s19, 3
      %s228 = scalar_select %p227, %s19, 3
      %p229 = scmp.lt.s32.totalorder %s226, 3
      %s230 = scalar_select %p229, %s226, 3
      %p231 = scmp.lt.s32.totalorder %s21, 0
      %s232 = scalar_select %p231, %s21, 0
      %s233 = sadd.s32 %s232, %s230
      %s234 = smul.addr %s228, 4
      %s235 = sadd.s32 %s233, %s234
      %s236 = smul.addr %s235, 4
      %s237 = scalar_lea.vmem %s3, %s236
      %s238 = smul.u32 4, %s20
      %p239 = scmp.lt.s32.totalorder %s19, 3
      %s240 = scalar_select %p239, %s19, 3
      %p241 = scmp.lt.s32.totalorder %s238, 3
      %s242 = scalar_select %p241, %s238, 3
      %s243 = smul.addr %s242, 8
      %s244 = smul.addr %s240, 32
      %s245 = sadd.s32 %s243, %s244
      %s246 = smul.addr %s245, 4
      %s247 = scalar_lea.vmem %s0, %s246
      %s248 = smul.u32 4, %s20
      %p249 = scmp.lt.s32.totalorder %s19, 3
      %s250 = scalar_select %p249, %s19, 3
      %p251 = scmp.lt.s32.totalorder %s21, 0
      %s252 = scalar_select %p251, %s21, 0
      %s253 = smul.addr %s250, 128
      %s254 = sadd.s32 %s252, %s253
      %s255 = smul.addr %s254, 4
      %s256 = scalar_lea.vmem %s1, %s255
      %p257 = scmp.lt.s32.totalorder %s21, 0
      %s258 = scalar_select %p257, %s21, 0
      %s259 = scalar_lea.vmem %s2, %s258
      %s260 = smul.u32 4, %s20
      %p261 = scmp.lt.s32.totalorder %s19, 3
      %s262 = scalar_select %p261, %s19, 3
      %p263 = scmp.lt.s32.totalorder %s260, 3
      %s264 = scalar_select %p263, %s260, 3
      %p265 = scmp.lt.s32.totalorder %s21, 0
      %s266 = scalar_select %p265, %s21, 0
      %s267 = sadd.s32 %s266, %s264
      %s268 = smul.addr %s262, 4
      %s269 = sadd.s32 %s267, %s268
      %s270 = smul.addr %s269, 4
      %s271 = scalar_lea.vmem %s3, %s270
      %s272 = smul.u32 4, %s20
      %v273 = vld [vmem:[%s247] sm:$0xff]
      %v274 = vld [vmem:[%s247 + $0x8] sm:$0xff]
      %v275 = vld [vmem:[%s247 + $0x10] sm:$0xff]
      %v276 = vld [vmem:[%s247 + $0x18] sm:$0xff]
      %v277 = vld [vmem:[%s247 + $0x20] sm:$0xff]
      %v278 = vld [vmem:[%s247 + $0x28] sm:$0xff]
      %v279 = vld [vmem:[%s247 + $0x30] sm:$0xff]
      %v280 = vld [vmem:[%s247 + $0x38] sm:$0xff]
      %v281 = vld [vmem:[%s247 + $0x40] sm:$0xff]
      %v282 = vld [vmem:[%s247 + $0x48] sm:$0xff]
      %v283 = vld [vmem:[%s247 + $0x50] sm:$0xff]
      %v284 = vld [vmem:[%s247 + $0x58] sm:$0xff]
      %v285 = vld [vmem:[%s247 + $0x60] sm:$0xff]
      %v286 = vld [vmem:[%s247 + $0x68] sm:$0xff]
      %v287 = vld [vmem:[%s247 + $0x70] sm:$0xff]
      %v288 = vld [vmem:[%s247 + $0x78] sm:$0xff]
      %v289 = vld [vmem:[%s256] sm:$0xf]
      %v290 = vld [vmem:[%s256 + $0x4] sm:$0xf]
      %v291 = vld [vmem:[%s256 + $0x8] sm:$0xf]
      %v292 = vld [vmem:[%s256 + $0xc] sm:$0xf]
      %v293 = vld [vmem:[%s256 + $0x10] sm:$0xf]
      %v294 = vld [vmem:[%s256 + $0x14] sm:$0xf]
      %v295 = vld [vmem:[%s256 + $0x18] sm:$0xf]
      %v296 = vld [vmem:[%s256 + $0x1c] sm:$0xf]
      %v297 = vld [vmem:[%s256 + $0x20] sm:$0xf]
      %v298 = vld [vmem:[%s256 + $0x24] sm:$0xf]
      %v299 = vld [vmem:[%s256 + $0x28] sm:$0xf]
      %v300 = vld [vmem:[%s256 + $0x2c] sm:$0xf]
      %v301 = vld [vmem:[%s256 + $0x30] sm:$0xf]
      %v302 = vld [vmem:[%s256 + $0x34] sm:$0xf]
      %v303 = vld [vmem:[%s256 + $0x38] sm:$0xf]
      %v304 = vld [vmem:[%s256 + $0x3c] sm:$0xf]
      %v305 = vld [vmem:[%s256 + $0x40] sm:$0xf]
      %v306 = vld [vmem:[%s256 + $0x44] sm:$0xf]
      %v307 = vld [vmem:[%s256 + $0x48] sm:$0xf]
      %v308 = vld [vmem:[%s256 + $0x4c] sm:$0xf]
      %v309 = vld [vmem:[%s256 + $0x50] sm:$0xf]
      %v310 = vld [vmem:[%s256 + $0x54] sm:$0xf]
      %v311 = vld [vmem:[%s256 + $0x58] sm:$0xf]
      %v312 = vld [vmem:[%s256 + $0x5c] sm:$0xf]
      %v313 = vld [vmem:[%s256 + $0x60] sm:$0xf]
      %v314 = vld [vmem:[%s256 + $0x64] sm:$0xf]
      %v315 = vld [vmem:[%s256 + $0x68] sm:$0xf]
      %v316 = vld [vmem:[%s256 + $0x6c] sm:$0xf]
      %v317 = vld [vmem:[%s256 + $0x70] sm:$0xf]
      %v318 = vld [vmem:[%s256 + $0x74] sm:$0xf]
      %v319 = vld [vmem:[%s256 + $0x78] sm:$0xf]
      %v320 = vld [vmem:[%s256 + $0x7c] sm:$0xf]
      %v321 = vld [vmem:[%s256 + $0x80] sm:$0xf]
      %v322 = vld [vmem:[%s256 + $0x84] sm:$0xf]
      %v323 = vld [vmem:[%s256 + $0x88] sm:$0xf]
      %v324 = vld [vmem:[%s256 + $0x8c] sm:$0xf]
      %v325 = vld [vmem:[%s256 + $0x90] sm:$0xf]
      %v326 = vld [vmem:[%s256 + $0x94] sm:$0xf]
      %v327 = vld [vmem:[%s256 + $0x98] sm:$0xf]
      %v328 = vld [vmem:[%s256 + $0x9c] sm:$0xf]
      %v329 = vld [vmem:[%s256 + $0xa0] sm:$0xf]
      %v330 = vld [vmem:[%s256 + $0xa4] sm:$0xf]
      %v331 = vld [vmem:[%s256 + $0xa8] sm:$0xf]
      %v332 = vld [vmem:[%s256 + $0xac] sm:$0xf]
      %v333 = vld [vmem:[%s256 + $0xb0] sm:$0xf]
      %v334 = vld [vmem:[%s256 + $0xb4] sm:$0xf]
      %v335 = vld [vmem:[%s256 + $0xb8] sm:$0xf]
      %v336 = vld [vmem:[%s256 + $0xbc] sm:$0xf]
      %v337 = vld [vmem:[%s256 + $0xc0] sm:$0xf]
      %v338 = vld [vmem:[%s256 + $0xc4] sm:$0xf]
      %v339 = vld [vmem:[%s256 + $0xc8] sm:$0xf]
      %v340 = vld [vmem:[%s256 + $0xcc] sm:$0xf]
      %v341 = vld [vmem:[%s256 + $0xd0] sm:$0xf]
      %v342 = vld [vmem:[%s256 + $0xd4] sm:$0xf]
      %v343 = vld [vmem:[%s256 + $0xd8] sm:$0xf]
      %v344 = vld [vmem:[%s256 + $0xdc] sm:$0xf]
      %v345 = vld [vmem:[%s256 + $0xe0] sm:$0xf]
      %v346 = vld [vmem:[%s256 + $0xe4] sm:$0xf]
      %v347 = vld [vmem:[%s256 + $0xe8] sm:$0xf]
      %v348 = vld [vmem:[%s256 + $0xec] sm:$0xf]
      %v349 = vld [vmem:[%s256 + $0xf0] sm:$0xf]
      %v350 = vld [vmem:[%s256 + $0xf4] sm:$0xf]
      %v351 = vld [vmem:[%s256 + $0xf8] sm:$0xf]
      %v352 = vld [vmem:[%s256 + $0xfc] sm:$0xf]
      %v353 = vld [vmem:[%s256 + $0x100] sm:$0xf]
      %v354 = vld [vmem:[%s256 + $0x104] sm:$0xf]
      %v355 = vld [vmem:[%s256 + $0x108] sm:$0xf]
      %v356 = vld [vmem:[%s256 + $0x10c] sm:$0xf]
      %v357 = vld [vmem:[%s256 + $0x110] sm:$0xf]
      %v358 = vld [vmem:[%s256 + $0x114] sm:$0xf]
      %v359 = vld [vmem:[%s256 + $0x118] sm:$0xf]
      %v360 = vld [vmem:[%s256 + $0x11c] sm:$0xf]
      %v361 = vld [vmem:[%s256 + $0x120] sm:$0xf]
      %v362 = vld [vmem:[%s256 + $0x124] sm:$0xf]
      %v363 = vld [vmem:[%s256 + $0x128] sm:$0xf]
      %v364 = vld [vmem:[%s256 + $0x12c] sm:$0xf]
      %v365 = vld [vmem:[%s256 + $0x130] sm:$0xf]
      %v366 = vld [vmem:[%s256 + $0x134] sm:$0xf]
      %v367 = vld [vmem:[%s256 + $0x138] sm:$0xf]
      %v368 = vld [vmem:[%s256 + $0x13c] sm:$0xf]
      %v369 = vld [vmem:[%s256 + $0x140] sm:$0xf]
      %v370 = vld [vmem:[%s256 + $0x144] sm:$0xf]
      %v371 = vld [vmem:[%s256 + $0x148] sm:$0xf]
      %v372 = vld [vmem:[%s256 + $0x14c] sm:$0xf]
      %v373 = vld [vmem:[%s256 + $0x150] sm:$0xf]
      %v374 = vld [vmem:[%s256 + $0x154] sm:$0xf]
      %v375 = vld [vmem:[%s256 + $0x158] sm:$0xf]
      %v376 = vld [vmem:[%s256 + $0x15c] sm:$0xf]
      %v377 = vld [vmem:[%s256 + $0x160] sm:$0xf]
      %v378 = vld [vmem:[%s256 + $0x164] sm:$0xf]
      %v379 = vld [vmem:[%s256 + $0x168] sm:$0xf]
      %v380 = vld [vmem:[%s256 + $0x16c] sm:$0xf]
      %v381 = vld [vmem:[%s256 + $0x170] sm:$0xf]
      %v382 = vld [vmem:[%s256 + $0x174] sm:$0xf]
      %v383 = vld [vmem:[%s256 + $0x178] sm:$0xf]
      %v384 = vld [vmem:[%s256 + $0x17c] sm:$0xf]
      %v385 = vld [vmem:[%s256 + $0x180] sm:$0xf]
      %v386 = vld [vmem:[%s256 + $0x184] sm:$0xf]
      %v387 = vld [vmem:[%s256 + $0x188] sm:$0xf]
      %v388 = vld [vmem:[%s256 + $0x18c] sm:$0xf]
      %v389 = vld [vmem:[%s256 + $0x190] sm:$0xf]
      %v390 = vld [vmem:[%s256 + $0x194] sm:$0xf]
      %v391 = vld [vmem:[%s256 + $0x198] sm:$0xf]
      %v392 = vld [vmem:[%s256 + $0x19c] sm:$0xf]
      %v393 = vld [vmem:[%s256 + $0x1a0] sm:$0xf]
      %v394 = vld [vmem:[%s256 + $0x1a4] sm:$0xf]
      %v395 = vld [vmem:[%s256 + $0x1a8] sm:$0xf]
      %v396 = vld [vmem:[%s256 + $0x1ac] sm:$0xf]
      %v397 = vld [vmem:[%s256 + $0x1b0] sm:$0xf]
      %v398 = vld [vmem:[%s256 + $0x1b4] sm:$0xf]
      %v399 = vld [vmem:[%s256 + $0x1b8] sm:$0xf]
      %v400 = vld [vmem:[%s256 + $0x1bc] sm:$0xf]
      %v401 = vld [vmem:[%s256 + $0x1c0] sm:$0xf]
      %v402 = vld [vmem:[%s256 + $0x1c4] sm:$0xf]
      %v403 = vld [vmem:[%s256 + $0x1c8] sm:$0xf]
      %v404 = vld [vmem:[%s256 + $0x1cc] sm:$0xf]
      %v405 = vld [vmem:[%s256 + $0x1d0] sm:$0xf]
      %v406 = vld [vmem:[%s256 + $0x1d4] sm:$0xf]
      %v407 = vld [vmem:[%s256 + $0x1d8] sm:$0xf]
      %v408 = vld [vmem:[%s256 + $0x1dc] sm:$0xf]
      %v409 = vld [vmem:[%s256 + $0x1e0] sm:$0xf]
      %v410 = vld [vmem:[%s256 + $0x1e4] sm:$0xf]
      %v411 = vld [vmem:[%s256 + $0x1e8] sm:$0xf]
      %v412 = vld [vmem:[%s256 + $0x1ec] sm:$0xf]
      %v413 = vld [vmem:[%s256 + $0x1f0] sm:$0xf]
      %v414 = vld [vmem:[%s256 + $0x1f4] sm:$0xf]
      %v415 = vld [vmem:[%s256 + $0x1f8] sm:$0xf]
      %v416 = vld [vmem:[%s256 + $0x1fc] sm:$0xf]
      %v417 = vld [vmem:[%s259] sm:$0x1]
      %v419 = vperm.slane %v417, 0
      %v437 = vunpack.c.l.b16 %v273
      %v438 = vunpack.c.h.b16 %v273
      %v439 = vunpack.c.l.b16 %v274
      %v440 = vunpack.c.h.b16 %v274
      %v441 = vunpack.c.l.b16 %v275
      %v442 = vunpack.c.h.b16 %v275
      %v443 = vunpack.c.l.b16 %v276
      %v444 = vunpack.c.h.b16 %v276
      %v445 = vunpack.c.l.b16 %v277
      %v446 = vunpack.c.h.b16 %v277
      %v447 = vunpack.c.l.b16 %v278
      %v448 = vunpack.c.h.b16 %v278
      %v449 = vunpack.c.l.b16 %v279
      %v450 = vunpack.c.h.b16 %v279
      %v451 = vunpack.c.l.b16 %v280
      %v452 = vunpack.c.h.b16 %v280
      %v453 = vunpack.c.l.b16 %v281
      %v454 = vunpack.c.h.b16 %v281
      %v455 = vunpack.c.l.b16 %v282
      %v456 = vunpack.c.h.b16 %v282
      %v457 = vunpack.c.l.b16 %v283
      %v458 = vunpack.c.h.b16 %v283
      %v459 = vunpack.c.l.b16 %v284
      %v460 = vunpack.c.h.b16 %v284
      %v461 = vunpack.c.l.b16 %v285
      %v462 = vunpack.c.h.b16 %v285
      %v463 = vunpack.c.l.b16 %v286
      %v464 = vunpack.c.h.b16 %v286
      %v465 = vunpack.c.l.b16 %v287
      %v466 = vunpack.c.h.b16 %v287
      %v467 = vunpack.c.l.b16 %v288
      %v468 = vunpack.c.h.b16 %v288
      %v469 = vpack.c.b16 %v445, %v437
      %v470 = vpack.c.b16 %v446, %v438
      %v471 = vpack.c.b16 %v447, %v439
      %v472 = vpack.c.b16 %v448, %v440
      %v473 = vpack.c.b16 %v449, %v441
      %v474 = vpack.c.b16 %v450, %v442
      %v475 = vpack.c.b16 %v451, %v443
      %v476 = vpack.c.b16 %v452, %v444
      %v477 = vpack.c.b16 %v461, %v453
      %v478 = vpack.c.b16 %v462, %v454
      %v479 = vpack.c.b16 %v463, %v455
      %v480 = vpack.c.b16 %v464, %v456
      %v481 = vpack.c.b16 %v465, %v457
      %v482 = vpack.c.b16 %v466, %v458
      %v483 = vpack.c.b16 %v467, %v459
      %v484 = vpack.c.b16 %v468, %v460
      %v629 = vunpack.c.l.b16 %v289
      %v630 = vunpack.c.l.b16 %v290
      %v631 = vunpack.c.l.b16 %v291
      %v632 = vunpack.c.l.b16 %v292
      %v633 = vunpack.c.l.b16 %v293
      %v634 = vunpack.c.l.b16 %v294
      %v635 = vunpack.c.l.b16 %v295
      %v636 = vunpack.c.l.b16 %v296
      %v637 = vunpack.c.l.b16 %v297
      %v638 = vunpack.c.l.b16 %v298
      %v639 = vunpack.c.l.b16 %v299
      %v640 = vunpack.c.l.b16 %v300
      %v641 = vunpack.c.l.b16 %v301
      %v642 = vunpack.c.l.b16 %v302
      %v643 = vunpack.c.l.b16 %v303
      %v644 = vunpack.c.l.b16 %v304
      %v645 = vunpack.c.l.b16 %v305
      %v646 = vunpack.c.l.b16 %v306
      %v647 = vunpack.c.l.b16 %v307
      %v648 = vunpack.c.l.b16 %v308
      %v649 = vunpack.c.l.b16 %v309
      %v650 = vunpack.c.l.b16 %v310
      %v651 = vunpack.c.l.b16 %v311
      %v652 = vunpack.c.l.b16 %v312
      %v653 = vunpack.c.l.b16 %v313
      %v654 = vunpack.c.l.b16 %v314
      %v655 = vunpack.c.l.b16 %v315
      %v656 = vunpack.c.l.b16 %v316
      %v657 = vunpack.c.l.b16 %v317
      %v658 = vunpack.c.l.b16 %v318
      %v659 = vunpack.c.l.b16 %v319
      %v660 = vunpack.c.l.b16 %v320
      %v661 = vunpack.c.l.b16 %v321
      %v662 = vunpack.c.l.b16 %v322
      %v663 = vunpack.c.l.b16 %v323
      %v664 = vunpack.c.l.b16 %v324
      %v665 = vunpack.c.l.b16 %v325
      %v666 = vunpack.c.l.b16 %v326
      %v667 = vunpack.c.l.b16 %v327
      %v668 = vunpack.c.l.b16 %v328
      %v669 = vunpack.c.l.b16 %v329
      %v670 = vunpack.c.l.b16 %v330
      %v671 = vunpack.c.l.b16 %v331
      %v672 = vunpack.c.l.b16 %v332
      %v673 = vunpack.c.l.b16 %v333
      %v674 = vunpack.c.l.b16 %v334
      %v675 = vunpack.c.l.b16 %v335
      %v676 = vunpack.c.l.b16 %v336
      %v677 = vunpack.c.l.b16 %v337
      %v678 = vunpack.c.l.b16 %v338
      %v679 = vunpack.c.l.b16 %v339
      %v680 = vunpack.c.l.b16 %v340
      %v681 = vunpack.c.l.b16 %v341
      %v682 = vunpack.c.l.b16 %v342
      %v683 = vunpack.c.l.b16 %v343
      %v684 = vunpack.c.l.b16 %v344
      %v685 = vunpack.c.l.b16 %v345
      %v686 = vunpack.c.l.b16 %v346
      %v687 = vunpack.c.l.b16 %v347
      %v688 = vunpack.c.l.b16 %v348
      %v689 = vunpack.c.l.b16 %v349
      %v690 = vunpack.c.l.b16 %v350
      %v691 = vunpack.c.l.b16 %v351
      %v692 = vunpack.c.l.b16 %v352
      %v693 = vunpack.c.l.b16 %v353
      %v694 = vunpack.c.l.b16 %v354
      %v695 = vunpack.c.l.b16 %v355
      %v696 = vunpack.c.l.b16 %v356
      %v697 = vunpack.c.l.b16 %v357
      %v698 = vunpack.c.l.b16 %v358
      %v699 = vunpack.c.l.b16 %v359
      %v700 = vunpack.c.l.b16 %v360
      %v701 = vunpack.c.l.b16 %v361
      %v702 = vunpack.c.l.b16 %v362
      %v703 = vunpack.c.l.b16 %v363
      %v704 = vunpack.c.l.b16 %v364
      %v705 = vunpack.c.l.b16 %v365
      %v706 = vunpack.c.l.b16 %v366
      %v707 = vunpack.c.l.b16 %v367
      %v708 = vunpack.c.l.b16 %v368
      %v709 = vunpack.c.l.b16 %v369
      %v710 = vunpack.c.l.b16 %v370
      %v711 = vunpack.c.l.b16 %v371
      %v712 = vunpack.c.l.b16 %v372
      %v713 = vunpack.c.l.b16 %v373
      %v714 = vunpack.c.l.b16 %v374
      %v715 = vunpack.c.l.b16 %v375
      %v716 = vunpack.c.l.b16 %v376
      %v717 = vunpack.c.l.b16 %v377
      %v718 = vunpack.c.l.b16 %v378
      %v719 = vunpack.c.l.b16 %v379
      %v720 = vunpack.c.l.b16 %v380
      %v721 = vunpack.c.l.b16 %v381
      %v722 = vunpack.c.l.b16 %v382
      %v723 = vunpack.c.l.b16 %v383
      %v724 = vunpack.c.l.b16 %v384
      %v725 = vunpack.c.l.b16 %v385
      %v726 = vunpack.c.l.b16 %v386
      %v727 = vunpack.c.l.b16 %v387
      %v728 = vunpack.c.l.b16 %v388
      %v729 = vunpack.c.l.b16 %v389
      %v730 = vunpack.c.l.b16 %v390
      %v731 = vunpack.c.l.b16 %v391
      %v732 = vunpack.c.l.b16 %v392
      %v733 = vunpack.c.l.b16 %v393
      %v734 = vunpack.c.l.b16 %v394
      %v735 = vunpack.c.l.b16 %v395
      %v736 = vunpack.c.l.b16 %v396
      %v737 = vunpack.c.l.b16 %v397
      %v738 = vunpack.c.l.b16 %v398
      %v739 = vunpack.c.l.b16 %v399
      %v740 = vunpack.c.l.b16 %v400
      %v741 = vunpack.c.l.b16 %v401
      %v742 = vunpack.c.l.b16 %v402
      %v743 = vunpack.c.l.b16 %v403
      %v744 = vunpack.c.l.b16 %v404
      %v745 = vunpack.c.l.b16 %v405
      %v746 = vunpack.c.l.b16 %v406
      %v747 = vunpack.c.l.b16 %v407
      %v748 = vunpack.c.l.b16 %v408
      %v749 = vunpack.c.l.b16 %v409
      %v750 = vunpack.c.l.b16 %v410
      %v751 = vunpack.c.l.b16 %v411
      %v752 = vunpack.c.l.b16 %v412
      %v753 = vunpack.c.l.b16 %v413
      %v754 = vunpack.c.l.b16 %v414
      %v755 = vunpack.c.l.b16 %v415
      %v756 = vunpack.c.l.b16 %v416
      %v757 = vpack.c.b16 %v630, %v629
      %v758 = vpack.c.b16 %v632, %v631
      %v759 = vpack.c.b16 %v634, %v633
      %v760 = vpack.c.b16 %v636, %v635
      %v761 = vpack.c.b16 %v638, %v637
      %v762 = vpack.c.b16 %v640, %v639
      %v763 = vpack.c.b16 %v642, %v641
      %v764 = vpack.c.b16 %v644, %v643
      %v765 = vpack.c.b16 %v646, %v645
      %v766 = vpack.c.b16 %v648, %v647
      %v767 = vpack.c.b16 %v650, %v649
      %v768 = vpack.c.b16 %v652, %v651
      %v769 = vpack.c.b16 %v654, %v653
      %v770 = vpack.c.b16 %v656, %v655
      %v771 = vpack.c.b16 %v658, %v657
      %v772 = vpack.c.b16 %v660, %v659
      %v773 = vpack.c.b16 %v662, %v661
      %v774 = vpack.c.b16 %v664, %v663
      %v775 = vpack.c.b16 %v666, %v665
      %v776 = vpack.c.b16 %v668, %v667
      %v777 = vpack.c.b16 %v670, %v669
      %v778 = vpack.c.b16 %v672, %v671
      %v779 = vpack.c.b16 %v674, %v673
      %v780 = vpack.c.b16 %v676, %v675
      %v781 = vpack.c.b16 %v678, %v677
      %v782 = vpack.c.b16 %v680, %v679
      %v783 = vpack.c.b16 %v682, %v681
      %v784 = vpack.c.b16 %v684, %v683
      %v785 = vpack.c.b16 %v686, %v685
      %v786 = vpack.c.b16 %v688, %v687
      %v787 = vpack.c.b16 %v690, %v689
      %v788 = vpack.c.b16 %v692, %v691
      %v789 = vpack.c.b16 %v694, %v693
      %v790 = vpack.c.b16 %v696, %v695
      %v791 = vpack.c.b16 %v698, %v697
      %v792 = vpack.c.b16 %v700, %v699
      %v793 = vpack.c.b16 %v702, %v701
      %v794 = vpack.c.b16 %v704, %v703
      %v795 = vpack.c.b16 %v706, %v705
      %v796 = vpack.c.b16 %v708, %v707
      %v797 = vpack.c.b16 %v710, %v709
      %v798 = vpack.c.b16 %v712, %v711
      %v799 = vpack.c.b16 %v714, %v713
      %v800 = vpack.c.b16 %v716, %v715
      %v801 = vpack.c.b16 %v718, %v717
      %v802 = vpack.c.b16 %v720, %v719
      %v803 = vpack.c.b16 %v722, %v721
      %v804 = vpack.c.b16 %v724, %v723
      %v805 = vpack.c.b16 %v726, %v725
      %v806 = vpack.c.b16 %v728, %v727
      %v807 = vpack.c.b16 %v730, %v729
      %v808 = vpack.c.b16 %v732, %v731
      %v809 = vpack.c.b16 %v734, %v733
      %v810 = vpack.c.b16 %v736, %v735
      %v811 = vpack.c.b16 %v738, %v737
      %v812 = vpack.c.b16 %v740, %v739
      %v813 = vpack.c.b16 %v742, %v741
      %v814 = vpack.c.b16 %v744, %v743
      %v815 = vpack.c.b16 %v746, %v745
      %v816 = vpack.c.b16 %v748, %v747
      %v817 = vpack.c.b16 %v750, %v749
      %v818 = vpack.c.b16 %v752, %v751
      %v819 = vpack.c.b16 %v754, %v753
      %v820 = vpack.c.b16 %v756, %v755
      %885 = vmatpush.bf16.msra.mxu0 %v764
      %886 = vmatpush.bf16.msra.mxu0 %v763
      %887 = vmatpush.bf16.msra.mxu0 %v762
      %888 = vmatpush.bf16.msra.mxu0 %v761
      %889 = vmatpush.bf16.msra.mxu0 %v760
      %890 = vmatpush.bf16.msra.mxu0 %v759
      %891 = vmatpush.bf16.msra.mxu0 %v758
      %892 = vmatpush.bf16.msra.mxu0 %v757
      %893 = vmatmul.bf16.gmra.mxu0 %v469
      %v894 = vpop.f32.mrf.mxu0
      %v895 = vadd.f32 %v419, %v894
      %v896 = vpop.f32.mrf.mxu0
      %v897 = vadd.f32 %v419, %v896
      %898 = vmatmul.bf16.gmra.mxu0 %v477
      %v899 = vpop.f32.mrf.mxu0
      %v900 = vadd.f32 %v419, %v899
      %v901 = vpop.f32.mrf.mxu0
      %v902 = vadd.f32 %v419, %v901
      %903 = vdwg.mxu0
      %904 = vmatpush.bf16.msra.mxu0 %v772
      %905 = vmatpush.bf16.msra.mxu0 %v771
      %906 = vmatpush.bf16.msra.mxu0 %v770
      %907 = vmatpush.bf16.msra.mxu0 %v769
      %908 = vmatpush.bf16.msra.mxu0 %v768
      %909 = vmatpush.bf16.msra.mxu0 %v767
      %910 = vmatpush.bf16.msra.mxu0 %v766
      %911 = vmatpush.bf16.msra.mxu0 %v765
      %912 = vmatmul.bf16.gmra.mxu0 %v470
      %v913 = vpop.f32.mrf.mxu0
      %v914 = vadd.f32 %v895, %v913
      %v915 = vpop.f32.mrf.mxu0
      %v916 = vadd.f32 %v897, %v915
      %917 = vmatmul.bf16.gmra.mxu0 %v478
      %v918 = vpop.f32.mrf.mxu0
      %v919 = vadd.f32 %v900, %v918
      %v920 = vpop.f32.mrf.mxu0
      %v921 = vadd.f32 %v902, %v920
      %922 = vdwg.mxu0
      %923 = vmatpush.bf16.msra.mxu0 %v780
      %924 = vmatpush.bf16.msra.mxu0 %v779
      %925 = vmatpush.bf16.msra.mxu0 %v778
      %926 = vmatpush.bf16.msra.mxu0 %v777
      %927 = vmatpush.bf16.msra.mxu0 %v776
      %928 = vmatpush.bf16.msra.mxu0 %v775
      %929 = vmatpush.bf16.msra.mxu0 %v774
      %930 = vmatpush.bf16.msra.mxu0 %v773
      %931 = vmatmul.bf16.gmra.mxu0 %v471
      %v932 = vpop.f32.mrf.mxu0
      %v933 = vadd.f32 %v914, %v932
      %v934 = vpop.f32.mrf.mxu0
      %v935 = vadd.f32 %v916, %v934
      %936 = vmatmul.bf16.gmra.mxu0 %v479
      %v937 = vpop.f32.mrf.mxu0
      %v938 = vadd.f32 %v919, %v937
      %v939 = vpop.f32.mrf.mxu0
      %v940 = vadd.f32 %v921, %v939
      %941 = vdwg.mxu0
      %942 = vmatpush.bf16.msra.mxu0 %v788
      %943 = vmatpush.bf16.msra.mxu0 %v787
      %944 = vmatpush.bf16.msra.mxu0 %v786
      %945 = vmatpush.bf16.msra.mxu0 %v785
      %946 = vmatpush.bf16.msra.mxu0 %v784
      %947 = vmatpush.bf16.msra.mxu0 %v783
      %948 = vmatpush.bf16.msra.mxu0 %v782
      %949 = vmatpush.bf16.msra.mxu0 %v781
      %950 = vmatmul.bf16.gmra.mxu0 %v472
      %v951 = vpop.f32.mrf.mxu0
      %v952 = vadd.f32 %v933, %v951
      %v953 = vpop.f32.mrf.mxu0
      %v954 = vadd.f32 %v935, %v953
      %955 = vmatmul.bf16.gmra.mxu0 %v480
      %v956 = vpop.f32.mrf.mxu0
      %v957 = vadd.f32 %v938, %v956
      %v958 = vpop.f32.mrf.mxu0
      %v959 = vadd.f32 %v940, %v958
      %960 = vdwg.mxu0
      %961 = vmatpush.bf16.msra.mxu0 %v796
      %962 = vmatpush.bf16.msra.mxu0 %v795
      %963 = vmatpush.bf16.msra.mxu0 %v794
      %964 = vmatpush.bf16.msra.mxu0 %v793
      %965 = vmatpush.bf16.msra.mxu0 %v792
      %966 = vmatpush.bf16.msra.mxu0 %v791
      %967 = vmatpush.bf16.msra.mxu0 %v790
      %968 = vmatpush.bf16.msra.mxu0 %v789
      %969 = vmatmul.bf16.gmra.mxu0 %v473
      %v970 = vpop.f32.mrf.mxu0
      %v971 = vadd.f32 %v952, %v970
      %v972 = vpop.f32.mrf.mxu0
      %v973 = vadd.f32 %v954, %v972
      %974 = vmatmul.bf16.gmra.mxu0 %v481
      %v975 = vpop.f32.mrf.mxu0
      %v976 = vadd.f32 %v957, %v975
      %v977 = vpop.f32.mrf.mxu0
      %v978 = vadd.f32 %v959, %v977
      %979 = vdwg.mxu0
      %980 = vmatpush.bf16.msra.mxu0 %v804
      %981 = vmatpush.bf16.msra.mxu0 %v803
      %982 = vmatpush.bf16.msra.mxu0 %v802
      %983 = vmatpush.bf16.msra.mxu0 %v801
      %984 = vmatpush.bf16.msra.mxu0 %v800
      %985 = vmatpush.bf16.msra.mxu0 %v799
      %986 = vmatpush.bf16.msra.mxu0 %v798
      %987 = vmatpush.bf16.msra.mxu0 %v797
      %988 = vmatmul.bf16.gmra.mxu0 %v474
      %v989 = vpop.f32.mrf.mxu0
      %v990 = vadd.f32 %v971, %v989
      %v991 = vpop.f32.mrf.mxu0
      %v992 = vadd.f32 %v973, %v991
      %993 = vmatmul.bf16.gmra.mxu0 %v482
      %v994 = vpop.f32.mrf.mxu0
      %v995 = vadd.f32 %v976, %v994
      %v996 = vpop.f32.mrf.mxu0
      %v997 = vadd.f32 %v978, %v996
      %998 = vdwg.mxu0
      %999 = vmatpush.bf16.msra.mxu0 %v812
      %1000 = vmatpush.bf16.msra.mxu0 %v811
      %1001 = vmatpush.bf16.msra.mxu0 %v810
      %1002 = vmatpush.bf16.msra.mxu0 %v809
      %1003 = vmatpush.bf16.msra.mxu0 %v808
      %1004 = vmatpush.bf16.msra.mxu0 %v807
      %1005 = vmatpush.bf16.msra.mxu0 %v806
      %1006 = vmatpush.bf16.msra.mxu0 %v805
      %1007 = vmatmul.bf16.gmra.mxu0 %v475
      %v1008 = vpop.f32.mrf.mxu0
      %v1009 = vadd.f32 %v990, %v1008
      %v1010 = vpop.f32.mrf.mxu0
      %v1011 = vadd.f32 %v992, %v1010
      %1012 = vmatmul.bf16.gmra.mxu0 %v483
      %v1013 = vpop.f32.mrf.mxu0
      %v1014 = vadd.f32 %v995, %v1013
      %v1015 = vpop.f32.mrf.mxu0
      %v1016 = vadd.f32 %v997, %v1015
      %1017 = vdwg.mxu0
      %1018 = vmatpush.bf16.msra.mxu0 %v820
      %1019 = vmatpush.bf16.msra.mxu0 %v819
      %1020 = vmatpush.bf16.msra.mxu0 %v818
      %1021 = vmatpush.bf16.msra.mxu0 %v817
      %1022 = vmatpush.bf16.msra.mxu0 %v816
      %1023 = vmatpush.bf16.msra.mxu0 %v815
      %1024 = vmatpush.bf16.msra.mxu0 %v814
      %1025 = vmatpush.bf16.msra.mxu0 %v813
      %1026 = vmatmul.bf16.gmra.mxu0 %v476
      %v1027 = vpop.f32.mrf.mxu0
      %v1028 = vadd.f32 %v1009, %v1027
      %v1029 = vpop.f32.mrf.mxu0
      %v1030 = vadd.f32 %v1011, %v1029
      %1031 = vmatmul.bf16.gmra.mxu0 %v484
      %v1032 = vpop.f32.mrf.mxu0
      %v1033 = vadd.f32 %v1014, %v1032
      %v1034 = vpop.f32.mrf.mxu0
      %v1035 = vadd.f32 %v1016, %v1034
      %1036 = vdwg.mxu0
      %v1037 = vmax.f32 %v1028, 0.0
      %v1038 = vmax.f32 %v1030, 0.0
      %v1039 = vmax.f32 %v1033, 0.0
      %v1040 = vmax.f32 %v1035, 0.0
      %v1041 = vpack.c.bf16 %v1037, %v1037
      %v1042 = vpack.c.bf16 %v1038, %v1038
      %v1043 = vpack.c.bf16 %v1039, %v1039
      %v1044 = vpack.c.bf16 %v1040, %v1040
      %1045 = vst [vmem:[%s271] sm:$0xf] %v1041
      %1046 = vst [vmem:[%s271 + $0x4] sm:$0xf] %v1042
      %1047 = vst [vmem:[%s271 + $0x8] sm:$0xf] %v1043
      %1048 = vst [vmem:[%s271 + $0xc] sm:$0xf] %v1044
      %s1049 = smul.u32 4, %s20
      %p1050 = scmp.lt.s32.totalorder %s19, 3
      %s1051 = scalar_select %p1050, %s19, 3
      %p1052 = scmp.lt.s32.totalorder %s1049, 3
      %s1053 = scalar_select %p1052, %s1049, 3
      %p1054 = scmp.lt.s32.totalorder %s21, 0
      %s1055 = scalar_select %p1054, %s21, 0
      %s1056 = sadd.s32 %s1055, %s1053
      %s1057 = smul.addr %s1051, 4
      %s1058 = sadd.s32 %s1056, %s1057
      %s1059 = smul.addr %s1058, 4
      %s1060 = scalar_lea.vmem %s3, %s1059
      // Predicated region
      $region33: #{generator_forward.9} parent=31 // pred_check
        %p1061 = pneg %p137
      $region34: #{generator_forward.9} parent=31 // pred_check_branch
        %1063 = sbr.rel (%p1061) target = $region36
      $region35: #{generator_forward.9} parent=31 // pred_region
        %s1064 = smul.u32 4, %s20
      $region36: #{generator_forward.9} parent=31 // pred_fallthru
        _
    $region32: #{generator_forward.9} parent=5 // pred_fallthru
      _
    %p1065 = scmp.le.s32.totalorder 2, %s9
    // Predicated region
    $region37: #{generator_forward.9} parent=5 // pred_check
      %p1066 = pneg %p1065
    $region38: #{generator_forward.9} parent=5 // pred_check_branch
      %1068 = sbr.rel (%p1066) target = $region40
    $region39: #{generator_forward.9} parent=5 // pred_region
      %s1069 = ssub.s32 %s9, 2
      // Predicated region
      $region41: #{generator_forward.9} parent=39 // pred_check
        %p1070 = pneg %p143
      $region42: #{generator_forward.9} parent=39 // pred_check_branch
        %1072 = sbr.rel (%p1070) target = $region44
      $region43: #{generator_forward.9} parent=39 // pred_region
        %s1073 = smul.u32 4, %s23
        %p1074 = scmp.lt.s32.totalorder %s22, 3
        %s1075 = scalar_select %p1074, %s22, 3
        %p1076 = scmp.lt.s32.totalorder %s1073, 3
        %s1077 = scalar_select %p1076, %s1073, 3
        %p1078 = scmp.lt.s32.totalorder %s24, 0
        %s1079 = scalar_select %p1078, %s24, 0
        %s1080 = sadd.s32 %s1079, %s1077
        %s1081 = smul.addr %s1075, 4
        %s1082 = sadd.s32 %s1080, %s1081
        %s1083 = smul.addr %s1082, 4
        %s1084 = scalar_lea.vmem %s3, %s1083
      $region44: #{generator_forward.9} parent=39 // pred_fallthru
        _
    $region40: #{generator_forward.9} parent=5 // pred_fallthru
      _
  $region6: #{generator_forward.9} parent=0 // loop_footer
    %s13 = sadd.s32 1, %s9
  $region7: #{generator_forward.9} parent=0 // loop_footer_branch
    %8 = sbr.rel target = $region3
  $region8: #{generator_forward.9} parent=0 // loop_exit
    _

// kernel: generator_forward.10
$region0: #{generator_forward.10}
  #allocation0 [shape = 'u32[]', space=smem, size = 0x4, offset = 0x4, fixed_abs, tag = 'smem constant byte address 0x4 - core index']
  #allocation1 [shape = 'u32[72,128]{1,0:T(1,128)}', space=vmem, size = 0x9000, scoped, tag = 'internal scratch']
  %s0 = inlined_call_operand.vmem [shape: bf16[4,128,512], index: 0, kind: input, shape index: {}]
  %s1 = inlined_call_operand.vmem [shape: bf16[4,512,128], index: 1, kind: input, shape index: {}]
  %s2 = inlined_call_operand.vmem [shape: f32[1,128], index: 2, kind: input, shape index: {}]
  %s3 = inlined_call_operand.vmem [shape: bf16[4,128,128], index: 3, kind: output, shape index: {}]
  %s4 = sld [smem:[#allocation0]]
  $region45: #{generator_forward.10} parent=0
    _
  %s6 = ssub.s32 1, %s4
  %s7 = scalar_select 0, %s6, %s4
  loop: start=0, step=1, limit=6
  $region2: #{generator_forward.10} parent=0 // loop_pre_header
    _
  $region3: #{generator_forward.10} parent=0 // loop_header
    %s9 = sphi 0, %s13
    %p10 = scmp.ge.s32.totalorder %s9, 6
    %s16 = sphi 0, %s35
    %s17 = sphi 0, %s31
    %s18 = sphi 0, %s27
    %s19 = sphi 0, %s16
    %s20 = sphi 0, %s17
    %s21 = sphi 0, %s18
    %s22 = sphi 0, %s19
    %s23 = sphi 0, %s20
    %s24 = sphi 0, %s21
    %s40 = sphi 0, %s42
    %s43 = sphi 0, %s40
    %s44 = sphi 0, %s43
    %s60 = sphi 0, %s44
    %s68 = sphi 0, %s70
    %s71 = sphi 0, %s68
    %s72 = sphi 0, %s71
    %s88 = sphi 0, %s72
    %s94 = sphi 0, %s96
    %s97 = sphi 0, %s94
    %s98 = sphi 0, %s97
    %s114 = sphi 0, %s98
    %s124 = sphi 0, %s126
    %s127 = sphi 0, %s124
    %s128 = sphi 0, %s127
    %s144 = sphi 0, %s128
  $region4: #{generator_forward.10} parent=0 // loop_header_branch
    %12 = sbr.rel (%p10) target = $region8
  $region5: #{generator_forward.10} parent=0 // loop_body
    %s14 = ssub.s32 %s9, 1
    %s15 = ssub.s32 %s9, 2
    %s25 = sadd.s32 1, %s18
    %p26 = scmp.ge.s32.totalorder %s25, 1
    %s27 = scalar_select %p26, 0, %s25
    %s28 = sadd.s32 1, %s17
    %s29 = scalar_select %p26, %s28, %s17
    %p30 = scmp.ge.s32.totalorder %s29, 1
    %s31 = scalar_select %p30, 0, %s29
    %s32 = sadd.s32 1, %s16
    %s33 = scalar_select %p30, %s32, %s16
    %p34 = scmp.ge.s32.totalorder %s33, 4
    %s35 = scalar_select %p34, 0, %s33
    %s36 = ssub.s32 %s16, %s35
    %s37 = ssub.s32 %s17, %s31
    %s38 = sor.u32 %s36, %s37
    %p39 = scmp.eq.s32.totalorder %s38, 0
    %s41 = sadd.s32 %s40, 1
    %s42 = scalar_select %p39, %s40, %s41
    %p45 = pneg %p39
    %p46 = scmp.eq.s32.totalorder %s9, 3
    %p47 = por %p45, %p46
    %p48 = scmp.ne.s32.totalorder %s40, %s43
    %p49 = scmp.eq.s32.totalorder %s9, 0
    %p50 = por %p48, %p49
    %p51 = scmp.ne.s32.totalorder %s40, %s43
    %p52 = scmp.eq.s32.totalorder %s14, 3
    %p53 = por %p51, %p52
    %p54 = scmp.ne.s32.totalorder %s43, %s44
    %p55 = scmp.eq.s32.totalorder %s14, 0
    %p56 = por %p54, %p55
    %p57 = scmp.ne.s32.totalorder %s43, %s44
    %p58 = scmp.eq.s32.totalorder %s15, 3
    %p59 = por %p57, %p58
    %p61 = scmp.ne.s32.totalorder %s44, %s60
    %p62 = scmp.eq.s32.totalorder %s15, 0
    %p63 = por %p61, %p62
    %s64 = ssub.s32 %s16, %s35
    %s65 = ssub.s32 %s18, %s27
    %s66 = sor.u32 %s64, %s65
    %p67 = scmp.eq.s32.totalorder %s66, 0
    %s69 = sadd.s32 %s68, 1
    %s70 = scalar_select %p67, %s68, %s69
    %p73 = pneg %p67
    %p74 = scmp.eq.s32.totalorder %s9, 3
    %p75 = por %p73, %p74
    %p76 = scmp.ne.s32.totalorder %s68, %s71
    %p77 = scmp.eq.s32.totalorder %s9, 0
    %p78 = por %p76, %p77
    %p79 = scmp.ne.s32.totalorder %s68, %s71
    %p80 = scmp.eq.s32.totalorder %s14, 3
    %p81 = por %p79, %p80
    %p82 = scmp.ne.s32.totalorder %s71, %s72
    %p83 = scmp.eq.s32.totalorder %s14, 0
    %p84 = por %p82, %p83
    %p85 = scmp.ne.s32.totalorder %s71, %s72
    %p86 = scmp.eq.s32.totalorder %s15, 3
    %p87 = por %p85, %p86
    %p89 = scmp.ne.s32.totalorder %s72, %s88
    %p90 = scmp.eq.s32.totalorder %s15, 0
    %p91 = por %p89, %p90
    %s92 = ssub.s32 %s18, %s27
    %p93 = scmp.eq.s32.totalorder %s92, 0
    %s95 = sadd.s32 %s94, 1
    %s96 = scalar_select %p93, %s94, %s95
    %p99 = pneg %p93
    %p100 = scmp.eq.s32.totalorder %s9, 3
    %p101 = por %p99, %p100
    %p102 = scmp.ne.s32.totalorder %s94, %s97
    %p103 = scmp.eq.s32.totalorder %s9, 0
    %p104 = por %p102, %p103
    %p105 = scmp.ne.s32.totalorder %s94, %s97
    %p106 = scmp.eq.s32.totalorder %s14, 3
    %p107 = por %p105, %p106
    %p108 = scmp.ne.s32.totalorder %s97, %s98
    %p109 = scmp.eq.s32.totalorder %s14, 0
    %p110 = por %p108, %p109
    %p111 = scmp.ne.s32.totalorder %s97, %s98
    %p112 = scmp.eq.s32.totalorder %s15, 3
    %p113 = por %p111, %p112
    %p115 = scmp.ne.s32.totalorder %s98, %s114
    %p116 = scmp.eq.s32.totalorder %s15, 0
    %p117 = por %p115, %p116
    %s118 = ssub.s32 %s16, %s35
    %s119 = ssub.s32 %s17, %s31
    %s120 = sor.u32 %s118, %s119
    %s121 = ssub.s32 %s18, %s27
    %s122 = sor.u32 %s120, %s121
    %p123 = scmp.eq.s32.totalorder %s122, 0
    %s125 = sadd.s32 %s124, 1
    %s126 = scalar_select %p123, %s124, %s125
    %p129 = pneg %p123
    %p130 = scmp.eq.s32.totalorder %s9, 3
    %p131 = por %p129, %p130
    %p132 = scmp.ne.s32.totalorder %s124, %s127
    %p133 = scmp.eq.s32.totalorder %s9, 0
    %p134 = por %p132, %p133
    %p135 = scmp.ne.s32.totalorder %s124, %s127
    %p136 = scmp.eq.s32.totalorder %s14, 3
    %p137 = por %p135, %p136
    %p138 = scmp.ne.s32.totalorder %s127, %s128
    %p139 = scmp.eq.s32.totalorder %s14, 0
    %p140 = por %p138, %p139
    %p141 = scmp.ne.s32.totalorder %s127, %s128
    %p142 = scmp.eq.s32.totalorder %s15, 3
    %p143 = por %p141, %p142
    %p145 = scmp.ne.s32.totalorder %s128, %s144
    %p146 = scmp.eq.s32.totalorder %s15, 0
    %p147 = por %p145, %p146
    %p148 = scmp.le.s32.totalorder 1, %s9
    %p149 = scmp.lt.s32.totalorder %s9, 5
    %p150 = pnand %p148, %p149
    %p151 = pneg %p150
    // Predicated region
    $region9: #{generator_forward.10} parent=5 // pred_check
      _
    $region10: #{generator_forward.10} parent=5 // pred_check_branch
      %153 = sbr.rel (%p150) target = $region12
    $region11: #{generator_forward.10} parent=5 // pred_region
      %s154 = ssub.s32 %s9, 1
      // Predicated region
      $region13: #{generator_forward.10} parent=11 // pred_check
        %p155 = pneg %p110
      $region14: #{generator_forward.10} parent=11 // pred_check_branch
        %157 = sbr.rel (%p155) target = $region16
      $region15: #{generator_forward.10} parent=11 // pred_region
        %p158 = scmp.lt.s32.totalorder %s21, 0
        %s159 = scalar_select %p158, %s21, 0
        %s160 = scalar_lea.vmem %s2, %s159
      $region16: #{generator_forward.10} parent=11 // pred_fallthru
        _
    $region12: #{generator_forward.10} parent=5 // pred_fallthru
      _
    %p161 = scmp.lt.s32.totalorder %s9, 4
    // Predicated region
    $region17: #{generator_forward.10} parent=5 // pred_check
      %p162 = pneg %p161
    $region18: #{generator_forward.10} parent=5 // pred_check_branch
      %164 = sbr.rel (%p162) target = $region20
    $region19: #{generator_forward.10} parent=5 // pred_region
      // Predicated region
      $region21: #{generator_forward.10} parent=19 // pred_check
        %p165 = pneg %p50
      $region22: #{generator_forward.10} parent=19 // pred_check_branch
        %167 = sbr.rel (%p165) target = $region24
      $region23: #{generator_forward.10} parent=19 // pred_region
        %s168 = smul.u32 16, %s17
        %p169 = scmp.lt.s32.totalorder %s16, 3
        %s170 = scalar_select %p169, %s16, 3
        %p171 = scmp.lt.s32.totalorder %s168, 15
        %s172 = scalar_select %p171, %s168, 15
        %s173 = smul.addr %s172, 4
        %s174 = smul.addr %s170, 64
        %s175 = sadd.s32 %s173, %s174
        %s176 = smul.addr %s175, 4
        %s177 = scalar_lea.vmem %s0, %s176
        %s178 = smul.u32 16, %s17
      $region24: #{generator_forward.10} parent=19 // pred_fallthru
        _
      // Predicated region
      $region25: #{generator_forward.10} parent=19 // pred_check
        %p179 = pneg %p78
      $region26: #{generator_forward.10} parent=19 // pred_check_branch
        %181 = sbr.rel (%p179) target = $region28
      $region27: #{generator_forward.10} parent=19 // pred_region
        %p182 = scmp.lt.s32.totalorder %s16, 3
        %s183 = scalar_select %p182, %s16, 3
        %p184 = scmp.lt.s32.totalorder %s18, 0
        %s185 = scalar_select %p184, %s18, 0
        %s186 = smul.addr %s183, 64
        %s187 = sadd.s32 %s185, %s186
        %s188 = smul.addr %s187, 4
        %s189 = scalar_lea.vmem %s1, %s188
      $region28: #{generator_forward.10} parent=19 // pred_fallthru
        _
    $region20: #{generator_forward.10} parent=5 // pred_fallthru
      _
    %p190 = scmp.le.s32.totalorder 1, %s9
    %p191 = scmp.lt.s32.totalorder %s9, 5
    %p192 = pnand %p190, %p191
    %p193 = pneg %p192
    // Predicated region
    $region29: #{generator_forward.10} parent=5 // pred_check
      _
    $region30: #{generator_forward.10} parent=5 // pred_check_branch
      %195 = sbr.rel (%p192) target = $region32
    $region31: #{generator_forward.10} parent=5 // pred_region
      %s196 = ssub.s32 %s9, 1
      %s197 = smul.u32 16, %s20
      %p198 = scmp.lt.s32.totalorder %s19, 3
      %s199 = scalar_select %p198, %s19, 3
      %p200 = scmp.lt.s32.totalorder %s197, 15
      %s201 = scalar_select %p200, %s197, 15
      %s202 = smul.addr %s201, 4
      %s203 = smul.addr %s199, 64
      %s204 = sadd.s32 %s202, %s203
      %s205 = smul.addr %s204, 4
      %s206 = scalar_lea.vmem %s0, %s205
      %p207 = pneg %p56
      %p208 = pneg %p53
      %p209 = scmp.lt.s32.totalorder %s19, 3
      %s210 = scalar_select %p209, %s19, 3
      %p211 = scmp.lt.s32.totalorder %s21, 0
      %s212 = scalar_select %p211, %s21, 0
      %s213 = smul.addr %s210, 64
      %s214 = sadd.s32 %s212, %s213
      %s215 = smul.addr %s214, 4
      %s216 = scalar_lea.vmem %s1, %s215
      %p217 = pneg %p84
      %p218 = pneg %p81
      %p219 = scmp.lt.s32.totalorder %s21, 0
      %s220 = scalar_select %p219, %s21, 0
      %s221 = scalar_lea.vmem %s2, %s220
      %p222 = pneg %p110
      %p223 = pneg %p107
      %p224 = pneg %p140
      %p225 = pneg %p137
      %s226 = smul.u32 16, %s20
      %p227 = scmp.lt.s32.totalorder %s19, 3
      %s228 = scalar_select %p227, %s19, 3
      %p229 = scmp.lt.s32.totalorder %s226, 15
      %s230 = scalar_select %p229, %s226, 15
      %p231 = scmp.lt.s32.totalorder %s21, 0
      %s232 = scalar_select %p231, %s21, 0
      %s233 = sadd.s32 %s232, %s230
      %s234 = smul.addr %s228, 16
      %s235 = sadd.s32 %s233, %s234
      %s236 = smul.addr %s235, 4
      %s237 = scalar_lea.vmem %s3, %s236
      %s238 = smul.u32 16, %s20
      %p239 = scmp.lt.s32.totalorder %s19, 3
      %s240 = scalar_select %p239, %s19, 3
      %p241 = scmp.lt.s32.totalorder %s238, 15
      %s242 = scalar_select %p241, %s238, 15
      %s243 = smul.addr %s242, 4
      %s244 = smul.addr %s240, 64
      %s245 = sadd.s32 %s243, %s244
      %s246 = smul.addr %s245, 4
      %s247 = scalar_lea.vmem %s0, %s246
      %s248 = smul.u32 16, %s20
      %p249 = scmp.lt.s32.totalorder %s19, 3
      %s250 = scalar_select %p249, %s19, 3
      %p251 = scmp.lt.s32.totalorder %s21, 0
      %s252 = scalar_select %p251, %s21, 0
      %s253 = smul.addr %s250, 64
      %s254 = sadd.s32 %s252, %s253
      %s255 = smul.addr %s254, 4
      %s256 = scalar_lea.vmem %s1, %s255
      %p257 = scmp.lt.s32.totalorder %s21, 0
      %s258 = scalar_select %p257, %s21, 0
      %s259 = scalar_lea.vmem %s2, %s258
      %s260 = smul.u32 16, %s20
      %p261 = scmp.lt.s32.totalorder %s19, 3
      %s262 = scalar_select %p261, %s19, 3
      %p263 = scmp.lt.s32.totalorder %s260, 15
      %s264 = scalar_select %p263, %s260, 15
      %p265 = scmp.lt.s32.totalorder %s21, 0
      %s266 = scalar_select %p265, %s21, 0
      %s267 = sadd.s32 %s266, %s264
      %s268 = smul.addr %s262, 16
      %s269 = sadd.s32 %s267, %s268
      %s270 = smul.addr %s269, 4
      %s271 = scalar_lea.vmem %s3, %s270
      %s272 = smul.u32 16, %s20
      %v273 = vld [vmem:[%s247] sm:$0xff]
      %v274 = vld [vmem:[%s247 + $0x8] sm:$0xff]
      %v275 = vld [vmem:[%s247 + $0x10] sm:$0xff]
      %v276 = vld [vmem:[%s247 + $0x18] sm:$0xff]
      %v277 = vld [vmem:[%s247 + $0x20] sm:$0xff]
      %v278 = vld [vmem:[%s247 + $0x28] sm:$0xff]
      %v279 = vld [vmem:[%s247 + $0x30] sm:$0xff]
      %v280 = vld [vmem:[%s247 + $0x38] sm:$0xff]
      %v281 = vld [vmem:[%s247 + $0x40] sm:$0xff]
      %v282 = vld [vmem:[%s247 + $0x48] sm:$0xff]
      %v283 = vld [vmem:[%s247 + $0x50] sm:$0xff]
      %v284 = vld [vmem:[%s247 + $0x58] sm:$0xff]
      %v285 = vld [vmem:[%s247 + $0x60] sm:$0xff]
      %v286 = vld [vmem:[%s247 + $0x68] sm:$0xff]
      %v287 = vld [vmem:[%s247 + $0x70] sm:$0xff]
      %v288 = vld [vmem:[%s247 + $0x78] sm:$0xff]
      %v289 = vld [vmem:[%s247 + $0x80] sm:$0xff]
      %v290 = vld [vmem:[%s247 + $0x88] sm:$0xff]
      %v291 = vld [vmem:[%s247 + $0x90] sm:$0xff]
      %v292 = vld [vmem:[%s247 + $0x98] sm:$0xff]
      %v293 = vld [vmem:[%s247 + $0xa0] sm:$0xff]
      %v294 = vld [vmem:[%s247 + $0xa8] sm:$0xff]
      %v295 = vld [vmem:[%s247 + $0xb0] sm:$0xff]
      %v296 = vld [vmem:[%s247 + $0xb8] sm:$0xff]
      %v297 = vld [vmem:[%s247 + $0xc0] sm:$0xff]
      %v298 = vld [vmem:[%s247 + $0xc8] sm:$0xff]
      %v299 = vld [vmem:[%s247 + $0xd0] sm:$0xff]
      %v300 = vld [vmem:[%s247 + $0xd8] sm:$0xff]
      %v301 = vld [vmem:[%s247 + $0xe0] sm:$0xff]
      %v302 = vld [vmem:[%s247 + $0xe8] sm:$0xff]
      %v303 = vld [vmem:[%s247 + $0xf0] sm:$0xff]
      %v304 = vld [vmem:[%s247 + $0xf8] sm:$0xff]
      %v305 = vld [vmem:[%s256] sm:$0xf]
      %v306 = vld [vmem:[%s256 + $0x4] sm:$0xf]
      %v307 = vld [vmem:[%s256 + $0x8] sm:$0xf]
      %v308 = vld [vmem:[%s256 + $0xc] sm:$0xf]
      %v309 = vld [vmem:[%s256 + $0x10] sm:$0xf]
      %v310 = vld [vmem:[%s256 + $0x14] sm:$0xf]
      %v311 = vld [vmem:[%s256 + $0x18] sm:$0xf]
      %v312 = vld [vmem:[%s256 + $0x1c] sm:$0xf]
      %v313 = vld [vmem:[%s256 + $0x20] sm:$0xf]
      %v314 = vld [vmem:[%s256 + $0x24] sm:$0xf]
      %v315 = vld [vmem:[%s256 + $0x28] sm:$0xf]
      %v316 = vld [vmem:[%s256 + $0x2c] sm:$0xf]
      %v317 = vld [vmem:[%s256 + $0x30] sm:$0xf]
      %v318 = vld [vmem:[%s256 + $0x34] sm:$0xf]
      %v319 = vld [vmem:[%s256 + $0x38] sm:$0xf]
      %v320 = vld [vmem:[%s256 + $0x3c] sm:$0xf]
      %v321 = vld [vmem:[%s256 + $0x40] sm:$0xf]
      %v322 = vld [vmem:[%s256 + $0x44] sm:$0xf]
      %v323 = vld [vmem:[%s256 + $0x48] sm:$0xf]
      %v324 = vld [vmem:[%s256 + $0x4c] sm:$0xf]
      %v325 = vld [vmem:[%s256 + $0x50] sm:$0xf]
      %v326 = vld [vmem:[%s256 + $0x54] sm:$0xf]
      %v327 = vld [vmem:[%s256 + $0x58] sm:$0xf]
      %v328 = vld [vmem:[%s256 + $0x5c] sm:$0xf]
      %v329 = vld [vmem:[%s256 + $0x60] sm:$0xf]
      %v330 = vld [vmem:[%s256 + $0x64] sm:$0xf]
      %v331 = vld [vmem:[%s256 + $0x68] sm:$0xf]
      %v332 = vld [vmem:[%s256 + $0x6c] sm:$0xf]
      %v333 = vld [vmem:[%s256 + $0x70] sm:$0xf]
      %v334 = vld [vmem:[%s256 + $0x74] sm:$0xf]
      %v335 = vld [vmem:[%s256 + $0x78] sm:$0xf]
      %v336 = vld [vmem:[%s256 + $0x7c] sm:$0xf]
      %v337 = vld [vmem:[%s256 + $0x80] sm:$0xf]
      %v338 = vld [vmem:[%s256 + $0x84] sm:$0xf]
      %v339 = vld [vmem:[%s256 + $0x88] sm:$0xf]
      %v340 = vld [vmem:[%s256 + $0x8c] sm:$0xf]
      %v341 = vld [vmem:[%s256 + $0x90] sm:$0xf]
      %v342 = vld [vmem:[%s256 + $0x94] sm:$0xf]
      %v343 = vld [vmem:[%s256 + $0x98] sm:$0xf]
      %v344 = vld [vmem:[%s256 + $0x9c] sm:$0xf]
      %v345 = vld [vmem:[%s256 + $0xa0] sm:$0xf]
      %v346 = vld [vmem:[%s256 + $0xa4] sm:$0xf]
      %v347 = vld [vmem:[%s256 + $0xa8] sm:$0xf]
      %v348 = vld [vmem:[%s256 + $0xac] sm:$0xf]
      %v349 = vld [vmem:[%s256 + $0xb0] sm:$0xf]
      %v350 = vld [vmem:[%s256 + $0xb4] sm:$0xf]
      %v351 = vld [vmem:[%s256 + $0xb8] sm:$0xf]
      %v352 = vld [vmem:[%s256 + $0xbc] sm:$0xf]
      %v353 = vld [vmem:[%s256 + $0xc0] sm:$0xf]
      %v354 = vld [vmem:[%s256 + $0xc4] sm:$0xf]
      %v355 = vld [vmem:[%s256 + $0xc8] sm:$0xf]
      %v356 = vld [vmem:[%s256 + $0xcc] sm:$0xf]
      %v357 = vld [vmem:[%s256 + $0xd0] sm:$0xf]
      %v358 = vld [vmem:[%s256 + $0xd4] sm:$0xf]
      %v359 = vld [vmem:[%s256 + $0xd8] sm:$0xf]
      %v360 = vld [vmem:[%s256 + $0xdc] sm:$0xf]
      %v361 = vld [vmem:[%s256 + $0xe0] sm:$0xf]
      %v362 = vld [vmem:[%s256 + $0xe4] sm:$0xf]
      %v363 = vld [vmem:[%s256 + $0xe8] sm:$0xf]
      %v364 = vld [vmem:[%s256 + $0xec] sm:$0xf]
      %v365 = vld [vmem:[%s256 + $0xf0] sm:$0xf]
      %v366 = vld [vmem:[%s256 + $0xf4] sm:$0xf]
      %v367 = vld [vmem:[%s256 + $0xf8] sm:$0xf]
      %v368 = vld [vmem:[%s256 + $0xfc] sm:$0xf]
      %v369 = vld [vmem:[%s259] sm:$0x1]
      %v371 = vperm.slane %v369, 0
      %v405 = vunpack.c.l.b16 %v273
      %v406 = vunpack.c.h.b16 %v273
      %v407 = vunpack.c.l.b16 %v274
      %v408 = vunpack.c.h.b16 %v274
      %v409 = vunpack.c.l.b16 %v275
      %v410 = vunpack.c.h.b16 %v275
      %v411 = vunpack.c.l.b16 %v276
      %v412 = vunpack.c.h.b16 %v276
      %v413 = vunpack.c.l.b16 %v277
      %v414 = vunpack.c.h.b16 %v277
      %v415 = vunpack.c.l.b16 %v278
      %v416 = vunpack.c.h.b16 %v278
      %v417 = vunpack.c.l.b16 %v279
      %v418 = vunpack.c.h.b16 %v279
      %v419 = vunpack.c.l.b16 %v280
      %v420 = vunpack.c.h.b16 %v280
      %v421 = vunpack.c.l.b16 %v281
      %v422 = vunpack.c.h.b16 %v281
      %v423 = vunpack.c.l.b16 %v282
      %v424 = vunpack.c.h.b16 %v282
      %v425 = vunpack.c.l.b16 %v283
      %v426 = vunpack.c.h.b16 %v283
      %v427 = vunpack.c.l.b16 %v284
      %v428 = vunpack.c.h.b16 %v284
      %v429 = vunpack.c.l.b16 %v285
      %v430 = vunpack.c.h.b16 %v285
      %v431 = vunpack.c.l.b16 %v286
      %v432 = vunpack.c.h.b16 %v286
      %v433 = vunpack.c.l.b16 %v287
      %v434 = vunpack.c.h.b16 %v287
      %v435 = vunpack.c.l.b16 %v288
      %v436 = vunpack.c.h.b16 %v288
      %v437 = vunpack.c.l.b16 %v289
      %v438 = vunpack.c.h.b16 %v289
      %v439 = vunpack.c.l.b16 %v290
      %v440 = vunpack.c.h.b16 %v290
      %v441 = vunpack.c.l.b16 %v291
      %v442 = vunpack.c.h.b16 %v291
      %v443 = vunpack.c.l.b16 %v292
      %v444 = vunpack.c.h.b16 %v292
      %v445 = vunpack.c.l.b16 %v293
      %v446 = vunpack.c.h.b16 %v293
      %v447 = vunpack.c.l.b16 %v294
      %v448 = vunpack.c.h.b16 %v294
      %v449 = vunpack.c.l.b16 %v295
      %v450 = vunpack.c.h.b16 %v295
      %v451 = vunpack.c.l.b16 %v296
      %v452 = vunpack.c.h.b16 %v296
      %v453 = vunpack.c.l.b16 %v297
      %v454 = vunpack.c.h.b16 %v297
      %v455 = vunpack.c.l.b16 %v298
      %v456 = vunpack.c.h.b16 %v298
      %v457 = vunpack.c.l.b16 %v299
      %v458 = vunpack.c.h.b16 %v299
      %v459 = vunpack.c.l.b16 %v300
      %v460 = vunpack.c.h.b16 %v300
      %v461 = vunpack.c.l.b16 %v301
      %v462 = vunpack.c.h.b16 %v301
      %v463 = vunpack.c.l.b16 %v302
      %v464 = vunpack.c.h.b16 %v302
      %v465 = vunpack.c.l.b16 %v303
      %v466 = vunpack.c.h.b16 %v303
      %v467 = vunpack.c.l.b16 %v304
      %v468 = vunpack.c.h.b16 %v304
      %v469 = vpack.c.b16 %v409, %v405
      %v470 = vpack.c.b16 %v410, %v406
      %v471 = vpack.c.b16 %v411, %v407
      %v472 = vpack.c.b16 %v412, %v408
      %v473 = vpack.c.b16 %v417, %v413
      %v474 = vpack.c.b16 %v418, %v414
      %v475 = vpack.c.b16 %v419, %v415
      %v476 = vpack.c.b16 %v420, %v416
      %v477 = vpack.c.b16 %v425, %v421
      %v478 = vpack.c.b16 %v426, %v422
      %v479 = vpack.c.b16 %v427, %v423
      %v480 = vpack.c.b16 %v428, %v424
      %v481 = vpack.c.b16 %v433, %v429
      %v482 = vpack.c.b16 %v434, %v430
      %v483 = vpack.c.b16 %v435, %v431
      %v484 = vpack.c.b16 %v436, %v432
      %v485 = vpack.c.b16 %v441, %v437
      %v486 = vpack.c.b16 %v442, %v438
      %v487 = vpack.c.b16 %v443, %v439
      %v488 = vpack.c.b16 %v444, %v440
      %v489 = vpack.c.b16 %v449, %v445
      %v490 = vpack.c.b16 %v450, %v446
      %v491 = vpack.c.b16 %v451, %v447
      %v492 = vpack.c.b16 %v452, %v448
      %v493 = vpack.c.b16 %v457, %v453
      %v494 = vpack.c.b16 %v458, %v454
      %v495 = vpack.c.b16 %v459, %v455
      %v496 = vpack.c.b16 %v460, %v456
      %v497 = vpack.c.b16 %v465, %v461
      %v498 = vpack.c.b16 %v466, %v462
      %v499 = vpack.c.b16 %v467, %v463
      %v500 = vpack.c.b16 %v468, %v464
      %v597 = vunpack.c.l.b16 %v305
      %v598 = vunpack.c.l.b16 %v306
      %v599 = vunpack.c.l.b16 %v307
      %v600 = vunpack.c.l.b16 %v308
      %v601 = vunpack.c.l.b16 %v309
      %v602 = vunpack.c.l.b16 %v310
      %v603 = vunpack.c.l.b16 %v311
      %v604 = vunpack.c.l.b16 %v312
      %v605 = vunpack.c.l.b16 %v313
      %v606 = vunpack.c.l.b16 %v314
      %v607 = vunpack.c.l.b16 %v315
      %v608 = vunpack.c.l.b16 %v316
      %v609 = vunpack.c.l.b16 %v317
      %v610 = vunpack.c.l.b16 %v318
      %v611 = vunpack.c.l.b16 %v319
      %v612 = vunpack.c.l.b16 %v320
      %v613 = vunpack.c.l.b16 %v321
      %v614 = vunpack.c.l.b16 %v322
      %v615 = vunpack.c.l.b16 %v323
      %v616 = vunpack.c.l.b16 %v324
      %v617 = vunpack.c.l.b16 %v325
      %v618 = vunpack.c.l.b16 %v326
      %v619 = vunpack.c.l.b16 %v327
      %v620 = vunpack.c.l.b16 %v328
      %v621 = vunpack.c.l.b16 %v329
      %v622 = vunpack.c.l.b16 %v330
      %v623 = vunpack.c.l.b16 %v331
      %v624 = vunpack.c.l.b16 %v332
      %v625 = vunpack.c.l.b16 %v333
      %v626 = vunpack.c.l.b16 %v334
      %v627 = vunpack.c.l.b16 %v335
      %v628 = vunpack.c.l.b16 %v336
      %v629 = vunpack.c.l.b16 %v337
      %v630 = vunpack.c.l.b16 %v338
      %v631 = vunpack.c.l.b16 %v339
      %v632 = vunpack.c.l.b16 %v340
      %v633 = vunpack.c.l.b16 %v341
      %v634 = vunpack.c.l.b16 %v342
      %v635 = vunpack.c.l.b16 %v343
      %v636 = vunpack.c.l.b16 %v344
      %v637 = vunpack.c.l.b16 %v345
      %v638 = vunpack.c.l.b16 %v346
      %v639 = vunpack.c.l.b16 %v347
      %v640 = vunpack.c.l.b16 %v348
      %v641 = vunpack.c.l.b16 %v349
      %v642 = vunpack.c.l.b16 %v350
      %v643 = vunpack.c.l.b16 %v351
      %v644 = vunpack.c.l.b16 %v352
      %v645 = vunpack.c.l.b16 %v353
      %v646 = vunpack.c.l.b16 %v354
      %v647 = vunpack.c.l.b16 %v355
      %v648 = vunpack.c.l.b16 %v356
      %v649 = vunpack.c.l.b16 %v357
      %v650 = vunpack.c.l.b16 %v358
      %v651 = vunpack.c.l.b16 %v359
      %v652 = vunpack.c.l.b16 %v360
      %v653 = vunpack.c.l.b16 %v361
      %v654 = vunpack.c.l.b16 %v362
      %v655 = vunpack.c.l.b16 %v363
      %v656 = vunpack.c.l.b16 %v364
      %v657 = vunpack.c.l.b16 %v365
      %v658 = vunpack.c.l.b16 %v366
      %v659 = vunpack.c.l.b16 %v367
      %v660 = vunpack.c.l.b16 %v368
      %v661 = vpack.c.b16 %v598, %v597
      %v662 = vpack.c.b16 %v600, %v599
      %v663 = vpack.c.b16 %v602, %v601
      %v664 = vpack.c.b16 %v604, %v603
      %v665 = vpack.c.b16 %v606, %v605
      %v666 = vpack.c.b16 %v608, %v607
      %v667 = vpack.c.b16 %v610, %v609
      %v668 = vpack.c.b16 %v612, %v611
      %v669 = vpack.c.b16 %v614, %v613
      %v670 = vpack.c.b16 %v616, %v615
      %v671 = vpack.c.b16 %v618, %v617
      %v672 = vpack.c.b16 %v620, %v619
      %v673 = vpack.c.b16 %v622, %v621
      %v674 = vpack.c.b16 %v624, %v623
      %v675 = vpack.c.b16 %v626, %v625
      %v676 = vpack.c.b16 %v628, %v627
      %v677 = vpack.c.b16 %v630, %v629
      %v678 = vpack.c.b16 %v632, %v631
      %v679 = vpack.c.b16 %v634, %v633
      %v680 = vpack.c.b16 %v636, %v635
      %v681 = vpack.c.b16 %v638, %v637
      %v682 = vpack.c.b16 %v640, %v639
      %v683 = vpack.c.b16 %v642, %v641
      %v684 = vpack.c.b16 %v644, %v643
      %v685 = vpack.c.b16 %v646, %v645
      %v686 = vpack.c.b16 %v648, %v647
      %v687 = vpack.c.b16 %v650, %v649
      %v688 = vpack.c.b16 %v652, %v651
      %v689 = vpack.c.b16 %v654, %v653
      %v690 = vpack.c.b16 %v656, %v655
      %v691 = vpack.c.b16 %v658, %v657
      %v692 = vpack.c.b16 %v660, %v659
      %725 = vmatpush.bf16.msra.mxu0 %v668
      %726 = vmatpush.bf16.msra.mxu0 %v667
      %727 = vmatpush.bf16.msra.mxu0 %v666
      %728 = vmatpush.bf16.msra.mxu0 %v665
      %729 = vmatpush.bf16.msra.mxu0 %v664
      %730 = vmatpush.bf16.msra.mxu0 %v663
      %731 = vmatpush.bf16.msra.mxu0 %v662
      %732 = vmatpush.bf16.msra.mxu0 %v661
      %733 = vmatmul.bf16.gmra.mxu0 %v469
      %v734 = vpop.f32.mrf.mxu0
      %v735 = vadd.f32 %v371, %v734
      %v736 = vpop.f32.mrf.mxu0
      %v737 = vadd.f32 %v371, %v736
      %738 = vmatmul.bf16.gmra.mxu0 %v473
      %v739 = vpop.f32.mrf.mxu0
      %v740 = vadd.f32 %v371, %v739
      %v741 = vpop.f32.mrf.mxu0
      %v742 = vadd.f32 %v371, %v741
      %743 = vmatmul.bf16.gmra.mxu0 %v477
      %v744 = vpop.f32.mrf.mxu0
      %v745 = vadd.f32 %v371, %v744
      %v746 = vpop.f32.mrf.mxu0
      %v747 = vadd.f32 %v371, %v746
      %748 = vmatmul.bf16.gmra.mxu0 %v481
      %v749 = vpop.f32.mrf.mxu0
      %v750 = vadd.f32 %v371, %v749
      %v751 = vpop.f32.mrf.mxu0
      %v752 = vadd.f32 %v371, %v751
      %753 = vmatmul.bf16.gmra.mxu0 %v485
      %v754 = vpop.f32.mrf.mxu0
      %v755 = vadd.f32 %v371, %v754
      %v756 = vpop.f32.mrf.mxu0
      %v757 = vadd.f32 %v371, %v756
      %758 = vmatmul.bf16.gmra.mxu0 %v489
      %v759 = vpop.f32.mrf.mxu0
      %v760 = vadd.f32 %v371, %v759
      %v761 = vpop.f32.mrf.mxu0
      %v762 = vadd.f32 %v371, %v761
      %763 = vmatmul.bf16.gmra.mxu0 %v493
      %v764 = vpop.f32.mrf.mxu0
      %v765 = vadd.f32 %v371, %v764
      %v766 = vpop.f32.mrf.mxu0
      %v767 = vadd.f32 %v371, %v766
      %768 = vmatmul.bf16.gmra.mxu0 %v497
      %v769 = vpop.f32.mrf.mxu0
      %v770 = vadd.f32 %v371, %v769
      %v771 = vpop.f32.mrf.mxu0
      %v772 = vadd.f32 %v371, %v771
      %773 = vdwg.mxu0
      %774 = vmatpush.bf16.msra.mxu0 %v676
      %775 = vmatpush.bf16.msra.mxu0 %v675
      %776 = vmatpush.bf16.msra.mxu0 %v674
      %777 = vmatpush.bf16.msra.mxu0 %v673
      %778 = vmatpush.bf16.msra.mxu0 %v672
      %779 = vmatpush.bf16.msra.mxu0 %v671
      %780 = vmatpush.bf16.msra.mxu0 %v670
      %781 = vmatpush.bf16.msra.mxu0 %v669
      %782 = vmatmul.bf16.gmra.mxu0 %v470
      %v783 = vpop.f32.mrf.mxu0
      %v784 = vadd.f32 %v735, %v783
      %v785 = vpop.f32.mrf.mxu0
      %v786 = vadd.f32 %v737, %v785
      %787 = vmatmul.bf16.gmra.mxu0 %v474
      %v788 = vpop.f32.mrf.mxu0
      %v789 = vadd.f32 %v740, %v788
      %v790 = vpop.f32.mrf.mxu0
      %v791 = vadd.f32 %v742, %v790
      %792 = vmatmul.bf16.gmra.mxu0 %v478
      %v793 = vpop.f32.mrf.mxu0
      %v794 = vadd.f32 %v745, %v793
      %v795 = vpop.f32.mrf.mxu0
      %v796 = vadd.f32 %v747, %v795
      %797 = vmatmul.bf16.gmra.mxu0 %v482
      %v798 = vpop.f32.mrf.mxu0
      %v799 = vadd.f32 %v750, %v798
      %v800 = vpop.f32.mrf.mxu0
      %v801 = vadd.f32 %v752, %v800
      %802 = vmatmul.bf16.gmra.mxu0 %v486
      %v803 = vpop.f32.mrf.mxu0
      %v804 = vadd.f32 %v755, %v803
      %v805 = vpop.f32.mrf.mxu0
      %v806 = vadd.f32 %v757, %v805
      %807 = vmatmul.bf16.gmra.mxu0 %v490
      %v808 = vpop.f32.mrf.mxu0
      %v809 = vadd.f32 %v760, %v808
      %v810 = vpop.f32.mrf.mxu0
      %v811 = vadd.f32 %v762, %v810
      %812 = vmatmul.bf16.gmra.mxu0 %v494
      %v813 = vpop.f32.mrf.mxu0
      %v814 = vadd.f32 %v765, %v813
      %v815 = vpop.f32.mrf.mxu0
      %v816 = vadd.f32 %v767, %v815
      %817 = vmatmul.bf16.gmra.mxu0 %v498
      %v818 = vpop.f32.mrf.mxu0
      %v819 = vadd.f32 %v770, %v818
      %v820 = vpop.f32.mrf.mxu0
      %v821 = vadd.f32 %v772, %v820
      %822 = vdwg.mxu0
      %823 = vmatpush.bf16.msra.mxu0 %v684
      %824 = vmatpush.bf16.msra.mxu0 %v683
      %825 = vmatpush.bf16.msra.mxu0 %v682
      %826 = vmatpush.bf16.msra.mxu0 %v681
      %827 = vmatpush.bf16.msra.mxu0 %v680
      %828 = vmatpush.bf16.msra.mxu0 %v679
      %829 = vmatpush.bf16.msra.mxu0 %v678
      %830 = vmatpush.bf16.msra.mxu0 %v677
      %831 = vmatmul.bf16.gmra.mxu0 %v471
      %v832 = vpop.f32.mrf.mxu0
      %v833 = vadd.f32 %v784, %v832
      %v834 = vpop.f32.mrf.mxu0
      %v835 = vadd.f32 %v786, %v834
      %836 = vmatmul.bf16.gmra.mxu0 %v475
      %v837 = vpop.f32.mrf.mxu0
      %v838 = vadd.f32 %v789, %v837
      %v839 = vpop.f32.mrf.mxu0
      %v840 = vadd.f32 %v791, %v839
      %841 = vmatmul.bf16.gmra.mxu0 %v479
      %v842 = vpop.f32.mrf.mxu0
      %v843 = vadd.f32 %v794, %v842
      %v844 = vpop.f32.mrf.mxu0
      %v845 = vadd.f32 %v796, %v844
      %846 = vmatmul.bf16.gmra.mxu0 %v483
      %v847 = vpop.f32.mrf.mxu0
      %v848 = vadd.f32 %v799, %v847
      %v849 = vpop.f32.mrf.mxu0
      %v850 = vadd.f32 %v801, %v849
      %851 = vmatmul.bf16.gmra.mxu0 %v487
      %v852 = vpop.f32.mrf.mxu0
      %v853 = vadd.f32 %v804, %v852
      %v854 = vpop.f32.mrf.mxu0
      %v855 = vadd.f32 %v806, %v854
      %856 = vmatmul.bf16.gmra.mxu0 %v491
      %v857 = vpop.f32.mrf.mxu0
      %v858 = vadd.f32 %v809, %v857
      %v859 = vpop.f32.mrf.mxu0
      %v860 = vadd.f32 %v811, %v859
      %861 = vmatmul.bf16.gmra.mxu0 %v495
      %v862 = vpop.f32.mrf.mxu0
      %v863 = vadd.f32 %v814, %v862
      %v864 = vpop.f32.mrf.mxu0
      %v865 = vadd.f32 %v816, %v864
      %866 = vmatmul.bf16.gmra.mxu0 %v499
      %v867 = vpop.f32.mrf.mxu0
      %v868 = vadd.f32 %v819, %v867
      %v869 = vpop.f32.mrf.mxu0
      %v870 = vadd.f32 %v821, %v869
      %871 = vdwg.mxu0
      %872 = vmatpush.bf16.msra.mxu0 %v692
      %873 = vmatpush.bf16.msra.mxu0 %v691
      %874 = vmatpush.bf16.msra.mxu0 %v690
      %875 = vmatpush.bf16.msra.mxu0 %v689
      %876 = vmatpush.bf16.msra.mxu0 %v688
      %877 = vmatpush.bf16.msra.mxu0 %v687
      %878 = vmatpush.bf16.msra.mxu0 %v686
      %879 = vmatpush.bf16.msra.mxu0 %v685
      %880 = vmatmul.bf16.gmra.mxu0 %v472
      %v881 = vpop.f32.mrf.mxu0
      %v882 = vadd.f32 %v833, %v881
      %v883 = vpop.f32.mrf.mxu0
      %v884 = vadd.f32 %v835, %v883
      %885 = vmatmul.bf16.gmra.mxu0 %v476
      %v886 = vpop.f32.mrf.mxu0
      %v887 = vadd.f32 %v838, %v886
      %v888 = vpop.f32.mrf.mxu0
      %v889 = vadd.f32 %v840, %v888
      %890 = vmatmul.bf16.gmra.mxu0 %v480
      %v891 = vpop.f32.mrf.mxu0
      %v892 = vadd.f32 %v843, %v891
      %v893 = vpop.f32.mrf.mxu0
      %v894 = vadd.f32 %v845, %v893
      %895 = vmatmul.bf16.gmra.mxu0 %v484
      %v896 = vpop.f32.mrf.mxu0
      %v897 = vadd.f32 %v848, %v896
      %v898 = vpop.f32.mrf.mxu0
      %v899 = vadd.f32 %v850, %v898
      %900 = vmatmul.bf16.gmra.mxu0 %v488
      %v901 = vpop.f32.mrf.mxu0
      %v902 = vadd.f32 %v853, %v901
      %v903 = vpop.f32.mrf.mxu0
      %v904 = vadd.f32 %v855, %v903
      %905 = vmatmul.bf16.gmra.mxu0 %v492
      %v906 = vpop.f32.mrf.mxu0
      %v907 = vadd.f32 %v858, %v906
      %v908 = vpop.f32.mrf.mxu0
      %v909 = vadd.f32 %v860, %v908
      %910 = vmatmul.bf16.gmra.mxu0 %v496
      %v911 = vpop.f32.mrf.mxu0
      %v912 = vadd.f32 %v863, %v911
      %v913 = vpop.f32.mrf.mxu0
      %v914 = vadd.f32 %v865, %v913
      %915 = vmatmul.bf16.gmra.mxu0 %v500
      %v916 = vpop.f32.mrf.mxu0
      %v917 = vadd.f32 %v868, %v916
      %v918 = vpop.f32.mrf.mxu0
      %v919 = vadd.f32 %v870, %v918
      %920 = vdwg.mxu0
      %v921 = vmax.f32 %v882, 0.0
      %v922 = vmax.f32 %v884, 0.0
      %v923 = vmax.f32 %v887, 0.0
      %v924 = vmax.f32 %v889, 0.0
      %v925 = vmax.f32 %v892, 0.0
      %v926 = vmax.f32 %v894, 0.0
      %v927 = vmax.f32 %v897, 0.0
      %v928 = vmax.f32 %v899, 0.0
      %v929 = vmax.f32 %v902, 0.0
      %v930 = vmax.f32 %v904, 0.0
      %v931 = vmax.f32 %v907, 0.0
      %v932 = vmax.f32 %v909, 0.0
      %v933 = vmax.f32 %v912, 0.0
      %v934 = vmax.f32 %v914, 0.0
      %v935 = vmax.f32 %v917, 0.0
      %v936 = vmax.f32 %v919, 0.0
      %v937 = vpack.c.bf16 %v921, %v921
      %v938 = vpack.c.bf16 %v922, %v922
      %v939 = vpack.c.bf16 %v923, %v923
      %v940 = vpack.c.bf16 %v924, %v924
      %v941 = vpack.c.bf16 %v925, %v925
      %v942 = vpack.c.bf16 %v926, %v926
      %v943 = vpack.c.bf16 %v927, %v927
      %v944 = vpack.c.bf16 %v928, %v928
      %v945 = vpack.c.bf16 %v929, %v929
      %v946 = vpack.c.bf16 %v930, %v930
      %v947 = vpack.c.bf16 %v931, %v931
      %v948 = vpack.c.bf16 %v932, %v932
      %v949 = vpack.c.bf16 %v933, %v933
      %v950 = vpack.c.bf16 %v934, %v934
      %v951 = vpack.c.bf16 %v935, %v935
      %v952 = vpack.c.bf16 %v936, %v936
      %953 = vst [vmem:[%s271] sm:$0xf] %v937
      %954 = vst [vmem:[%s271 + $0x4] sm:$0xf] %v938
      %955 = vst [vmem:[%s271 + $0x8] sm:$0xf] %v939
      %956 = vst [vmem:[%s271 + $0xc] sm:$0xf] %v940
      %957 = vst [vmem:[%s271 + $0x10] sm:$0xf] %v941
      %958 = vst [vmem:[%s271 + $0x14] sm:$0xf] %v942
      %959 = vst [vmem:[%s271 + $0x18] sm:$0xf] %v943
      %960 = vst [vmem:[%s271 + $0x1c] sm:$0xf] %v944
      %961 = vst [vmem:[%s271 + $0x20] sm:$0xf] %v945
      %962 = vst [vmem:[%s271 + $0x24] sm:$0xf] %v946
      %963 = vst [vmem:[%s271 + $0x28] sm:$0xf] %v947
      %964 = vst [vmem:[%s271 + $0x2c] sm:$0xf] %v948
      %965 = vst [vmem:[%s271 + $0x30] sm:$0xf] %v949
      %966 = vst [vmem:[%s271 + $0x34] sm:$0xf] %v950
      %967 = vst [vmem:[%s271 + $0x38] sm:$0xf] %v951
      %968 = vst [vmem:[%s271 + $0x3c] sm:$0xf] %v952
      %s969 = smul.u32 16, %s20
      %p970 = scmp.lt.s32.totalorder %s19, 3
      %s971 = scalar_select %p970, %s19, 3
      %p972 = scmp.lt.s32.totalorder %s969, 15
      %s973 = scalar_select %p972, %s969, 15
      %p974 = scmp.lt.s32.totalorder %s21, 0
      %s975 = scalar_select %p974, %s21, 0
      %s976 = sadd.s32 %s975, %s973
      %s977 = smul.addr %s971, 16
      %s978 = sadd.s32 %s976, %s977
      %s979 = smul.addr %s978, 4
      %s980 = scalar_lea.vmem %s3, %s979
      // Predicated region
      $region33: #{generator_forward.10} parent=31 // pred_check
        %p981 = pneg %p137
      $region34: #{generator_forward.10} parent=31 // pred_check_branch
        %983 = sbr.rel (%p981) target = $region36
      $region35: #{generator_forward.10} parent=31 // pred_region
        %s984 = smul.u32 16, %s20
      $region36: #{generator_forward.10} parent=31 // pred_fallthru
        _
    $region32: #{generator_forward.10} parent=5 // pred_fallthru
      _
    %p985 = scmp.le.s32.totalorder 2, %s9
    // Predicated region
    $region37: #{generator_forward.10} parent=5 // pred_check
      %p986 = pneg %p985
    $region38: #{generator_forward.10} parent=5 // pred_check_branch
      %988 = sbr.rel (%p986) target = $region40
    $region39: #{generator_forward.10} parent=5 // pred_region
      %s989 = ssub.s32 %s9, 2
      // Predicated region
      $region41: #{generator_forward.10} parent=39 // pred_check
        %p990 = pneg %p143
      $region42: #{generator_forward.10} parent=39 // pred_check_branch
        %992 = sbr.rel (%p990) target = $region44
      $region43: #{generator_forward.10} parent=39 // pred_region
        %s993 = smul.u32 16, %s23
        %p994 = scmp.lt.s32.totalorder %s22, 3
        %s995 = scalar_select %p994, %s22, 3
        %p996 = scmp.lt.s32.totalorder %s993, 15
        %s997 = scalar_select %p996, %s993, 15
        %p998 = scmp.lt.s32.totalorder %s24, 0
        %s999 = scalar_select %p998, %s24, 0
        %s1000 = sadd.s32 %s999, %s997
        %s1001 = smul.addr %s995, 16
        %s1002 = sadd.s32 %s1000, %s1001
        %s1003 = smul.addr %s1002, 4
        %s1004 = scalar_lea.vmem %s3, %s1003
      $region44: #{generator_forward.10} parent=39 // pred_fallthru
        _
    $region40: #{generator_forward.10} parent=5 // pred_fallthru
      _
  $region6: #{generator_forward.10} parent=0 // loop_footer
    %s13 = sadd.s32 1, %s9
  $region7: #{generator_forward.10} parent=0 // loop_footer_branch
    %8 = sbr.rel target = $region3
  $region8: #{generator_forward.10} parent=0 // loop_exit
    _

// kernel: generator_forward.11
$region0: #{generator_forward.11}
  #allocation0 [shape = 'u32[]', space=smem, size = 0x4, offset = 0x4, fixed_abs, tag = 'smem constant byte address 0x4 - core index']
  #allocation1 [shape = 'u32[72,128]{1,0:T(1,128)}', space=vmem, size = 0x9000, scoped, tag = 'internal scratch']
  #allocation2 [shape = 'f32[256,128]{1,0:T(8,128)}', space=vmem, size = 0x20000, scoped, tag = 'scratch operand']
  %s0 = inlined_call_operand.vmem [shape: bf16[1,512,3200], index: 0, kind: input, shape index: {}]
  %s1 = inlined_call_operand.vmem [shape: bf16[1,3200,128], index: 1, kind: input, shape index: {}]
  %s2 = inlined_call_operand.vmem [shape: f32[1,128], index: 2, kind: input, shape index: {}]
  %s3 = inlined_call_operand.vmem [shape: f32[1,512,128], index: 3, kind: output, shape index: {}]
  %s4 = sld [smem:[#allocation0]]
  $region79: #{generator_forward.11} parent=0
    _
  %s6 = ssub.s32 1, %s4
  %s7 = scalar_select 0, %s6, %s4
  $region1: #{generator_forward.11} parent=0
    #allocation3 [shape = 'u8[655360]{0}', space=vmem, size = 0xa0000, scoped, tag = 'input window, operand 0']
    loop: start=0, step=1, limit=12
    $region2: #{generator_forward.11} parent=1 // loop_pre_header
      _
    $region3: #{generator_forward.11} parent=1 // loop_header
      %s9 = sphi 0, %s13
      %p10 = scmp.ge.s32.totalorder %s9, 12
      %s16 = sphi 0, %s42
      %s17 = sphi 0, %s38
      %s18 = sphi 0, %s34
      %s19 = sphi 0, %s30
      %s20 = sphi 0, %s16
      %s21 = sphi 0, %s17
      %s22 = sphi 0, %s18
      %s23 = sphi 0, %s19
      %s24 = sphi 0, %s20
      %s25 = sphi 0, %s21
      %s26 = sphi 0, %s22
      %s27 = sphi 0, %s23
      %s49 = sphi 0, %s51
      %s52 = sphi 0, %s49
      %s53 = sphi 0, %s52
      %s69 = sphi 0, %s53
      %s79 = sphi 0, %s81
      %s82 = sphi 0, %s79
      %s83 = sphi 0, %s82
      %s99 = sphi 0, %s83
      %s105 = sphi 0, %s107
      %s108 = sphi 0, %s105
      %s109 = sphi 0, %s108
      %s125 = sphi 0, %s109
      %s135 = sphi 0, %s137
      %s138 = sphi 0, %s135
      %s139 = sphi 0, %s138
      %s155 = sphi 0, %s139
    $region4: #{generator_forward.11} parent=1 // loop_header_branch
      %12 = sbr.rel (%p10) target = $region8
    $region5: #{generator_forward.11} parent=1 // loop_body
      %s14 = ssub.s32 %s9, 1
      %s15 = ssub.s32 %s9, 2
      %s28 = sadd.s32 1, %s19
      %p29 = scmp.ge.s32.totalorder %s28, 5
      %s30 = scalar_select %p29, 0, %s28
      %s31 = sadd.s32 1, %s18
      %s32 = scalar_select %p29, %s31, %s18
      %p33 = scmp.ge.s32.totalorder %s32, 1
      %s34 = scalar_select %p33, 0, %s32
      %s35 = sadd.s32 1, %s17
      %s36 = scalar_select %p33, %s35, %s17
      %p37 = scmp.ge.s32.totalorder %s36, 2
      %s38 = scalar_select %p37, 0, %s36
      %s39 = sadd.s32 1, %s16
      %s40 = scalar_select %p37, %s39, %s16
      %p41 = scmp.ge.s32.totalorder %s40, 1
      %s42 = scalar_select %p41, 0, %s40
      %s43 = ssub.s32 %s16, %s42
      %s44 = ssub.s32 %s17, %s38
      %s45 = sor.u32 %s43, %s44
      %s46 = ssub.s32 %s19, %s30
      %s47 = sor.u32 %s45, %s46
      %p48 = scmp.eq.s32.totalorder %s47, 0
      %s50 = sadd.s32 %s49, 1
      %s51 = scalar_select %p48, %s49, %s50
      %p54 = pneg %p48
      %p55 = scmp.eq.s32.totalorder %s9, 9
      %p56 = por %p54, %p55
      %p57 = scmp.ne.s32.totalorder %s49, %s52
      %p58 = scmp.eq.s32.totalorder %s9, 0
      %p59 = por %p57, %p58
      %p60 = scmp.ne.s32.totalorder %s49, %s52
      %p61 = scmp.eq.s32.totalorder %s14, 9
      %p62 = por %p60, %p61
      %p63 = scmp.ne.s32.totalorder %s52, %s53
      %p64 = scmp.eq.s32.totalorder %s14, 0
      %p65 = por %p63, %p64
      %p66 = scmp.ne.s32.totalorder %s52, %s53
      %p67 = scmp.eq.s32.totalorder %s15, 9
      %p68 = por %p66, %p67
      %p70 = scmp.ne.s32.totalorder %s53, %s69
      %p71 = scmp.eq.s32.totalorder %s15, 0
      %p72 = por %p70, %p71
      %s73 = ssub.s32 %s16, %s42
      %s74 = ssub.s32 %s19, %s30
      %s75 = sor.u32 %s73, %s74
      %s76 = ssub.s32 %s18, %s34
      %s77 = sor.u32 %s75, %s76
      %p78 = scmp.eq.s32.totalorder %s77, 0
      %s80 = sadd.s32 %s79, 1
      %s81 = scalar_select %p78, %s79, %s80
      %p84 = pneg %p78
      %p85 = scmp.eq.s32.totalorder %s9, 9
      %p86 = por %p84, %p85
      %p87 = scmp.ne.s32.totalorder %s79, %s82
      %p88 = scmp.eq.s32.totalorder %s9, 0
      %p89 = por %p87, %p88
      %p90 = scmp.ne.s32.totalorder %s79, %s82
      %p91 = scmp.eq.s32.totalorder %s14, 9
      %p92 = por %p90, %p91
      %p93 = scmp.ne.s32.totalorder %s82, %s83
      %p94 = scmp.eq.s32.totalorder %s14, 0
      %p95 = por %p93, %p94
      %p96 = scmp.ne.s32.totalorder %s82, %s83
      %p97 = scmp.eq.s32.totalorder %s15, 9
      %p98 = por %p96, %p97
      %p100 = scmp.ne.s32.totalorder %s83, %s99
      %p101 = scmp.eq.s32.totalorder %s15, 0
      %p102 = por %p100, %p101
      %s103 = ssub.s32 %s18, %s34
      %p104 = scmp.eq.s32.totalorder %s103, 0
      %s106 = sadd.s32 %s105, 1
      %s107 = scalar_select %p104, %s105, %s106
      %p110 = pneg %p104
      %p111 = scmp.eq.s32.totalorder %s9, 9
      %p112 = por %p110, %p111
      %p113 = scmp.ne.s32.totalorder %s105, %s108
      %p114 = scmp.eq.s32.totalorder %s9, 0
      %p115 = por %p113, %p114
      %p116 = scmp.ne.s32.totalorder %s105, %s108
      %p117 = scmp.eq.s32.totalorder %s14, 9
      %p118 = por %p116, %p117
      %p119 = scmp.ne.s32.totalorder %s108, %s109
      %p120 = scmp.eq.s32.totalorder %s14, 0
      %p121 = por %p119, %p120
      %p122 = scmp.ne.s32.totalorder %s108, %s109
      %p123 = scmp.eq.s32.totalorder %s15, 9
      %p124 = por %p122, %p123
      %p126 = scmp.ne.s32.totalorder %s109, %s125
      %p127 = scmp.eq.s32.totalorder %s15, 0
      %p128 = por %p126, %p127
      %s129 = ssub.s32 %s16, %s42
      %s130 = ssub.s32 %s17, %s38
      %s131 = sor.u32 %s129, %s130
      %s132 = ssub.s32 %s18, %s34
      %s133 = sor.u32 %s131, %s132
      %p134 = scmp.eq.s32.totalorder %s133, 0
      %s136 = sadd.s32 %s135, 1
      %s137 = scalar_select %p134, %s135, %s136
      %p140 = pneg %p134
      %p141 = scmp.eq.s32.totalorder %s9, 9
      %p142 = por %p140, %p141
      %p143 = scmp.ne.s32.totalorder %s135, %s138
      %p144 = scmp.eq.s32.totalorder %s9, 0
      %p145 = por %p143, %p144
      %p146 = scmp.ne.s32.totalorder %s135, %s138
      %p147 = scmp.eq.s32.totalorder %s14, 9
      %p148 = por %p146, %p147
      %p149 = scmp.ne.s32.totalorder %s138, %s139
      %p150 = scmp.eq.s32.totalorder %s14, 0
      %p151 = por %p149, %p150
      %p152 = scmp.ne.s32.totalorder %s138, %s139
      %p153 = scmp.eq.s32.totalorder %s15, 9
      %p154 = por %p152, %p153
      %p156 = scmp.ne.s32.totalorder %s139, %s155
      %p157 = scmp.eq.s32.totalorder %s15, 0
      %p158 = por %p156, %p157
      %p159 = scmp.le.s32.totalorder 1, %s9
      %p160 = scmp.lt.s32.totalorder %s9, 11
      %p161 = pnand %p159, %p160
      %p162 = pneg %p161
      // Predicated region
      $region9: #{generator_forward.11} parent=5 // pred_check
        _
      $region10: #{generator_forward.11} parent=5 // pred_check_branch
        %164 = sbr.rel (%p161) target = $region12
      $region11: #{generator_forward.11} parent=5 // pred_region
        %s165 = ssub.s32 %s9, 1
        // Predicated region
        $region13: #{generator_forward.11} parent=11 // pred_check
          %p166 = pneg %p121
        $region14: #{generator_forward.11} parent=11 // pred_check_branch
          %168 = sbr.rel (%p166) target = $region16
        $region15: #{generator_forward.11} parent=11 // pred_region
          %p169 = scmp.lt.s32.totalorder %s22, 0
          %s170 = scalar_select %p169, %s22, 0
          %s171 = scalar_lea.vmem %s2, %s170
        $region16: #{generator_forward.11} parent=11 // pred_fallthru
          _
      $region12: #{generator_forward.11} parent=5 // pred_fallthru
        _
      %p172 = scmp.lt.s32.totalorder %s9, 10
      // Predicated region
      $region17: #{generator_forward.11} parent=5 // pred_check
        %p173 = pneg %p172
      $region18: #{generator_forward.11} parent=5 // pred_check_branch
        %175 = sbr.rel (%p173) target = $region20
      $region19: #{generator_forward.11} parent=5 // pred_region
        // Predicated region
        $region21: #{generator_forward.11} parent=19 // pred_check
          %p176 = pneg %p59
        $region22: #{generator_forward.11} parent=19 // pred_check_branch
          %178 = sbr.rel (%p176) target = $region24
        $region23: #{generator_forward.11} parent=19 // pred_region
          %s179 = sand.u32 %s49, 1
          %s180 = sand.u32 %s49, 1
          %s181 = smul.addr %s180, 640
          %s182 = scalar_lea.vmem [#allocation3], %s181
          %s183 = smul.u32 32, %s17
          %s184 = smul.u32 5, %s19
          %s185 = smul.addr %s183, 25
          %s186 = sadd.s32 %s184, %s185
          %s187 = smul.addr %s16, 1600
          %s188 = sadd.s32 %s186, %s187
          %s189 = smul.addr %s188, 4
          %s190 = scalar_lea.vmem %s0, %s189
          // Predicated region
          $region25: #{generator_forward.11} parent=23 // pred_check
            _
          $region26: #{generator_forward.11} parent=23 // pred_check_branch
            %192 = sbr.rel (0) target = $region28
          $region27: #{generator_forward.11} parent=23 // pred_region
            // Predicated region
            $region29: #{generator_forward.11} parent=27 // pred_check
              _
            $region30: #{generator_forward.11} parent=27 // pred_check_branch
              %194 = sbr.rel (0) target = $region32
            $region31: #{generator_forward.11} parent=27 // pred_region
              %s195 = scalar_lea.vmem %s190, 16
              %s196 = scalar_lea.vmem %s182, 16 [#allocation3]
              loop: start=0, step=1, limit=1
              $region33: #{generator_forward.11} parent=31 // loop_pre_header
                _
              $region34: #{generator_forward.11} parent=31 // loop_header
                %s198 = sphi 0, %s202
                %p199 = scmp.ge.s32.totalorder %s198, 1
                %s203 = sphi %s190, %s190
                %s204 = sphi %s182, %s182
              $region35: #{generator_forward.11} parent=31 // loop_header_branch
                %201 = sbr.rel (%p199) target = $region39
              $region36: #{generator_forward.11} parent=31 // loop_body
                %v205 = vld [vmem:[%s203] sm:$0xff]
                %206 = vst [vmem:[%s204] sm:$0xff] %v205
                %v207 = vld [vmem:[%s203 + $0x8] sm:$0xff]
                %208 = vst [vmem:[%s204 + $0x8] sm:$0xff] %v207
                %v209 = vld [vmem:[%s203 + $0x64] sm:$0xff]
                %210 = vst [vmem:[%s204 + $0x14] sm:$0xff] %v209
                %v211 = vld [vmem:[%s203 + $0x6c] sm:$0xff]
                %212 = vst [vmem:[%s204 + $0x1c] sm:$0xff] %v211
                %v213 = vld [vmem:[%s203 + $0xc8] sm:$0xff]
                %214 = vst [vmem:[%s204 + $0x28] sm:$0xff] %v213
                %v215 = vld [vmem:[%s203 + $0xd0] sm:$0xff]
                %216 = vst [vmem:[%s204 + $0x30] sm:$0xff] %v215
                %v217 = vld [vmem:[%s203 + $0x12c] sm:$0xff]
                %218 = vst [vmem:[%s204 + $0x3c] sm:$0xff] %v217
                %v219 = vld [vmem:[%s203 + $0x134] sm:$0xff]
                %220 = vst [vmem:[%s204 + $0x44] sm:$0xff] %v219
                %v221 = vld [vmem:[%s203 + $0x190] sm:$0xff]
                %222 = vst [vmem:[%s204 + $0x50] sm:$0xff] %v221
                %v223 = vld [vmem:[%s203 + $0x198] sm:$0xff]
                %224 = vst [vmem:[%s204 + $0x58] sm:$0xff] %v223
                %v225 = vld [vmem:[%s203 + $0x1f4] sm:$0xff]
                %226 = vst [vmem:[%s204 + $0x64] sm:$0xff] %v225
                %v227 = vld [vmem:[%s203 + $0x1fc] sm:$0xff]
                %228 = vst [vmem:[%s204 + $0x6c] sm:$0xff] %v227
                %v229 = vld [vmem:[%s203 + $0x258] sm:$0xff]
                %230 = vst [vmem:[%s204 + $0x78] sm:$0xff] %v229
                %v231 = vld [vmem:[%s203 + $0x260] sm:$0xff]
                %232 = vst [vmem:[%s204 + $0x80] sm:$0xff] %v231
                %v233 = vld [vmem:[%s203 + $0x2bc] sm:$0xff]
                %234 = vst [vmem:[%s204 + $0x8c] sm:$0xff] %v233
                %v235 = vld [vmem:[%s203 + $0x2c4] sm:$0xff]
                %236 = vst [vmem:[%s204 + $0x94] sm:$0xff] %v235
                %v237 = vld [vmem:[%s203 + $0x320] sm:$0xff]
                %238 = vst [vmem:[%s204 + $0xa0] sm:$0xff] %v237
                %v239 = vld [vmem:[%s203 + $0x328] sm:$0xff]
                %240 = vst [vmem:[%s204 + $0xa8] sm:$0xff] %v239
                %v241 = vld [vmem:[%s203 + $0x384] sm:$0xff]
                %242 = vst [vmem:[%s204 + $0xb4] sm:$0xff] %v241
                %v243 = vld [vmem:[%s203 + $0x38c] sm:$0xff]
                %244 = vst [vmem:[%s204 + $0xbc] sm:$0xff] %v243
                %v245 = vld [vmem:[%s203 + $0x3e8] sm:$0xff]
                %246 = vst [vmem:[%s204 + $0xc8] sm:$0xff] %v245
                %v247 = vld [vmem:[%s203 + $0x3f0] sm:$0xff]
                %248 = vst [vmem:[%s204 + $0xd0] sm:$0xff] %v247
                %v249 = vld [vmem:[%s203 + $0x44c] sm:$0xff]
                %250 = vst [vmem:[%s204 + $0xdc] sm:$0xff] %v249
                %v251 = vld [vmem:[%s203 + $0x454] sm:$0xff]
                %252 = vst [vmem:[%s204 + $0xe4] sm:$0xff] %v251
                %v253 = vld [vmem:[%s203 + $0x4b0] sm:$0xff]
                %254 = vst [vmem:[%s204 + $0xf0] sm:$0xff] %v253
                %v255 = vld [vmem:[%s203 + $0x4b8] sm:$0xff]
                %256 = vst [vmem:[%s204 + $0xf8] sm:$0xff] %v255
                %v257 = vld [vmem:[%s203 + $0x514] sm:$0xff]
                %258 = vst [vmem:[%s204 + $0x104] sm:$0xff] %v257
                %v259 = vld [vmem:[%s203 + $0x51c] sm:$0xff]
                %260 = vst [vmem:[%s204 + $0x10c] sm:$0xff] %v259
                %v261 = vld [vmem:[%s203 + $0x578] sm:$0xff]
                %262 = vst [vmem:[%s204 + $0x118] sm:$0xff] %v261
                %v263 = vld [vmem:[%s203 + $0x580] sm:$0xff]
                %264 = vst [vmem:[%s204 + $0x120] sm:$0xff] %v263
                %v265 = vld [vmem:[%s203 + $0x5dc] sm:$0xff]
                %266 = vst [vmem:[%s204 + $0x12c] sm:$0xff] %v265
                %v267 = vld [vmem:[%s203 + $0x5e4] sm:$0xff]
                %268 = vst [vmem:[%s204 + $0x134] sm:$0xff] %v267
                %v269 = vld [vmem:[%s203 + $0x640] sm:$0xff]
                %270 = vst [vmem:[%s204 + $0x140] sm:$0xff] %v269
                %v271 = vld [vmem:[%s203 + $0x648] sm:$0xff]
                %272 = vst [vmem:[%s204 + $0x148] sm:$0xff] %v271
                %v273 = vld [vmem:[%s203 + $0x6a4] sm:$0xff]
                %274 = vst [vmem:[%s204 + $0x154] sm:$0xff] %v273
                %v275 = vld [vmem:[%s203 + $0x6ac] sm:$0xff]
                %276 = vst [vmem:[%s204 + $0x15c] sm:$0xff] %v275
                %v277 = vld [vmem:[%s203 + $0x708] sm:$0xff]
                %278 = vst [vmem:[%s204 + $0x168] sm:$0xff] %v277
                %v279 = vld [vmem:[%s203 + $0x710] sm:$0xff]
                %280 = vst [vmem:[%s204 + $0x170] sm:$0xff] %v279
                %v281 = vld [vmem:[%s203 + $0x76c] sm:$0xff]
                %282 = vst [vmem:[%s204 + $0x17c] sm:$0xff] %v281
                %v283 = vld [vmem:[%s203 + $0x774] sm:$0xff]
                %284 = vst [vmem:[%s204 + $0x184] sm:$0xff] %v283
                %v285 = vld [vmem:[%s203 + $0x7d0] sm:$0xff]
                %286 = vst [vmem:[%s204 + $0x190] sm:$0xff] %v285
                %v287 = vld [vmem:[%s203 + $0x7d8] sm:$0xff]
                %288 = vst [vmem:[%s204 + $0x198] sm:$0xff] %v287
                %v289 = vld [vmem:[%s203 + $0x834] sm:$0xff]
                %290 = vst [vmem:[%s204 + $0x1a4] sm:$0xff] %v289
                %v291 = vld [vmem:[%s203 + $0x83c] sm:$0xff]
                %292 = vst [vmem:[%s204 + $0x1ac] sm:$0xff] %v291
                %v293 = vld [vmem:[%s203 + $0x898] sm:$0xff]
                %294 = vst [vmem:[%s204 + $0x1b8] sm:$0xff] %v293
                %v295 = vld [vmem:[%s203 + $0x8a0] sm:$0xff]
                %296 = vst [vmem:[%s204 + $0x1c0] sm:$0xff] %v295
                %v297 = vld [vmem:[%s203 + $0x8fc] sm:$0xff]
                %298 = vst [vmem:[%s204 + $0x1cc] sm:$0xff] %v297
                %v299 = vld [vmem:[%s203 + $0x904] sm:$0xff]
                %300 = vst [vmem:[%s204 + $0x1d4] sm:$0xff] %v299
                %v301 = vld [vmem:[%s203 + $0x960] sm:$0xff]
                %302 = vst [vmem:[%s204 + $0x1e0] sm:$0xff] %v301
                %v303 = vld [vmem:[%s203 + $0x968] sm:$0xff]
                %304 = vst [vmem:[%s204 + $0x1e8] sm:$0xff] %v303
                %v305 = vld [vmem:[%s203 + $0x9c4] sm:$0xff]
                %306 = vst [vmem:[%s204 + $0x1f4] sm:$0xff] %v305
                %v307 = vld [vmem:[%s203 + $0x9cc] sm:$0xff]
                %308 = vst [vmem:[%s204 + $0x1fc] sm:$0xff] %v307
                %v309 = vld [vmem:[%s203 + $0xa28] sm:$0xff]
                %310 = vst [vmem:[%s204 + $0x208] sm:$0xff] %v309
                %v311 = vld [vmem:[%s203 + $0xa30] sm:$0xff]
                %312 = vst [vmem:[%s204 + $0x210] sm:$0xff] %v311
                %v313 = vld [vmem:[%s203 + $0xa8c] sm:$0xff]
                %314 = vst [vmem:[%s204 + $0x21c] sm:$0xff] %v313
                %v315 = vld [vmem:[%s203 + $0xa94] sm:$0xff]
                %316 = vst [vmem:[%s204 + $0x224] sm:$0xff] %v315
                %v317 = vld [vmem:[%s203 + $0xaf0] sm:$0xff]
                %318 = vst [vmem:[%s204 + $0x230] sm:$0xff] %v317
                %v319 = vld [vmem:[%s203 + $0xaf8] sm:$0xff]
                %320 = vst [vmem:[%s204 + $0x238] sm:$0xff] %v319
                %v321 = vld [vmem:[%s203 + $0xb54] sm:$0xff]
                %322 = vst [vmem:[%s204 + $0x244] sm:$0xff] %v321
                %v323 = vld [vmem:[%s203 + $0xb5c] sm:$0xff]
                %324 = vst [vmem:[%s204 + $0x24c] sm:$0xff] %v323
                %v325 = vld [vmem:[%s203 + $0xbb8] sm:$0xff]
                %326 = vst [vmem:[%s204 + $0x258] sm:$0xff] %v325
                %v327 = vld [vmem:[%s203 + $0xbc0] sm:$0xff]
                %328 = vst [vmem:[%s204 + $0x260] sm:$0xff] %v327
                %v329 = vld [vmem:[%s203 + $0xc1c] sm:$0xff]
                %330 = vst [vmem:[%s204 + $0x26c] sm:$0xff] %v329
                %v331 = vld [vmem:[%s203 + $0xc24] sm:$0xff]
                %332 = vst [vmem:[%s204 + $0x274] sm:$0xff] %v331
              $region37: #{generator_forward.11} parent=31 // loop_footer
                %s202 = sadd.s32 1, %s198
              $region38: #{generator_forward.11} parent=31 // loop_footer_branch
                %197 = sbr.rel target = $region34
              $region39: #{generator_forward.11} parent=31 // loop_exit
                _
              %s334 = ssub.s32 16, 1
              loop: start=0, step=1, limit=1
              $region40: #{generator_forward.11} parent=31 // loop_pre_header
                _
              $region41: #{generator_forward.11} parent=31 // loop_header
                %s336 = sphi 0, %s340
                %p337 = scmp.ge.s32.totalorder %s336, 1
                %s341 = sphi %s195, %s195
                %s342 = sphi %s196, %s196
              $region42: #{generator_forward.11} parent=31 // loop_header_branch
                %339 = sbr.rel (%p337) target = $region46
              $region43: #{generator_forward.11} parent=31 // loop_body
                %v343 = vld [vmem:[%s341] sm:%s334]
                %344 = vst [vmem:[%s342] sm:%s334] %v343
                %v345 = vld [vmem:[%s341 + $0x64] sm:%s334]
                %346 = vst [vmem:[%s342 + $0x14] sm:%s334] %v345
                %v347 = vld [vmem:[%s341 + $0xc8] sm:%s334]
                %348 = vst [vmem:[%s342 + $0x28] sm:%s334] %v347
                %v349 = vld [vmem:[%s341 + $0x12c] sm:%s334]
                %350 = vst [vmem:[%s342 + $0x3c] sm:%s334] %v349
                %v351 = vld [vmem:[%s341 + $0x190] sm:%s334]
                %352 = vst [vmem:[%s342 + $0x50] sm:%s334] %v351
                %v353 = vld [vmem:[%s341 + $0x1f4] sm:%s334]
                %354 = vst [vmem:[%s342 + $0x64] sm:%s334] %v353
                %v355 = vld [vmem:[%s341 + $0x258] sm:%s334]
                %356 = vst [vmem:[%s342 + $0x78] sm:%s334] %v355
                %v357 = vld [vmem:[%s341 + $0x2bc] sm:%s334]
                %358 = vst [vmem:[%s342 + $0x8c] sm:%s334] %v357
                %v359 = vld [vmem:[%s341 + $0x320] sm:%s334]
                %360 = vst [vmem:[%s342 + $0xa0] sm:%s334] %v359
                %v361 = vld [vmem:[%s341 + $0x384] sm:%s334]
                %362 = vst [vmem:[%s342 + $0xb4] sm:%s334] %v361
                %v363 = vld [vmem:[%s341 + $0x3e8] sm:%s334]
                %364 = vst [vmem:[%s342 + $0xc8] sm:%s334] %v363
                %v365 = vld [vmem:[%s341 + $0x44c] sm:%s334]
                %366 = vst [vmem:[%s342 + $0xdc] sm:%s334] %v365
                %v367 = vld [vmem:[%s341 + $0x4b0] sm:%s334]
                %368 = vst [vmem:[%s342 + $0xf0] sm:%s334] %v367
                %v369 = vld [vmem:[%s341 + $0x514] sm:%s334]
                %370 = vst [vmem:[%s342 + $0x104] sm:%s334] %v369
                %v371 = vld [vmem:[%s341 + $0x578] sm:%s334]
                %372 = vst [vmem:[%s342 + $0x118] sm:%s334] %v371
                %v373 = vld [vmem:[%s341 + $0x5dc] sm:%s334]
                %374 = vst [vmem:[%s342 + $0x12c] sm:%s334] %v373
                %v375 = vld [vmem:[%s341 + $0x640] sm:%s334]
                %376 = vst [vmem:[%s342 + $0x140] sm:%s334] %v375
                %v377 = vld [vmem:[%s341 + $0x6a4] sm:%s334]
                %378 = vst [vmem:[%s342 + $0x154] sm:%s334] %v377
                %v379 = vld [vmem:[%s341 + $0x708] sm:%s334]
                %380 = vst [vmem:[%s342 + $0x168] sm:%s334] %v379
                %v381 = vld [vmem:[%s341 + $0x76c] sm:%s334]
                %382 = vst [vmem:[%s342 + $0x17c] sm:%s334] %v381
                %v383 = vld [vmem:[%s341 + $0x7d0] sm:%s334]
                %384 = vst [vmem:[%s342 + $0x190] sm:%s334] %v383
                %v385 = vld [vmem:[%s341 + $0x834] sm:%s334]
                %386 = vst [vmem:[%s342 + $0x1a4] sm:%s334] %v385
                %v387 = vld [vmem:[%s341 + $0x898] sm:%s334]
                %388 = vst [vmem:[%s342 + $0x1b8] sm:%s334] %v387
                %v389 = vld [vmem:[%s341 + $0x8fc] sm:%s334]
                %390 = vst [vmem:[%s342 + $0x1cc] sm:%s334] %v389
                %v391 = vld [vmem:[%s341 + $0x960] sm:%s334]
                %392 = vst [vmem:[%s342 + $0x1e0] sm:%s334] %v391
                %v393 = vld [vmem:[%s341 + $0x9c4] sm:%s334]
                %394 = vst [vmem:[%s342 + $0x1f4] sm:%s334] %v393
                %v395 = vld [vmem:[%s341 + $0xa28] sm:%s334]
                %396 = vst [vmem:[%s342 + $0x208] sm:%s334] %v395
                %v397 = vld [vmem:[%s341 + $0xa8c] sm:%s334]
                %398 = vst [vmem:[%s342 + $0x21c] sm:%s334] %v397
                %v399 = vld [vmem:[%s341 + $0xaf0] sm:%s334]
                %400 = vst [vmem:[%s342 + $0x230] sm:%s334] %v399
                %v401 = vld [vmem:[%s341 + $0xb54] sm:%s334]
                %402 = vst [vmem:[%s342 + $0x244] sm:%s334] %v401
                %v403 = vld [vmem:[%s341 + $0xbb8] sm:%s334]
                %404 = vst [vmem:[%s342 + $0x258] sm:%s334] %v403
                %v405 = vld [vmem:[%s341 + $0xc1c] sm:%s334]
                %406 = vst [vmem:[%s342 + $0x26c] sm:%s334] %v405
              $region44: #{generator_forward.11} parent=31 // loop_footer
                %s340 = sadd.s32 1, %s336
              $region45: #{generator_forward.11} parent=31 // loop_footer_branch
                %335 = sbr.rel target = $region41
              $region46: #{generator_forward.11} parent=31 // loop_exit
                _
            $region32: #{generator_forward.11} parent=27 // pred_fallthru
              _
          $region28: #{generator_forward.11} parent=23 // pred_fallthru
            _
          %407 = vnop
        $region24: #{generator_forward.11} parent=19 // pred_fallthru
          _
        // Predicated region
        $region47: #{generator_forward.11} parent=19 // pred_check
          %p408 = pneg %p89
        $region48: #{generator_forward.11} parent=19 // pred_check_branch
          %410 = sbr.rel (%p408) target = $region50
        $region49: #{generator_forward.11} parent=19 // pred_region
          %s411 = smul.u32 80, %s19
          %p412 = scmp.lt.s32.totalorder %s16, 0
          %s413 = scalar_select %p412, %s16, 0
          %p414 = scmp.lt.s32.totalorder %s411, 399
          %s415 = scalar_select %p414, %s411, 399
          %p416 = scmp.lt.s32.totalorder %s18, 0
          %s417 = scalar_select %p416, %s18, 0
          %s418 = sadd.s32 %s417, %s415
          %s419 = smul.addr %s413, 400
          %s420 = sadd.s32 %s418, %s419
          %s421 = smul.addr %s420, 4
          %s422 = scalar_lea.vmem %s1, %s421
          %s423 = smul.u32 80, %s19
        $region50: #{generator_forward.11} parent=19 // pred_fallthru
          _
      $region20: #{generator_forward.11} parent=5 // pred_fallthru
        _
      %p424 = scmp.le.s32.totalorder 1, %s9
      %p425 = scmp.lt.s32.totalorder %s9, 11
      %p426 = pnand %p424, %p425
      %p427 = pneg %p426
      // Predicated region
      $region51: #{generator_forward.11} parent=5 // pred_check
        _
      $region52: #{generator_forward.11} parent=5 // pred_check_branch
        %429 = sbr.rel (%p426) target = $region54
      $region53: #{generator_forward.11} parent=5 // pred_region
        %s430 = ssub.s32 %s9, 1
        %s431 = sand.u32 %s52, 1
        %s432 = sand.u32 %s52, 1
        %s433 = smul.addr %s432, 640
        %s434 = scalar_lea.vmem [#allocation3], %s433
        // Predicated region
        $region55: #{generator_forward.11} parent=53 // pred_check
          %p435 = pneg %p65
        $region56: #{generator_forward.11} parent=53 // pred_check_branch
          %437 = sbr.rel (%p435) target = $region58
        $region57: #{generator_forward.11} parent=53 // pred_region
          _
        $region58: #{generator_forward.11} parent=53 // pred_fallthru
          _
        %s438 = sand.u32 %s52, 1
        %s439 = sand.u32 %s52, 1
        %s440 = smul.addr %s439, 640
        %s441 = scalar_lea.vmem [#allocation3], %s440
        %p442 = pneg %p65
        %p443 = pneg %p62
        %s444 = smul.u32 80, %s23
        %p445 = scmp.lt.s32.totalorder %s20, 0
        %s446 = scalar_select %p445, %s20, 0
        %p447 = scmp.lt.s32.totalorder %s444, 399
        %s448 = scalar_select %p447, %s444, 399
        %p449 = scmp.lt.s32.totalorder %s22, 0
        %s450 = scalar_select %p449, %s22, 0
        %s451 = sadd.s32 %s450, %s448
        %s452 = smul.addr %s446, 400
        %s453 = sadd.s32 %s451, %s452
        %s454 = smul.addr %s453, 4
        %s455 = scalar_lea.vmem %s1, %s454
        %p456 = pneg %p95
        %p457 = pneg %p92
        %p458 = scmp.lt.s32.totalorder %s22, 0
        %s459 = scalar_select %p458, %s22, 0
        %s460 = scalar_lea.vmem %s2, %s459
        %p461 = pneg %p121
        %p462 = pneg %p118
        %p463 = pneg %p151
        %p464 = pneg %p148
        %s465 = smul.u32 32, %s21
        %p466 = scmp.lt.s32.totalorder %s20, 0
        %s467 = scalar_select %p466, %s20, 0
        %p468 = scmp.lt.s32.totalorder %s465, 63
        %s469 = scalar_select %p468, %s465, 63
        %p470 = scmp.lt.s32.totalorder %s22, 0
        %s471 = scalar_select %p470, %s22, 0
        %s472 = sadd.s32 %s471, %s469
        %s473 = smul.addr %s467, 64
        %s474 = sadd.s32 %s472, %s473
        %s475 = smul.addr %s474, 8
        %s476 = scalar_lea.vmem %s3, %s475
        %s477 = smul.u32 32, %s21
        %s478 = smul.u32 5, %s23
        %s479 = smul.u32 80, %s23
        %p480 = scmp.lt.s32.totalorder %s20, 0
        %s481 = scalar_select %p480, %s20, 0
        %p482 = scmp.lt.s32.totalorder %s479, 399
        %s483 = scalar_select %p482, %s479, 399
        %p484 = scmp.lt.s32.totalorder %s22, 0
        %s485 = scalar_select %p484, %s22, 0
        %s486 = sadd.s32 %s485, %s483
        %s487 = smul.addr %s481, 400
        %s488 = sadd.s32 %s486, %s487
        %s489 = smul.addr %s488, 4
        %s490 = scalar_lea.vmem %s1, %s489
        %s491 = smul.u32 80, %s23
        %p492 = scmp.lt.s32.totalorder %s22, 0
        %s493 = scalar_select %p492, %s22, 0
        %s494 = scalar_lea.vmem %s2, %s493
        %s495 = smul.u32 32, %s21
        %p496 = scmp.lt.s32.totalorder %s20, 0
        %s497 = scalar_select %p496, %s20, 0
        %p498 = scmp.lt.s32.totalorder %s495, 63
        %s499 = scalar_select %p498, %s495, 63
        %p500 = scmp.lt.s32.totalorder %s22, 0
        %s501 = scalar_select %p500, %s22, 0
        %s502 = sadd.s32 %s501, %s499
        %s503 = smul.addr %s497, 64
        %s504 = sadd.s32 %s502, %s503
        %s505 = smul.addr %s504, 8
        %s506 = scalar_lea.vmem %s3, %s505
        %s507 = smul.u32 32, %s21
        %p508 = scmp.eq.s32.totalorder %s23, 0
        // Predicated region
        $region59: #{generator_forward.11} parent=53 // pred_check
          %p509 = pneg %p508
        $region60: #{generator_forward.11} parent=53 // pred_check_branch
          %511 = sbr.rel (%p509) target = $region62
        $region61: #{generator_forward.11} parent=53 // pred_region
          %512 = vst [vmem:[#allocation2] sm:$0xff] 0.0
          %513 = vst [vmem:[#allocation2 + $0x8] sm:$0xff] 0.0
          %514 = vst [vmem:[#allocation2 + $0x10] sm:$0xff] 0.0
          %515 = vst [vmem:[#allocation2 + $0x18] sm:$0xff] 0.0
          %516 = vst [vmem:[#allocation2 + $0x20] sm:$0xff] 0.0
          %517 = vst [vmem:[#allocation2 + $0x28] sm:$0xff] 0.0
          %518 = vst [vmem:[#allocation2 + $0x30] sm:$0xff] 0.0
          %519 = vst [vmem:[#allocation2 + $0x38] sm:$0xff] 0.0
          %520 = vst [vmem:[#allocation2 + $0x40] sm:$0xff] 0.0
          %521 = vst [vmem:[#allocation2 + $0x48] sm:$0xff] 0.0
          %522 = vst [vmem:[#allocation2 + $0x50] sm:$0xff] 0.0
          %523 = vst [vmem:[#allocation2 + $0x58] sm:$0xff] 0.0
          %524 = vst [vmem:[#allocation2 + $0x60] sm:$0xff] 0.0
          %525 = vst [vmem:[#allocation2 + $0x68] sm:$0xff] 0.0
          %526 = vst [vmem:[#allocation2 + $0x70] sm:$0xff] 0.0
          %527 = vst [vmem:[#allocation2 + $0x78] sm:$0xff] 0.0
          %528 = vst [vmem:[#allocation2 + $0x80] sm:$0xff] 0.0
          %529 = vst [vmem:[#allocation2 + $0x88] sm:$0xff] 0.0
          %530 = vst [vmem:[#allocation2 + $0x90] sm:$0xff] 0.0
          %531 = vst [vmem:[#allocation2 + $0x98] sm:$0xff] 0.0
          %532 = vst [vmem:[#allocation2 + $0xa0] sm:$0xff] 0.0
          %533 = vst [vmem:[#allocation2 + $0xa8] sm:$0xff] 0.0
          %534 = vst [vmem:[#allocation2 + $0xb0] sm:$0xff] 0.0
          %535 = vst [vmem:[#allocation2 + $0xb8] sm:$0xff] 0.0
          %536 = vst [vmem:[#allocation2 + $0xc0] sm:$0xff] 0.0
          %537 = vst [vmem:[#allocation2 + $0xc8] sm:$0xff] 0.0
          %538 = vst [vmem:[#allocation2 + $0xd0] sm:$0xff] 0.0
          %539 = vst [vmem:[#allocation2 + $0xd8] sm:$0xff] 0.0
          %540 = vst [vmem:[#allocation2 + $0xe0] sm:$0xff] 0.0
          %541 = vst [vmem:[#allocation2 + $0xe8] sm:$0xff] 0.0
          %542 = vst [vmem:[#allocation2 + $0xf0] sm:$0xff] 0.0
          %543 = vst [vmem:[#allocation2 + $0xf8] sm:$0xff] 0.0
        $region62: #{generator_forward.11} parent=53 // pred_fallthru
          _
        %v544 = vld [vmem:[#allocation2] sm:$0xff]
        %v545 = vld [vmem:[#allocation2 + $0x8] sm:$0xff]
        %v546 = vld [vmem:[#allocation2 + $0x10] sm:$0xff]
        %v547 = vld [vmem:[#allocation2 + $0x18] sm:$0xff]
        %v548 = vld [vmem:[#allocation2 + $0x20] sm:$0xff]
        %v549 = vld [vmem:[#allocation2 + $0x28] sm:$0xff]
        %v550 = vld [vmem:[#allocation2 + $0x30] sm:$0xff]
        %v551 = vld [vmem:[#allocation2 + $0x38] sm:$0xff]
        %v552 = vld [vmem:[#allocation2 + $0x40] sm:$0xff]
        %v553 = vld [vmem:[#allocation2 + $0x48] sm:$0xff]
        %v554 = vld [vmem:[#allocation2 + $0x50] sm:$0xff]
        %v555 = vld [vmem:[#allocation2 + $0x58] sm:$0xff]
        %v556 = vld [vmem:[#allocation2 + $0x60] sm:$0xff]
        %v557 = vld [vmem:[#allocation2 + $0x68] sm:$0xff]
        %v558 = vld [vmem:[#allocation2 + $0x70] sm:$0xff]
        %v559 = vld [vmem:[#allocation2 + $0x78] sm:$0xff]
        %v560 = vld [vmem:[#allocation2 + $0x80] sm:$0xff]
        %v561 = vld [vmem:[#allocation2 + $0x88] sm:$0xff]
        %v562 = vld [vmem:[#allocation2 + $0x90] sm:$0xff]
        %v563 = vld [vmem:[#allocation2 + $0x98] sm:$0xff]
        %v564 = vld [vmem:[#allocation2 + $0xa0] sm:$0xff]
        %v565 = vld [vmem:[#allocation2 + $0xa8] sm:$0xff]
        %v566 = vld [vmem:[#allocation2 + $0xb0] sm:$0xff]
        %v567 = vld [vmem:[#allocation2 + $0xb8] sm:$0xff]
        %v568 = vld [vmem:[#allocation2 + $0xc0] sm:$0xff]
        %v569 = vld [vmem:[#allocation2 + $0xc8] sm:$0xff]
        %v570 = vld [vmem:[#allocation2 + $0xd0] sm:$0xff]
        %v571 = vld [vmem:[#allocation2 + $0xd8] sm:$0xff]
        %v572 = vld [vmem:[#allocation2 + $0xe0] sm:$0xff]
        %v573 = vld [vmem:[#allocation2 + $0xe8] sm:$0xff]
        %v574 = vld [vmem:[#allocation2 + $0xf0] sm:$0xff]
        %v575 = vld [vmem:[#allocation2 + $0xf8] sm:$0xff]
        %v576 = vld [vmem:[%s434] sm:$0xff]
        %v577 = vld [vmem:[%s434 + $0x8] sm:$0xff]
        %v578 = vld [vmem:[%s434 + $0x10] sm:$0xf]
        %v579 = vld [vmem:[%s434 + $0x14] sm:$0xff]
        %v580 = vld [vmem:[%s434 + $0x1c] sm:$0xff]
        %v581 = vld [vmem:[%s434 + $0x24] sm:$0xf]
        %v582 = vld [vmem:[%s434 + $0x28] sm:$0xff]
        %v583 = vld [vmem:[%s434 + $0x30] sm:$0xff]
        %v584 = vld [vmem:[%s434 + $0x38] sm:$0xf]
        %v585 = vld [vmem:[%s434 + $0x3c] sm:$0xff]
        %v586 = vld [vmem:[%s434 + $0x44] sm:$0xff]
        %v587 = vld [vmem:[%s434 + $0x4c] sm:$0xf]
        %v588 = vld [vmem:[%s434 + $0x50] sm:$0xff]
        %v589 = vld [vmem:[%s434 + $0x58] sm:$0xff]
        %v590 = vld [vmem:[%s434 + $0x60] sm:$0xf]
        %v591 = vld [vmem:[%s434 + $0x64] sm:$0xff]
        %v592 = vld [vmem:[%s434 + $0x6c] sm:$0xff]
        %v593 = vld [vmem:[%s434 + $0x74] sm:$0xf]
        %v594 = vld [vmem:[%s434 + $0x78] sm:$0xff]
        %v595 = vld [vmem:[%s434 + $0x80] sm:$0xff]
        %v596 = vld [vmem:[%s434 + $0x88] sm:$0xf]
        %v597 = vld [vmem:[%s434 + $0x8c] sm:$0xff]
        %v598 = vld [vmem:[%s434 + $0x94] sm:$0xff]
        %v599 = vld [vmem:[%s434 + $0x9c] sm:$0xf]
        %v600 = vld [vmem:[%s434 + $0xa0] sm:$0xff]
        %v601 = vld [vmem:[%s434 + $0xa8] sm:$0xff]
        %v602 = vld [vmem:[%s434 + $0xb0] sm:$0xf]
        %v603 = vld [vmem:[%s434 + $0xb4] sm:$0xff]
        %v604 = vld [vmem:[%s434 + $0xbc] sm:$0xff]
        %v605 = vld [vmem:[%s434 + $0xc4] sm:$0xf]
        %v606 = vld [vmem:[%s434 + $0xc8] sm:$0xff]
        %v607 = vld [vmem:[%s434 + $0xd0] sm:$0xff]
        %v608 = vld [vmem:[%s434 + $0xd8] sm:$0xf]
        %v609 = vld [vmem:[%s434 + $0xdc] sm:$0xff]
        %v610 = vld [vmem:[%s434 + $0xe4] sm:$0xff]
        %v611 = vld [vmem:[%s434 + $0xec] sm:$0xf]
        %v612 = vld [vmem:[%s434 + $0xf0] sm:$0xff]
        %v613 = vld [vmem:[%s434 + $0xf8] sm:$0xff]
        %v614 = vld [vmem:[%s434 + $0x100] sm:$0xf]
        %v615 = vld [vmem:[%s434 + $0x104] sm:$0xff]
        %v616 = vld [vmem:[%s434 + $0x10c] sm:$0xff]
        %v617 = vld [vmem:[%s434 + $0x114] sm:$0xf]
        %v618 = vld [vmem:[%s434 + $0x118] sm:$0xff]
        %v619 = vld [vmem:[%s434 + $0x120] sm:$0xff]
        %v620 = vld [vmem:[%s434 + $0x128] sm:$0xf]
        %v621 = vld [vmem:[%s434 + $0x12c] sm:$0xff]
        %v622 = vld [vmem:[%s434 + $0x134] sm:$0xff]
        %v623 = vld [vmem:[%s434 + $0x13c] sm:$0xf]
        %v624 = vld [vmem:[%s434 + $0x140] sm:$0xff]
        %v625 = vld [vmem:[%s434 + $0x148] sm:$0xff]
        %v626 = vld [vmem:[%s434 + $0x150] sm:$0xf]
        %v627 = vld [vmem:[%s434 + $0x154] sm:$0xff]
        %v628 = vld [vmem:[%s434 + $0x15c] sm:$0xff]
        %v629 = vld [vmem:[%s434 + $0x164] sm:$0xf]
        %v630 = vld [vmem:[%s434 + $0x168] sm:$0xff]
        %v631 = vld [vmem:[%s434 + $0x170] sm:$0xff]
        %v632 = vld [vmem:[%s434 + $0x178] sm:$0xf]
        %v633 = vld [vmem:[%s434 + $0x17c] sm:$0xff]
        %v634 = vld [vmem:[%s434 + $0x184] sm:$0xff]
        %v635 = vld [vmem:[%s434 + $0x18c] sm:$0xf]
        %v636 = vld [vmem:[%s434 + $0x190] sm:$0xff]
        %v637 = vld [vmem:[%s434 + $0x198] sm:$0xff]
        %v638 = vld [vmem:[%s434 + $0x1a0] sm:$0xf]
        %v639 = vld [vmem:[%s434 + $0x1a4] sm:$0xff]
        %v640 = vld [vmem:[%s434 + $0x1ac] sm:$0xff]
        %v641 = vld [vmem:[%s434 + $0x1b4] sm:$0xf]
        %v642 = vld [vmem:[%s434 + $0x1b8] sm:$0xff]
        %v643 = vld [vmem:[%s434 + $0x1c0] sm:$0xff]
        %v644 = vld [vmem:[%s434 + $0x1c8] sm:$0xf]
        %v645 = vld [vmem:[%s434 + $0x1cc] sm:$0xff]
        %v646 = vld [vmem:[%s434 + $0x1d4] sm:$0xff]
        %v647 = vld [vmem:[%s434 + $0x1dc] sm:$0xf]
        %v648 = vld [vmem:[%s434 + $0x1e0] sm:$0xff]
        %v649 = vld [vmem:[%s434 + $0x1e8] sm:$0xff]
        %v650 = vld [vmem:[%s434 + $0x1f0] sm:$0xf]
        %v651 = vld [vmem:[%s434 + $0x1f4] sm:$0xff]
        %v652 = vld [vmem:[%s434 + $0x1fc] sm:$0xff]
        %v653 = vld [vmem:[%s434 + $0x204] sm:$0xf]
        %v654 = vld [vmem:[%s434 + $0x208] sm:$0xff]
        %v655 = vld [vmem:[%s434 + $0x210] sm:$0xff]
        %v656 = vld [vmem:[%s434 + $0x218] sm:$0xf]
        %v657 = vld [vmem:[%s434 + $0x21c] sm:$0xff]
        %v658 = vld [vmem:[%s434 + $0x224] sm:$0xff]
        %v659 = vld [vmem:[%s434 + $0x22c] sm:$0xf]
        %v660 = vld [vmem:[%s434 + $0x230] sm:$0xff]
        %v661 = vld [vmem:[%s434 + $0x238] sm:$0xff]
        %v662 = vld [vmem:[%s434 + $0x240] sm:$0xf]
        %v663 = vld [vmem:[%s434 + $0x244] sm:$0xff]
        %v664 = vld [vmem:[%s434 + $0x24c] sm:$0xff]
        %v665 = vld [vmem:[%s434 + $0x254] sm:$0xf]
        %v666 = vld [vmem:[%s434 + $0x258] sm:$0xff]
        %v667 = vld [vmem:[%s434 + $0x260] sm:$0xff]
        %v668 = vld [vmem:[%s434 + $0x268] sm:$0xf]
        %v669 = vld [vmem:[%s434 + $0x26c] sm:$0xff]
        %v670 = vld [vmem:[%s434 + $0x274] sm:$0xff]
        %v671 = vld [vmem:[%s434 + $0x27c] sm:$0xf]
        %v672 = vld [vmem:[%s490] sm:$0xf]
        %v673 = vld [vmem:[%s490 + $0x4] sm:$0xf]
        %v674 = vld [vmem:[%s490 + $0x8] sm:$0xf]
        %v675 = vld [vmem:[%s490 + $0xc] sm:$0xf]
        %v676 = vld [vmem:[%s490 + $0x10] sm:$0xf]
        %v677 = vld [vmem:[%s490 + $0x14] sm:$0xf]
        %v678 = vld [vmem:[%s490 + $0x18] sm:$0xf]
        %v679 = vld [vmem:[%s490 + $0x1c] sm:$0xf]
        %v680 = vld [vmem:[%s490 + $0x20] sm:$0xf]
        %v681 = vld [vmem:[%s490 + $0x24] sm:$0xf]
        %v682 = vld [vmem:[%s490 + $0x28] sm:$0xf]
        %v683 = vld [vmem:[%s490 + $0x2c] sm:$0xf]
        %v684 = vld [vmem:[%s490 + $0x30] sm:$0xf]
        %v685 = vld [vmem:[%s490 + $0x34] sm:$0xf]
        %v686 = vld [vmem:[%s490 + $0x38] sm:$0xf]
        %v687 = vld [vmem:[%s490 + $0x3c] sm:$0xf]
        %v688 = vld [vmem:[%s490 + $0x40] sm:$0xf]
        %v689 = vld [vmem:[%s490 + $0x44] sm:$0xf]
        %v690 = vld [vmem:[%s490 + $0x48] sm:$0xf]
        %v691 = vld [vmem:[%s490 + $0x4c] sm:$0xf]
        %v692 = vld [vmem:[%s490 + $0x50] sm:$0xf]
        %v693 = vld [vmem:[%s490 + $0x54] sm:$0xf]
        %v694 = vld [vmem:[%s490 + $0x58] sm:$0xf]
        %v695 = vld [vmem:[%s490 + $0x5c] sm:$0xf]
        %v696 = vld [vmem:[%s490 + $0x60] sm:$0xf]
        %v697 = vld [vmem:[%s490 + $0x64] sm:$0xf]
        %v698 = vld [vmem:[%s490 + $0x68] sm:$0xf]
        %v699 = vld [vmem:[%s490 + $0x6c] sm:$0xf]
        %v700 = vld [vmem:[%s490 + $0x70] sm:$0xf]
        %v701 = vld [vmem:[%s490 + $0x74] sm:$0xf]
        %v702 = vld [vmem:[%s490 + $0x78] sm:$0xf]
        %v703 = vld [vmem:[%s490 + $0x7c] sm:$0xf]
        %v704 = vld [vmem:[%s490 + $0x80] sm:$0xf]
        %v705 = vld [vmem:[%s490 + $0x84] sm:$0xf]
        %v706 = vld [vmem:[%s490 + $0x88] sm:$0xf]
        %v707 = vld [vmem:[%s490 + $0x8c] sm:$0xf]
        %v708 = vld [vmem:[%s490 + $0x90] sm:$0xf]
        %v709 = vld [vmem:[%s490 + $0x94] sm:$0xf]
        %v710 = vld [vmem:[%s490 + $0x98] sm:$0xf]
        %v711 = vld [vmem:[%s490 + $0x9c] sm:$0xf]
        %v712 = vld [vmem:[%s490 + $0xa0] sm:$0xf]
        %v713 = vld [vmem:[%s490 + $0xa4] sm:$0xf]
        %v714 = vld [vmem:[%s490 + $0xa8] sm:$0xf]
        %v715 = vld [vmem:[%s490 + $0xac] sm:$0xf]
        %v716 = vld [vmem:[%s490 + $0xb0] sm:$0xf]
        %v717 = vld [vmem:[%s490 + $0xb4] sm:$0xf]
        %v718 = vld [vmem:[%s490 + $0xb8] sm:$0xf]
        %v719 = vld [vmem:[%s490 + $0xbc] sm:$0xf]
        %v720 = vld [vmem:[%s490 + $0xc0] sm:$0xf]
        %v721 = vld [vmem:[%s490 + $0xc4] sm:$0xf]
        %v722 = vld [vmem:[%s490 + $0xc8] sm:$0xf]
        %v723 = vld [vmem:[%s490 + $0xcc] sm:$0xf]
        %v724 = vld [vmem:[%s490 + $0xd0] sm:$0xf]
        %v725 = vld [vmem:[%s490 + $0xd4] sm:$0xf]
        %v726 = vld [vmem:[%s490 + $0xd8] sm:$0xf]
        %v727 = vld [vmem:[%s490 + $0xdc] sm:$0xf]
        %v728 = vld [vmem:[%s490 + $0xe0] sm:$0xf]
        %v729 = vld [vmem:[%s490 + $0xe4] sm:$0xf]
        %v730 = vld [vmem:[%s490 + $0xe8] sm:$0xf]
        %v731 = vld [vmem:[%s490 + $0xec] sm:$0xf]
        %v732 = vld [vmem:[%s490 + $0xf0] sm:$0xf]
        %v733 = vld [vmem:[%s490 + $0xf4] sm:$0xf]
        %v734 = vld [vmem:[%s490 + $0xf8] sm:$0xf]
        %v735 = vld [vmem:[%s490 + $0xfc] sm:$0xf]
        %v736 = vld [vmem:[%s490 + $0x100] sm:$0xf]
        %v737 = vld [vmem:[%s490 + $0x104] sm:$0xf]
        %v738 = vld [vmem:[%s490 + $0x108] sm:$0xf]
        %v739 = vld [vmem:[%s490 + $0x10c] sm:$0xf]
        %v740 = vld [vmem:[%s490 + $0x110] sm:$0xf]
        %v741 = vld [vmem:[%s490 + $0x114] sm:$0xf]
        %v742 = vld [vmem:[%s490 + $0x118] sm:$0xf]
        %v743 = vld [vmem:[%s490 + $0x11c] sm:$0xf]
        %v744 = vld [vmem:[%s490 + $0x120] sm:$0xf]
        %v745 = vld [vmem:[%s490 + $0x124] sm:$0xf]
        %v746 = vld [vmem:[%s490 + $0x128] sm:$0xf]
        %v747 = vld [vmem:[%s490 + $0x12c] sm:$0xf]
        %v748 = vld [vmem:[%s490 + $0x130] sm:$0xf]
        %v749 = vld [vmem:[%s490 + $0x134] sm:$0xf]
        %v750 = vld [vmem:[%s490 + $0x138] sm:$0xf]
        %v751 = vld [vmem:[%s490 + $0x13c] sm:$0xf]
        %v848 = vunpack.c.l.b16 %v576
        %v849 = vunpack.c.h.b16 %v576
        %v850 = vunpack.c.l.b16 %v577
        %v851 = vunpack.c.h.b16 %v577
        %v852 = vunpack.c.l.b16 %v578
        %v853 = vunpack.c.l.b16 %v579
        %v854 = vunpack.c.h.b16 %v579
        %v855 = vunpack.c.l.b16 %v580
        %v856 = vunpack.c.h.b16 %v580
        %v857 = vunpack.c.l.b16 %v581
        %v858 = vunpack.c.l.b16 %v582
        %v859 = vunpack.c.h.b16 %v582
        %v860 = vunpack.c.l.b16 %v583
        %v861 = vunpack.c.h.b16 %v583
        %v862 = vunpack.c.l.b16 %v584
        %v863 = vunpack.c.l.b16 %v585
        %v864 = vunpack.c.h.b16 %v585
        %v865 = vunpack.c.l.b16 %v586
        %v866 = vunpack.c.h.b16 %v586
        %v867 = vunpack.c.l.b16 %v587
        %v868 = vunpack.c.l.b16 %v588
        %v869 = vunpack.c.h.b16 %v588
        %v870 = vunpack.c.l.b16 %v589
        %v871 = vunpack.c.h.b16 %v589
        %v872 = vunpack.c.l.b16 %v590
        %v873 = vunpack.c.l.b16 %v591
        %v874 = vunpack.c.h.b16 %v591
        %v875 = vunpack.c.l.b16 %v592
        %v876 = vunpack.c.h.b16 %v592
        %v877 = vunpack.c.l.b16 %v593
        %v878 = vunpack.c.l.b16 %v594
        %v879 = vunpack.c.h.b16 %v594
        %v880 = vunpack.c.l.b16 %v595
        %v881 = vunpack.c.h.b16 %v595
        %v882 = vunpack.c.l.b16 %v596
        %v883 = vunpack.c.l.b16 %v597
        %v884 = vunpack.c.h.b16 %v597
        %v885 = vunpack.c.l.b16 %v598
        %v886 = vunpack.c.h.b16 %v598
        %v887 = vunpack.c.l.b16 %v599
        %v888 = vunpack.c.l.b16 %v600
        %v889 = vunpack.c.h.b16 %v600
        %v890 = vunpack.c.l.b16 %v601
        %v891 = vunpack.c.h.b16 %v601
        %v892 = vunpack.c.l.b16 %v602
        %v893 = vunpack.c.l.b16 %v603
        %v894 = vunpack.c.h.b16 %v603
        %v895 = vunpack.c.l.b16 %v604
        %v896 = vunpack.c.h.b16 %v604
        %v897 = vunpack.c.l.b16 %v605
        %v898 = vunpack.c.l.b16 %v606
        %v899 = vunpack.c.h.b16 %v606
        %v900 = vunpack.c.l.b16 %v607
        %v901 = vunpack.c.h.b16 %v607
        %v902 = vunpack.c.l.b16 %v608
        %v903 = vunpack.c.l.b16 %v609
        %v904 = vunpack.c.h.b16 %v609
        %v905 = vunpack.c.l.b16 %v610
        %v906 = vunpack.c.h.b16 %v610
        %v907 = vunpack.c.l.b16 %v611
        %v908 = vunpack.c.l.b16 %v612
        %v909 = vunpack.c.h.b16 %v612
        %v910 = vunpack.c.l.b16 %v613
        %v911 = vunpack.c.h.b16 %v613
        %v912 = vunpack.c.l.b16 %v614
        %v913 = vunpack.c.l.b16 %v615
        %v914 = vunpack.c.h.b16 %v615
        %v915 = vunpack.c.l.b16 %v616
        %v916 = vunpack.c.h.b16 %v616
        %v917 = vunpack.c.l.b16 %v617
        %v918 = vunpack.c.l.b16 %v618
        %v919 = vunpack.c.h.b16 %v618
        %v920 = vunpack.c.l.b16 %v619
        %v921 = vunpack.c.h.b16 %v619
        %v922 = vunpack.c.l.b16 %v620
        %v923 = vunpack.c.l.b16 %v621
        %v924 = vunpack.c.h.b16 %v621
        %v925 = vunpack.c.l.b16 %v622
        %v926 = vunpack.c.h.b16 %v622
        %v927 = vunpack.c.l.b16 %v623
        %v928 = vunpack.c.l.b16 %v624
        %v929 = vunpack.c.h.b16 %v624
        %v930 = vunpack.c.l.b16 %v625
        %v931 = vunpack.c.h.b16 %v625
        %v932 = vunpack.c.l.b16 %v626
        %v933 = vunpack.c.l.b16 %v627
        %v934 = vunpack.c.h.b16 %v627
        %v935 = vunpack.c.l.b16 %v628
        %v936 = vunpack.c.h.b16 %v628
        %v937 = vunpack.c.l.b16 %v629
        %v938 = vunpack.c.l.b16 %v630
        %v939 = vunpack.c.h.b16 %v630
        %v940 = vunpack.c.l.b16 %v631
        %v941 = vunpack.c.h.b16 %v631
        %v942 = vunpack.c.l.b16 %v632
        %v943 = vunpack.c.l.b16 %v633
        %v944 = vunpack.c.h.b16 %v633
        %v945 = vunpack.c.l.b16 %v634
        %v946 = vunpack.c.h.b16 %v634
        %v947 = vunpack.c.l.b16 %v635
        %v948 = vunpack.c.l.b16 %v636
        %v949 = vunpack.c.h.b16 %v636
        %v950 = vunpack.c.l.b16 %v637
        %v951 = vunpack.c.h.b16 %v637
        %v952 = vunpack.c.l.b16 %v638
        %v953 = vunpack.c.l.b16 %v639
        %v954 = vunpack.c.h.b16 %v639
        %v955 = vunpack.c.l.b16 %v640
        %v956 = vunpack.c.h.b16 %v640
        %v957 = vunpack.c.l.b16 %v641
        %v958 = vunpack.c.l.b16 %v642
        %v959 = vunpack.c.h.b16 %v642
        %v960 = vunpack.c.l.b16 %v643
        %v961 = vunpack.c.h.b16 %v643
        %v962 = vunpack.c.l.b16 %v644
        %v963 = vunpack.c.l.b16 %v645
        %v964 = vunpack.c.h.b16 %v645
        %v965 = vunpack.c.l.b16 %v646
        %v966 = vunpack.c.h.b16 %v646
        %v967 = vunpack.c.l.b16 %v647
        %v968 = vunpack.c.l.b16 %v648
        %v969 = vunpack.c.h.b16 %v648
        %v970 = vunpack.c.l.b16 %v649
        %v971 = vunpack.c.h.b16 %v649
        %v972 = vunpack.c.l.b16 %v650
        %v973 = vunpack.c.l.b16 %v651
        %v974 = vunpack.c.h.b16 %v651
        %v975 = vunpack.c.l.b16 %v652
        %v976 = vunpack.c.h.b16 %v652
        %v977 = vunpack.c.l.b16 %v653
        %v978 = vunpack.c.l.b16 %v654
        %v979 = vunpack.c.h.b16 %v654
        %v980 = vunpack.c.l.b16 %v655
        %v981 = vunpack.c.h.b16 %v655
        %v982 = vunpack.c.l.b16 %v656
        %v983 = vunpack.c.l.b16 %v657
        %v984 = vunpack.c.h.b16 %v657
        %v985 = vunpack.c.l.b16 %v658
        %v986 = vunpack.c.h.b16 %v658
        %v987 = vunpack.c.l.b16 %v659
        %v988 = vunpack.c.l.b16 %v660
        %v989 = vunpack.c.h.b16 %v660
        %v990 = vunpack.c.l.b16 %v661
        %v991 = vunpack.c.h.b16 %v661
        %v992 = vunpack.c.l.b16 %v662
        %v993 = vunpack.c.l.b16 %v663
        %v994 = vunpack.c.h.b16 %v663
        %v995 = vunpack.c.l.b16 %v664
        %v996 = vunpack.c.h.b16 %v664
        %v997 = vunpack.c.l.b16 %v665
        %v998 = vunpack.c.l.b16 %v666
        %v999 = vunpack.c.h.b16 %v666
        %v1000 = vunpack.c.l.b16 %v667
        %v1001 = vunpack.c.h.b16 %v667
        %v1002 = vunpack.c.l.b16 %v668
        %v1003 = vunpack.c.l.b16 %v669
        %v1004 = vunpack.c.h.b16 %v669
        %v1005 = vunpack.c.l.b16 %v670
        %v1006 = vunpack.c.h.b16 %v670
        %v1007 = vunpack.c.l.b16 %v671
        %v1008 = vpack.c.b16 %v853, %v848
        %v1009 = vpack.c.b16 %v854, %v849
        %v1010 = vpack.c.b16 %v855, %v850
        %v1011 = vpack.c.b16 %v856, %v851
        %v1012 = vpack.c.b16 %v857, %v852
        %v1013 = vpack.c.b16 %v863, %v858
        %v1014 = vpack.c.b16 %v864, %v859
        %v1015 = vpack.c.b16 %v865, %v860
        %v1016 = vpack.c.b16 %v866, %v861
        %v1017 = vpack.c.b16 %v867, %v862
        %v1018 = vpack.c.b16 %v873, %v868
        %v1019 = vpack.c.b16 %v874, %v869
        %v1020 = vpack.c.b16 %v875, %v870
        %v1021 = vpack.c.b16 %v876, %v871
        %v1022 = vpack.c.b16 %v877, %v872
        %v1023 = vpack.c.b16 %v883, %v878
        %v1024 = vpack.c.b16 %v884, %v879
        %v1025 = vpack.c.b16 %v885, %v880
        %v1026 = vpack.c.b16 %v886, %v881
        %v1027 = vpack.c.b16 %v887, %v882
        %v1028 = vpack.c.b16 %v893, %v888
        %v1029 = vpack.c.b16 %v894, %v889
        %v1030 = vpack.c.b16 %v895, %v890
        %v1031 = vpack.c.b16 %v896, %v891
        %v1032 = vpack.c.b16 %v897, %v892
        %v1033 = vpack.c.b16 %v903, %v898
        %v1034 = vpack.c.b16 %v904, %v899
        %v1035 = vpack.c.b16 %v905, %v900
        %v1036 = vpack.c.b16 %v906, %v901
        %v1037 = vpack.c.b16 %v907, %v902
        %v1038 = vpack.c.b16 %v913, %v908
        %v1039 = vpack.c.b16 %v914, %v909
        %v1040 = vpack.c.b16 %v915, %v910
        %v1041 = vpack.c.b16 %v916, %v911
        %v1042 = vpack.c.b16 %v917, %v912
        %v1043 = vpack.c.b16 %v923, %v918
        %v1044 = vpack.c.b16 %v924, %v919
        %v1045 = vpack.c.b16 %v925, %v920
        %v1046 = vpack.c.b16 %v926, %v921
        %v1047 = vpack.c.b16 %v927, %v922
        %v1048 = vpack.c.b16 %v933, %v928
        %v1049 = vpack.c.b16 %v934, %v929
        %v1050 = vpack.c.b16 %v935, %v930
        %v1051 = vpack.c.b16 %v936, %v931
        %v1052 = vpack.c.b16 %v937, %v932
        %v1053 = vpack.c.b16 %v943, %v938
        %v1054 = vpack.c.b16 %v944, %v939
        %v1055 = vpack.c.b16 %v945, %v940
        %v1056 = vpack.c.b16 %v946, %v941
        %v1057 = vpack.c.b16 %v947, %v942
        %v1058 = vpack.c.b16 %v953, %v948
        %v1059 = vpack.c.b16 %v954, %v949
        %v1060 = vpack.c.b16 %v955, %v950
        %v1061 = vpack.c.b16 %v956, %v951
        %v1062 = vpack.c.b16 %v957, %v952
        %v1063 = vpack.c.b16 %v963, %v958
        %v1064 = vpack.c.b16 %v964, %v959
        %v1065 = vpack.c.b16 %v965, %v960
        %v1066 = vpack.c.b16 %v966, %v961
        %v1067 = vpack.c.b16 %v967, %v962
        %v1068 = vpack.c.b16 %v973, %v968
        %v1069 = vpack.c.b16 %v974, %v969
        %v1070 = vpack.c.b16 %v975, %v970
        %v1071 = vpack.c.b16 %v976, %v971
        %v1072 = vpack.c.b16 %v977, %v972
        %v1073 = vpack.c.b16 %v983, %v978
        %v1074 = vpack.c.b16 %v984, %v979
        %v1075 = vpack.c.b16 %v985, %v980
        %v1076 = vpack.c.b16 %v986, %v981
        %v1077 = vpack.c.b16 %v987, %v982
        %v1078 = vpack.c.b16 %v993, %v988
        %v1079 = vpack.c.b16 %v994, %v989
        %v1080 = vpack.c.b16 %v995, %v990
        %v1081 = vpack.c.b16 %v996, %v991
        %v1082 = vpack.c.b16 %v997, %v992
        %v1083 = vpack.c.b16 %v1003, %v998
        %v1084 = vpack.c.b16 %v1004, %v999
        %v1085 = vpack.c.b16 %v1005, %v1000
        %v1086 = vpack.c.b16 %v1006, %v1001
        %v1087 = vpack.c.b16 %v1007, %v1002
        %v1248 = vunpack.c.l.b16 %v672
        %v1249 = vunpack.c.l.b16 %v673
        %v1250 = vunpack.c.l.b16 %v674
        %v1251 = vunpack.c.l.b16 %v675
        %v1252 = vunpack.c.l.b16 %v676
        %v1253 = vunpack.c.l.b16 %v677
        %v1254 = vunpack.c.l.b16 %v678
        %v1255 = vunpack.c.l.b16 %v679
        %v1256 = vunpack.c.l.b16 %v680
        %v1257 = vunpack.c.l.b16 %v681
        %v1258 = vunpack.c.l.b16 %v682
        %v1259 = vunpack.c.l.b16 %v683
        %v1260 = vunpack.c.l.b16 %v684
        %v1261 = vunpack.c.l.b16 %v685
        %v1262 = vunpack.c.l.b16 %v686
        %v1263 = vunpack.c.l.b16 %v687
        %v1264 = vunpack.c.l.b16 %v688
        %v1265 = vunpack.c.l.b16 %v689
        %v1266 = vunpack.c.l.b16 %v690
        %v1267 = vunpack.c.l.b16 %v691
        %v1268 = vunpack.c.l.b16 %v692
        %v1269 = vunpack.c.l.b16 %v693
        %v1270 = vunpack.c.l.b16 %v694
        %v1271 = vunpack.c.l.b16 %v695
        %v1272 = vunpack.c.l.b16 %v696
        %v1273 = vunpack.c.l.b16 %v697
        %v1274 = vunpack.c.l.b16 %v698
        %v1275 = vunpack.c.l.b16 %v699
        %v1276 = vunpack.c.l.b16 %v700
        %v1277 = vunpack.c.l.b16 %v701
        %v1278 = vunpack.c.l.b16 %v702
        %v1279 = vunpack.c.l.b16 %v703
        %v1280 = vunpack.c.l.b16 %v704
        %v1281 = vunpack.c.l.b16 %v705
        %v1282 = vunpack.c.l.b16 %v706
        %v1283 = vunpack.c.l.b16 %v707
        %v1284 = vunpack.c.l.b16 %v708
        %v1285 = vunpack.c.l.b16 %v709
        %v1286 = vunpack.c.l.b16 %v710
        %v1287 = vunpack.c.l.b16 %v711
        %v1288 = vunpack.c.l.b16 %v712
        %v1289 = vunpack.c.l.b16 %v713
        %v1290 = vunpack.c.l.b16 %v714
        %v1291 = vunpack.c.l.b16 %v715
        %v1292 = vunpack.c.l.b16 %v716
        %v1293 = vunpack.c.l.b16 %v717
        %v1294 = vunpack.c.l.b16 %v718
        %v1295 = vunpack.c.l.b16 %v719
        %v1296 = vunpack.c.l.b16 %v720
        %v1297 = vunpack.c.l.b16 %v721
        %v1298 = vunpack.c.l.b16 %v722
        %v1299 = vunpack.c.l.b16 %v723
        %v1300 = vunpack.c.l.b16 %v724
        %v1301 = vunpack.c.l.b16 %v725
        %v1302 = vunpack.c.l.b16 %v726
        %v1303 = vunpack.c.l.b16 %v727
        %v1304 = vunpack.c.l.b16 %v728
        %v1305 = vunpack.c.l.b16 %v729
        %v1306 = vunpack.c.l.b16 %v730
        %v1307 = vunpack.c.l.b16 %v731
        %v1308 = vunpack.c.l.b16 %v732
        %v1309 = vunpack.c.l.b16 %v733
        %v1310 = vunpack.c.l.b16 %v734
        %v1311 = vunpack.c.l.b16 %v735
        %v1312 = vunpack.c.l.b16 %v736
        %v1313 = vunpack.c.l.b16 %v737
        %v1314 = vunpack.c.l.b16 %v738
        %v1315 = vunpack.c.l.b16 %v739
        %v1316 = vunpack.c.l.b16 %v740
        %v1317 = vunpack.c.l.b16 %v741
        %v1318 = vunpack.c.l.b16 %v742
        %v1319 = vunpack.c.l.b16 %v743
        %v1320 = vunpack.c.l.b16 %v744
        %v1321 = vunpack.c.l.b16 %v745
        %v1322 = vunpack.c.l.b16 %v746
        %v1323 = vunpack.c.l.b16 %v747
        %v1324 = vunpack.c.l.b16 %v748
        %v1325 = vunpack.c.l.b16 %v749
        %v1326 = vunpack.c.l.b16 %v750
        %v1327 = vunpack.c.l.b16 %v751
        %v1328 = vpack.c.b16 %v1249, %v1248
        %v1329 = vpack.c.b16 %v1251, %v1250
        %v1330 = vpack.c.b16 %v1253, %v1252
        %v1331 = vpack.c.b16 %v1255, %v1254
        %v1332 = vpack.c.b16 %v1257, %v1256
        %v1333 = vpack.c.b16 %v1259, %v1258
        %v1334 = vpack.c.b16 %v1261, %v1260
        %v1335 = vpack.c.b16 %v1263, %v1262
        %v1336 = vpack.c.b16 %v1265, %v1264
        %v1337 = vpack.c.b16 %v1267, %v1266
        %v1338 = vpack.c.b16 %v1269, %v1268
        %v1339 = vpack.c.b16 %v1271, %v1270
        %v1340 = vpack.c.b16 %v1273, %v1272
        %v1341 = vpack.c.b16 %v1275, %v1274
        %v1342 = vpack.c.b16 %v1277, %v1276
        %v1343 = vpack.c.b16 %v1279, %v1278
        %v1344 = vpack.c.b16 %v1281, %v1280
        %v1345 = vpack.c.b16 %v1283, %v1282
        %v1346 = vpack.c.b16 %v1285, %v1284
        %v1347 = vpack.c.b16 %v1287, %v1286
        %v1348 = vpack.c.b16 %v1289, %v1288
        %v1349 = vpack.c.b16 %v1291, %v1290
        %v1350 = vpack.c.b16 %v1293, %v1292
        %v1351 = vpack.c.b16 %v1295, %v1294
        %v1352 = vpack.c.b16 %v1297, %v1296
        %v1353 = vpack.c.b16 %v1299, %v1298
        %v1354 = vpack.c.b16 %v1301, %v1300
        %v1355 = vpack.c.b16 %v1303, %v1302
        %v1356 = vpack.c.b16 %v1305, %v1304
        %v1357 = vpack.c.b16 %v1307, %v1306
        %v1358 = vpack.c.b16 %v1309, %v1308
        %v1359 = vpack.c.b16 %v1311, %v1310
        %v1360 = vpack.c.b16 %v1313, %v1312
        %v1361 = vpack.c.b16 %v1315, %v1314
        %v1362 = vpack.c.b16 %v1317, %v1316
        %v1363 = vpack.c.b16 %v1319, %v1318
        %v1364 = vpack.c.b16 %v1321, %v1320
        %v1365 = vpack.c.b16 %v1323, %v1322
        %v1366 = vpack.c.b16 %v1325, %v1324
        %v1367 = vpack.c.b16 %v1327, %v1326
        %1408 = vmatpush.bf16.msra.mxu0 %v1335
        %1409 = vmatpush.bf16.msra.mxu0 %v1334
        %1410 = vmatpush.bf16.msra.mxu0 %v1333
        %1411 = vmatpush.bf16.msra.mxu0 %v1332
        %1412 = vmatpush.bf16.msra.mxu0 %v1331
        %1413 = vmatpush.bf16.msra.mxu0 %v1330
        %1414 = vmatpush.bf16.msra.mxu0 %v1329
        %1415 = vmatpush.bf16.msra.mxu0 %v1328
        %1416 = vmatmul.bf16.gmra.mxu0 %v1008
        %v1417 = vpop.f32.mrf.mxu0
        %v1418 = vadd.f32 0.0, %v1417
        %v1419 = vpop.f32.mrf.mxu0
        %v1420 = vadd.f32 0.0, %v1419
        %1421 = vmatmul.bf16.gmra.mxu0 %v1013
        %v1422 = vpop.f32.mrf.mxu0
        %v1423 = vadd.f32 0.0, %v1422
        %v1424 = vpop.f32.mrf.mxu0
        %v1425 = vadd.f32 0.0, %v1424
        %1426 = vmatmul.bf16.gmra.mxu0 %v1018
        %v1427 = vpop.f32.mrf.mxu0
        %v1428 = vadd.f32 0.0, %v1427
        %v1429 = vpop.f32.mrf.mxu0
        %v1430 = vadd.f32 0.0, %v1429
        %1431 = vmatmul.bf16.gmra.mxu0 %v1023
        %v1432 = vpop.f32.mrf.mxu0
        %v1433 = vadd.f32 0.0, %v1432
        %v1434 = vpop.f32.mrf.mxu0
        %v1435 = vadd.f32 0.0, %v1434
        %1436 = vmatmul.bf16.gmra.mxu0 %v1028
        %v1437 = vpop.f32.mrf.mxu0
        %v1438 = vadd.f32 0.0, %v1437
        %v1439 = vpop.f32.mrf.mxu0
        %v1440 = vadd.f32 0.0, %v1439
        %1441 = vmatmul.bf16.gmra.mxu0 %v1033
        %v1442 = vpop.f32.mrf.mxu0
        %v1443 = vadd.f32 0.0, %v1442
        %v1444 = vpop.f32.mrf.mxu0
        %v1445 = vadd.f32 0.0, %v1444
        %1446 = vmatmul.bf16.gmra.mxu0 %v1038
        %v1447 = vpop.f32.mrf.mxu0
        %v1448 = vadd.f32 0.0, %v1447
        %v1449 = vpop.f32.mrf.mxu0
        %v1450 = vadd.f32 0.0, %v1449
        %1451 = vmatmul.bf16.gmra.mxu0 %v1043
        %v1452 = vpop.f32.mrf.mxu0
        %v1453 = vadd.f32 0.0, %v1452
        %v1454 = vpop.f32.mrf.mxu0
        %v1455 = vadd.f32 0.0, %v1454
        %1456 = vmatmul.bf16.gmra.mxu0 %v1048
        %v1457 = vpop.f32.mrf.mxu0
        %v1458 = vadd.f32 0.0, %v1457
        %v1459 = vpop.f32.mrf.mxu0
        %v1460 = vadd.f32 0.0, %v1459
        %1461 = vmatmul.bf16.gmra.mxu0 %v1053
        %v1462 = vpop.f32.mrf.mxu0
        %v1463 = vadd.f32 0.0, %v1462
        %v1464 = vpop.f32.mrf.mxu0
        %v1465 = vadd.f32 0.0, %v1464
        %1466 = vmatmul.bf16.gmra.mxu0 %v1058
        %v1467 = vpop.f32.mrf.mxu0
        %v1468 = vadd.f32 0.0, %v1467
        %v1469 = vpop.f32.mrf.mxu0
        %v1470 = vadd.f32 0.0, %v1469
        %1471 = vmatmul.bf16.gmra.mxu0 %v1063
        %v1472 = vpop.f32.mrf.mxu0
        %v1473 = vadd.f32 0.0, %v1472
        %v1474 = vpop.f32.mrf.mxu0
        %v1475 = vadd.f32 0.0, %v1474
        %1476 = vmatmul.bf16.gmra.mxu0 %v1068
        %v1477 = vpop.f32.mrf.mxu0
        %v1478 = vadd.f32 0.0, %v1477
        %v1479 = vpop.f32.mrf.mxu0
        %v1480 = vadd.f32 0.0, %v1479
        %1481 = vmatmul.bf16.gmra.mxu0 %v1073
        %v1482 = vpop.f32.mrf.mxu0
        %v1483 = vadd.f32 0.0, %v1482
        %v1484 = vpop.f32.mrf.mxu0
        %v1485 = vadd.f32 0.0, %v1484
        %1486 = vmatmul.bf16.gmra.mxu0 %v1078
        %v1487 = vpop.f32.mrf.mxu0
        %v1488 = vadd.f32 0.0, %v1487
        %v1489 = vpop.f32.mrf.mxu0
        %v1490 = vadd.f32 0.0, %v1489
        %1491 = vmatmul.bf16.gmra.mxu0 %v1083
        %v1492 = vpop.f32.mrf.mxu0
        %v1493 = vadd.f32 0.0, %v1492
        %v1494 = vpop.f32.mrf.mxu0
        %v1495 = vadd.f32 0.0, %v1494
        %1496 = vdwg.mxu0
        %1497 = vmatpush.bf16.msra.mxu0 %v1343
        %1498 = vmatpush.bf16.msra.mxu0 %v1342
        %1499 = vmatpush.bf16.msra.mxu0 %v1341
        %1500 = vmatpush.bf16.msra.mxu0 %v1340
        %1501 = vmatpush.bf16.msra.mxu0 %v1339
        %1502 = vmatpush.bf16.msra.mxu0 %v1338
        %1503 = vmatpush.bf16.msra.mxu0 %v1337
        %1504 = vmatpush.bf16.msra.mxu0 %v1336
        %1505 = vmatmul.bf16.gmra.mxu0 %v1009
        %v1506 = vpop.f32.mrf.mxu0
        %v1507 = vadd.f32 %v1418, %v1506
        %v1508 = vpop.f32.mrf.mxu0
        %v1509 = vadd.f32 %v1420, %v1508
        %1510 = vmatmul.bf16.gmra.mxu0 %v1014
        %v1511 = vpop.f32.mrf.mxu0
        %v1512 = vadd.f32 %v1423, %v1511
        %v1513 = vpop.f32.mrf.mxu0
        %v1514 = vadd.f32 %v1425, %v1513
        %1515 = vmatmul.bf16.gmra.mxu0 %v1019
        %v1516 = vpop.f32.mrf.mxu0
        %v1517 = vadd.f32 %v1428, %v1516
        %v1518 = vpop.f32.mrf.mxu0
        %v1519 = vadd.f32 %v1430, %v1518
        %1520 = vmatmul.bf16.gmra.mxu0 %v1024
        %v1521 = vpop.f32.mrf.mxu0
        %v1522 = vadd.f32 %v1433, %v1521
        %v1523 = vpop.f32.mrf.mxu0
        %v1524 = vadd.f32 %v1435, %v1523
        %1525 = vmatmul.bf16.gmra.mxu0 %v1029
        %v1526 = vpop.f32.mrf.mxu0
        %v1527 = vadd.f32 %v1438, %v1526
        %v1528 = vpop.f32.mrf.mxu0
        %v1529 = vadd.f32 %v1440, %v1528
        %1530 = vmatmul.bf16.gmra.mxu0 %v1034
        %v1531 = vpop.f32.mrf.mxu0
        %v1532 = vadd.f32 %v1443, %v1531
        %v1533 = vpop.f32.mrf.mxu0
        %v1534 = vadd.f32 %v1445, %v1533
        %1535 = vmatmul.bf16.gmra.mxu0 %v1039
        %v1536 = vpop.f32.mrf.mxu0
        %v1537 = vadd.f32 %v1448, %v1536
        %v1538 = vpop.f32.mrf.mxu0
        %v1539 = vadd.f32 %v1450, %v1538
        %1540 = vmatmul.bf16.gmra.mxu0 %v1044
        %v1541 = vpop.f32.mrf.mxu0
        %v1542 = vadd.f32 %v1453, %v1541
        %v1543 = vpop.f32.mrf.mxu0
        %v1544 = vadd.f32 %v1455, %v1543
        %1545 = vmatmul.bf16.gmra.mxu0 %v1049
        %v1546 = vpop.f32.mrf.mxu0
        %v1547 = vadd.f32 %v1458, %v1546
        %v1548 = vpop.f32.mrf.mxu0
        %v1549 = vadd.f32 %v1460, %v1548
        %1550 = vmatmul.bf16.gmra.mxu0 %v1054
        %v1551 = vpop.f32.mrf.mxu0
        %v1552 = vadd.f32 %v1463, %v1551
        %v1553 = vpop.f32.mrf.mxu0
        %v1554 = vadd.f32 %v1465, %v1553
        %1555 = vmatmul.bf16.gmra.mxu0 %v1059
        %v1556 = vpop.f32.mrf.mxu0
        %v1557 = vadd.f32 %v1468, %v1556
        %v1558 = vpop.f32.mrf.mxu0
        %v1559 = vadd.f32 %v1470, %v1558
        %1560 = vmatmul.bf16.gmra.mxu0 %v1064
        %v1561 = vpop.f32.mrf.mxu0
        %v1562 = vadd.f32 %v1473, %v1561
        %v1563 = vpop.f32.mrf.mxu0
        %v1564 = vadd.f32 %v1475, %v1563
        %1565 = vmatmul.bf16.gmra.mxu0 %v1069
        %v1566 = vpop.f32.mrf.mxu0
        %v1567 = vadd.f32 %v1478, %v1566
        %v1568 = vpop.f32.mrf.mxu0
        %v1569 = vadd.f32 %v1480, %v1568
        %1570 = vmatmul.bf16.gmra.mxu0 %v1074
        %v1571 = vpop.f32.mrf.mxu0
        %v1572 = vadd.f32 %v1483, %v1571
        %v1573 = vpop.f32.mrf.mxu0
        %v1574 = vadd.f32 %v1485, %v1573
        %1575 = vmatmul.bf16.gmra.mxu0 %v1079
        %v1576 = vpop.f32.mrf.mxu0
        %v1577 = vadd.f32 %v1488, %v1576
        %v1578 = vpop.f32.mrf.mxu0
        %v1579 = vadd.f32 %v1490, %v1578
        %1580 = vmatmul.bf16.gmra.mxu0 %v1084
        %v1581 = vpop.f32.mrf.mxu0
        %v1582 = vadd.f32 %v1493, %v1581
        %v1583 = vpop.f32.mrf.mxu0
        %v1584 = vadd.f32 %v1495, %v1583
        %1585 = vdwg.mxu0
        %1586 = vmatpush.bf16.msra.mxu0 %v1351
        %1587 = vmatpush.bf16.msra.mxu0 %v1350
        %1588 = vmatpush.bf16.msra.mxu0 %v1349
        %1589 = vmatpush.bf16.msra.mxu0 %v1348
        %1590 = vmatpush.bf16.msra.mxu0 %v1347
        %1591 = vmatpush.bf16.msra.mxu0 %v1346
        %1592 = vmatpush.bf16.msra.mxu0 %v1345
        %1593 = vmatpush.bf16.msra.mxu0 %v1344
        %1594 = vmatmul.bf16.gmra.mxu0 %v1010
        %v1595 = vpop.f32.mrf.mxu0
        %v1596 = vadd.f32 %v1507, %v1595
        %v1597 = vpop.f32.mrf.mxu0
        %v1598 = vadd.f32 %v1509, %v1597
        %1599 = vmatmul.bf16.gmra.mxu0 %v1015
        %v1600 = vpop.f32.mrf.mxu0
        %v1601 = vadd.f32 %v1512, %v1600
        %v1602 = vpop.f32.mrf.mxu0
        %v1603 = vadd.f32 %v1514, %v1602
        %1604 = vmatmul.bf16.gmra.mxu0 %v1020
        %v1605 = vpop.f32.mrf.mxu0
        %v1606 = vadd.f32 %v1517, %v1605
        %v1607 = vpop.f32.mrf.mxu0
        %v1608 = vadd.f32 %v1519, %v1607
        %1609 = vmatmul.bf16.gmra.mxu0 %v1025
        %v1610 = vpop.f32.mrf.mxu0
        %v1611 = vadd.f32 %v1522, %v1610
        %v1612 = vpop.f32.mrf.mxu0
        %v1613 = vadd.f32 %v1524, %v1612
        %1614 = vmatmul.bf16.gmra.mxu0 %v1030
        %v1615 = vpop.f32.mrf.mxu0
        %v1616 = vadd.f32 %v1527, %v1615
        %v1617 = vpop.f32.mrf.mxu0
        %v1618 = vadd.f32 %v1529, %v1617
        %1619 = vmatmul.bf16.gmra.mxu0 %v1035
        %v1620 = vpop.f32.mrf.mxu0
        %v1621 = vadd.f32 %v1532, %v1620
        %v1622 = vpop.f32.mrf.mxu0
        %v1623 = vadd.f32 %v1534, %v1622
        %1624 = vmatmul.bf16.gmra.mxu0 %v1040
        %v1625 = vpop.f32.mrf.mxu0
        %v1626 = vadd.f32 %v1537, %v1625
        %v1627 = vpop.f32.mrf.mxu0
        %v1628 = vadd.f32 %v1539, %v1627
        %1629 = vmatmul.bf16.gmra.mxu0 %v1045
        %v1630 = vpop.f32.mrf.mxu0
        %v1631 = vadd.f32 %v1542, %v1630
        %v1632 = vpop.f32.mrf.mxu0
        %v1633 = vadd.f32 %v1544, %v1632
        %1634 = vmatmul.bf16.gmra.mxu0 %v1050
        %v1635 = vpop.f32.mrf.mxu0
        %v1636 = vadd.f32 %v1547, %v1635
        %v1637 = vpop.f32.mrf.mxu0
        %v1638 = vadd.f32 %v1549, %v1637
        %1639 = vmatmul.bf16.gmra.mxu0 %v1055
        %v1640 = vpop.f32.mrf.mxu0
        %v1641 = vadd.f32 %v1552, %v1640
        %v1642 = vpop.f32.mrf.mxu0
        %v1643 = vadd.f32 %v1554, %v1642
        %1644 = vmatmul.bf16.gmra.mxu0 %v1060
        %v1645 = vpop.f32.mrf.mxu0
        %v1646 = vadd.f32 %v1557, %v1645
        %v1647 = vpop.f32.mrf.mxu0
        %v1648 = vadd.f32 %v1559, %v1647
        %1649 = vmatmul.bf16.gmra.mxu0 %v1065
        %v1650 = vpop.f32.mrf.mxu0
        %v1651 = vadd.f32 %v1562, %v1650
        %v1652 = vpop.f32.mrf.mxu0
        %v1653 = vadd.f32 %v1564, %v1652
        %1654 = vmatmul.bf16.gmra.mxu0 %v1070
        %v1655 = vpop.f32.mrf.mxu0
        %v1656 = vadd.f32 %v1567, %v1655
        %v1657 = vpop.f32.mrf.mxu0
        %v1658 = vadd.f32 %v1569, %v1657
        %1659 = vmatmul.bf16.gmra.mxu0 %v1075
        %v1660 = vpop.f32.mrf.mxu0
        %v1661 = vadd.f32 %v1572, %v1660
        %v1662 = vpop.f32.mrf.mxu0
        %v1663 = vadd.f32 %v1574, %v1662
        %1664 = vmatmul.bf16.gmra.mxu0 %v1080
        %v1665 = vpop.f32.mrf.mxu0
        %v1666 = vadd.f32 %v1577, %v1665
        %v1667 = vpop.f32.mrf.mxu0
        %v1668 = vadd.f32 %v1579, %v1667
        %1669 = vmatmul.bf16.gmra.mxu0 %v1085
        %v1670 = vpop.f32.mrf.mxu0
        %v1671 = vadd.f32 %v1582, %v1670
        %v1672 = vpop.f32.mrf.mxu0
        %v1673 = vadd.f32 %v1584, %v1672
        %1674 = vdwg.mxu0
        %1675 = vmatpush.bf16.msra.mxu0 %v1359
        %1676 = vmatpush.bf16.msra.mxu0 %v1358
        %1677 = vmatpush.bf16.msra.mxu0 %v1357
        %1678 = vmatpush.bf16.msra.mxu0 %v1356
        %1679 = vmatpush.bf16.msra.mxu0 %v1355
        %1680 = vmatpush.bf16.msra.mxu0 %v1354
        %1681 = vmatpush.bf16.msra.mxu0 %v1353
        %1682 = vmatpush.bf16.msra.mxu0 %v1352
        %1683 = vmatmul.bf16.gmra.mxu0 %v1011
        %v1684 = vpop.f32.mrf.mxu0
        %v1685 = vadd.f32 %v1596, %v1684
        %v1686 = vpop.f32.mrf.mxu0
        %v1687 = vadd.f32 %v1598, %v1686
        %1688 = vmatmul.bf16.gmra.mxu0 %v1016
        %v1689 = vpop.f32.mrf.mxu0
        %v1690 = vadd.f32 %v1601, %v1689
        %v1691 = vpop.f32.mrf.mxu0
        %v1692 = vadd.f32 %v1603, %v1691
        %1693 = vmatmul.bf16.gmra.mxu0 %v1021
        %v1694 = vpop.f32.mrf.mxu0
        %v1695 = vadd.f32 %v1606, %v1694
        %v1696 = vpop.f32.mrf.mxu0
        %v1697 = vadd.f32 %v1608, %v1696
        %1698 = vmatmul.bf16.gmra.mxu0 %v1026
        %v1699 = vpop.f32.mrf.mxu0
        %v1700 = vadd.f32 %v1611, %v1699
        %v1701 = vpop.f32.mrf.mxu0
        %v1702 = vadd.f32 %v1613, %v1701
        %1703 = vmatmul.bf16.gmra.mxu0 %v1031
        %v1704 = vpop.f32.mrf.mxu0
        %v1705 = vadd.f32 %v1616, %v1704
        %v1706 = vpop.f32.mrf.mxu0
        %v1707 = vadd.f32 %v1618, %v1706
        %1708 = vmatmul.bf16.gmra.mxu0 %v1036
        %v1709 = vpop.f32.mrf.mxu0
        %v1710 = vadd.f32 %v1621, %v1709
        %v1711 = vpop.f32.mrf.mxu0
        %v1712 = vadd.f32 %v1623, %v1711
        %1713 = vmatmul.bf16.gmra.mxu0 %v1041
        %v1714 = vpop.f32.mrf.mxu0
        %v1715 = vadd.f32 %v1626, %v1714
        %v1716 = vpop.f32.mrf.mxu0
        %v1717 = vadd.f32 %v1628, %v1716
        %1718 = vmatmul.bf16.gmra.mxu0 %v1046
        %v1719 = vpop.f32.mrf.mxu0
        %v1720 = vadd.f32 %v1631, %v1719
        %v1721 = vpop.f32.mrf.mxu0
        %v1722 = vadd.f32 %v1633, %v1721
        %1723 = vmatmul.bf16.gmra.mxu0 %v1051
        %v1724 = vpop.f32.mrf.mxu0
        %v1725 = vadd.f32 %v1636, %v1724
        %v1726 = vpop.f32.mrf.mxu0
        %v1727 = vadd.f32 %v1638, %v1726
        %1728 = vmatmul.bf16.gmra.mxu0 %v1056
        %v1729 = vpop.f32.mrf.mxu0
        %v1730 = vadd.f32 %v1641, %v1729
        %v1731 = vpop.f32.mrf.mxu0
        %v1732 = vadd.f32 %v1643, %v1731
        %1733 = vmatmul.bf16.gmra.mxu0 %v1061
        %v1734 = vpop.f32.mrf.mxu0
        %v1735 = vadd.f32 %v1646, %v1734
        %v1736 = vpop.f32.mrf.mxu0
        %v1737 = vadd.f32 %v1648, %v1736
        %1738 = vmatmul.bf16.gmra.mxu0 %v1066
        %v1739 = vpop.f32.mrf.mxu0
        %v1740 = vadd.f32 %v1651, %v1739
        %v1741 = vpop.f32.mrf.mxu0
        %v1742 = vadd.f32 %v1653, %v1741
        %1743 = vmatmul.bf16.gmra.mxu0 %v1071
        %v1744 = vpop.f32.mrf.mxu0
        %v1745 = vadd.f32 %v1656, %v1744
        %v1746 = vpop.f32.mrf.mxu0
        %v1747 = vadd.f32 %v1658, %v1746
        %1748 = vmatmul.bf16.gmra.mxu0 %v1076
        %v1749 = vpop.f32.mrf.mxu0
        %v1750 = vadd.f32 %v1661, %v1749
        %v1751 = vpop.f32.mrf.mxu0
        %v1752 = vadd.f32 %v1663, %v1751
        %1753 = vmatmul.bf16.gmra.mxu0 %v1081
        %v1754 = vpop.f32.mrf.mxu0
        %v1755 = vadd.f32 %v1666, %v1754
        %v1756 = vpop.f32.mrf.mxu0
        %v1757 = vadd.f32 %v1668, %v1756
        %1758 = vmatmul.bf16.gmra.mxu0 %v1086
        %v1759 = vpop.f32.mrf.mxu0
        %v1760 = vadd.f32 %v1671, %v1759
        %v1761 = vpop.f32.mrf.mxu0
        %v1762 = vadd.f32 %v1673, %v1761
        %1763 = vdwg.mxu0
        %1764 = vmatpush.bf16.msra.mxu0 %v1367
        %1765 = vmatpush.bf16.msra.mxu0 %v1366
        %1766 = vmatpush.bf16.msra.mxu0 %v1365
        %1767 = vmatpush.bf16.msra.mxu0 %v1364
        %1768 = vmatpush.bf16.msra.mxu0 %v1363
        %1769 = vmatpush.bf16.msra.mxu0 %v1362
        %1770 = vmatpush.bf16.msra.mxu0 %v1361
        %1771 = vmatpush.bf16.msra.mxu0 %v1360
        %1772 = vmatmul.bf16.gmra.mxu0 %v1012
        %v1773 = vpop.f32.mrf.mxu0
        %v1774 = vadd.f32 %v1685, %v1773
        %v1775 = vpop.f32.mrf.mxu0
        %v1776 = vadd.f32 %v1687, %v1775
        %1777 = vmatmul.bf16.gmra.mxu0 %v1017
        %v1778 = vpop.f32.mrf.mxu0
        %v1779 = vadd.f32 %v1690, %v1778
        %v1780 = vpop.f32.mrf.mxu0
        %v1781 = vadd.f32 %v1692, %v1780
        %1782 = vmatmul.bf16.gmra.mxu0 %v1022
        %v1783 = vpop.f32.mrf.mxu0
        %v1784 = vadd.f32 %v1695, %v1783
        %v1785 = vpop.f32.mrf.mxu0
        %v1786 = vadd.f32 %v1697, %v1785
        %1787 = vmatmul.bf16.gmra.mxu0 %v1027
        %v1788 = vpop.f32.mrf.mxu0
        %v1789 = vadd.f32 %v1700, %v1788
        %v1790 = vpop.f32.mrf.mxu0
        %v1791 = vadd.f32 %v1702, %v1790
        %1792 = vmatmul.bf16.gmra.mxu0 %v1032
        %v1793 = vpop.f32.mrf.mxu0
        %v1794 = vadd.f32 %v1705, %v1793
        %v1795 = vpop.f32.mrf.mxu0
        %v1796 = vadd.f32 %v1707, %v1795
        %1797 = vmatmul.bf16.gmra.mxu0 %v1037
        %v1798 = vpop.f32.mrf.mxu0
        %v1799 = vadd.f32 %v1710, %v1798
        %v1800 = vpop.f32.mrf.mxu0
        %v1801 = vadd.f32 %v1712, %v1800
        %1802 = vmatmul.bf16.gmra.mxu0 %v1042
        %v1803 = vpop.f32.mrf.mxu0
        %v1804 = vadd.f32 %v1715, %v1803
        %v1805 = vpop.f32.mrf.mxu0
        %v1806 = vadd.f32 %v1717, %v1805
        %1807 = vmatmul.bf16.gmra.mxu0 %v1047
        %v1808 = vpop.f32.mrf.mxu0
        %v1809 = vadd.f32 %v1720, %v1808
        %v1810 = vpop.f32.mrf.mxu0
        %v1811 = vadd.f32 %v1722, %v1810
        %1812 = vmatmul.bf16.gmra.mxu0 %v1052
        %v1813 = vpop.f32.mrf.mxu0
        %v1814 = vadd.f32 %v1725, %v1813
        %v1815 = vpop.f32.mrf.mxu0
        %v1816 = vadd.f32 %v1727, %v1815
        %1817 = vmatmul.bf16.gmra.mxu0 %v1057
        %v1818 = vpop.f32.mrf.mxu0
        %v1819 = vadd.f32 %v1730, %v1818
        %v1820 = vpop.f32.mrf.mxu0
        %v1821 = vadd.f32 %v1732, %v1820
        %1822 = vmatmul.bf16.gmra.mxu0 %v1062
        %v1823 = vpop.f32.mrf.mxu0
        %v1824 = vadd.f32 %v1735, %v1823
        %v1825 = vpop.f32.mrf.mxu0
        %v1826 = vadd.f32 %v1737, %v1825
        %1827 = vmatmul.bf16.gmra.mxu0 %v1067
        %v1828 = vpop.f32.mrf.mxu0
        %v1829 = vadd.f32 %v1740, %v1828
        %v1830 = vpop.f32.mrf.mxu0
        %v1831 = vadd.f32 %v1742, %v1830
        %1832 = vmatmul.bf16.gmra.mxu0 %v1072
        %v1833 = vpop.f32.mrf.mxu0
        %v1834 = vadd.f32 %v1745, %v1833
        %v1835 = vpop.f32.mrf.mxu0
        %v1836 = vadd.f32 %v1747, %v1835
        %1837 = vmatmul.bf16.gmra.mxu0 %v1077
        %v1838 = vpop.f32.mrf.mxu0
        %v1839 = vadd.f32 %v1750, %v1838
        %v1840 = vpop.f32.mrf.mxu0
        %v1841 = vadd.f32 %v1752, %v1840
        %1842 = vmatmul.bf16.gmra.mxu0 %v1082
        %v1843 = vpop.f32.mrf.mxu0
        %v1844 = vadd.f32 %v1755, %v1843
        %v1845 = vpop.f32.mrf.mxu0
        %v1846 = vadd.f32 %v1757, %v1845
        %1847 = vmatmul.bf16.gmra.mxu0 %v1087
        %v1848 = vpop.f32.mrf.mxu0
        %v1849 = vadd.f32 %v1760, %v1848
        %v1850 = vpop.f32.mrf.mxu0
        %v1851 = vadd.f32 %v1762, %v1850
        %1852 = vdwg.mxu0
        %v1853 = vadd.f32 %v544, %v1774
        %v1854 = vadd.f32 %v545, %v1776
        %v1855 = vadd.f32 %v546, %v1779
        %v1856 = vadd.f32 %v547, %v1781
        %v1857 = vadd.f32 %v548, %v1784
        %v1858 = vadd.f32 %v549, %v1786
        %v1859 = vadd.f32 %v550, %v1789
        %v1860 = vadd.f32 %v551, %v1791
        %v1861 = vadd.f32 %v552, %v1794
        %v1862 = vadd.f32 %v553, %v1796
        %v1863 = vadd.f32 %v554, %v1799
        %v1864 = vadd.f32 %v555, %v1801
        %v1865 = vadd.f32 %v556, %v1804
        %v1866 = vadd.f32 %v557, %v1806
        %v1867 = vadd.f32 %v558, %v1809
        %v1868 = vadd.f32 %v559, %v1811
        %v1869 = vadd.f32 %v560, %v1814
        %v1870 = vadd.f32 %v561, %v1816
        %v1871 = vadd.f32 %v562, %v1819
        %v1872 = vadd.f32 %v563, %v1821
        %v1873 = vadd.f32 %v564, %v1824
        %v1874 = vadd.f32 %v565, %v1826
        %v1875 = vadd.f32 %v566, %v1829
        %v1876 = vadd.f32 %v567, %v1831
        %v1877 = vadd.f32 %v568, %v1834
        %v1878 = vadd.f32 %v569, %v1836
        %v1879 = vadd.f32 %v570, %v1839
        %v1880 = vadd.f32 %v571, %v1841
        %v1881 = vadd.f32 %v572, %v1844
        %v1882 = vadd.f32 %v573, %v1846
        %v1883 = vadd.f32 %v574, %v1849
        %v1884 = vadd.f32 %v575, %v1851
        %1885 = vst [vmem:[#allocation2] sm:$0xff] %v1853
        %1886 = vst [vmem:[#allocation2 + $0x8] sm:$0xff] %v1854
        %1887 = vst [vmem:[#allocation2 + $0x10] sm:$0xff] %v1855
        %1888 = vst [vmem:[#allocation2 + $0x18] sm:$0xff] %v1856
        %1889 = vst [vmem:[#allocation2 + $0x20] sm:$0xff] %v1857
        %1890 = vst [vmem:[#allocation2 + $0x28] sm:$0xff] %v1858
        %1891 = vst [vmem:[#allocation2 + $0x30] sm:$0xff] %v1859
        %1892 = vst [vmem:[#allocation2 + $0x38] sm:$0xff] %v1860
        %1893 = vst [vmem:[#allocation2 + $0x40] sm:$0xff] %v1861
        %1894 = vst [vmem:[#allocation2 + $0x48] sm:$0xff] %v1862
        %1895 = vst [vmem:[#allocation2 + $0x50] sm:$0xff] %v1863
        %1896 = vst [vmem:[#allocation2 + $0x58] sm:$0xff] %v1864
        %1897 = vst [vmem:[#allocation2 + $0x60] sm:$0xff] %v1865
        %1898 = vst [vmem:[#allocation2 + $0x68] sm:$0xff] %v1866
        %1899 = vst [vmem:[#allocation2 + $0x70] sm:$0xff] %v1867
        %1900 = vst [vmem:[#allocation2 + $0x78] sm:$0xff] %v1868
        %1901 = vst [vmem:[#allocation2 + $0x80] sm:$0xff] %v1869
        %1902 = vst [vmem:[#allocation2 + $0x88] sm:$0xff] %v1870
        %1903 = vst [vmem:[#allocation2 + $0x90] sm:$0xff] %v1871
        %1904 = vst [vmem:[#allocation2 + $0x98] sm:$0xff] %v1872
        %1905 = vst [vmem:[#allocation2 + $0xa0] sm:$0xff] %v1873
        %1906 = vst [vmem:[#allocation2 + $0xa8] sm:$0xff] %v1874
        %1907 = vst [vmem:[#allocation2 + $0xb0] sm:$0xff] %v1875
        %1908 = vst [vmem:[#allocation2 + $0xb8] sm:$0xff] %v1876
        %1909 = vst [vmem:[#allocation2 + $0xc0] sm:$0xff] %v1877
        %1910 = vst [vmem:[#allocation2 + $0xc8] sm:$0xff] %v1878
        %1911 = vst [vmem:[#allocation2 + $0xd0] sm:$0xff] %v1879
        %1912 = vst [vmem:[#allocation2 + $0xd8] sm:$0xff] %v1880
        %1913 = vst [vmem:[#allocation2 + $0xe0] sm:$0xff] %v1881
        %1914 = vst [vmem:[#allocation2 + $0xe8] sm:$0xff] %v1882
        %1915 = vst [vmem:[#allocation2 + $0xf0] sm:$0xff] %v1883
        %1916 = vst [vmem:[#allocation2 + $0xf8] sm:$0xff] %v1884
        %p1917 = scmp.eq.s32.totalorder %s23, 4
        // Predicated region
        $region63: #{generator_forward.11} parent=53 // pred_check
          %p1918 = pneg %p1917
        $region64: #{generator_forward.11} parent=53 // pred_check_branch
          %1920 = sbr.rel (%p1918) target = $region66
        $region65: #{generator_forward.11} parent=53 // pred_region
          %v1921 = vld [vmem:[#allocation2] sm:$0xff]
          %v1922 = vld [vmem:[#allocation2 + $0x8] sm:$0xff]
          %v1923 = vld [vmem:[#allocation2 + $0x10] sm:$0xff]
          %v1924 = vld [vmem:[#allocation2 + $0x18] sm:$0xff]
          %v1925 = vld [vmem:[#allocation2 + $0x20] sm:$0xff]
          %v1926 = vld [vmem:[#allocation2 + $0x28] sm:$0xff]
          %v1927 = vld [vmem:[#allocation2 + $0x30] sm:$0xff]
          %v1928 = vld [vmem:[#allocation2 + $0x38] sm:$0xff]
          %v1929 = vld [vmem:[#allocation2 + $0x40] sm:$0xff]
          %v1930 = vld [vmem:[#allocation2 + $0x48] sm:$0xff]
          %v1931 = vld [vmem:[#allocation2 + $0x50] sm:$0xff]
          %v1932 = vld [vmem:[#allocation2 + $0x58] sm:$0xff]
          %v1933 = vld [vmem:[#allocation2 + $0x60] sm:$0xff]
          %v1934 = vld [vmem:[#allocation2 + $0x68] sm:$0xff]
          %v1935 = vld [vmem:[#allocation2 + $0x70] sm:$0xff]
          %v1936 = vld [vmem:[#allocation2 + $0x78] sm:$0xff]
          %v1937 = vld [vmem:[#allocation2 + $0x80] sm:$0xff]
          %v1938 = vld [vmem:[#allocation2 + $0x88] sm:$0xff]
          %v1939 = vld [vmem:[#allocation2 + $0x90] sm:$0xff]
          %v1940 = vld [vmem:[#allocation2 + $0x98] sm:$0xff]
          %v1941 = vld [vmem:[#allocation2 + $0xa0] sm:$0xff]
          %v1942 = vld [vmem:[#allocation2 + $0xa8] sm:$0xff]
          %v1943 = vld [vmem:[#allocation2 + $0xb0] sm:$0xff]
          %v1944 = vld [vmem:[#allocation2 + $0xb8] sm:$0xff]
          %v1945 = vld [vmem:[#allocation2 + $0xc0] sm:$0xff]
          %v1946 = vld [vmem:[#allocation2 + $0xc8] sm:$0xff]
          %v1947 = vld [vmem:[#allocation2 + $0xd0] sm:$0xff]
          %v1948 = vld [vmem:[#allocation2 + $0xd8] sm:$0xff]
          %v1949 = vld [vmem:[#allocation2 + $0xe0] sm:$0xff]
          %v1950 = vld [vmem:[#allocation2 + $0xe8] sm:$0xff]
          %v1951 = vld [vmem:[#allocation2 + $0xf0] sm:$0xff]
          %v1952 = vld [vmem:[#allocation2 + $0xf8] sm:$0xff]
          %v1953 = vld [vmem:[%s494] sm:$0x1]
          %v1955 = vperm.slane %v1953, 0
          %v1957 = vadd.f32 %v1921, %v1955
          %v1958 = vadd.f32 %v1922, %v1955
          %v1959 = vadd.f32 %v1923, %v1955
          %v1960 = vadd.f32 %v1924, %v1955
          %v1961 = vadd.f32 %v1925, %v1955
          %v1962 = vadd.f32 %v1926, %v1955
          %v1963 = vadd.f32 %v1927, %v1955
          %v1964 = vadd.f32 %v1928, %v1955
          %v1965 = vadd.f32 %v1929, %v1955
          %v1966 = vadd.f32 %v1930, %v1955
          %v1967 = vadd.f32 %v1931, %v1955
          %v1968 = vadd.f32 %v1932, %v1955
          %v1969 = vadd.f32 %v1933, %v1955
          %v1970 = vadd.f32 %v1934, %v1955
          %v1971 = vadd.f32 %v1935, %v1955
          %v1972 = vadd.f32 %v1936, %v1955
          %v1973 = vadd.f32 %v1937, %v1955
          %v1974 = vadd.f32 %v1938, %v1955
          %v1975 = vadd.f32 %v1939, %v1955
          %v1976 = vadd.f32 %v1940, %v1955
          %v1977 = vadd.f32 %v1941, %v1955
          %v1978 = vadd.f32 %v1942, %v1955
          %v1979 = vadd.f32 %v1943, %v1955
          %v1980 = vadd.f32 %v1944, %v1955
          %v1981 = vadd.f32 %v1945, %v1955
          %v1982 = vadd.f32 %v1946, %v1955
          %v1983 = vadd.f32 %v1947, %v1955
          %v1984 = vadd.f32 %v1948, %v1955
          %v1985 = vadd.f32 %v1949, %v1955
          %v1986 = vadd.f32 %v1950, %v1955
          %v1987 = vadd.f32 %v1951, %v1955
          %v1988 = vadd.f32 %v1952, %v1955
          %1989 = vst [vmem:[%s506] sm:$0xff] %v1957
          %1990 = vst [vmem:[%s506 + $0x8] sm:$0xff] %v1958
          %1991 = vst [vmem:[%s506 + $0x10] sm:$0xff] %v1959
          %1992 = vst [vmem:[%s506 + $0x18] sm:$0xff] %v1960
          %1993 = vst [vmem:[%s506 + $0x20] sm:$0xff] %v1961
          %1994 = vst [vmem:[%s506 + $0x28] sm:$0xff] %v1962
          %1995 = vst [vmem:[%s506 + $0x30] sm:$0xff] %v1963
          %1996 = vst [vmem:[%s506 + $0x38] sm:$0xff] %v1964
          %1997 = vst [vmem:[%s506 + $0x40] sm:$0xff] %v1965
          %1998 = vst [vmem:[%s506 + $0x48] sm:$0xff] %v1966
          %1999 = vst [vmem:[%s506 + $0x50] sm:$0xff] %v1967
          %2000 = vst [vmem:[%s506 + $0x58] sm:$0xff] %v1968
          %2001 = vst [vmem:[%s506 + $0x60] sm:$0xff] %v1969
          %2002 = vst [vmem:[%s506 + $0x68] sm:$0xff] %v1970
          %2003 = vst [vmem:[%s506 + $0x70] sm:$0xff] %v1971
          %2004 = vst [vmem:[%s506 + $0x78] sm:$0xff] %v1972
          %2005 = vst [vmem:[%s506 + $0x80] sm:$0xff] %v1973
          %2006 = vst [vmem:[%s506 + $0x88] sm:$0xff] %v1974
          %2007 = vst [vmem:[%s506 + $0x90] sm:$0xff] %v1975
          %2008 = vst [vmem:[%s506 + $0x98] sm:$0xff] %v1976
          %2009 = vst [vmem:[%s506 + $0xa0] sm:$0xff] %v1977
          %2010 = vst [vmem:[%s506 + $0xa8] sm:$0xff] %v1978
          %2011 = vst [vmem:[%s506 + $0xb0] sm:$0xff] %v1979
          %2012 = vst [vmem:[%s506 + $0xb8] sm:$0xff] %v1980
          %2013 = vst [vmem:[%s506 + $0xc0] sm:$0xff] %v1981
          %2014 = vst [vmem:[%s506 + $0xc8] sm:$0xff] %v1982
          %2015 = vst [vmem:[%s506 + $0xd0] sm:$0xff] %v1983
          %2016 = vst [vmem:[%s506 + $0xd8] sm:$0xff] %v1984
          %2017 = vst [vmem:[%s506 + $0xe0] sm:$0xff] %v1985
          %2018 = vst [vmem:[%s506 + $0xe8] sm:$0xff] %v1986
          %2019 = vst [vmem:[%s506 + $0xf0] sm:$0xff] %v1987
          %2020 = vst [vmem:[%s506 + $0xf8] sm:$0xff] %v1988
        $region66: #{generator_forward.11} parent=53 // pred_fallthru
          _
        %s2021 = smul.u32 32, %s21
        %p2022 = scmp.lt.s32.totalorder %s20, 0
        %s2023 = scalar_select %p2022, %s20, 0
        %p2024 = scmp.lt.s32.totalorder %s2021, 63
        %s2025 = scalar_select %p2024, %s2021, 63
        %p2026 = scmp.lt.s32.totalorder %s22, 0
        %s2027 = scalar_select %p2026, %s22, 0
        %s2028 = sadd.s32 %s2027, %s2025
        %s2029 = smul.addr %s2023, 64
        %s2030 = sadd.s32 %s2028, %s2029
        %s2031 = smul.addr %s2030, 8
        %s2032 = scalar_lea.vmem %s3, %s2031
        // Predicated region
        $region67: #{generator_forward.11} parent=53 // pred_check
          %p2033 = pneg %p148
        $region68: #{generator_forward.11} parent=53 // pred_check_branch
          %2035 = sbr.rel (%p2033) target = $region70
        $region69: #{generator_forward.11} parent=53 // pred_region
          %s2036 = smul.u32 32, %s21
        $region70: #{generator_forward.11} parent=53 // pred_fallthru
          _
      $region54: #{generator_forward.11} parent=5 // pred_fallthru
        _
      %p2037 = scmp.le.s32.totalorder 2, %s9
      // Predicated region
      $region71: #{generator_forward.11} parent=5 // pred_check
        %p2038 = pneg %p2037
      $region72: #{generator_forward.11} parent=5 // pred_check_branch
        %2040 = sbr.rel (%p2038) target = $region74
      $region73: #{generator_forward.11} parent=5 // pred_region
        %s2041 = ssub.s32 %s9, 2
        // Predicated region
        $region75: #{generator_forward.11} parent=73 // pred_check
          %p2042 = pneg %p154
        $region76: #{generator_forward.11} parent=73 // pred_check_branch
          %2044 = sbr.rel (%p2042) target = $region78
        $region77: #{generator_forward.11} parent=73 // pred_region
          %s2045 = smul.u32 32, %s25
          %p2046 = scmp.lt.s32.totalorder %s24, 0
          %s2047 = scalar_select %p2046, %s24, 0
          %p2048 = scmp.lt.s32.totalorder %s2045, 63
          %s2049 = scalar_select %p2048, %s2045, 63
          %p2050 = scmp.lt.s32.totalorder %s26, 0
          %s2051 = scalar_select %p2050, %s26, 0
          %s2052 = sadd.s32 %s2051, %s2049
          %s2053 = smul.addr %s2047, 64
          %s2054 = sadd.s32 %s2052, %s2053
          %s2055 = smul.addr %s2054, 8
          %s2056 = scalar_lea.vmem %s3, %s2055
        $region78: #{generator_forward.11} parent=73 // pred_fallthru
          _
      $region74: #{generator_forward.11} parent=5 // pred_fallthru
        _
    $region6: #{generator_forward.11} parent=1 // loop_footer
      %s13 = sadd.s32 1, %s9
    $region7: #{generator_forward.11} parent=1 // loop_footer_branch
      %8 = sbr.rel target = $region3
    $region8: #{generator_forward.11} parent=1 // loop_exit
      _

</llo_original>
